<compile_context>
chip_gen: v7x
topology: tpu7x:2x2x1
jax: 0.10.0
libtpu: 0.0.40
codegen_flags: <defaults>
</compile_context>

<pallas_src>
import functools

import numpy as np
import jax
import jax.numpy as jnp
from jax import lax
from jax.experimental import pallas as pl
from jax.experimental.pallas import tpu as pltpu

# ----------------------------------------------------------------------------
# Sizes / layout constants
# ----------------------------------------------------------------------------
TB = 8            # images per grid step
R = TB * 8        # stacked row-groups per grid step (8 per image)
_L1 = 512         # conv1 matmul lanes: [even ow (15*16 -> pad 256) | odd ow (pad 256)]
_P1 = 256         # W-pooled conv1 lanes (15*16 = 240 -> pad 256)
_L2 = 256         # conv2 matmul lanes: [even ow2 (6*16 -> pad 128) | odd ow2 (pad 128)]
_P2 = 128         # fully pooled conv2 lanes (6*16 = 96 -> pad 128)


# ----------------------------------------------------------------------------
# The single fused kernel (one grid step = TB images)
# ----------------------------------------------------------------------------
def _fused_cnn_kernel(x_ref, m1_ref, b1_ref, m2_ref, b2_ref,
                      w1_ref, c1_ref, w2_ref, c2_ref,
                      out_ref, p1e_ref, p1o_ref, p2_ref):
    dot = functools.partial(jnp.dot, preferred_element_type=jnp.float32)
    b1 = b1_ref[...]                       # (1, 256) conv1 bias (tiled over W)
    b2 = b2_ref[...]                       # (1, 128) conv2 bias (tiled over W)

    # ---- conv1 (3x3 valid) as banded matmuls, grouped by output row mod 4 ----
    # x_ref[s][t*8+m, :] = input row 4m+s of image t, lanes = W*Cin = 96.
    g0 = dot(x_ref[0], m1_ref[0]) + dot(x_ref[1], m1_ref[1]) + dot(x_ref[2], m1_ref[2])
    g1 = dot(x_ref[1], m1_ref[0]) + dot(x_ref[2], m1_ref[1]) + dot(x_ref[3], m1_ref[2])
    g2 = (dot(x_ref[2, 0:R - 1, :], m1_ref[0]) + dot(x_ref[3, 0:R - 1, :], m1_ref[1])
          + dot(x_ref[0, 1:R, :], m1_ref[2]))
    g3 = (dot(x_ref[3, 0:R - 1, :], m1_ref[0]) + dot(x_ref[0, 1:R, :], m1_ref[1])
          + dot(x_ref[1, 1:R, :], m1_ref[2]))
    # (rows with m == 7 of g2/g3 mix adjacent images; they are never consumed.)

    # ---- ReLU + 2x2 max-pool fused as conv1 epilogue -------------------------
    wpool1 = lambda g: jnp.maximum(g[:, :_P1], g[:, _P1:])      # pool along W
    p1e_ref[...] = jnp.maximum(jnp.maximum(wpool1(g0), wpool1(g1)) + b1, 0.0)
    p1o_ref[R - 1:R, :] = jnp.zeros((1, _P1), jnp.float32)      # never consumed; keep finite
    p1o_ref[0:R - 1, :] = jnp.maximum(jnp.maximum(wpool1(g2), wpool1(g3)) + b1, 0.0)

    # ---- conv2 (3x3 valid) on the pooled map; rows/cols dropped by the floor
    #      2x2 pool are never computed; ReLU + pool fused as epilogue ----------
    be = (dot(p1e_ref[0:R - 1, :], m2_ref[0]) + dot(p1o_ref[0:R - 1, :], m2_ref[1])
          + dot(p1e_ref[1:R, :], m2_ref[2]))
    bo = (dot(p1o_ref[0:R - 1, :], m2_ref[0]) + dot(p1e_ref[1:R, :], m2_ref[1])
          + dot(p1o_ref[1:R, :], m2_ref[2]))
    wpool2 = lambda g: jnp.maximum(g[:, :_P2], g[:, _P2:])
    p2 = jnp.maximum(jnp.maximum(wpool2(be), wpool2(bo)) + b2, 0.0)     # (R-1, 128)

    # regroup the 6 valid pooled rows of each image (8-row bands -> (TB, 6, 128))
    for t in range(TB):
        p2_ref[t] = p2[t * 8:t * 8 + 6, :]

    # ---- fc1 + ReLU + fc2, batched over the TB images of this step -----------
    hid = c1_ref[...]                                            # (1, 100)
    for h in range(6):
        rows = p2_ref[:, h:h + 1, :].reshape(TB, _P2)            # (TB, 128)
        hid = hid + dot(rows, w1_ref[h * _P2:(h + 1) * _P2, :])
    hid = jnp.maximum(hid, 0.0)                                  # (TB, 100)
    out_ref[...] = (dot(hid, w2_ref[...]) + c2_ref[...]).astype(out_ref.dtype)


# ----------------------------------------------------------------------------
# Host-side parameter packing (PyTorch layout -> kernel layout), done once
# ----------------------------------------------------------------------------
def init_params(key, cnn_out_dim=10):
    """Parameters in PyTorch layout: conv (Cout,Cin,KH,KW), linear (out,in)."""
    ks = jax.random.split(key, 8)

    def uni(k, shape, fan_in):
        b = 1.0 / float(np.sqrt(fan_in))
        return jax.random.uniform(k, shape, jnp.float32, -b, b)

    return {
        "conv1_w": uni(ks[0], (16, 3, 3, 3), 3 * 9),
        "conv1_b": uni(ks[1], (16,), 3 * 9),
        "conv2_w": uni(ks[2], (16, 16, 3, 3), 16 * 9),
        "conv2_b": uni(ks[3], (16,), 16 * 9),
        "fc1_w": uni(ks[4], (100, 16 * 6 * 6), 16 * 6 * 6),
        "fc1_b": uni(ks[5], (100,), 16 * 6 * 6),
        "fc2_w": uni(ks[6], (cnn_out_dim, 100), 100),
        "fc2_b": uni(ks[7], (cnn_out_dim,), 100),
    }


def pack_params(p):
    """Build the banded conv matrices, tiled biases and permuted fc1 weights."""
    w1 = np.asarray(p["conv1_w"], np.float32)    # (16, 3, 3, 3)
    b1 = np.asarray(p["conv1_b"], np.float32)
    w2 = np.asarray(p["conv2_w"], np.float32)    # (16, 16, 3, 3)
    b2 = np.asarray(p["conv2_b"], np.float32)
    fw1 = np.asarray(p["fc1_w"], np.float32)     # (100, 576)
    fb1 = np.asarray(p["fc1_b"], np.float32)
    fw2 = np.asarray(p["fc2_w"], np.float32)     # (out, 100)
    fb2 = np.asarray(p["fc2_b"], np.float32)
    out_dim = fw2.shape[0]

    # conv1: rows = input lane (w*3+ci), cols = [even ow | odd ow] x (pw*16+co)
    m1 = np.zeros((3, 96, _L1), np.float32)
    for kh in range(3):
        for kw in range(3):
            blk = w1[:, :, kh, kw].T                      # (ci=3, co=16)
            for pw in range(15):
                for par, off in ((0, 0), (1, _P1)):
                    ow = 2 * pw + par
                    m1[kh, (ow + kw) * 3:(ow + kw) * 3 + 3,
                       off + pw * 16:off + pw * 16 + 16] = blk
    b1t = np.zeros((1, _P1), np.float32)
    for pw in range(15):
        b1t[0, pw * 16:(pw + 1) * 16] = b1

    # conv2: rows = pooled lane (pw*16+ci, 240 valid of 256), cols = [even|odd ow2]
    m2 = np.zeros((3, _P1, _L2), np.float32)
    for kh in range(3):
        for kw in range(3):
            blk = w2[:, :, kh, kw].T                      # (ci=16, co=16)
            for j in range(6):
                for par, off in ((0, 0), (1, _P2)):
                    ow2 = 2 * j + par
                    m2[kh, (ow2 + kw) * 16:(ow2 + kw) * 16 + 16,
                       off + j * 16:off + j * 16 + 16] = blk
    b2t = np.zeros((1, _P2), np.float32)
    for j in range(6):
        b2t[0, j * 16:(j + 1) * 16] = b2

    # fc1: fold PyTorch's (C, H, W) flatten into a row permutation of fc1_w
    fc1k = np.zeros((6 * _P2, 100), np.float32)
    for h in range(6):
        for w in range(6):
            for c in range(16):
                fc1k[h * _P2 + w * 16 + c, :] = fw1[:, c * 36 + h * 6 + w]

    return {
        "m1": jnp.asarray(m1), "b1": jnp.asarray(b1t),
        "m2": jnp.asarray(m2), "b2": jnp.asarray(b2t),
        "fc1_w": jnp.asarray(fc1k), "fc1_b": jnp.asarray(fb1.reshape(1, 100)),
        "fc2_w": jnp.asarray(fw2.T), "fc2_b": jnp.asarray(fb2.reshape(1, out_dim)),
    }


# ----------------------------------------------------------------------------
# Forward pass
# ----------------------------------------------------------------------------
def _prep_inputs(x_nchw, n_pad):
    """NCHW -> stacked row layout (4, n_pad*8, 96): row r=n*8+m of split s holds
    image n, input row 4m+s, lanes = W*Cin."""
    n = x_nchw.shape[0]
    x = x_nchw.astype(jnp.float32)
    if n_pad != n:
        x = jnp.pad(x, ((0, n_pad - n), (0, 0), (0, 0), (0, 0)))
    x = jnp.transpose(x, (0, 2, 3, 1))            # NHWC
    x = x.reshape(n_pad, 32, 96)                  # rows = H, lanes = W*Cin
    x = x.reshape(n_pad, 8, 4, 96)                # H = 4*m + s
    x = jnp.transpose(x, (2, 0, 1, 3))            # (4, n_pad, 8, 96)
    return x.reshape(4, n_pad * 8, 96)


@jax.jit
def example_cnn_forward(x_nchw, packed):
    n = x_nchw.shape[0]
    n_pad = -(-n // TB) * TB
    x = _prep_inputs(x_nchw, n_pad)
    hdim = packed["fc1_w"].shape[1]
    out_dim = packed["fc2_w"].shape[1]

    out = pl.pallas_call(
        _fused_cnn_kernel,
        out_shape=jax.ShapeDtypeStruct((n_pad, out_dim), jnp.float32),
        grid_spec=pltpu.PrefetchScalarGridSpec(
            num_scalar_prefetch=0,
            grid=(n_pad // TB,),
            in_specs=[
                pl.BlockSpec((4, R, 96), lambda i: (0, i, 0)),       # input tile
                pl.BlockSpec((3, 96, _L1), lambda i: (0, 0, 0)),     # conv1 (banded)
                pl.BlockSpec((1, _P1), lambda i: (0, 0)),            # conv1 bias
                pl.BlockSpec((3, _P1, _L2), lambda i: (0, 0, 0)),    # conv2 (banded)
                pl.BlockSpec((1, _P2), lambda i: (0, 0)),            # conv2 bias
                pl.BlockSpec((6 * _P2, hdim), lambda i: (0, 0)),     # fc1 W (permuted)
                pl.BlockSpec((1, hdim), lambda i: (0, 0)),           # fc1 b
                pl.BlockSpec((hdim, out_dim), lambda i: (0, 0)),     # fc2 W
                pl.BlockSpec((1, out_dim), lambda i: (0, 0)),        # fc2 b
            ],
            out_specs=pl.BlockSpec((TB, out_dim), lambda i: (i, 0)),
            scratch_shapes=[
                pltpu.VMEM((R, _P1), jnp.float32),      # pooled-W conv1, even rows
                pltpu.VMEM((R, _P1), jnp.float32),      # pooled-W conv1, odd rows
                pltpu.VMEM((TB, 6, _P2), jnp.float32),  # pooled conv2 per image
            ],
        ),
        compiler_params=pltpu.CompilerParams(
            dimension_semantics=("parallel",),
        ),
    )(x, packed["m1"], packed["b1"], packed["m2"], packed["b2"],
      packed["fc1_w"], packed["fc1_b"], packed["fc2_w"], packed["fc2_b"])
    return out[:n]


# ----------------------------------------------------------------------------
# Pure-JAX reference (matches the PyTorch module op-for-op) for self-checking
# ----------------------------------------------------------------------------
@jax.jit
def reference_forward(x_nchw, p):
    hp = lax.Precision.HIGHEST
    dn = ("NCHW", "OIHW", "NCHW")
    x = x_nchw.astype(jnp.float32)
    y = lax.conv_general_dilated(x, p["conv1_w"], (1, 1), "VALID",
                                 dimension_numbers=dn, precision=hp)
    y = jnp.maximum(y + p["conv1_b"].reshape(1, -1, 1, 1), 0.0)
    y = lax.reduce_window(y, -jnp.inf, lax.max, (1, 1, 2, 2), (1, 1, 2, 2), "VALID")
    y = lax.conv_general_dilated(y, p["conv2_w"], (1, 1), "VALID",
                                 dimension_numbers=dn, precision=hp)
    y = jnp.maximum(y + p["conv2_b"].reshape(1, -1, 1, 1), 0.0)
    y = lax.reduce_window(y, -jnp.inf, lax.max, (1, 1, 2, 2), (1, 1, 2, 2), "VALID")
    y = y.reshape(y.shape[0], -1)                 # PyTorch (C, H, W) flatten
    y = jnp.maximum(jnp.dot(y, p["fc1_w"].T, precision=hp) + p["fc1_b"], 0.0)
    return jnp.dot(y, p["fc2_w"].T, precision=hp) + p["fc2_b"]


if __name__ == "__main__":
    key = jax.random.PRNGKey(0)
    k_x, k_p = jax.random.split(key)

    batch = 12   # deliberately not a multiple of TB to exercise the padding path
    x = jax.random.normal(k_x, (batch, 3, 32, 32), dtype=jnp.float32)
    params = init_params(k_p, cnn_out_dim=10)
    packed = pack_params(params)

    out = jax.block_until_ready(example_cnn_forward(x, packed))
    assert out.shape == (batch, 10), out.shape
    assert bool(jnp.all(jnp.isfinite(out)))

    ref = jax.block_until_ready(reference_forward(x, params))
    max_err = float(jnp.max(jnp.abs(out - ref)))
    assert bool(jnp.allclose(out, ref, rtol=2e-2, atol=2e-2)), max_err

    print("KERNEL_OK")
</pallas_src>

<mosaic_0001>
module attributes {stable_mosaic.version = 11 : i64} {
  func.func @_fused_cnn_kernel(%arg0: i32, %arg1: memref<4x64x96xf32, #tpu.memory_space<vmem>>, %arg2: memref<3x96x512xf32, #tpu.memory_space<vmem>>, %arg3: memref<1x256xf32, #tpu.memory_space<vmem>>, %arg4: memref<3x256x256xf32, #tpu.memory_space<vmem>>, %arg5: memref<1x128xf32, #tpu.memory_space<vmem>>, %arg6: memref<768x100xf32, #tpu.memory_space<vmem>>, %arg7: memref<1x100xf32, #tpu.memory_space<vmem>>, %arg8: memref<100x10xf32, #tpu.memory_space<vmem>>, %arg9: memref<1x10xf32, #tpu.memory_space<vmem>>, %arg10: memref<8x10xf32, #tpu.memory_space<vmem>>, %arg11: memref<64x256xf32, #tpu.memory_space<vmem>>, %arg12: memref<64x256xf32, #tpu.memory_space<vmem>>, %arg13: memref<8x6x128xf32, #tpu.memory_space<vmem>>) attributes {dimension_semantics = [#tpu.dimension_semantics<parallel>], iteration_bounds = array<i64: 2>, scalar_prefetch = 0 : i64, scratch_operands = 3 : i64, tpu.core_type = #tpu.core_type<tc>, window_params = [{transform_indices = @transform_0, window_bounds = array<i64: 4, 64, 96>}, {pipeline_mode = #tpu.pipeline_mode<synchronous>, transform_indices = @transform_1, window_bounds = array<i64: 3, 96, 512>}, {pipeline_mode = #tpu.pipeline_mode<synchronous>, transform_indices = @transform_2, window_bounds = array<i64: 1, 256>}, {pipeline_mode = #tpu.pipeline_mode<synchronous>, transform_indices = @transform_3, window_bounds = array<i64: 3, 256, 256>}, {pipeline_mode = #tpu.pipeline_mode<synchronous>, transform_indices = @transform_4, window_bounds = array<i64: 1, 128>}, {pipeline_mode = #tpu.pipeline_mode<synchronous>, transform_indices = @transform_5, window_bounds = array<i64: 768, 100>}, {pipeline_mode = #tpu.pipeline_mode<synchronous>, transform_indices = @transform_6, window_bounds = array<i64: 1, 100>}, {pipeline_mode = #tpu.pipeline_mode<synchronous>, transform_indices = @transform_7, window_bounds = array<i64: 100, 10>}, {pipeline_mode = #tpu.pipeline_mode<synchronous>, transform_indices = @transform_8, window_bounds = array<i64: 1, 10>}, {transform_indices = @transform_9, window_bounds = array<i64: 8, 10>}]} {
    %c0 = arith.constant 0 : index
    %c0_0 = arith.constant 0 : index
    %0 = vector.load %arg3[%c0, %c0_0] : memref<1x256xf32, #tpu.memory_space<vmem>>, vector<1x256xf32>
    %c0_1 = arith.constant 0 : index
    %c0_2 = arith.constant 0 : index
    %1 = vector.load %arg5[%c0_1, %c0_2] : memref<1x128xf32, #tpu.memory_space<vmem>>, vector<1x128xf32>
    %c0_3 = arith.constant 0 : index
    %c0_4 = arith.constant 0 : index
    %c0_5 = arith.constant 0 : index
    %2 = vector.load %arg1[%c0_3, %c0_4, %c0_5] : memref<4x64x96xf32, #tpu.memory_space<vmem>>, vector<1x64x96xf32>
    %3 = vector.shape_cast %2 : vector<1x64x96xf32> to vector<64x96xf32>
    %c0_6 = arith.constant 0 : index
    %c0_7 = arith.constant 0 : index
    %c0_8 = arith.constant 0 : index
    %4 = vector.load %arg2[%c0_6, %c0_7, %c0_8] : memref<3x96x512xf32, #tpu.memory_space<vmem>>, vector<1x96x512xf32>
    %5 = vector.shape_cast %4 : vector<1x96x512xf32> to vector<96x512xf32>
    %cst = arith.constant dense<0.000000e+00> : vector<64x512xf32>
    %6 = tpu.matmul %3, %5, %cst {dimension_numbers = #tpu.dot_dimension_numbers<[1], [0], [0], [1], [0, 0, 1, 1], [], []>} : vector<64x96xf32>, vector<96x512xf32>, vector<64x512xf32> -> vector<64x512xf32>
    %c1 = arith.constant 1 : index
    %c0_9 = arith.constant 0 : index
    %c0_10 = arith.constant 0 : index
    %7 = vector.load %arg1[%c1, %c0_9, %c0_10] : memref<4x64x96xf32, #tpu.memory_space<vmem>>, vector<1x64x96xf32>
    %8 = vector.shape_cast %7 : vector<1x64x96xf32> to vector<64x96xf32>
    %c1_11 = arith.constant 1 : index
    %c0_12 = arith.constant 0 : index
    %c0_13 = arith.constant 0 : index
    %9 = vector.load %arg2[%c1_11, %c0_12, %c0_13] : memref<3x96x512xf32, #tpu.memory_space<vmem>>, vector<1x96x512xf32>
    %10 = vector.shape_cast %9 : vector<1x96x512xf32> to vector<96x512xf32>
    %cst_14 = arith.constant dense<0.000000e+00> : vector<64x512xf32>
    %11 = tpu.matmul %8, %10, %cst_14 {dimension_numbers = #tpu.dot_dimension_numbers<[1], [0], [0], [1], [0, 0, 1, 1], [], []>} : vector<64x96xf32>, vector<96x512xf32>, vector<64x512xf32> -> vector<64x512xf32>
    %12 = arith.addf %6, %11 : vector<64x512xf32>
    %c2 = arith.constant 2 : index
    %c0_15 = arith.constant 0 : index
    %c0_16 = arith.constant 0 : index
    %13 = vector.load %arg1[%c2, %c0_15, %c0_16] : memref<4x64x96xf32, #tpu.memory_space<vmem>>, vector<1x64x96xf32>
    %14 = vector.shape_cast %13 : vector<1x64x96xf32> to vector<64x96xf32>
    %c2_17 = arith.constant 2 : index
    %c0_18 = arith.constant 0 : index
    %c0_19 = arith.constant 0 : index
    %15 = vector.load %arg2[%c2_17, %c0_18, %c0_19] : memref<3x96x512xf32, #tpu.memory_space<vmem>>, vector<1x96x512xf32>
    %16 = vector.shape_cast %15 : vector<1x96x512xf32> to vector<96x512xf32>
    %cst_20 = arith.constant dense<0.000000e+00> : vector<64x512xf32>
    %17 = tpu.matmul %14, %16, %cst_20 {dimension_numbers = #tpu.dot_dimension_numbers<[1], [0], [0], [1], [0, 0, 1, 1], [], []>} : vector<64x96xf32>, vector<96x512xf32>, vector<64x512xf32> -> vector<64x512xf32>
    %18 = arith.addf %12, %17 : vector<64x512xf32>
    %c1_21 = arith.constant 1 : index
    %c0_22 = arith.constant 0 : index
    %c0_23 = arith.constant 0 : index
    %19 = vector.load %arg1[%c1_21, %c0_22, %c0_23] : memref<4x64x96xf32, #tpu.memory_space<vmem>>, vector<1x64x96xf32>
    %20 = vector.shape_cast %19 : vector<1x64x96xf32> to vector<64x96xf32>
    %c0_24 = arith.constant 0 : index
    %c0_25 = arith.constant 0 : index
    %c0_26 = arith.constant 0 : index
    %21 = vector.load %arg2[%c0_24, %c0_25, %c0_26] : memref<3x96x512xf32, #tpu.memory_space<vmem>>, vector<1x96x512xf32>
    %22 = vector.shape_cast %21 : vector<1x96x512xf32> to vector<96x512xf32>
    %cst_27 = arith.constant dense<0.000000e+00> : vector<64x512xf32>
    %23 = tpu.matmul %20, %22, %cst_27 {dimension_numbers = #tpu.dot_dimension_numbers<[1], [0], [0], [1], [0, 0, 1, 1], [], []>} : vector<64x96xf32>, vector<96x512xf32>, vector<64x512xf32> -> vector<64x512xf32>
    %c2_28 = arith.constant 2 : index
    %c0_29 = arith.constant 0 : index
    %c0_30 = arith.constant 0 : index
    %24 = vector.load %arg1[%c2_28, %c0_29, %c0_30] : memref<4x64x96xf32, #tpu.memory_space<vmem>>, vector<1x64x96xf32>
    %25 = vector.shape_cast %24 : vector<1x64x96xf32> to vector<64x96xf32>
    %c1_31 = arith.constant 1 : index
    %c0_32 = arith.constant 0 : index
    %c0_33 = arith.constant 0 : index
    %26 = vector.load %arg2[%c1_31, %c0_32, %c0_33] : memref<3x96x512xf32, #tpu.memory_space<vmem>>, vector<1x96x512xf32>
    %27 = vector.shape_cast %26 : vector<1x96x512xf32> to vector<96x512xf32>
    %cst_34 = arith.constant dense<0.000000e+00> : vector<64x512xf32>
    %28 = tpu.matmul %25, %27, %cst_34 {dimension_numbers = #tpu.dot_dimension_numbers<[1], [0], [0], [1], [0, 0, 1, 1], [], []>} : vector<64x96xf32>, vector<96x512xf32>, vector<64x512xf32> -> vector<64x512xf32>
    %29 = arith.addf %23, %28 : vector<64x512xf32>
    %c3 = arith.constant 3 : index
    %c0_35 = arith.constant 0 : index
    %c0_36 = arith.constant 0 : index
    %30 = vector.load %arg1[%c3, %c0_35, %c0_36] : memref<4x64x96xf32, #tpu.memory_space<vmem>>, vector<1x64x96xf32>
    %31 = vector.shape_cast %30 : vector<1x64x96xf32> to vector<64x96xf32>
    %c2_37 = arith.constant 2 : index
    %c0_38 = arith.constant 0 : index
    %c0_39 = arith.constant 0 : index
    %32 = vector.load %arg2[%c2_37, %c0_38, %c0_39] : memref<3x96x512xf32, #tpu.memory_space<vmem>>, vector<1x96x512xf32>
    %33 = vector.shape_cast %32 : vector<1x96x512xf32> to vector<96x512xf32>
    %cst_40 = arith.constant dense<0.000000e+00> : vector<64x512xf32>
    %34 = tpu.matmul %31, %33, %cst_40 {dimension_numbers = #tpu.dot_dimension_numbers<[1], [0], [0], [1], [0, 0, 1, 1], [], []>} : vector<64x96xf32>, vector<96x512xf32>, vector<64x512xf32> -> vector<64x512xf32>
    %35 = arith.addf %29, %34 : vector<64x512xf32>
    %c2_41 = arith.constant 2 : index
    %c0_42 = arith.constant 0 : index
    %c0_43 = arith.constant 0 : index
    %36 = vector.load %arg1[%c2_41, %c0_42, %c0_43] : memref<4x64x96xf32, #tpu.memory_space<vmem>>, vector<1x63x96xf32>
    %37 = vector.shape_cast %36 : vector<1x63x96xf32> to vector<63x96xf32>
    %c0_44 = arith.constant 0 : index
    %c0_45 = arith.constant 0 : index
    %c0_46 = arith.constant 0 : index
    %38 = vector.load %arg2[%c0_44, %c0_45, %c0_46] : memref<3x96x512xf32, #tpu.memory_space<vmem>>, vector<1x96x512xf32>
    %39 = vector.shape_cast %38 : vector<1x96x512xf32> to vector<96x512xf32>
    %cst_47 = arith.constant dense<0.000000e+00> : vector<63x512xf32>
    %40 = tpu.matmul %37, %39, %cst_47 {dimension_numbers = #tpu.dot_dimension_numbers<[1], [0], [0], [1], [0, 0, 1, 1], [], []>} : vector<63x96xf32>, vector<96x512xf32>, vector<63x512xf32> -> vector<63x512xf32>
    %c3_48 = arith.constant 3 : index
    %c0_49 = arith.constant 0 : index
    %c0_50 = arith.constant 0 : index
    %41 = vector.load %arg1[%c3_48, %c0_49, %c0_50] : memref<4x64x96xf32, #tpu.memory_space<vmem>>, vector<1x63x96xf32>
    %42 = vector.shape_cast %41 : vector<1x63x96xf32> to vector<63x96xf32>
    %c1_51 = arith.constant 1 : index
    %c0_52 = arith.constant 0 : index
    %c0_53 = arith.constant 0 : index
    %43 = vector.load %arg2[%c1_51, %c0_52, %c0_53] : memref<3x96x512xf32, #tpu.memory_space<vmem>>, vector<1x96x512xf32>
    %44 = vector.shape_cast %43 : vector<1x96x512xf32> to vector<96x512xf32>
    %cst_54 = arith.constant dense<0.000000e+00> : vector<63x512xf32>
    %45 = tpu.matmul %42, %44, %cst_54 {dimension_numbers = #tpu.dot_dimension_numbers<[1], [0], [0], [1], [0, 0, 1, 1], [], []>} : vector<63x96xf32>, vector<96x512xf32>, vector<63x512xf32> -> vector<63x512xf32>
    %46 = arith.addf %40, %45 : vector<63x512xf32>
    %c0_55 = arith.constant 0 : index
    %c1_56 = arith.constant 1 : index
    %c0_57 = arith.constant 0 : index
    %47 = vector.load %arg1[%c0_55, %c1_56, %c0_57] : memref<4x64x96xf32, #tpu.memory_space<vmem>>, vector<1x63x96xf32>
    %48 = vector.shape_cast %47 : vector<1x63x96xf32> to vector<63x96xf32>
    %c2_58 = arith.constant 2 : index
    %c0_59 = arith.constant 0 : index
    %c0_60 = arith.constant 0 : index
    %49 = vector.load %arg2[%c2_58, %c0_59, %c0_60] : memref<3x96x512xf32, #tpu.memory_space<vmem>>, vector<1x96x512xf32>
    %50 = vector.shape_cast %49 : vector<1x96x512xf32> to vector<96x512xf32>
    %cst_61 = arith.constant dense<0.000000e+00> : vector<63x512xf32>
    %51 = tpu.matmul %48, %50, %cst_61 {dimension_numbers = #tpu.dot_dimension_numbers<[1], [0], [0], [1], [0, 0, 1, 1], [], []>} : vector<63x96xf32>, vector<96x512xf32>, vector<63x512xf32> -> vector<63x512xf32>
    %52 = arith.addf %46, %51 : vector<63x512xf32>
    %c3_62 = arith.constant 3 : index
    %c0_63 = arith.constant 0 : index
    %c0_64 = arith.constant 0 : index
    %53 = vector.load %arg1[%c3_62, %c0_63, %c0_64] : memref<4x64x96xf32, #tpu.memory_space<vmem>>, vector<1x63x96xf32>
    %54 = vector.shape_cast %53 : vector<1x63x96xf32> to vector<63x96xf32>
    %c0_65 = arith.constant 0 : index
    %c0_66 = arith.constant 0 : index
    %c0_67 = arith.constant 0 : index
    %55 = vector.load %arg2[%c0_65, %c0_66, %c0_67] : memref<3x96x512xf32, #tpu.memory_space<vmem>>, vector<1x96x512xf32>
    %56 = vector.shape_cast %55 : vector<1x96x512xf32> to vector<96x512xf32>
    %cst_68 = arith.constant dense<0.000000e+00> : vector<63x512xf32>
    %57 = tpu.matmul %54, %56, %cst_68 {dimension_numbers = #tpu.dot_dimension_numbers<[1], [0], [0], [1], [0, 0, 1, 1], [], []>} : vector<63x96xf32>, vector<96x512xf32>, vector<63x512xf32> -> vector<63x512xf32>
    %c0_69 = arith.constant 0 : index
    %c1_70 = arith.constant 1 : index
    %c0_71 = arith.constant 0 : index
    %58 = vector.load %arg1[%c0_69, %c1_70, %c0_71] : memref<4x64x96xf32, #tpu.memory_space<vmem>>, vector<1x63x96xf32>
    %59 = vector.shape_cast %58 : vector<1x63x96xf32> to vector<63x96xf32>
    %c1_72 = arith.constant 1 : index
    %c0_73 = arith.constant 0 : index
    %c0_74 = arith.constant 0 : index
    %60 = vector.load %arg2[%c1_72, %c0_73, %c0_74] : memref<3x96x512xf32, #tpu.memory_space<vmem>>, vector<1x96x512xf32>
    %61 = vector.shape_cast %60 : vector<1x96x512xf32> to vector<96x512xf32>
    %cst_75 = arith.constant dense<0.000000e+00> : vector<63x512xf32>
    %62 = tpu.matmul %59, %61, %cst_75 {dimension_numbers = #tpu.dot_dimension_numbers<[1], [0], [0], [1], [0, 0, 1, 1], [], []>} : vector<63x96xf32>, vector<96x512xf32>, vector<63x512xf32> -> vector<63x512xf32>
    %63 = arith.addf %57, %62 : vector<63x512xf32>
    %c1_76 = arith.constant 1 : index
    %c1_77 = arith.constant 1 : index
    %c0_78 = arith.constant 0 : index
    %64 = vector.load %arg1[%c1_76, %c1_77, %c0_78] : memref<4x64x96xf32, #tpu.memory_space<vmem>>, vector<1x63x96xf32>
    %65 = vector.shape_cast %64 : vector<1x63x96xf32> to vector<63x96xf32>
    %c2_79 = arith.constant 2 : index
    %c0_80 = arith.constant 0 : index
    %c0_81 = arith.constant 0 : index
    %66 = vector.load %arg2[%c2_79, %c0_80, %c0_81] : memref<3x96x512xf32, #tpu.memory_space<vmem>>, vector<1x96x512xf32>
    %67 = vector.shape_cast %66 : vector<1x96x512xf32> to vector<96x512xf32>
    %cst_82 = arith.constant dense<0.000000e+00> : vector<63x512xf32>
    %68 = tpu.matmul %65, %67, %cst_82 {dimension_numbers = #tpu.dot_dimension_numbers<[1], [0], [0], [1], [0, 0, 1, 1], [], []>} : vector<63x96xf32>, vector<96x512xf32>, vector<63x512xf32> -> vector<63x512xf32>
    %69 = arith.addf %63, %68 : vector<63x512xf32>
    %70 = vector.extract_strided_slice %18 {offsets = [0, 0], sizes = [64, 256], strides = [1, 1]} : vector<64x512xf32> to vector<64x256xf32>
    %71 = vector.extract_strided_slice %18 {offsets = [0, 256], sizes = [64, 256], strides = [1, 1]} : vector<64x512xf32> to vector<64x256xf32>
    %72 = arith.maximumf %70, %71 : vector<64x256xf32>
    %73 = vector.extract_strided_slice %35 {offsets = [0, 0], sizes = [64, 256], strides = [1, 1]} : vector<64x512xf32> to vector<64x256xf32>
    %74 = vector.extract_strided_slice %35 {offsets = [0, 256], sizes = [64, 256], strides = [1, 1]} : vector<64x512xf32> to vector<64x256xf32>
    %75 = arith.maximumf %73, %74 : vector<64x256xf32>
    %76 = arith.maximumf %72, %75 : vector<64x256xf32>
    %77 = vector.broadcast %0 : vector<1x256xf32> to vector<64x256xf32>
    %78 = arith.addf %76, %77 : vector<64x256xf32>
    %cst_83 = arith.constant 0.000000e+00 : f32
    %79 = vector.broadcast %cst_83 : f32 to vector<64x256xf32>
    %80 = arith.maximumf %78, %79 : vector<64x256xf32>
    %c0_84 = arith.constant 0 : index
    %c0_85 = arith.constant 0 : index
    %81 = vector.load %arg11[%c0_84, %c0_85] : memref<64x256xf32, #tpu.memory_space<vmem>>, vector<64x256xf32>
    tpu.vector_store %arg11[%c0_84, %c0_85], %80 {strides = array<i32>} : memref<64x256xf32, #tpu.memory_space<vmem>>, vector<64x256xf32>,
    %cst_86 = arith.constant 0.000000e+00 : f32
    %82 = vector.broadcast %cst_86 : f32 to vector<1x256xf32>
    %c63 = arith.constant 63 : index
    %c0_87 = arith.constant 0 : index
    %83 = vector.load %arg12[%c63, %c0_87] : memref<64x256xf32, #tpu.memory_space<vmem>>, vector<1x256xf32>
    tpu.vector_store %arg12[%c63, %c0_87], %82 {strides = array<i32>} : memref<64x256xf32, #tpu.memory_space<vmem>>, vector<1x256xf32>,
    %84 = vector.extract_strided_slice %52 {offsets = [0, 0], sizes = [63, 256], strides = [1, 1]} : vector<63x512xf32> to vector<63x256xf32>
    %85 = vector.extract_strided_slice %52 {offsets = [0, 256], sizes = [63, 256], strides = [1, 1]} : vector<63x512xf32> to vector<63x256xf32>
    %86 = arith.maximumf %84, %85 : vector<63x256xf32>
    %87 = vector.extract_strided_slice %69 {offsets = [0, 0], sizes = [63, 256], strides = [1, 1]} : vector<63x512xf32> to vector<63x256xf32>
    %88 = vector.extract_strided_slice %69 {offsets = [0, 256], sizes = [63, 256], strides = [1, 1]} : vector<63x512xf32> to vector<63x256xf32>
    %89 = arith.maximumf %87, %88 : vector<63x256xf32>
    %90 = arith.maximumf %86, %89 : vector<63x256xf32>
    %91 = vector.broadcast %0 : vector<1x256xf32> to vector<63x256xf32>
    %92 = arith.addf %90, %91 : vector<63x256xf32>
    %cst_88 = arith.constant 0.000000e+00 : f32
    %93 = vector.broadcast %cst_88 : f32 to vector<63x256xf32>
    %94 = arith.maximumf %92, %93 : vector<63x256xf32>
    %c0_89 = arith.constant 0 : index
    %c0_90 = arith.constant 0 : index
    %95 = vector.load %arg12[%c0_89, %c0_90] : memref<64x256xf32, #tpu.memory_space<vmem>>, vector<63x256xf32>
    tpu.vector_store %arg12[%c0_89, %c0_90], %94 {strides = array<i32>} : memref<64x256xf32, #tpu.memory_space<vmem>>, vector<63x256xf32>,
    %c0_91 = arith.constant 0 : index
    %c0_92 = arith.constant 0 : index
    %96 = vector.load %arg11[%c0_91, %c0_92] : memref<64x256xf32, #tpu.memory_space<vmem>>, vector<63x256xf32>
    %c0_93 = arith.constant 0 : index
    %c0_94 = arith.constant 0 : index
    %c0_95 = arith.constant 0 : index
    %97 = vector.load %arg4[%c0_93, %c0_94, %c0_95] : memref<3x256x256xf32, #tpu.memory_space<vmem>>, vector<1x256x256xf32>
    %98 = vector.shape_cast %97 : vector<1x256x256xf32> to vector<256x256xf32>
    %cst_96 = arith.constant dense<0.000000e+00> : vector<63x256xf32>
    %99 = tpu.matmul %96, %98, %cst_96 {dimension_numbers = #tpu.dot_dimension_numbers<[1], [0], [0], [1], [0, 0, 1, 1], [], []>} : vector<63x256xf32>, vector<256x256xf32>, vector<63x256xf32> -> vector<63x256xf32>
    %c0_97 = arith.constant 0 : index
    %c0_98 = arith.constant 0 : index
    %100 = vector.load %arg12[%c0_97, %c0_98] : memref<64x256xf32, #tpu.memory_space<vmem>>, vector<63x256xf32>
    %c1_99 = arith.constant 1 : index
    %c0_100 = arith.constant 0 : index
    %c0_101 = arith.constant 0 : index
    %101 = vector.load %arg4[%c1_99, %c0_100, %c0_101] : memref<3x256x256xf32, #tpu.memory_space<vmem>>, vector<1x256x256xf32>
    %102 = vector.shape_cast %101 : vector<1x256x256xf32> to vector<256x256xf32>
    %cst_102 = arith.constant dense<0.000000e+00> : vector<63x256xf32>
    %103 = tpu.matmul %100, %102, %cst_102 {dimension_numbers = #tpu.dot_dimension_numbers<[1], [0], [0], [1], [0, 0, 1, 1], [], []>} : vector<63x256xf32>, vector<256x256xf32>, vector<63x256xf32> -> vector<63x256xf32>
    %104 = arith.addf %99, %103 : vector<63x256xf32>
    %c1_103 = arith.constant 1 : index
    %c0_104 = arith.constant 0 : index
    %105 = vector.load %arg11[%c1_103, %c0_104] : memref<64x256xf32, #tpu.memory_space<vmem>>, vector<63x256xf32>
    %c2_105 = arith.constant 2 : index
    %c0_106 = arith.constant 0 : index
    %c0_107 = arith.constant 0 : index
    %106 = vector.load %arg4[%c2_105, %c0_106, %c0_107] : memref<3x256x256xf32, #tpu.memory_space<vmem>>, vector<1x256x256xf32>
    %107 = vector.shape_cast %106 : vector<1x256x256xf32> to vector<256x256xf32>
    %cst_108 = arith.constant dense<0.000000e+00> : vector<63x256xf32>
    %108 = tpu.matmul %105, %107, %cst_108 {dimension_numbers = #tpu.dot_dimension_numbers<[1], [0], [0], [1], [0, 0, 1, 1], [], []>} : vector<63x256xf32>, vector<256x256xf32>, vector<63x256xf32> -> vector<63x256xf32>
    %109 = arith.addf %104, %108 : vector<63x256xf32>
    %c0_109 = arith.constant 0 : index
    %c0_110 = arith.constant 0 : index
    %110 = vector.load %arg12[%c0_109, %c0_110] : memref<64x256xf32, #tpu.memory_space<vmem>>, vector<63x256xf32>
    %c0_111 = arith.constant 0 : index
    %c0_112 = arith.constant 0 : index
    %c0_113 = arith.constant 0 : index
    %111 = vector.load %arg4[%c0_111, %c0_112, %c0_113] : memref<3x256x256xf32, #tpu.memory_space<vmem>>, vector<1x256x256xf32>
    %112 = vector.shape_cast %111 : vector<1x256x256xf32> to vector<256x256xf32>
    %cst_114 = arith.constant dense<0.000000e+00> : vector<63x256xf32>
    %113 = tpu.matmul %110, %112, %cst_114 {dimension_numbers = #tpu.dot_dimension_numbers<[1], [0], [0], [1], [0, 0, 1, 1], [], []>} : vector<63x256xf32>, vector<256x256xf32>, vector<63x256xf32> -> vector<63x256xf32>
    %c1_115 = arith.constant 1 : index
    %c0_116 = arith.constant 0 : index
    %114 = vector.load %arg11[%c1_115, %c0_116] : memref<64x256xf32, #tpu.memory_space<vmem>>, vector<63x256xf32>
    %c1_117 = arith.constant 1 : index
    %c0_118 = arith.constant 0 : index
    %c0_119 = arith.constant 0 : index
    %115 = vector.load %arg4[%c1_117, %c0_118, %c0_119] : memref<3x256x256xf32, #tpu.memory_space<vmem>>, vector<1x256x256xf32>
    %116 = vector.shape_cast %115 : vector<1x256x256xf32> to vector<256x256xf32>
    %cst_120 = arith.constant dense<0.000000e+00> : vector<63x256xf32>
    %117 = tpu.matmul %114, %116, %cst_120 {dimension_numbers = #tpu.dot_dimension_numbers<[1], [0], [0], [1], [0, 0, 1, 1], [], []>} : vector<63x256xf32>, vector<256x256xf32>, vector<63x256xf32> -> vector<63x256xf32>
    %118 = arith.addf %113, %117 : vector<63x256xf32>
    %c1_121 = arith.constant 1 : index
    %c0_122 = arith.constant 0 : index
    %119 = vector.load %arg12[%c1_121, %c0_122] : memref<64x256xf32, #tpu.memory_space<vmem>>, vector<63x256xf32>
    %c2_123 = arith.constant 2 : index
    %c0_124 = arith.constant 0 : index
    %c0_125 = arith.constant 0 : index
    %120 = vector.load %arg4[%c2_123, %c0_124, %c0_125] : memref<3x256x256xf32, #tpu.memory_space<vmem>>, vector<1x256x256xf32>
    %121 = vector.shape_cast %120 : vector<1x256x256xf32> to vector<256x256xf32>
    %cst_126 = arith.constant dense<0.000000e+00> : vector<63x256xf32>
    %122 = tpu.matmul %119, %121, %cst_126 {dimension_numbers = #tpu.dot_dimension_numbers<[1], [0], [0], [1], [0, 0, 1, 1], [], []>} : vector<63x256xf32>, vector<256x256xf32>, vector<63x256xf32> -> vector<63x256xf32>
    %123 = arith.addf %118, %122 : vector<63x256xf32>
    %124 = vector.extract_strided_slice %109 {offsets = [0, 0], sizes = [63, 128], strides = [1, 1]} : vector<63x256xf32> to vector<63x128xf32>
    %125 = vector.extract_strided_slice %109 {offsets = [0, 128], sizes = [63, 128], strides = [1, 1]} : vector<63x256xf32> to vector<63x128xf32>
    %126 = arith.maximumf %124, %125 : vector<63x128xf32>
    %127 = vector.extract_strided_slice %123 {offsets = [0, 0], sizes = [63, 128], strides = [1, 1]} : vector<63x256xf32> to vector<63x128xf32>
    %128 = vector.extract_strided_slice %123 {offsets = [0, 128], sizes = [63, 128], strides = [1, 1]} : vector<63x256xf32> to vector<63x128xf32>
    %129 = arith.maximumf %127, %128 : vector<63x128xf32>
    %130 = arith.maximumf %126, %129 : vector<63x128xf32>
    %131 = vector.broadcast %1 : vector<1x128xf32> to vector<63x128xf32>
    %132 = arith.addf %130, %131 : vector<63x128xf32>
    %cst_127 = arith.constant 0.000000e+00 : f32
    %133 = vector.broadcast %cst_127 : f32 to vector<63x128xf32>
    %134 = arith.maximumf %132, %133 : vector<63x128xf32>
    %135 = vector.extract_strided_slice %134 {offsets = [0, 0], sizes = [6, 128], strides = [1, 1]} : vector<63x128xf32> to vector<6x128xf32>
    %c0_128 = arith.constant 0 : index
    %c0_129 = arith.constant 0 : index
    %c0_130 = arith.constant 0 : index
    %136 = vector.load %arg13[%c0_128, %c0_129, %c0_130] : memref<8x6x128xf32, #tpu.memory_space<vmem>>, vector<1x6x128xf32>
    %137 = vector.shape_cast %136 : vector<1x6x128xf32> to vector<6x128xf32>
    %138 = vector.shape_cast %135 : vector<6x128xf32> to vector<1x6x128xf32>
    tpu.vector_store %arg13[%c0_128, %c0_129, %c0_130], %138 {strides = array<i32>} : memref<8x6x128xf32, #tpu.memory_space<vmem>>, vector<1x6x128xf32>,
    %139 = vector.extract_strided_slice %134 {offsets = [8, 0], sizes = [6, 128], strides = [1, 1]} : vector<63x128xf32> to vector<6x128xf32>
    %c1_131 = arith.constant 1 : index
    %c0_132 = arith.constant 0 : index
    %c0_133 = arith.constant 0 : index
    %140 = vector.load %arg13[%c1_131, %c0_132, %c0_133] : memref<8x6x128xf32, #tpu.memory_space<vmem>>, vector<1x6x128xf32>
    %141 = vector.shape_cast %140 : vector<1x6x128xf32> to vector<6x128xf32>
    %142 = vector.shape_cast %139 : vector<6x128xf32> to vector<1x6x128xf32>
    tpu.vector_store %arg13[%c1_131, %c0_132, %c0_133], %142 {strides = array<i32>} : memref<8x6x128xf32, #tpu.memory_space<vmem>>, vector<1x6x128xf32>,
    %143 = vector.extract_strided_slice %134 {offsets = [16, 0], sizes = [6, 128], strides = [1, 1]} : vector<63x128xf32> to vector<6x128xf32>
    %c2_134 = arith.constant 2 : index
    %c0_135 = arith.constant 0 : index
    %c0_136 = arith.constant 0 : index
    %144 = vector.load %arg13[%c2_134, %c0_135, %c0_136] : memref<8x6x128xf32, #tpu.memory_space<vmem>>, vector<1x6x128xf32>
    %145 = vector.shape_cast %144 : vector<1x6x128xf32> to vector<6x128xf32>
    %146 = vector.shape_cast %143 : vector<6x128xf32> to vector<1x6x128xf32>
    tpu.vector_store %arg13[%c2_134, %c0_135, %c0_136], %146 {strides = array<i32>} : memref<8x6x128xf32, #tpu.memory_space<vmem>>, vector<1x6x128xf32>,
    %147 = vector.extract_strided_slice %134 {offsets = [24, 0], sizes = [6, 128], strides = [1, 1]} : vector<63x128xf32> to vector<6x128xf32>
    %c3_137 = arith.constant 3 : index
    %c0_138 = arith.constant 0 : index
    %c0_139 = arith.constant 0 : index
    %148 = vector.load %arg13[%c3_137, %c0_138, %c0_139] : memref<8x6x128xf32, #tpu.memory_space<vmem>>, vector<1x6x128xf32>
    %149 = vector.shape_cast %148 : vector<1x6x128xf32> to vector<6x128xf32>
    %150 = vector.shape_cast %147 : vector<6x128xf32> to vector<1x6x128xf32>
    tpu.vector_store %arg13[%c3_137, %c0_138, %c0_139], %150 {strides = array<i32>} : memref<8x6x128xf32, #tpu.memory_space<vmem>>, vector<1x6x128xf32>,
    %151 = vector.extract_strided_slice %134 {offsets = [32, 0], sizes = [6, 128], strides = [1, 1]} : vector<63x128xf32> to vector<6x128xf32>
    %c4 = arith.constant 4 : index
    %c0_140 = arith.constant 0 : index
    %c0_141 = arith.constant 0 : index
    %152 = vector.load %arg13[%c4, %c0_140, %c0_141] : memref<8x6x128xf32, #tpu.memory_space<vmem>>, vector<1x6x128xf32>
    %153 = vector.shape_cast %152 : vector<1x6x128xf32> to vector<6x128xf32>
    %154 = vector.shape_cast %151 : vector<6x128xf32> to vector<1x6x128xf32>
    tpu.vector_store %arg13[%c4, %c0_140, %c0_141], %154 {strides = array<i32>} : memref<8x6x128xf32, #tpu.memory_space<vmem>>, vector<1x6x128xf32>,
    %155 = vector.extract_strided_slice %134 {offsets = [40, 0], sizes = [6, 128], strides = [1, 1]} : vector<63x128xf32> to vector<6x128xf32>
    %c5 = arith.constant 5 : index
    %c0_142 = arith.constant 0 : index
    %c0_143 = arith.constant 0 : index
    %156 = vector.load %arg13[%c5, %c0_142, %c0_143] : memref<8x6x128xf32, #tpu.memory_space<vmem>>, vector<1x6x128xf32>
    %157 = vector.shape_cast %156 : vector<1x6x128xf32> to vector<6x128xf32>
    %158 = vector.shape_cast %155 : vector<6x128xf32> to vector<1x6x128xf32>
    tpu.vector_store %arg13[%c5, %c0_142, %c0_143], %158 {strides = array<i32>} : memref<8x6x128xf32, #tpu.memory_space<vmem>>, vector<1x6x128xf32>,
    %159 = vector.extract_strided_slice %134 {offsets = [48, 0], sizes = [6, 128], strides = [1, 1]} : vector<63x128xf32> to vector<6x128xf32>
    %c6 = arith.constant 6 : index
    %c0_144 = arith.constant 0 : index
    %c0_145 = arith.constant 0 : index
    %160 = vector.load %arg13[%c6, %c0_144, %c0_145] : memref<8x6x128xf32, #tpu.memory_space<vmem>>, vector<1x6x128xf32>
    %161 = vector.shape_cast %160 : vector<1x6x128xf32> to vector<6x128xf32>
    %162 = vector.shape_cast %159 : vector<6x128xf32> to vector<1x6x128xf32>
    tpu.vector_store %arg13[%c6, %c0_144, %c0_145], %162 {strides = array<i32>} : memref<8x6x128xf32, #tpu.memory_space<vmem>>, vector<1x6x128xf32>,
    %163 = vector.extract_strided_slice %134 {offsets = [56, 0], sizes = [6, 128], strides = [1, 1]} : vector<63x128xf32> to vector<6x128xf32>
    %c7 = arith.constant 7 : index
    %c0_146 = arith.constant 0 : index
    %c0_147 = arith.constant 0 : index
    %164 = vector.load %arg13[%c7, %c0_146, %c0_147] : memref<8x6x128xf32, #tpu.memory_space<vmem>>, vector<1x6x128xf32>
    %165 = vector.shape_cast %164 : vector<1x6x128xf32> to vector<6x128xf32>
    %166 = vector.shape_cast %163 : vector<6x128xf32> to vector<1x6x128xf32>
    tpu.vector_store %arg13[%c7, %c0_146, %c0_147], %166 {strides = array<i32>} : memref<8x6x128xf32, #tpu.memory_space<vmem>>, vector<1x6x128xf32>,
    %c0_148 = arith.constant 0 : index
    %c0_149 = arith.constant 0 : index
    %167 = vector.load %arg7[%c0_148, %c0_149] : memref<1x100xf32, #tpu.memory_space<vmem>>, vector<1x100xf32>
    %c0_150 = arith.constant 0 : index
    %c0_151 = arith.constant 0 : index
    %c0_152 = arith.constant 0 : index
    %168 = vector.load %arg13[%c0_150, %c0_151, %c0_152] : memref<8x6x128xf32, #tpu.memory_space<vmem>>, vector<8x1x128xf32>
    %169 = vector.shape_cast %168 : vector<8x1x128xf32> to vector<8x128xf32>
    %c0_153 = arith.constant 0 : index
    %c0_154 = arith.constant 0 : index
    %170 = vector.load %arg6[%c0_153, %c0_154] : memref<768x100xf32, #tpu.memory_space<vmem>>, vector<128x100xf32>
    %cst_155 = arith.constant dense<0.000000e+00> : vector<8x100xf32>
    %171 = tpu.matmul %169, %170, %cst_155 {dimension_numbers = #tpu.dot_dimension_numbers<[1], [0], [0], [1], [0, 0, 1, 1], [], []>} : vector<8x128xf32>, vector<128x100xf32>, vector<8x100xf32> -> vector<8x100xf32>
    %172 = vector.broadcast %167 : vector<1x100xf32> to vector<8x100xf32>
    %173 = arith.addf %172, %171 : vector<8x100xf32>
    %c0_156 = arith.constant 0 : index
    %c1_157 = arith.constant 1 : index
    %c0_158 = arith.constant 0 : index
    %174 = vector.load %arg13[%c0_156, %c1_157, %c0_158] : memref<8x6x128xf32, #tpu.memory_space<vmem>>, vector<8x1x128xf32>
    %175 = vector.shape_cast %174 : vector<8x1x128xf32> to vector<8x128xf32>
    %c128 = arith.constant 128 : index
    %c0_159 = arith.constant 0 : index
    %176 = vector.load %arg6[%c128, %c0_159] : memref<768x100xf32, #tpu.memory_space<vmem>>, vector<128x100xf32>
    %cst_160 = arith.constant dense<0.000000e+00> : vector<8x100xf32>
    %177 = tpu.matmul %175, %176, %cst_160 {dimension_numbers = #tpu.dot_dimension_numbers<[1], [0], [0], [1], [0, 0, 1, 1], [], []>} : vector<8x128xf32>, vector<128x100xf32>, vector<8x100xf32> -> vector<8x100xf32>
    %178 = arith.addf %173, %177 : vector<8x100xf32>
    %c0_161 = arith.constant 0 : index
    %c2_162 = arith.constant 2 : index
    %c0_163 = arith.constant 0 : index
    %179 = vector.load %arg13[%c0_161, %c2_162, %c0_163] : memref<8x6x128xf32, #tpu.memory_space<vmem>>, vector<8x1x128xf32>
    %180 = vector.shape_cast %179 : vector<8x1x128xf32> to vector<8x128xf32>
    %c256 = arith.constant 256 : index
    %c0_164 = arith.constant 0 : index
    %181 = vector.load %arg6[%c256, %c0_164] : memref<768x100xf32, #tpu.memory_space<vmem>>, vector<128x100xf32>
    %cst_165 = arith.constant dense<0.000000e+00> : vector<8x100xf32>
    %182 = tpu.matmul %180, %181, %cst_165 {dimension_numbers = #tpu.dot_dimension_numbers<[1], [0], [0], [1], [0, 0, 1, 1], [], []>} : vector<8x128xf32>, vector<128x100xf32>, vector<8x100xf32> -> vector<8x100xf32>
    %183 = arith.addf %178, %182 : vector<8x100xf32>
    %c0_166 = arith.constant 0 : index
    %c3_167 = arith.constant 3 : index
    %c0_168 = arith.constant 0 : index
    %184 = vector.load %arg13[%c0_166, %c3_167, %c0_168] : memref<8x6x128xf32, #tpu.memory_space<vmem>>, vector<8x1x128xf32>
    %185 = vector.shape_cast %184 : vector<8x1x128xf32> to vector<8x128xf32>
    %c384 = arith.constant 384 : index
    %c0_169 = arith.constant 0 : index
    %186 = vector.load %arg6[%c384, %c0_169] : memref<768x100xf32, #tpu.memory_space<vmem>>, vector<128x100xf32>
    %cst_170 = arith.constant dense<0.000000e+00> : vector<8x100xf32>
    %187 = tpu.matmul %185, %186, %cst_170 {dimension_numbers = #tpu.dot_dimension_numbers<[1], [0], [0], [1], [0, 0, 1, 1], [], []>} : vector<8x128xf32>, vector<128x100xf32>, vector<8x100xf32> -> vector<8x100xf32>
    %188 = arith.addf %183, %187 : vector<8x100xf32>
    %c0_171 = arith.constant 0 : index
    %c4_172 = arith.constant 4 : index
    %c0_173 = arith.constant 0 : index
    %189 = vector.load %arg13[%c0_171, %c4_172, %c0_173] : memref<8x6x128xf32, #tpu.memory_space<vmem>>, vector<8x1x128xf32>
    %190 = vector.shape_cast %189 : vector<8x1x128xf32> to vector<8x128xf32>
    %c512 = arith.constant 512 : index
    %c0_174 = arith.constant 0 : index
    %191 = vector.load %arg6[%c512, %c0_174] : memref<768x100xf32, #tpu.memory_space<vmem>>, vector<128x100xf32>
    %cst_175 = arith.constant dense<0.000000e+00> : vector<8x100xf32>
    %192 = tpu.matmul %190, %191, %cst_175 {dimension_numbers = #tpu.dot_dimension_numbers<[1], [0], [0], [1], [0, 0, 1, 1], [], []>} : vector<8x128xf32>, vector<128x100xf32>, vector<8x100xf32> -> vector<8x100xf32>
    %193 = arith.addf %188, %192 : vector<8x100xf32>
    %c0_176 = arith.constant 0 : index
    %c5_177 = arith.constant 5 : index
    %c0_178 = arith.constant 0 : index
    %194 = vector.load %arg13[%c0_176, %c5_177, %c0_178] : memref<8x6x128xf32, #tpu.memory_space<vmem>>, vector<8x1x128xf32>
    %195 = vector.shape_cast %194 : vector<8x1x128xf32> to vector<8x128xf32>
    %c640 = arith.constant 640 : index
    %c0_179 = arith.constant 0 : index
    %196 = vector.load %arg6[%c640, %c0_179] : memref<768x100xf32, #tpu.memory_space<vmem>>, vector<128x100xf32>
    %cst_180 = arith.constant dense<0.000000e+00> : vector<8x100xf32>
    %197 = tpu.matmul %195, %196, %cst_180 {dimension_numbers = #tpu.dot_dimension_numbers<[1], [0], [0], [1], [0, 0, 1, 1], [], []>} : vector<8x128xf32>, vector<128x100xf32>, vector<8x100xf32> -> vector<8x100xf32>
    %198 = arith.addf %193, %197 : vector<8x100xf32>
    %cst_181 = arith.constant 0.000000e+00 : f32
    %199 = vector.broadcast %cst_181 : f32 to vector<8x100xf32>
    %200 = arith.maximumf %198, %199 : vector<8x100xf32>
    %c0_182 = arith.constant 0 : index
    %c0_183 = arith.constant 0 : index
    %201 = vector.load %arg8[%c0_182, %c0_183] : memref<100x10xf32, #tpu.memory_space<vmem>>, vector<100x10xf32>
    %cst_184 = arith.constant dense<0.000000e+00> : vector<8x10xf32>
    %202 = tpu.matmul %200, %201, %cst_184 {dimension_numbers = #tpu.dot_dimension_numbers<[1], [0], [0], [1], [0, 0, 1, 1], [], []>} : vector<8x100xf32>, vector<100x10xf32>, vector<8x10xf32> -> vector<8x10xf32>
    %c0_185 = arith.constant 0 : index
    %c0_186 = arith.constant 0 : index
    %203 = vector.load %arg9[%c0_185, %c0_186] : memref<1x10xf32, #tpu.memory_space<vmem>>, vector<1x10xf32>
    %204 = vector.broadcast %203 : vector<1x10xf32> to vector<8x10xf32>
    %205 = arith.addf %202, %204 : vector<8x10xf32>
    %c0_187 = arith.constant 0 : index
    %c0_188 = arith.constant 0 : index
    %206 = vector.load %arg10[%c0_187, %c0_188] : memref<8x10xf32, #tpu.memory_space<vmem>>, vector<8x10xf32>
    tpu.vector_store %arg10[%c0_187, %c0_188], %205 {strides = array<i32>} : memref<8x10xf32, #tpu.memory_space<vmem>>, vector<8x10xf32>,
    return
  }
  func.func @transform_0(%arg0: i32) -> (i32, i32, i32) {
    %c0_i32 = arith.constant 0 : i32
    %c0_i32_0 = arith.constant 0 : i32
    %c0_i32_1 = arith.constant 0 : i32
    return %c0_i32, %arg0, %c0_i32_0 : i32, i32, i32
  }
  func.func @transform_1(%arg0: i32) -> (i32, i32, i32) {
    %c0_i32 = arith.constant 0 : i32
    %c0_i32_0 = arith.constant 0 : i32
    %c0_i32_1 = arith.constant 0 : i32
    %c0_i32_2 = arith.constant 0 : i32
    return %c0_i32, %c0_i32_0, %c0_i32_1 : i32, i32, i32
  }
  func.func @transform_2(%arg0: i32) -> (i32, i32) {
    %c0_i32 = arith.constant 0 : i32
    %c0_i32_0 = arith.constant 0 : i32
    %c0_i32_1 = arith.constant 0 : i32
    return %c0_i32, %c0_i32_0 : i32, i32
  }
  func.func @transform_3(%arg0: i32) -> (i32, i32, i32) {
    %c0_i32 = arith.constant 0 : i32
    %c0_i32_0 = arith.constant 0 : i32
    %c0_i32_1 = arith.constant 0 : i32
    %c0_i32_2 = arith.constant 0 : i32
    return %c0_i32, %c0_i32_0, %c0_i32_1 : i32, i32, i32
  }
  func.func @transform_4(%arg0: i32) -> (i32, i32) {
    %c0_i32 = arith.constant 0 : i32
    %c0_i32_0 = arith.constant 0 : i32
    %c0_i32_1 = arith.constant 0 : i32
    return %c0_i32, %c0_i32_0 : i32, i32
  }
  func.func @transform_5(%arg0: i32) -> (i32, i32) {
    %c0_i32 = arith.constant 0 : i32
    %c0_i32_0 = arith.constant 0 : i32
    %c0_i32_1 = arith.constant 0 : i32
    return %c0_i32, %c0_i32_0 : i32, i32
  }
  func.func @transform_6(%arg0: i32) -> (i32, i32) {
    %c0_i32 = arith.constant 0 : i32
    %c0_i32_0 = arith.constant 0 : i32
    %c0_i32_1 = arith.constant 0 : i32
    return %c0_i32, %c0_i32_0 : i32, i32
  }
  func.func @transform_7(%arg0: i32) -> (i32, i32) {
    %c0_i32 = arith.constant 0 : i32
    %c0_i32_0 = arith.constant 0 : i32
    %c0_i32_1 = arith.constant 0 : i32
    return %c0_i32, %c0_i32_0 : i32, i32
  }
  func.func @transform_8(%arg0: i32) -> (i32, i32) {
    %c0_i32 = arith.constant 0 : i32
    %c0_i32_0 = arith.constant 0 : i32
    %c0_i32_1 = arith.constant 0 : i32
    return %c0_i32, %c0_i32_0 : i32, i32
  }
  func.func @transform_9(%arg0: i32) -> (i32, i32) {
    %c0_i32 = arith.constant 0 : i32
    %c0_i32_0 = arith.constant 0 : i32
    return %arg0, %c0_i32 : i32, i32
  }
}

</mosaic_0001>

<llo_original>
// kernel: example_cnn_forward.1
$region0: #{example_cnn_forward.1}
  #allocation0 [shape = 'u32[]', space=smem, size = 0x4, offset = 0x4, fixed_abs, tag = 'smem constant byte address 0x4 - core index']
  #allocation1 [shape = 'u32[144,128]{1,0:T(1,128)}', space=vmem, size = 0x12000, scoped, tag = 'internal scratch']
  #allocation2 [shape = 'f32[64,256]{1,0:T(8,128)}', space=vmem, size = 0x10000, scoped, tag = 'scratch operand']
  #allocation3 [shape = 'f32[64,256]{1,0:T(8,128)}', space=vmem, size = 0x10000, scoped, tag = 'scratch operand']
  #allocation4 [shape = 'f32[8,6,128]{2,1,0:T(8,128)}', space=vmem, size = 0x8000, scoped, tag = 'scratch operand']
  %s0 = inlined_call_operand.vmem [shape: f32[4,128,96], index: 0, kind: input, shape index: {}]
  %s1 = inlined_call_operand.vmem [shape: f32[3,96,512], index: 1, kind: input, shape index: {}]
  %s2 = inlined_call_operand.vmem [shape: f32[1,256], index: 2, kind: input, shape index: {}]
  %s3 = inlined_call_operand.vmem [shape: f32[3,256,256], index: 3, kind: input, shape index: {}]
  %s4 = inlined_call_operand.vmem [shape: f32[1,128], index: 4, kind: input, shape index: {}]
  %s5 = inlined_call_operand.vmem [shape: f32[768,100], index: 5, kind: input, shape index: {}]
  %s6 = inlined_call_operand.vmem [shape: f32[1,100], index: 6, kind: input, shape index: {}]
  %s7 = inlined_call_operand.vmem [shape: f32[100,10], index: 7, kind: input, shape index: {}]
  %s8 = inlined_call_operand.vmem [shape: f32[1,10], index: 8, kind: input, shape index: {}]
  %s9 = inlined_call_operand.hbm [shape: f32[16,10], index: 9, kind: output, shape index: {}]
  %s10 = sld [smem:[#allocation0]]
  $region107: #{example_cnn_forward.1} parent=0
    _
  %s12 = ssub.s32 1, %s10
  %s13 = scalar_select 0, %s12, %s10
  $region1: #{example_cnn_forward.1} parent=0
    #allocation5 [shape = 'u8[262144]{0}', space=vmem, size = 0x40000, scoped, tag = 'input window, operand 0']
    #allocation6 [shape = 'u8[8192]{0}', space=vmem, size = 0x2000, scoped, tag = 'output window, operand 0']
    #allocation7 [shape = 's32[2]{0}', space=sflag, size = 0x8, scoped, tag = 'scoped memory for example_cnn_forward.1']
    %14 = vsyncpa [#allocation7], 0
    %s15 = scalar_lea.sflag [#allocation7], 1
    %16 = vsyncpa %s15, 0
    loop: start=0, step=1, limit=4
    $region2: #{example_cnn_forward.1} parent=1 // loop_pre_header
      _
    $region3: #{example_cnn_forward.1} parent=1 // loop_header
      %s18 = sphi 0, %s22
      %p19 = scmp.ge.s32.totalorder %s18, 4
      %s28 = sphi 0, %s30
      %s31 = sphi 0, %s28
      %s32 = sphi 0, %s31
      %s48 = sphi 0, %s32
      %s52 = sphi 0, %s52
      %s54 = sphi 0, %s52
      %s55 = sphi 0, %s54
      %s69 = sphi 0, %s55
      %s73 = sphi 0, %s73
      %s75 = sphi 0, %s73
      %s76 = sphi 0, %s75
      %s90 = sphi 0, %s76
      %s94 = sphi 0, %s94
      %s96 = sphi 0, %s94
      %s97 = sphi 0, %s96
      %s111 = sphi 0, %s97
      %s115 = sphi 0, %s115
      %s117 = sphi 0, %s115
      %s118 = sphi 0, %s117
      %s132 = sphi 0, %s118
      %s136 = sphi 0, %s136
      %s138 = sphi 0, %s136
      %s139 = sphi 0, %s138
      %s153 = sphi 0, %s139
      %s157 = sphi 0, %s157
      %s159 = sphi 0, %s157
      %s160 = sphi 0, %s159
      %s174 = sphi 0, %s160
      %s178 = sphi 0, %s178
      %s180 = sphi 0, %s178
      %s181 = sphi 0, %s180
      %s195 = sphi 0, %s181
      %s199 = sphi 0, %s199
      %s201 = sphi 0, %s199
      %s202 = sphi 0, %s201
      %s216 = sphi 0, %s202
      %s222 = sphi 0, %s224
      %s225 = sphi 0, %s222
      %s226 = sphi 0, %s225
      %s242 = sphi 0, %s226
    $region4: #{example_cnn_forward.1} parent=1 // loop_header_branch
      %21 = sbr.rel (%p19) target = $region8
    $region5: #{example_cnn_forward.1} parent=1 // loop_body
      %s23 = ssub.s32 %s18, 1
      %s24 = ssub.s32 %s18, 2
      %s25 = sadd.s32 %s18, 1
      %s26 = ssub.s32 %s18, %s25
      %p27 = scmp.eq.s32.totalorder %s26, 0
      %s29 = sadd.s32 %s28, 1
      %s30 = scalar_select %p27, %s28, %s29
      %p33 = pneg %p27
      %p34 = scmp.eq.s32.totalorder %s18, 1
      %p35 = por %p33, %p34
      %p36 = scmp.ne.s32.totalorder %s28, %s31
      %p37 = scmp.eq.s32.totalorder %s18, 0
      %p38 = por %p36, %p37
      %p39 = scmp.ne.s32.totalorder %s28, %s31
      %p40 = scmp.eq.s32.totalorder %s23, 1
      %p41 = por %p39, %p40
      %p42 = scmp.ne.s32.totalorder %s31, %s32
      %p43 = scmp.eq.s32.totalorder %s23, 0
      %p44 = por %p42, %p43
      %p45 = scmp.ne.s32.totalorder %s31, %s32
      %p46 = scmp.eq.s32.totalorder %s24, 1
      %p47 = por %p45, %p46
      %p49 = scmp.ne.s32.totalorder %s32, %s48
      %p50 = scmp.eq.s32.totalorder %s24, 0
      %p51 = por %p49, %p50
      %s53 = sadd.s32 %s52, 1
      %p56 = scmp.eq.s32.totalorder %s18, 1
      %p57 = scmp.ne.s32.totalorder %s52, %s54
      %p58 = scmp.eq.s32.totalorder %s18, 0
      %p59 = por %p57, %p58
      %p60 = scmp.ne.s32.totalorder %s52, %s54
      %p61 = scmp.eq.s32.totalorder %s23, 1
      %p62 = por %p60, %p61
      %p63 = scmp.ne.s32.totalorder %s54, %s55
      %p64 = scmp.eq.s32.totalorder %s23, 0
      %p65 = por %p63, %p64
      %p66 = scmp.ne.s32.totalorder %s54, %s55
      %p67 = scmp.eq.s32.totalorder %s24, 1
      %p68 = por %p66, %p67
      %p70 = scmp.ne.s32.totalorder %s55, %s69
      %p71 = scmp.eq.s32.totalorder %s24, 0
      %p72 = por %p70, %p71
      %s74 = sadd.s32 %s73, 1
      %p77 = scmp.eq.s32.totalorder %s18, 1
      %p78 = scmp.ne.s32.totalorder %s73, %s75
      %p79 = scmp.eq.s32.totalorder %s18, 0
      %p80 = por %p78, %p79
      %p81 = scmp.ne.s32.totalorder %s73, %s75
      %p82 = scmp.eq.s32.totalorder %s23, 1
      %p83 = por %p81, %p82
      %p84 = scmp.ne.s32.totalorder %s75, %s76
      %p85 = scmp.eq.s32.totalorder %s23, 0
      %p86 = por %p84, %p85
      %p87 = scmp.ne.s32.totalorder %s75, %s76
      %p88 = scmp.eq.s32.totalorder %s24, 1
      %p89 = por %p87, %p88
      %p91 = scmp.ne.s32.totalorder %s76, %s90
      %p92 = scmp.eq.s32.totalorder %s24, 0
      %p93 = por %p91, %p92
      %s95 = sadd.s32 %s94, 1
      %p98 = scmp.eq.s32.totalorder %s18, 1
      %p99 = scmp.ne.s32.totalorder %s94, %s96
      %p100 = scmp.eq.s32.totalorder %s18, 0
      %p101 = por %p99, %p100
      %p102 = scmp.ne.s32.totalorder %s94, %s96
      %p103 = scmp.eq.s32.totalorder %s23, 1
      %p104 = por %p102, %p103
      %p105 = scmp.ne.s32.totalorder %s96, %s97
      %p106 = scmp.eq.s32.totalorder %s23, 0
      %p107 = por %p105, %p106
      %p108 = scmp.ne.s32.totalorder %s96, %s97
      %p109 = scmp.eq.s32.totalorder %s24, 1
      %p110 = por %p108, %p109
      %p112 = scmp.ne.s32.totalorder %s97, %s111
      %p113 = scmp.eq.s32.totalorder %s24, 0
      %p114 = por %p112, %p113
      %s116 = sadd.s32 %s115, 1
      %p119 = scmp.eq.s32.totalorder %s18, 1
      %p120 = scmp.ne.s32.totalorder %s115, %s117
      %p121 = scmp.eq.s32.totalorder %s18, 0
      %p122 = por %p120, %p121
      %p123 = scmp.ne.s32.totalorder %s115, %s117
      %p124 = scmp.eq.s32.totalorder %s23, 1
      %p125 = por %p123, %p124
      %p126 = scmp.ne.s32.totalorder %s117, %s118
      %p127 = scmp.eq.s32.totalorder %s23, 0
      %p128 = por %p126, %p127
      %p129 = scmp.ne.s32.totalorder %s117, %s118
      %p130 = scmp.eq.s32.totalorder %s24, 1
      %p131 = por %p129, %p130
      %p133 = scmp.ne.s32.totalorder %s118, %s132
      %p134 = scmp.eq.s32.totalorder %s24, 0
      %p135 = por %p133, %p134
      %s137 = sadd.s32 %s136, 1
      %p140 = scmp.eq.s32.totalorder %s18, 1
      %p141 = scmp.ne.s32.totalorder %s136, %s138
      %p142 = scmp.eq.s32.totalorder %s18, 0
      %p143 = por %p141, %p142
      %p144 = scmp.ne.s32.totalorder %s136, %s138
      %p145 = scmp.eq.s32.totalorder %s23, 1
      %p146 = por %p144, %p145
      %p147 = scmp.ne.s32.totalorder %s138, %s139
      %p148 = scmp.eq.s32.totalorder %s23, 0
      %p149 = por %p147, %p148
      %p150 = scmp.ne.s32.totalorder %s138, %s139
      %p151 = scmp.eq.s32.totalorder %s24, 1
      %p152 = por %p150, %p151
      %p154 = scmp.ne.s32.totalorder %s139, %s153
      %p155 = scmp.eq.s32.totalorder %s24, 0
      %p156 = por %p154, %p155
      %s158 = sadd.s32 %s157, 1
      %p161 = scmp.eq.s32.totalorder %s18, 1
      %p162 = scmp.ne.s32.totalorder %s157, %s159
      %p163 = scmp.eq.s32.totalorder %s18, 0
      %p164 = por %p162, %p163
      %p165 = scmp.ne.s32.totalorder %s157, %s159
      %p166 = scmp.eq.s32.totalorder %s23, 1
      %p167 = por %p165, %p166
      %p168 = scmp.ne.s32.totalorder %s159, %s160
      %p169 = scmp.eq.s32.totalorder %s23, 0
      %p170 = por %p168, %p169
      %p171 = scmp.ne.s32.totalorder %s159, %s160
      %p172 = scmp.eq.s32.totalorder %s24, 1
      %p173 = por %p171, %p172
      %p175 = scmp.ne.s32.totalorder %s160, %s174
      %p176 = scmp.eq.s32.totalorder %s24, 0
      %p177 = por %p175, %p176
      %s179 = sadd.s32 %s178, 1
      %p182 = scmp.eq.s32.totalorder %s18, 1
      %p183 = scmp.ne.s32.totalorder %s178, %s180
      %p184 = scmp.eq.s32.totalorder %s18, 0
      %p185 = por %p183, %p184
      %p186 = scmp.ne.s32.totalorder %s178, %s180
      %p187 = scmp.eq.s32.totalorder %s23, 1
      %p188 = por %p186, %p187
      %p189 = scmp.ne.s32.totalorder %s180, %s181
      %p190 = scmp.eq.s32.totalorder %s23, 0
      %p191 = por %p189, %p190
      %p192 = scmp.ne.s32.totalorder %s180, %s181
      %p193 = scmp.eq.s32.totalorder %s24, 1
      %p194 = por %p192, %p193
      %p196 = scmp.ne.s32.totalorder %s181, %s195
      %p197 = scmp.eq.s32.totalorder %s24, 0
      %p198 = por %p196, %p197
      %s200 = sadd.s32 %s199, 1
      %p203 = scmp.eq.s32.totalorder %s18, 1
      %p204 = scmp.ne.s32.totalorder %s199, %s201
      %p205 = scmp.eq.s32.totalorder %s18, 0
      %p206 = por %p204, %p205
      %p207 = scmp.ne.s32.totalorder %s199, %s201
      %p208 = scmp.eq.s32.totalorder %s23, 1
      %p209 = por %p207, %p208
      %p210 = scmp.ne.s32.totalorder %s201, %s202
      %p211 = scmp.eq.s32.totalorder %s23, 0
      %p212 = por %p210, %p211
      %p213 = scmp.ne.s32.totalorder %s201, %s202
      %p214 = scmp.eq.s32.totalorder %s24, 1
      %p215 = por %p213, %p214
      %p217 = scmp.ne.s32.totalorder %s202, %s216
      %p218 = scmp.eq.s32.totalorder %s24, 0
      %p219 = por %p217, %p218
      %s220 = ssub.s32 %s18, %s25
      %p221 = scmp.eq.s32.totalorder %s220, 0
      %s223 = sadd.s32 %s222, 1
      %s224 = scalar_select %p221, %s222, %s223
      %p227 = pneg %p221
      %p228 = scmp.eq.s32.totalorder %s18, 1
      %p229 = por %p227, %p228
      %p230 = scmp.ne.s32.totalorder %s222, %s225
      %p231 = scmp.eq.s32.totalorder %s18, 0
      %p232 = por %p230, %p231
      %p233 = scmp.ne.s32.totalorder %s222, %s225
      %p234 = scmp.eq.s32.totalorder %s23, 1
      %p235 = por %p233, %p234
      %p236 = scmp.ne.s32.totalorder %s225, %s226
      %p237 = scmp.eq.s32.totalorder %s23, 0
      %p238 = por %p236, %p237
      %p239 = scmp.ne.s32.totalorder %s225, %s226
      %p240 = scmp.eq.s32.totalorder %s24, 1
      %p241 = por %p239, %p240
      %p243 = scmp.ne.s32.totalorder %s226, %s242
      %p244 = scmp.eq.s32.totalorder %s24, 0
      %p245 = por %p243, %p244
      %p246 = scmp.le.s32.totalorder 1, %s18
      %p247 = scmp.lt.s32.totalorder %s18, 3
      %p248 = pnand %p246, %p247
      %p249 = pneg %p248
      // Predicated region
      $region9: #{example_cnn_forward.1} parent=5 // pred_check
        _
      $region10: #{example_cnn_forward.1} parent=5 // pred_check_branch
        %251 = sbr.rel (%p248) target = $region12
      $region11: #{example_cnn_forward.1} parent=5 // pred_region
        %s252 = ssub.s32 %s18, 1
        // Predicated region
        $region13: #{example_cnn_forward.1} parent=11 // pred_check
          %p253 = pneg %p65
        $region14: #{example_cnn_forward.1} parent=11 // pred_check_branch
          %255 = sbr.rel (%p253) target = $region16
        $region15: #{example_cnn_forward.1} parent=11 // pred_region
          _
        $region16: #{example_cnn_forward.1} parent=11 // pred_fallthru
          _
        // Predicated region
        $region17: #{example_cnn_forward.1} parent=11 // pred_check
          %p256 = pneg %p86
        $region18: #{example_cnn_forward.1} parent=11 // pred_check_branch
          %258 = sbr.rel (%p256) target = $region20
        $region19: #{example_cnn_forward.1} parent=11 // pred_region
          _
        $region20: #{example_cnn_forward.1} parent=11 // pred_fallthru
          _
        // Predicated region
        $region21: #{example_cnn_forward.1} parent=11 // pred_check
          %p259 = pneg %p107
        $region22: #{example_cnn_forward.1} parent=11 // pred_check_branch
          %261 = sbr.rel (%p259) target = $region24
        $region23: #{example_cnn_forward.1} parent=11 // pred_region
          _
        $region24: #{example_cnn_forward.1} parent=11 // pred_fallthru
          _
        // Predicated region
        $region25: #{example_cnn_forward.1} parent=11 // pred_check
          %p262 = pneg %p128
        $region26: #{example_cnn_forward.1} parent=11 // pred_check_branch
          %264 = sbr.rel (%p262) target = $region28
        $region27: #{example_cnn_forward.1} parent=11 // pred_region
          _
        $region28: #{example_cnn_forward.1} parent=11 // pred_fallthru
          _
        // Predicated region
        $region29: #{example_cnn_forward.1} parent=11 // pred_check
          %p265 = pneg %p149
        $region30: #{example_cnn_forward.1} parent=11 // pred_check_branch
          %267 = sbr.rel (%p265) target = $region32
        $region31: #{example_cnn_forward.1} parent=11 // pred_region
          _
        $region32: #{example_cnn_forward.1} parent=11 // pred_fallthru
          _
        // Predicated region
        $region33: #{example_cnn_forward.1} parent=11 // pred_check
          %p268 = pneg %p170
        $region34: #{example_cnn_forward.1} parent=11 // pred_check_branch
          %270 = sbr.rel (%p268) target = $region36
        $region35: #{example_cnn_forward.1} parent=11 // pred_region
          _
        $region36: #{example_cnn_forward.1} parent=11 // pred_fallthru
          _
        // Predicated region
        $region37: #{example_cnn_forward.1} parent=11 // pred_check
          %p271 = pneg %p191
        $region38: #{example_cnn_forward.1} parent=11 // pred_check_branch
          %273 = sbr.rel (%p271) target = $region40
        $region39: #{example_cnn_forward.1} parent=11 // pred_region
          _
        $region40: #{example_cnn_forward.1} parent=11 // pred_fallthru
          _
        // Predicated region
        $region41: #{example_cnn_forward.1} parent=11 // pred_check
          %p274 = pneg %p212
        $region42: #{example_cnn_forward.1} parent=11 // pred_check_branch
          %276 = sbr.rel (%p274) target = $region44
        $region43: #{example_cnn_forward.1} parent=11 // pred_region
          _
        $region44: #{example_cnn_forward.1} parent=11 // pred_fallthru
          _
      $region12: #{example_cnn_forward.1} parent=5 // pred_fallthru
        _
      %p277 = scmp.lt.s32.totalorder %s18, 2
      // Predicated region
      $region45: #{example_cnn_forward.1} parent=5 // pred_check
        %p278 = pneg %p277
      $region46: #{example_cnn_forward.1} parent=5 // pred_check_branch
        %280 = sbr.rel (%p278) target = $region48
      $region47: #{example_cnn_forward.1} parent=5 // pred_region
        // Predicated region
        $region49: #{example_cnn_forward.1} parent=47 // pred_check
          %p281 = pneg %p38
        $region50: #{example_cnn_forward.1} parent=47 // pred_check_branch
          %283 = sbr.rel (%p281) target = $region52
        $region51: #{example_cnn_forward.1} parent=47 // pred_region
          %s284 = sand.u32 %s28, 1
          %s285 = sand.u32 %s28, 1
          %s286 = smul.addr %s285, 256
          %s287 = scalar_lea.vmem [#allocation5], %s286
          %s288 = smul.u32 8, %s18
          %s289 = smul.addr %s288, 8
          %s290 = scalar_lea.vmem %s0, %s289
          // Predicated region
          $region53: #{example_cnn_forward.1} parent=51 // pred_check
            _
          $region54: #{example_cnn_forward.1} parent=51 // pred_check_branch
            %292 = sbr.rel (0) target = $region56
          $region55: #{example_cnn_forward.1} parent=51 // pred_region
            // Predicated region
            $region57: #{example_cnn_forward.1} parent=55 // pred_check
              _
            $region58: #{example_cnn_forward.1} parent=55 // pred_check_branch
              %294 = sbr.rel (0) target = $region60
            $region59: #{example_cnn_forward.1} parent=55 // pred_region
              // Predicated region
              $region72: #{example_cnn_forward.1} parent=59 // pred_check
                _
              $region73: #{example_cnn_forward.1} parent=59 // pred_check_branch
                %371 = sbr.rel (0) target = $region75
              $region74: #{example_cnn_forward.1} parent=59 // pred_region
                loop: start=0, step=1, limit=1
                $region76: #{example_cnn_forward.1} parent=74 // loop_pre_header
                  _
                $region77: #{example_cnn_forward.1} parent=74 // loop_header
                  %s373 = sphi 0, %s377
                  %p374 = scmp.ge.s32.totalorder %s373, 1
                  %s378 = sphi %s290, %s290
                  %s379 = sphi %s287, %s287
                $region78: #{example_cnn_forward.1} parent=74 // loop_header_branch
                  %376 = sbr.rel (%p374) target = $region82
                $region79: #{example_cnn_forward.1} parent=74 // loop_body
                  %v380 = vld [vmem:[%s378] sm:$0xff]
                  %381 = vst [vmem:[%s379] sm:$0xff] %v380
                  %v382 = vld [vmem:[%s378 + $0x8] sm:$0xff]
                  %383 = vst [vmem:[%s379 + $0x8] sm:$0xff] %v382
                  %v384 = vld [vmem:[%s378 + $0x10] sm:$0xff]
                  %385 = vst [vmem:[%s379 + $0x10] sm:$0xff] %v384
                  %v386 = vld [vmem:[%s378 + $0x18] sm:$0xff]
                  %387 = vst [vmem:[%s379 + $0x18] sm:$0xff] %v386
                  %v388 = vld [vmem:[%s378 + $0x20] sm:$0xff]
                  %389 = vst [vmem:[%s379 + $0x20] sm:$0xff] %v388
                  %v390 = vld [vmem:[%s378 + $0x28] sm:$0xff]
                  %391 = vst [vmem:[%s379 + $0x28] sm:$0xff] %v390
                  %v392 = vld [vmem:[%s378 + $0x30] sm:$0xff]
                  %393 = vst [vmem:[%s379 + $0x30] sm:$0xff] %v392
                  %v394 = vld [vmem:[%s378 + $0x38] sm:$0xff]
                  %395 = vst [vmem:[%s379 + $0x38] sm:$0xff] %v394
                  %v396 = vld [vmem:[%s378 + $0x80] sm:$0xff]
                  %397 = vst [vmem:[%s379 + $0x40] sm:$0xff] %v396
                  %v398 = vld [vmem:[%s378 + $0x88] sm:$0xff]
                  %399 = vst [vmem:[%s379 + $0x48] sm:$0xff] %v398
                  %v400 = vld [vmem:[%s378 + $0x90] sm:$0xff]
                  %401 = vst [vmem:[%s379 + $0x50] sm:$0xff] %v400
                  %v402 = vld [vmem:[%s378 + $0x98] sm:$0xff]
                  %403 = vst [vmem:[%s379 + $0x58] sm:$0xff] %v402
                  %v404 = vld [vmem:[%s378 + $0xa0] sm:$0xff]
                  %405 = vst [vmem:[%s379 + $0x60] sm:$0xff] %v404
                  %v406 = vld [vmem:[%s378 + $0xa8] sm:$0xff]
                  %407 = vst [vmem:[%s379 + $0x68] sm:$0xff] %v406
                  %v408 = vld [vmem:[%s378 + $0xb0] sm:$0xff]
                  %409 = vst [vmem:[%s379 + $0x70] sm:$0xff] %v408
                  %v410 = vld [vmem:[%s378 + $0xb8] sm:$0xff]
                  %411 = vst [vmem:[%s379 + $0x78] sm:$0xff] %v410
                  %v412 = vld [vmem:[%s378 + $0x100] sm:$0xff]
                  %413 = vst [vmem:[%s379 + $0x80] sm:$0xff] %v412
                  %v414 = vld [vmem:[%s378 + $0x108] sm:$0xff]
                  %415 = vst [vmem:[%s379 + $0x88] sm:$0xff] %v414
                  %v416 = vld [vmem:[%s378 + $0x110] sm:$0xff]
                  %417 = vst [vmem:[%s379 + $0x90] sm:$0xff] %v416
                  %v418 = vld [vmem:[%s378 + $0x118] sm:$0xff]
                  %419 = vst [vmem:[%s379 + $0x98] sm:$0xff] %v418
                  %v420 = vld [vmem:[%s378 + $0x120] sm:$0xff]
                  %421 = vst [vmem:[%s379 + $0xa0] sm:$0xff] %v420
                  %v422 = vld [vmem:[%s378 + $0x128] sm:$0xff]
                  %423 = vst [vmem:[%s379 + $0xa8] sm:$0xff] %v422
                  %v424 = vld [vmem:[%s378 + $0x130] sm:$0xff]
                  %425 = vst [vmem:[%s379 + $0xb0] sm:$0xff] %v424
                  %v426 = vld [vmem:[%s378 + $0x138] sm:$0xff]
                  %427 = vst [vmem:[%s379 + $0xb8] sm:$0xff] %v426
                  %v428 = vld [vmem:[%s378 + $0x180] sm:$0xff]
                  %429 = vst [vmem:[%s379 + $0xc0] sm:$0xff] %v428
                  %v430 = vld [vmem:[%s378 + $0x188] sm:$0xff]
                  %431 = vst [vmem:[%s379 + $0xc8] sm:$0xff] %v430
                  %v432 = vld [vmem:[%s378 + $0x190] sm:$0xff]
                  %433 = vst [vmem:[%s379 + $0xd0] sm:$0xff] %v432
                  %v434 = vld [vmem:[%s378 + $0x198] sm:$0xff]
                  %435 = vst [vmem:[%s379 + $0xd8] sm:$0xff] %v434
                  %v436 = vld [vmem:[%s378 + $0x1a0] sm:$0xff]
                  %437 = vst [vmem:[%s379 + $0xe0] sm:$0xff] %v436
                  %v438 = vld [vmem:[%s378 + $0x1a8] sm:$0xff]
                  %439 = vst [vmem:[%s379 + $0xe8] sm:$0xff] %v438
                  %v440 = vld [vmem:[%s378 + $0x1b0] sm:$0xff]
                  %441 = vst [vmem:[%s379 + $0xf0] sm:$0xff] %v440
                  %v442 = vld [vmem:[%s378 + $0x1b8] sm:$0xff]
                  %443 = vst [vmem:[%s379 + $0xf8] sm:$0xff] %v442
                $region80: #{example_cnn_forward.1} parent=74 // loop_footer
                  %s377 = sadd.s32 1, %s373
                $region81: #{example_cnn_forward.1} parent=74 // loop_footer_branch
                  %372 = sbr.rel target = $region77
                $region82: #{example_cnn_forward.1} parent=74 // loop_exit
                  _
              $region75: #{example_cnn_forward.1} parent=59 // pred_fallthru
                _
              // Predicated region
              $region83: #{example_cnn_forward.1} parent=59 // pred_check
                _
              $region84: #{example_cnn_forward.1} parent=59 // pred_check_branch
                %445 = sbr.rel target = $region86
              $region85: #{example_cnn_forward.1} parent=59 // pred_region
                _
              $region86: #{example_cnn_forward.1} parent=59 // pred_fallthru
                _
            $region60: #{example_cnn_forward.1} parent=55 // pred_fallthru
              _
            // Predicated region
            $region61: #{example_cnn_forward.1} parent=55 // pred_check
              _
            $region62: #{example_cnn_forward.1} parent=55 // pred_check_branch
              %296 = sbr.rel target = $region64
            $region63: #{example_cnn_forward.1} parent=55 // pred_region
              loop: start=0, step=1, limit=1
              $region65: #{example_cnn_forward.1} parent=63 // loop_pre_header
                _
              $region66: #{example_cnn_forward.1} parent=63 // loop_header
                %s299 = sphi 0, %s303
                %p300 = scmp.ge.s32.totalorder %s299, 1
                %s304 = sphi %s290, %s290
                %s305 = sphi %s287, %s287
              $region67: #{example_cnn_forward.1} parent=63 // loop_header_branch
                %302 = sbr.rel (%p300) target = $region71
              $region68: #{example_cnn_forward.1} parent=63 // loop_body
                %v306 = vld [vmem:[%s304] sm:$0xff]
                %307 = vst [vmem:[%s305] sm:$0xff] %v306
                %v308 = vld [vmem:[%s304 + $0x8] sm:$0xff]
                %309 = vst [vmem:[%s305 + $0x8] sm:$0xff] %v308
                %v310 = vld [vmem:[%s304 + $0x10] sm:$0xff]
                %311 = vst [vmem:[%s305 + $0x10] sm:$0xff] %v310
                %v312 = vld [vmem:[%s304 + $0x18] sm:$0xff]
                %313 = vst [vmem:[%s305 + $0x18] sm:$0xff] %v312
                %v314 = vld [vmem:[%s304 + $0x20] sm:$0xff]
                %315 = vst [vmem:[%s305 + $0x20] sm:$0xff] %v314
                %v316 = vld [vmem:[%s304 + $0x28] sm:$0xff]
                %317 = vst [vmem:[%s305 + $0x28] sm:$0xff] %v316
                %v318 = vld [vmem:[%s304 + $0x30] sm:$0xff]
                %319 = vst [vmem:[%s305 + $0x30] sm:$0xff] %v318
                %v320 = vld [vmem:[%s304 + $0x38] sm:$0xff]
                %321 = vst [vmem:[%s305 + $0x38] sm:$0xff] %v320
                %v322 = vld [vmem:[%s304 + $0x80] sm:$0xff]
                %323 = vst [vmem:[%s305 + $0x40] sm:$0xff] %v322
                %v324 = vld [vmem:[%s304 + $0x88] sm:$0xff]
                %325 = vst [vmem:[%s305 + $0x48] sm:$0xff] %v324
                %v326 = vld [vmem:[%s304 + $0x90] sm:$0xff]
                %327 = vst [vmem:[%s305 + $0x50] sm:$0xff] %v326
                %v328 = vld [vmem:[%s304 + $0x98] sm:$0xff]
                %329 = vst [vmem:[%s305 + $0x58] sm:$0xff] %v328
                %v330 = vld [vmem:[%s304 + $0xa0] sm:$0xff]
                %331 = vst [vmem:[%s305 + $0x60] sm:$0xff] %v330
                %v332 = vld [vmem:[%s304 + $0xa8] sm:$0xff]
                %333 = vst [vmem:[%s305 + $0x68] sm:$0xff] %v332
                %v334 = vld [vmem:[%s304 + $0xb0] sm:$0xff]
                %335 = vst [vmem:[%s305 + $0x70] sm:$0xff] %v334
                %v336 = vld [vmem:[%s304 + $0xb8] sm:$0xff]
                %337 = vst [vmem:[%s305 + $0x78] sm:$0xff] %v336
                %v338 = vld [vmem:[%s304 + $0x100] sm:$0xff]
                %339 = vst [vmem:[%s305 + $0x80] sm:$0xff] %v338
                %v340 = vld [vmem:[%s304 + $0x108] sm:$0xff]
                %341 = vst [vmem:[%s305 + $0x88] sm:$0xff] %v340
                %v342 = vld [vmem:[%s304 + $0x110] sm:$0xff]
                %343 = vst [vmem:[%s305 + $0x90] sm:$0xff] %v342
                %v344 = vld [vmem:[%s304 + $0x118] sm:$0xff]
                %345 = vst [vmem:[%s305 + $0x98] sm:$0xff] %v344
                %v346 = vld [vmem:[%s304 + $0x120] sm:$0xff]
                %347 = vst [vmem:[%s305 + $0xa0] sm:$0xff] %v346
                %v348 = vld [vmem:[%s304 + $0x128] sm:$0xff]
                %349 = vst [vmem:[%s305 + $0xa8] sm:$0xff] %v348
                %v350 = vld [vmem:[%s304 + $0x130] sm:$0xff]
                %351 = vst [vmem:[%s305 + $0xb0] sm:$0xff] %v350
                %v352 = vld [vmem:[%s304 + $0x138] sm:$0xff]
                %353 = vst [vmem:[%s305 + $0xb8] sm:$0xff] %v352
                %v354 = vld [vmem:[%s304 + $0x180] sm:$0xff]
                %355 = vst [vmem:[%s305 + $0xc0] sm:$0xff] %v354
                %v356 = vld [vmem:[%s304 + $0x188] sm:$0xff]
                %357 = vst [vmem:[%s305 + $0xc8] sm:$0xff] %v356
                %v358 = vld [vmem:[%s304 + $0x190] sm:$0xff]
                %359 = vst [vmem:[%s305 + $0xd0] sm:$0xff] %v358
                %v360 = vld [vmem:[%s304 + $0x198] sm:$0xff]
                %361 = vst [vmem:[%s305 + $0xd8] sm:$0xff] %v360
                %v362 = vld [vmem:[%s304 + $0x1a0] sm:$0xff]
                %363 = vst [vmem:[%s305 + $0xe0] sm:$0xff] %v362
                %v364 = vld [vmem:[%s304 + $0x1a8] sm:$0xff]
                %365 = vst [vmem:[%s305 + $0xe8] sm:$0xff] %v364
                %v366 = vld [vmem:[%s304 + $0x1b0] sm:$0xff]
                %367 = vst [vmem:[%s305 + $0xf0] sm:$0xff] %v366
                %v368 = vld [vmem:[%s304 + $0x1b8] sm:$0xff]
                %369 = vst [vmem:[%s305 + $0xf8] sm:$0xff] %v368
              $region69: #{example_cnn_forward.1} parent=63 // loop_footer
                %s303 = sadd.s32 1, %s299
              $region70: #{example_cnn_forward.1} parent=63 // loop_footer_branch
                %298 = sbr.rel target = $region66
              $region71: #{example_cnn_forward.1} parent=63 // loop_exit
                _
            $region64: #{example_cnn_forward.1} parent=55 // pred_fallthru
              _
          $region56: #{example_cnn_forward.1} parent=51 // pred_fallthru
            _
          %446 = vnop
        $region52: #{example_cnn_forward.1} parent=47 // pred_fallthru
          _
      $region48: #{example_cnn_forward.1} parent=5 // pred_fallthru
        _
      %p447 = scmp.le.s32.totalorder 1, %s18
      %p448 = scmp.lt.s32.totalorder %s18, 3
      %p449 = pnand %p447, %p448
      %p450 = pneg %p449
      // Predicated region
      $region87: #{example_cnn_forward.1} parent=5 // pred_check
        _
      $region88: #{example_cnn_forward.1} parent=5 // pred_check_branch
        %452 = sbr.rel (%p449) target = $region90
      $region89: #{example_cnn_forward.1} parent=5 // pred_region
        %s453 = ssub.s32 %s18, 1
        %s454 = sand.u32 %s31, 1
        %s455 = sand.u32 %s31, 1
        %s456 = smul.addr %s455, 256
        %s457 = scalar_lea.vmem [#allocation5], %s456
        // Predicated region
        $region91: #{example_cnn_forward.1} parent=89 // pred_check
          %p458 = pneg %p44
        $region92: #{example_cnn_forward.1} parent=89 // pred_check_branch
          %460 = sbr.rel (%p458) target = $region94
        $region93: #{example_cnn_forward.1} parent=89 // pred_region
          _
        $region94: #{example_cnn_forward.1} parent=89 // pred_fallthru
          _
        %s461 = sand.u32 %s31, 1
        %s462 = sand.u32 %s31, 1
        %s463 = smul.addr %s462, 256
        %s464 = scalar_lea.vmem [#allocation5], %s463
        %p465 = pneg %p44
        %p466 = pneg %p41
        %p467 = pneg %p65
        %p468 = pneg %p62
        %p469 = pneg %p86
        %p470 = pneg %p83
        %p471 = pneg %p107
        %p472 = pneg %p104
        %p473 = pneg %p128
        %p474 = pneg %p125
        %p475 = pneg %p149
        %p476 = pneg %p146
        %p477 = pneg %p170
        %p478 = pneg %p167
        %p479 = pneg %p191
        %p480 = pneg %p188
        %p481 = pneg %p212
        %p482 = pneg %p209
        %p483 = pneg %p238
        %p484 = pneg %p235
        %s485 = sand.u32 %s225, 1
        %s486 = scalar_lea.sflag [#allocation7], %s485
        %s487 = sand.u32 %s225, 1
        %s488 = smul.addr %s487, 8
        %s489 = scalar_lea.vmem [#allocation6], %s488
        %s490 = smul.u32 8, %s23
        %v491 = vld [vmem:[%s2] sm:$0x3]
        %v492 = vld [vmem:[%s4] sm:$0x1]
        %v493 = vld [vmem:[%s457] sm:$0xff]
        %v494 = vld [vmem:[%s457 + $0x8] sm:$0xff]
        %v495 = vld [vmem:[%s457 + $0x10] sm:$0xff]
        %v496 = vld [vmem:[%s457 + $0x18] sm:$0xff]
        %v497 = vld [vmem:[%s457 + $0x20] sm:$0xff]
        %v498 = vld [vmem:[%s457 + $0x28] sm:$0xff]
        %v499 = vld [vmem:[%s457 + $0x30] sm:$0xff]
        %v500 = vld [vmem:[%s457 + $0x38] sm:$0xff]
        %v501 = vld [vmem:[%s1] sm:$0xff]
        %v502 = vld [vmem:[%s1 + $0x8] sm:$0xff]
        %v503 = vld [vmem:[%s1 + $0x10] sm:$0xff]
        %v504 = vld [vmem:[%s1 + $0x18] sm:$0xff]
        %v505 = vld [vmem:[%s1 + $0x20] sm:$0xff]
        %v506 = vld [vmem:[%s1 + $0x28] sm:$0xff]
        %v507 = vld [vmem:[%s1 + $0x30] sm:$0xff]
        %v508 = vld [vmem:[%s1 + $0x38] sm:$0xff]
        %v509 = vld [vmem:[%s1 + $0x40] sm:$0xff]
        %v510 = vld [vmem:[%s1 + $0x48] sm:$0xff]
        %v511 = vld [vmem:[%s1 + $0x50] sm:$0xff]
        %v512 = vld [vmem:[%s1 + $0x58] sm:$0xff]
        %v513 = vld [vmem:[%s1 + $0x60] sm:$0xff]
        %v514 = vld [vmem:[%s1 + $0x68] sm:$0xff]
        %v515 = vld [vmem:[%s1 + $0x70] sm:$0xff]
        %v516 = vld [vmem:[%s1 + $0x78] sm:$0xff]
        %v517 = vld [vmem:[%s1 + $0x80] sm:$0xff]
        %v518 = vld [vmem:[%s1 + $0x88] sm:$0xff]
        %v519 = vld [vmem:[%s1 + $0x90] sm:$0xff]
        %v520 = vld [vmem:[%s1 + $0x98] sm:$0xff]
        %v521 = vld [vmem:[%s1 + $0xa0] sm:$0xff]
        %v522 = vld [vmem:[%s1 + $0xa8] sm:$0xff]
        %v523 = vld [vmem:[%s1 + $0xb0] sm:$0xff]
        %v524 = vld [vmem:[%s1 + $0xb8] sm:$0xff]
        %v525 = vld [vmem:[%s1 + $0xc0] sm:$0xff]
        %v526 = vld [vmem:[%s1 + $0xc8] sm:$0xff]
        %v527 = vld [vmem:[%s1 + $0xd0] sm:$0xff]
        %v528 = vld [vmem:[%s1 + $0xd8] sm:$0xff]
        %v529 = vld [vmem:[%s1 + $0xe0] sm:$0xff]
        %v530 = vld [vmem:[%s1 + $0xe8] sm:$0xff]
        %v531 = vld [vmem:[%s1 + $0xf0] sm:$0xff]
        %v532 = vld [vmem:[%s1 + $0xf8] sm:$0xff]
        %v533 = vld [vmem:[%s1 + $0x100] sm:$0xff]
        %v534 = vld [vmem:[%s1 + $0x108] sm:$0xff]
        %v535 = vld [vmem:[%s1 + $0x110] sm:$0xff]
        %v536 = vld [vmem:[%s1 + $0x118] sm:$0xff]
        %v537 = vld [vmem:[%s1 + $0x120] sm:$0xff]
        %v538 = vld [vmem:[%s1 + $0x128] sm:$0xff]
        %v539 = vld [vmem:[%s1 + $0x130] sm:$0xff]
        %v540 = vld [vmem:[%s1 + $0x138] sm:$0xff]
        %v541 = vld [vmem:[%s1 + $0x140] sm:$0xff]
        %v542 = vld [vmem:[%s1 + $0x148] sm:$0xff]
        %v543 = vld [vmem:[%s1 + $0x150] sm:$0xff]
        %v544 = vld [vmem:[%s1 + $0x158] sm:$0xff]
        %v545 = vld [vmem:[%s1 + $0x160] sm:$0xff]
        %v546 = vld [vmem:[%s1 + $0x168] sm:$0xff]
        %v547 = vld [vmem:[%s1 + $0x170] sm:$0xff]
        %v548 = vld [vmem:[%s1 + $0x178] sm:$0xff]
        %s549 = scalar_lea.vmem %s457, 64 [#allocation5]
        %v550 = vld [vmem:[%s549] sm:$0xff]
        %v551 = vld [vmem:[%s549 + $0x8] sm:$0xff]
        %v552 = vld [vmem:[%s549 + $0x10] sm:$0xff]
        %v553 = vld [vmem:[%s549 + $0x18] sm:$0xff]
        %v554 = vld [vmem:[%s549 + $0x20] sm:$0xff]
        %v555 = vld [vmem:[%s549 + $0x28] sm:$0xff]
        %v556 = vld [vmem:[%s549 + $0x30] sm:$0xff]
        %v557 = vld [vmem:[%s549 + $0x38] sm:$0xff]
        %s558 = scalar_lea.vmem %s1, 384
        %v559 = vld [vmem:[%s558] sm:$0xff]
        %v560 = vld [vmem:[%s558 + $0x8] sm:$0xff]
        %v561 = vld [vmem:[%s558 + $0x10] sm:$0xff]
        %v562 = vld [vmem:[%s558 + $0x18] sm:$0xff]
        %v563 = vld [vmem:[%s558 + $0x20] sm:$0xff]
        %v564 = vld [vmem:[%s558 + $0x28] sm:$0xff]
        %v565 = vld [vmem:[%s558 + $0x30] sm:$0xff]
        %v566 = vld [vmem:[%s558 + $0x38] sm:$0xff]
        %v567 = vld [vmem:[%s558 + $0x40] sm:$0xff]
        %v568 = vld [vmem:[%s558 + $0x48] sm:$0xff]
        %v569 = vld [vmem:[%s558 + $0x50] sm:$0xff]
        %v570 = vld [vmem:[%s558 + $0x58] sm:$0xff]
        %v571 = vld [vmem:[%s558 + $0x60] sm:$0xff]
        %v572 = vld [vmem:[%s558 + $0x68] sm:$0xff]
        %v573 = vld [vmem:[%s558 + $0x70] sm:$0xff]
        %v574 = vld [vmem:[%s558 + $0x78] sm:$0xff]
        %v575 = vld [vmem:[%s558 + $0x80] sm:$0xff]
        %v576 = vld [vmem:[%s558 + $0x88] sm:$0xff]
        %v577 = vld [vmem:[%s558 + $0x90] sm:$0xff]
        %v578 = vld [vmem:[%s558 + $0x98] sm:$0xff]
        %v579 = vld [vmem:[%s558 + $0xa0] sm:$0xff]
        %v580 = vld [vmem:[%s558 + $0xa8] sm:$0xff]
        %v581 = vld [vmem:[%s558 + $0xb0] sm:$0xff]
        %v582 = vld [vmem:[%s558 + $0xb8] sm:$0xff]
        %v583 = vld [vmem:[%s558 + $0xc0] sm:$0xff]
        %v584 = vld [vmem:[%s558 + $0xc8] sm:$0xff]
        %v585 = vld [vmem:[%s558 + $0xd0] sm:$0xff]
        %v586 = vld [vmem:[%s558 + $0xd8] sm:$0xff]
        %v587 = vld [vmem:[%s558 + $0xe0] sm:$0xff]
        %v588 = vld [vmem:[%s558 + $0xe8] sm:$0xff]
        %v589 = vld [vmem:[%s558 + $0xf0] sm:$0xff]
        %v590 = vld [vmem:[%s558 + $0xf8] sm:$0xff]
        %v591 = vld [vmem:[%s558 + $0x100] sm:$0xff]
        %v592 = vld [vmem:[%s558 + $0x108] sm:$0xff]
        %v593 = vld [vmem:[%s558 + $0x110] sm:$0xff]
        %v594 = vld [vmem:[%s558 + $0x118] sm:$0xff]
        %v595 = vld [vmem:[%s558 + $0x120] sm:$0xff]
        %v596 = vld [vmem:[%s558 + $0x128] sm:$0xff]
        %v597 = vld [vmem:[%s558 + $0x130] sm:$0xff]
        %v598 = vld [vmem:[%s558 + $0x138] sm:$0xff]
        %v599 = vld [vmem:[%s558 + $0x140] sm:$0xff]
        %v600 = vld [vmem:[%s558 + $0x148] sm:$0xff]
        %v601 = vld [vmem:[%s558 + $0x150] sm:$0xff]
        %v602 = vld [vmem:[%s558 + $0x158] sm:$0xff]
        %v603 = vld [vmem:[%s558 + $0x160] sm:$0xff]
        %v604 = vld [vmem:[%s558 + $0x168] sm:$0xff]
        %v605 = vld [vmem:[%s558 + $0x170] sm:$0xff]
        %v606 = vld [vmem:[%s558 + $0x178] sm:$0xff]
        %vm607 = vcmask 785408
        %v609 = vsel %vm607, %v550, 0
        %v612 = vsel %vm607, %v551, 0
        %v615 = vsel %vm607, %v552, 0
        %v618 = vsel %vm607, %v553, 0
        %v621 = vsel %vm607, %v554, 0
        %v624 = vsel %vm607, %v555, 0
        %v627 = vsel %vm607, %v556, 0
        %v630 = vsel %vm607, %v557, 0
        %632 = vmatprep.subr.mxu0 %v560
        %633 = vmatpush1.msra.mxu0 %v559
        %634 = vmatprep.subr.mxu0 %v564
        %635 = vmatpush1.msra.mxu0 %v563
        %636 = vmatprep.subr.mxu0 %v568
        %637 = vmatpush1.msra.mxu0 %v567
        %638 = vmatprep.subr.mxu0 %v572
        %639 = vmatpush1.msra.mxu0 %v571
        %640 = vmatprep.subr.mxu0 %v576
        %641 = vmatpush1.msra.mxu0 %v575
        %642 = vmatprep.subr.mxu0 %v580
        %643 = vmatpush1.msra.mxu0 %v579
        %644 = vmatprep.subr.mxu0 %v584
        %645 = vmatpush1.msra.mxu0 %v583
        %646 = vmatprep.subr.mxu0 %v588
        %647 = vmatpush1.msra.mxu0 %v587
        %648 = vmatprep.subr.mxu0 %v592
        %649 = vmatpush1.msra.mxu0 %v591
        %650 = vmatprep.subr.mxu0 %v596
        %651 = vmatpush1.msra.mxu0 %v595
        %652 = vmatprep.subr.mxu0 %v600
        %653 = vmatpush1.msra.mxu0 %v599
        %654 = vmatprep.subr.mxu0 %v604
        %655 = vmatpush1.msra.mxu0 %v603
        %656 = vmatprep.subr.mxu0 0.0
        %657 = vmatpush1.msra.mxu0 0.0
        %658 = vmatprep.subr.mxu0 0.0
        %659 = vmatpush1.msra.mxu0 0.0
        %660 = vmatprep.subr.mxu0 0.0
        %661 = vmatpush1.msra.mxu0 0.0
        %662 = vmatprep.subr.mxu0 0.0
        %663 = vmatpush1.msra.mxu0 0.0
        %664 = vmatprep.subr.mxu0 0.0
        %665 = vmatpush1.msra.mxu0 0.0
        %666 = vmatprep.subr.mxu0 0.0
        %667 = vmatpush1.msra.mxu0 0.0
        %668 = vmatprep.subr.mxu0 0.0
        %669 = vmatpush1.msra.mxu0 0.0
        %670 = vmatprep.subr.mxu0 0.0
        %671 = vmatpush1.msra.mxu0 0.0
        %672 = vmatprep.subr.mxu0 0.0
        %673 = vmatpush1.msra.mxu0 0.0
        %674 = vmatprep.subr.mxu0 0.0
        %675 = vmatpush1.msra.mxu0 0.0
        %676 = vmatprep.subr.mxu0 0.0
        %677 = vmatpush1.msra.mxu0 0.0
        %678 = vmatprep.subr.mxu0 0.0
        %679 = vmatpush1.msra.mxu0 0.0
        %680 = vmatprep.subr.mxu0 0.0
        %681 = vmatpush1.msra.mxu0 0.0
        %682 = vmatprep.subr.mxu0 0.0
        %683 = vmatpush1.msra.mxu0 0.0
        %684 = vmatprep.subr.mxu0 0.0
        %685 = vmatpush1.msra.mxu0 0.0
        %686 = vmatprep.subr.mxu0 0.0
        %687 = vmatpush1.msra.mxu0 0.0
        %688 = vmatprep.subr.mxu0 0.0
        %689 = vmatpush1.msra.mxu0 0.0
        %690 = vmatprep.subr.mxu0 0.0
        %691 = vmatpush1.msra.mxu0 0.0
        %692 = vmatprep.subr.mxu0 0.0
        %693 = vmatpush1.msra.mxu0 0.0
        %694 = vmatprep.subr.mxu0 0.0
        %695 = vmatpush1.msra.mxu0 0.0
        %696 = vmatprep.mubr.f32.mxu0 0.0
        %697 = vmatmul.mubr.f32.gmra.mrb[0].mxu0 %v609
        %v698 = vpop.f32.mrb[0].mxu0
        %v699 = vadd.f32 0.0, %v698
        %v700 = vpop.f32.mrb[0].mxu0
        %v701 = vadd.f32 0.0, %v700
        %702 = vmatprep.mubr.f32.mxu0 0.0
        %703 = vmatmul.mubr.f32.gmra.mrb[0].mxu0 %v612
        %v704 = vpop.f32.mrb[0].mxu0
        %v705 = vadd.f32 0.0, %v704
        %v706 = vpop.f32.mrb[0].mxu0
        %v707 = vadd.f32 0.0, %v706
        %708 = vmatprep.mubr.f32.mxu0 0.0
        %709 = vmatmul.mubr.f32.gmra.mrb[0].mxu0 %v615
        %v710 = vpop.f32.mrb[0].mxu0
        %v711 = vadd.f32 0.0, %v710
        %v712 = vpop.f32.mrb[0].mxu0
        %v713 = vadd.f32 0.0, %v712
        %714 = vmatprep.mubr.f32.mxu0 0.0
        %715 = vmatmul.mubr.f32.gmra.mrb[0].mxu0 %v618
        %v716 = vpop.f32.mrb[0].mxu0
        %v717 = vadd.f32 0.0, %v716
        %v718 = vpop.f32.mrb[0].mxu0
        %v719 = vadd.f32 0.0, %v718
        %720 = vmatprep.mubr.f32.mxu0 0.0
        %721 = vmatmul.mubr.f32.gmra.mrb[0].mxu0 %v621
        %v722 = vpop.f32.mrb[0].mxu0
        %v723 = vadd.f32 0.0, %v722
        %v724 = vpop.f32.mrb[0].mxu0
        %v725 = vadd.f32 0.0, %v724
        %726 = vmatprep.mubr.f32.mxu0 0.0
        %727 = vmatmul.mubr.f32.gmra.mrb[0].mxu0 %v624
        %v728 = vpop.f32.mrb[0].mxu0
        %v729 = vadd.f32 0.0, %v728
        %v730 = vpop.f32.mrb[0].mxu0
        %v731 = vadd.f32 0.0, %v730
        %732 = vmatprep.mubr.f32.mxu0 0.0
        %733 = vmatmul.mubr.f32.gmra.mrb[0].mxu0 %v627
        %v734 = vpop.f32.mrb[0].mxu0
        %v735 = vadd.f32 0.0, %v734
        %v736 = vpop.f32.mrb[0].mxu0
        %v737 = vadd.f32 0.0, %v736
        %738 = vmatprep.mubr.f32.mxu0 0.0
        %739 = vmatmul.mubr.f32.gmra.mrb[0].mxu0 %v630
        %v740 = vpop.f32.mrb[0].mxu0
        %v741 = vadd.f32 0.0, %v740
        %v742 = vpop.f32.mrb[0].mxu0
        %v743 = vadd.f32 0.0, %v742
        %744 = vdwg.mxu0
        %745 = vmatprep.subr.mxu0 %v562
        %746 = vmatpush1.msra.mxu0 %v561
        %747 = vmatprep.subr.mxu0 %v566
        %748 = vmatpush1.msra.mxu0 %v565
        %749 = vmatprep.subr.mxu0 %v570
        %750 = vmatpush1.msra.mxu0 %v569
        %751 = vmatprep.subr.mxu0 %v574
        %752 = vmatpush1.msra.mxu0 %v573
        %753 = vmatprep.subr.mxu0 %v578
        %754 = vmatpush1.msra.mxu0 %v577
        %755 = vmatprep.subr.mxu0 %v582
        %756 = vmatpush1.msra.mxu0 %v581
        %757 = vmatprep.subr.mxu0 %v586
        %758 = vmatpush1.msra.mxu0 %v585
        %759 = vmatprep.subr.mxu0 %v590
        %760 = vmatpush1.msra.mxu0 %v589
        %761 = vmatprep.subr.mxu0 %v594
        %762 = vmatpush1.msra.mxu0 %v593
        %763 = vmatprep.subr.mxu0 %v598
        %764 = vmatpush1.msra.mxu0 %v597
        %765 = vmatprep.subr.mxu0 %v602
        %766 = vmatpush1.msra.mxu0 %v601
        %767 = vmatprep.subr.mxu0 %v606
        %768 = vmatpush1.msra.mxu0 %v605
        %769 = vmatprep.subr.mxu0 0.0
        %770 = vmatpush1.msra.mxu0 0.0
        %771 = vmatprep.subr.mxu0 0.0
        %772 = vmatpush1.msra.mxu0 0.0
        %773 = vmatprep.subr.mxu0 0.0
        %774 = vmatpush1.msra.mxu0 0.0
        %775 = vmatprep.subr.mxu0 0.0
        %776 = vmatpush1.msra.mxu0 0.0
        %777 = vmatprep.subr.mxu0 0.0
        %778 = vmatpush1.msra.mxu0 0.0
        %779 = vmatprep.subr.mxu0 0.0
        %780 = vmatpush1.msra.mxu0 0.0
        %781 = vmatprep.subr.mxu0 0.0
        %782 = vmatpush1.msra.mxu0 0.0
        %783 = vmatprep.subr.mxu0 0.0
        %784 = vmatpush1.msra.mxu0 0.0
        %785 = vmatprep.subr.mxu0 0.0
        %786 = vmatpush1.msra.mxu0 0.0
        %787 = vmatprep.subr.mxu0 0.0
        %788 = vmatpush1.msra.mxu0 0.0
        %789 = vmatprep.subr.mxu0 0.0
        %790 = vmatpush1.msra.mxu0 0.0
        %791 = vmatprep.subr.mxu0 0.0
        %792 = vmatpush1.msra.mxu0 0.0
        %793 = vmatprep.subr.mxu0 0.0
        %794 = vmatpush1.msra.mxu0 0.0
        %795 = vmatprep.subr.mxu0 0.0
        %796 = vmatpush1.msra.mxu0 0.0
        %797 = vmatprep.subr.mxu0 0.0
        %798 = vmatpush1.msra.mxu0 0.0
        %799 = vmatprep.subr.mxu0 0.0
        %800 = vmatpush1.msra.mxu0 0.0
        %801 = vmatprep.subr.mxu0 0.0
        %802 = vmatpush1.msra.mxu0 0.0
        %803 = vmatprep.subr.mxu0 0.0
        %804 = vmatpush1.msra.mxu0 0.0
        %805 = vmatprep.subr.mxu0 0.0
        %806 = vmatpush1.msra.mxu0 0.0
        %807 = vmatprep.subr.mxu0 0.0
        %808 = vmatpush1.msra.mxu0 0.0
        %809 = vmatprep.mubr.f32.mxu0 0.0
        %810 = vmatmul.mubr.f32.gmra.mrb[0].mxu0 %v609
        %v811 = vpop.f32.mrb[0].mxu0
        %v812 = vadd.f32 0.0, %v811
        %v813 = vpop.f32.mrb[0].mxu0
        %v814 = vadd.f32 0.0, %v813
        %815 = vmatprep.mubr.f32.mxu0 0.0
        %816 = vmatmul.mubr.f32.gmra.mrb[0].mxu0 %v612
        %v817 = vpop.f32.mrb[0].mxu0
        %v818 = vadd.f32 0.0, %v817
        %v819 = vpop.f32.mrb[0].mxu0
        %v820 = vadd.f32 0.0, %v819
        %821 = vmatprep.mubr.f32.mxu0 0.0
        %822 = vmatmul.mubr.f32.gmra.mrb[0].mxu0 %v615
        %v823 = vpop.f32.mrb[0].mxu0
        %v824 = vadd.f32 0.0, %v823
        %v825 = vpop.f32.mrb[0].mxu0
        %v826 = vadd.f32 0.0, %v825
        %827 = vmatprep.mubr.f32.mxu0 0.0
        %828 = vmatmul.mubr.f32.gmra.mrb[0].mxu0 %v618
        %v829 = vpop.f32.mrb[0].mxu0
        %v830 = vadd.f32 0.0, %v829
        %v831 = vpop.f32.mrb[0].mxu0
        %v832 = vadd.f32 0.0, %v831
        %833 = vmatprep.mubr.f32.mxu0 0.0
        %834 = vmatmul.mubr.f32.gmra.mrb[0].mxu0 %v621
        %v835 = vpop.f32.mrb[0].mxu0
        %v836 = vadd.f32 0.0, %v835
        %v837 = vpop.f32.mrb[0].mxu0
        %v838 = vadd.f32 0.0, %v837
        %839 = vmatprep.mubr.f32.mxu0 0.0
        %840 = vmatmul.mubr.f32.gmra.mrb[0].mxu0 %v624
        %v841 = vpop.f32.mrb[0].mxu0
        %v842 = vadd.f32 0.0, %v841
        %v843 = vpop.f32.mrb[0].mxu0
        %v844 = vadd.f32 0.0, %v843
        %845 = vmatprep.mubr.f32.mxu0 0.0
        %846 = vmatmul.mubr.f32.gmra.mrb[0].mxu0 %v627
        %v847 = vpop.f32.mrb[0].mxu0
        %v848 = vadd.f32 0.0, %v847
        %v849 = vpop.f32.mrb[0].mxu0
        %v850 = vadd.f32 0.0, %v849
        %851 = vmatprep.mubr.f32.mxu0 0.0
        %852 = vmatmul.mubr.f32.gmra.mrb[0].mxu0 %v630
        %v853 = vpop.f32.mrb[0].mxu0
        %v854 = vadd.f32 0.0, %v853
        %v855 = vpop.f32.mrb[0].mxu0
        %v856 = vadd.f32 0.0, %v855
        %857 = vdwg.mxu0
        %v859 = vsel %vm607, %v493, 0
        %v862 = vsel %vm607, %v494, 0
        %v865 = vsel %vm607, %v495, 0
        %v868 = vsel %vm607, %v496, 0
        %v871 = vsel %vm607, %v497, 0
        %v874 = vsel %vm607, %v498, 0
        %v877 = vsel %vm607, %v499, 0
        %v880 = vsel %vm607, %v500, 0
        %882 = vmatprep.subr.mxu0 %v502
        %883 = vmatpush1.msra.mxu0 %v501
        %884 = vmatprep.subr.mxu0 %v506
        %885 = vmatpush1.msra.mxu0 %v505
        %886 = vmatprep.subr.mxu0 %v510
        %887 = vmatpush1.msra.mxu0 %v509
        %888 = vmatprep.subr.mxu0 %v514
        %889 = vmatpush1.msra.mxu0 %v513
        %890 = vmatprep.subr.mxu0 %v518
        %891 = vmatpush1.msra.mxu0 %v517
        %892 = vmatprep.subr.mxu0 %v522
        %893 = vmatpush1.msra.mxu0 %v521
        %894 = vmatprep.subr.mxu0 %v526
        %895 = vmatpush1.msra.mxu0 %v525
        %896 = vmatprep.subr.mxu0 %v530
        %897 = vmatpush1.msra.mxu0 %v529
        %898 = vmatprep.subr.mxu0 %v534
        %899 = vmatpush1.msra.mxu0 %v533
        %900 = vmatprep.subr.mxu0 %v538
        %901 = vmatpush1.msra.mxu0 %v537
        %902 = vmatprep.subr.mxu0 %v542
        %903 = vmatpush1.msra.mxu0 %v541
        %904 = vmatprep.subr.mxu0 %v546
        %905 = vmatpush1.msra.mxu0 %v545
        %906 = vmatprep.subr.mxu0 0.0
        %907 = vmatpush1.msra.mxu0 0.0
        %908 = vmatprep.subr.mxu0 0.0
        %909 = vmatpush1.msra.mxu0 0.0
        %910 = vmatprep.subr.mxu0 0.0
        %911 = vmatpush1.msra.mxu0 0.0
        %912 = vmatprep.subr.mxu0 0.0
        %913 = vmatpush1.msra.mxu0 0.0
        %914 = vmatprep.subr.mxu0 0.0
        %915 = vmatpush1.msra.mxu0 0.0
        %916 = vmatprep.subr.mxu0 0.0
        %917 = vmatpush1.msra.mxu0 0.0
        %918 = vmatprep.subr.mxu0 0.0
        %919 = vmatpush1.msra.mxu0 0.0
        %920 = vmatprep.subr.mxu0 0.0
        %921 = vmatpush1.msra.mxu0 0.0
        %922 = vmatprep.subr.mxu0 0.0
        %923 = vmatpush1.msra.mxu0 0.0
        %924 = vmatprep.subr.mxu0 0.0
        %925 = vmatpush1.msra.mxu0 0.0
        %926 = vmatprep.subr.mxu0 0.0
        %927 = vmatpush1.msra.mxu0 0.0
        %928 = vmatprep.subr.mxu0 0.0
        %929 = vmatpush1.msra.mxu0 0.0
        %930 = vmatprep.subr.mxu0 0.0
        %931 = vmatpush1.msra.mxu0 0.0
        %932 = vmatprep.subr.mxu0 0.0
        %933 = vmatpush1.msra.mxu0 0.0
        %934 = vmatprep.subr.mxu0 0.0
        %935 = vmatpush1.msra.mxu0 0.0
        %936 = vmatprep.subr.mxu0 0.0
        %937 = vmatpush1.msra.mxu0 0.0
        %938 = vmatprep.subr.mxu0 0.0
        %939 = vmatpush1.msra.mxu0 0.0
        %940 = vmatprep.subr.mxu0 0.0
        %941 = vmatpush1.msra.mxu0 0.0
        %942 = vmatprep.subr.mxu0 0.0
        %943 = vmatpush1.msra.mxu0 0.0
        %944 = vmatprep.subr.mxu0 0.0
        %945 = vmatpush1.msra.mxu0 0.0
        %946 = vmatprep.mubr.f32.mxu0 0.0
        %947 = vmatmul.mubr.f32.gmra.mrb[0].mxu0 %v859
        %v948 = vpop.f32.mrb[0].mxu0
        %v949 = vadd.f32 %v699, %v948
        %v950 = vpop.f32.mrb[0].mxu0
        %v951 = vadd.f32 %v701, %v950
        %952 = vmatprep.mubr.f32.mxu0 0.0
        %953 = vmatmul.mubr.f32.gmra.mrb[0].mxu0 %v862
        %v954 = vpop.f32.mrb[0].mxu0
        %v955 = vadd.f32 %v705, %v954
        %v956 = vpop.f32.mrb[0].mxu0
        %v957 = vadd.f32 %v707, %v956
        %958 = vmatprep.mubr.f32.mxu0 0.0
        %959 = vmatmul.mubr.f32.gmra.mrb[0].mxu0 %v865
        %v960 = vpop.f32.mrb[0].mxu0
        %v961 = vadd.f32 %v711, %v960
        %v962 = vpop.f32.mrb[0].mxu0
        %v963 = vadd.f32 %v713, %v962
        %964 = vmatprep.mubr.f32.mxu0 0.0
        %965 = vmatmul.mubr.f32.gmra.mrb[0].mxu0 %v868
        %v966 = vpop.f32.mrb[0].mxu0
        %v967 = vadd.f32 %v717, %v966
        %v968 = vpop.f32.mrb[0].mxu0
        %v969 = vadd.f32 %v719, %v968
        %970 = vmatprep.mubr.f32.mxu0 0.0
        %971 = vmatmul.mubr.f32.gmra.mrb[0].mxu0 %v871
        %v972 = vpop.f32.mrb[0].mxu0
        %v973 = vadd.f32 %v723, %v972
        %v974 = vpop.f32.mrb[0].mxu0
        %v975 = vadd.f32 %v725, %v974
        %976 = vmatprep.mubr.f32.mxu0 0.0
        %977 = vmatmul.mubr.f32.gmra.mrb[0].mxu0 %v874
        %v978 = vpop.f32.mrb[0].mxu0
        %v979 = vadd.f32 %v729, %v978
        %v980 = vpop.f32.mrb[0].mxu0
        %v981 = vadd.f32 %v731, %v980
        %982 = vmatprep.mubr.f32.mxu0 0.0
        %983 = vmatmul.mubr.f32.gmra.mrb[0].mxu0 %v877
        %v984 = vpop.f32.mrb[0].mxu0
        %v985 = vadd.f32 %v735, %v984
        %v986 = vpop.f32.mrb[0].mxu0
        %v987 = vadd.f32 %v737, %v986
        %988 = vmatprep.mubr.f32.mxu0 0.0
        %989 = vmatmul.mubr.f32.gmra.mrb[0].mxu0 %v880
        %v990 = vpop.f32.mrb[0].mxu0
        %v991 = vadd.f32 %v741, %v990
        %v992 = vpop.f32.mrb[0].mxu0
        %v993 = vadd.f32 %v743, %v992
        %994 = vdwg.mxu0
        %995 = vmatprep.subr.mxu0 %v504
        %996 = vmatpush1.msra.mxu0 %v503
        %997 = vmatprep.subr.mxu0 %v508
        %998 = vmatpush1.msra.mxu0 %v507
        %999 = vmatprep.subr.mxu0 %v512
        %1000 = vmatpush1.msra.mxu0 %v511
        %1001 = vmatprep.subr.mxu0 %v516
        %1002 = vmatpush1.msra.mxu0 %v515
        %1003 = vmatprep.subr.mxu0 %v520
        %1004 = vmatpush1.msra.mxu0 %v519
        %1005 = vmatprep.subr.mxu0 %v524
        %1006 = vmatpush1.msra.mxu0 %v523
        %1007 = vmatprep.subr.mxu0 %v528
        %1008 = vmatpush1.msra.mxu0 %v527
        %1009 = vmatprep.subr.mxu0 %v532
        %1010 = vmatpush1.msra.mxu0 %v531
        %1011 = vmatprep.subr.mxu0 %v536
        %1012 = vmatpush1.msra.mxu0 %v535
        %1013 = vmatprep.subr.mxu0 %v540
        %1014 = vmatpush1.msra.mxu0 %v539
        %1015 = vmatprep.subr.mxu0 %v544
        %1016 = vmatpush1.msra.mxu0 %v543
        %1017 = vmatprep.subr.mxu0 %v548
        %1018 = vmatpush1.msra.mxu0 %v547
        %1019 = vmatprep.subr.mxu0 0.0
        %1020 = vmatpush1.msra.mxu0 0.0
        %1021 = vmatprep.subr.mxu0 0.0
        %1022 = vmatpush1.msra.mxu0 0.0
        %1023 = vmatprep.subr.mxu0 0.0
        %1024 = vmatpush1.msra.mxu0 0.0
        %1025 = vmatprep.subr.mxu0 0.0
        %1026 = vmatpush1.msra.mxu0 0.0
        %1027 = vmatprep.subr.mxu0 0.0
        %1028 = vmatpush1.msra.mxu0 0.0
        %1029 = vmatprep.subr.mxu0 0.0
        %1030 = vmatpush1.msra.mxu0 0.0
        %1031 = vmatprep.subr.mxu0 0.0
        %1032 = vmatpush1.msra.mxu0 0.0
        %1033 = vmatprep.subr.mxu0 0.0
        %1034 = vmatpush1.msra.mxu0 0.0
        %1035 = vmatprep.subr.mxu0 0.0
        %1036 = vmatpush1.msra.mxu0 0.0
        %1037 = vmatprep.subr.mxu0 0.0
        %1038 = vmatpush1.msra.mxu0 0.0
        %1039 = vmatprep.subr.mxu0 0.0
        %1040 = vmatpush1.msra.mxu0 0.0
        %1041 = vmatprep.subr.mxu0 0.0
        %1042 = vmatpush1.msra.mxu0 0.0
        %1043 = vmatprep.subr.mxu0 0.0
        %1044 = vmatpush1.msra.mxu0 0.0
        %1045 = vmatprep.subr.mxu0 0.0
        %1046 = vmatpush1.msra.mxu0 0.0
        %1047 = vmatprep.subr.mxu0 0.0
        %1048 = vmatpush1.msra.mxu0 0.0
        %1049 = vmatprep.subr.mxu0 0.0
        %1050 = vmatpush1.msra.mxu0 0.0
        %1051 = vmatprep.subr.mxu0 0.0
        %1052 = vmatpush1.msra.mxu0 0.0
        %1053 = vmatprep.subr.mxu0 0.0
        %1054 = vmatpush1.msra.mxu0 0.0
        %1055 = vmatprep.subr.mxu0 0.0
        %1056 = vmatpush1.msra.mxu0 0.0
        %1057 = vmatprep.subr.mxu0 0.0
        %1058 = vmatpush1.msra.mxu0 0.0
        %1059 = vmatprep.mubr.f32.mxu0 0.0
        %1060 = vmatmul.mubr.f32.gmra.mrb[0].mxu0 %v859
        %v1061 = vpop.f32.mrb[0].mxu0
        %v1062 = vadd.f32 %v812, %v1061
        %v1063 = vpop.f32.mrb[0].mxu0
        %v1064 = vadd.f32 %v814, %v1063
        %1065 = vmatprep.mubr.f32.mxu0 0.0
        %1066 = vmatmul.mubr.f32.gmra.mrb[0].mxu0 %v862
        %v1067 = vpop.f32.mrb[0].mxu0
        %v1068 = vadd.f32 %v818, %v1067
        %v1069 = vpop.f32.mrb[0].mxu0
        %v1070 = vadd.f32 %v820, %v1069
        %1071 = vmatprep.mubr.f32.mxu0 0.0
        %1072 = vmatmul.mubr.f32.gmra.mrb[0].mxu0 %v865
        %v1073 = vpop.f32.mrb[0].mxu0
        %v1074 = vadd.f32 %v824, %v1073
        %v1075 = vpop.f32.mrb[0].mxu0
        %v1076 = vadd.f32 %v826, %v1075
        %1077 = vmatprep.mubr.f32.mxu0 0.0
        %1078 = vmatmul.mubr.f32.gmra.mrb[0].mxu0 %v868
        %v1079 = vpop.f32.mrb[0].mxu0
        %v1080 = vadd.f32 %v830, %v1079
        %v1081 = vpop.f32.mrb[0].mxu0
        %v1082 = vadd.f32 %v832, %v1081
        %1083 = vmatprep.mubr.f32.mxu0 0.0
        %1084 = vmatmul.mubr.f32.gmra.mrb[0].mxu0 %v871
        %v1085 = vpop.f32.mrb[0].mxu0
        %v1086 = vadd.f32 %v836, %v1085
        %v1087 = vpop.f32.mrb[0].mxu0
        %v1088 = vadd.f32 %v838, %v1087
        %1089 = vmatprep.mubr.f32.mxu0 0.0
        %1090 = vmatmul.mubr.f32.gmra.mrb[0].mxu0 %v874
        %v1091 = vpop.f32.mrb[0].mxu0
        %v1092 = vadd.f32 %v842, %v1091
        %v1093 = vpop.f32.mrb[0].mxu0
        %v1094 = vadd.f32 %v844, %v1093
        %1095 = vmatprep.mubr.f32.mxu0 0.0
        %1096 = vmatmul.mubr.f32.gmra.mrb[0].mxu0 %v877
        %v1097 = vpop.f32.mrb[0].mxu0
        %v1098 = vadd.f32 %v848, %v1097
        %v1099 = vpop.f32.mrb[0].mxu0
        %v1100 = vadd.f32 %v850, %v1099
        %1101 = vmatprep.mubr.f32.mxu0 0.0
        %1102 = vmatmul.mubr.f32.gmra.mrb[0].mxu0 %v880
        %v1103 = vpop.f32.mrb[0].mxu0
        %v1104 = vadd.f32 %v854, %v1103
        %v1105 = vpop.f32.mrb[0].mxu0
        %v1106 = vadd.f32 %v856, %v1105
        %1107 = vdwg.mxu0
        %s1108 = scalar_lea.vmem %s457, 128 [#allocation5]
        %v1109 = vld [vmem:[%s1108] sm:$0xff]
        %v1110 = vld [vmem:[%s1108 + $0x8] sm:$0xff]
        %v1111 = vld [vmem:[%s1108 + $0x10] sm:$0xff]
        %v1112 = vld [vmem:[%s1108 + $0x18] sm:$0xff]
        %v1113 = vld [vmem:[%s1108 + $0x20] sm:$0xff]
        %v1114 = vld [vmem:[%s1108 + $0x28] sm:$0xff]
        %v1115 = vld [vmem:[%s1108 + $0x30] sm:$0xff]
        %v1116 = vld [vmem:[%s1108 + $0x38] sm:$0xff]
        %s1117 = scalar_lea.vmem %s1, 768
        %v1118 = vld [vmem:[%s1117] sm:$0xff]
        %v1119 = vld [vmem:[%s1117 + $0x8] sm:$0xff]
        %v1120 = vld [vmem:[%s1117 + $0x10] sm:$0xff]
        %v1121 = vld [vmem:[%s1117 + $0x18] sm:$0xff]
        %v1122 = vld [vmem:[%s1117 + $0x20] sm:$0xff]
        %v1123 = vld [vmem:[%s1117 + $0x28] sm:$0xff]
        %v1124 = vld [vmem:[%s1117 + $0x30] sm:$0xff]
        %v1125 = vld [vmem:[%s1117 + $0x38] sm:$0xff]
        %v1126 = vld [vmem:[%s1117 + $0x40] sm:$0xff]
        %v1127 = vld [vmem:[%s1117 + $0x48] sm:$0xff]
        %v1128 = vld [vmem:[%s1117 + $0x50] sm:$0xff]
        %v1129 = vld [vmem:[%s1117 + $0x58] sm:$0xff]
        %v1130 = vld [vmem:[%s1117 + $0x60] sm:$0xff]
        %v1131 = vld [vmem:[%s1117 + $0x68] sm:$0xff]
        %v1132 = vld [vmem:[%s1117 + $0x70] sm:$0xff]
        %v1133 = vld [vmem:[%s1117 + $0x78] sm:$0xff]
        %v1134 = vld [vmem:[%s1117 + $0x80] sm:$0xff]
        %v1135 = vld [vmem:[%s1117 + $0x88] sm:$0xff]
        %v1136 = vld [vmem:[%s1117 + $0x90] sm:$0xff]
        %v1137 = vld [vmem:[%s1117 + $0x98] sm:$0xff]
        %v1138 = vld [vmem:[%s1117 + $0xa0] sm:$0xff]
        %v1139 = vld [vmem:[%s1117 + $0xa8] sm:$0xff]
        %v1140 = vld [vmem:[%s1117 + $0xb0] sm:$0xff]
        %v1141 = vld [vmem:[%s1117 + $0xb8] sm:$0xff]
        %v1142 = vld [vmem:[%s1117 + $0xc0] sm:$0xff]
        %v1143 = vld [vmem:[%s1117 + $0xc8] sm:$0xff]
        %v1144 = vld [vmem:[%s1117 + $0xd0] sm:$0xff]
        %v1145 = vld [vmem:[%s1117 + $0xd8] sm:$0xff]
        %v1146 = vld [vmem:[%s1117 + $0xe0] sm:$0xff]
        %v1147 = vld [vmem:[%s1117 + $0xe8] sm:$0xff]
        %v1148 = vld [vmem:[%s1117 + $0xf0] sm:$0xff]
        %v1149 = vld [vmem:[%s1117 + $0xf8] sm:$0xff]
        %v1150 = vld [vmem:[%s1117 + $0x100] sm:$0xff]
        %v1151 = vld [vmem:[%s1117 + $0x108] sm:$0xff]
        %v1152 = vld [vmem:[%s1117 + $0x110] sm:$0xff]
        %v1153 = vld [vmem:[%s1117 + $0x118] sm:$0xff]
        %v1154 = vld [vmem:[%s1117 + $0x120] sm:$0xff]
        %v1155 = vld [vmem:[%s1117 + $0x128] sm:$0xff]
        %v1156 = vld [vmem:[%s1117 + $0x130] sm:$0xff]
        %v1157 = vld [vmem:[%s1117 + $0x138] sm:$0xff]
        %v1158 = vld [vmem:[%s1117 + $0x140] sm:$0xff]
        %v1159 = vld [vmem:[%s1117 + $0x148] sm:$0xff]
        %v1160 = vld [vmem:[%s1117 + $0x150] sm:$0xff]
        %v1161 = vld [vmem:[%s1117 + $0x158] sm:$0xff]
        %v1162 = vld [vmem:[%s1117 + $0x160] sm:$0xff]
        %v1163 = vld [vmem:[%s1117 + $0x168] sm:$0xff]
        %v1164 = vld [vmem:[%s1117 + $0x170] sm:$0xff]
        %v1165 = vld [vmem:[%s1117 + $0x178] sm:$0xff]
        %v1167 = vsel %vm607, %v1109, 0
        %v1170 = vsel %vm607, %v1110, 0
        %v1173 = vsel %vm607, %v1111, 0
        %v1176 = vsel %vm607, %v1112, 0
        %v1179 = vsel %vm607, %v1113, 0
        %v1182 = vsel %vm607, %v1114, 0
        %v1185 = vsel %vm607, %v1115, 0
        %v1188 = vsel %vm607, %v1116, 0
        %1190 = vmatprep.subr.mxu0 %v1119
        %1191 = vmatpush1.msra.mxu0 %v1118
        %1192 = vmatprep.subr.mxu0 %v1123
        %1193 = vmatpush1.msra.mxu0 %v1122
        %1194 = vmatprep.subr.mxu0 %v1127
        %1195 = vmatpush1.msra.mxu0 %v1126
        %1196 = vmatprep.subr.mxu0 %v1131
        %1197 = vmatpush1.msra.mxu0 %v1130
        %1198 = vmatprep.subr.mxu0 %v1135
        %1199 = vmatpush1.msra.mxu0 %v1134
        %1200 = vmatprep.subr.mxu0 %v1139
        %1201 = vmatpush1.msra.mxu0 %v1138
        %1202 = vmatprep.subr.mxu0 %v1143
        %1203 = vmatpush1.msra.mxu0 %v1142
        %1204 = vmatprep.subr.mxu0 %v1147
        %1205 = vmatpush1.msra.mxu0 %v1146
        %1206 = vmatprep.subr.mxu0 %v1151
        %1207 = vmatpush1.msra.mxu0 %v1150
        %1208 = vmatprep.subr.mxu0 %v1155
        %1209 = vmatpush1.msra.mxu0 %v1154
        %1210 = vmatprep.subr.mxu0 %v1159
        %1211 = vmatpush1.msra.mxu0 %v1158
        %1212 = vmatprep.subr.mxu0 %v1163
        %1213 = vmatpush1.msra.mxu0 %v1162
        %1214 = vmatprep.subr.mxu0 0.0
        %1215 = vmatpush1.msra.mxu0 0.0
        %1216 = vmatprep.subr.mxu0 0.0
        %1217 = vmatpush1.msra.mxu0 0.0
        %1218 = vmatprep.subr.mxu0 0.0
        %1219 = vmatpush1.msra.mxu0 0.0
        %1220 = vmatprep.subr.mxu0 0.0
        %1221 = vmatpush1.msra.mxu0 0.0
        %1222 = vmatprep.subr.mxu0 0.0
        %1223 = vmatpush1.msra.mxu0 0.0
        %1224 = vmatprep.subr.mxu0 0.0
        %1225 = vmatpush1.msra.mxu0 0.0
        %1226 = vmatprep.subr.mxu0 0.0
        %1227 = vmatpush1.msra.mxu0 0.0
        %1228 = vmatprep.subr.mxu0 0.0
        %1229 = vmatpush1.msra.mxu0 0.0
        %1230 = vmatprep.subr.mxu0 0.0
        %1231 = vmatpush1.msra.mxu0 0.0
        %1232 = vmatprep.subr.mxu0 0.0
        %1233 = vmatpush1.msra.mxu0 0.0
        %1234 = vmatprep.subr.mxu0 0.0
        %1235 = vmatpush1.msra.mxu0 0.0
        %1236 = vmatprep.subr.mxu0 0.0
        %1237 = vmatpush1.msra.mxu0 0.0
        %1238 = vmatprep.subr.mxu0 0.0
        %1239 = vmatpush1.msra.mxu0 0.0
        %1240 = vmatprep.subr.mxu0 0.0
        %1241 = vmatpush1.msra.mxu0 0.0
        %1242 = vmatprep.subr.mxu0 0.0
        %1243 = vmatpush1.msra.mxu0 0.0
        %1244 = vmatprep.subr.mxu0 0.0
        %1245 = vmatpush1.msra.mxu0 0.0
        %1246 = vmatprep.subr.mxu0 0.0
        %1247 = vmatpush1.msra.mxu0 0.0
        %1248 = vmatprep.subr.mxu0 0.0
        %1249 = vmatpush1.msra.mxu0 0.0
        %1250 = vmatprep.subr.mxu0 0.0
        %1251 = vmatpush1.msra.mxu0 0.0
        %1252 = vmatprep.subr.mxu0 0.0
        %1253 = vmatpush1.msra.mxu0 0.0
        %1254 = vmatprep.mubr.f32.mxu0 0.0
        %1255 = vmatmul.mubr.f32.gmra.mrb[0].mxu0 %v1167
        %v1256 = vpop.f32.mrb[0].mxu0
        %v1257 = vadd.f32 0.0, %v1256
        %v1258 = vpop.f32.mrb[0].mxu0
        %v1259 = vadd.f32 0.0, %v1258
        %1260 = vmatprep.mubr.f32.mxu0 0.0
        %1261 = vmatmul.mubr.f32.gmra.mrb[0].mxu0 %v1170
        %v1262 = vpop.f32.mrb[0].mxu0
        %v1263 = vadd.f32 0.0, %v1262
        %v1264 = vpop.f32.mrb[0].mxu0
        %v1265 = vadd.f32 0.0, %v1264
        %1266 = vmatprep.mubr.f32.mxu0 0.0
        %1267 = vmatmul.mubr.f32.gmra.mrb[0].mxu0 %v1173
        %v1268 = vpop.f32.mrb[0].mxu0
        %v1269 = vadd.f32 0.0, %v1268
        %v1270 = vpop.f32.mrb[0].mxu0
        %v1271 = vadd.f32 0.0, %v1270
        %1272 = vmatprep.mubr.f32.mxu0 0.0
        %1273 = vmatmul.mubr.f32.gmra.mrb[0].mxu0 %v1176
        %v1274 = vpop.f32.mrb[0].mxu0
        %v1275 = vadd.f32 0.0, %v1274
        %v1276 = vpop.f32.mrb[0].mxu0
        %v1277 = vadd.f32 0.0, %v1276
        %1278 = vmatprep.mubr.f32.mxu0 0.0
        %1279 = vmatmul.mubr.f32.gmra.mrb[0].mxu0 %v1179
        %v1280 = vpop.f32.mrb[0].mxu0
        %v1281 = vadd.f32 0.0, %v1280
        %v1282 = vpop.f32.mrb[0].mxu0
        %v1283 = vadd.f32 0.0, %v1282
        %1284 = vmatprep.mubr.f32.mxu0 0.0
        %1285 = vmatmul.mubr.f32.gmra.mrb[0].mxu0 %v1182
        %v1286 = vpop.f32.mrb[0].mxu0
        %v1287 = vadd.f32 0.0, %v1286
        %v1288 = vpop.f32.mrb[0].mxu0
        %v1289 = vadd.f32 0.0, %v1288
        %1290 = vmatprep.mubr.f32.mxu0 0.0
        %1291 = vmatmul.mubr.f32.gmra.mrb[0].mxu0 %v1185
        %v1292 = vpop.f32.mrb[0].mxu0
        %v1293 = vadd.f32 0.0, %v1292
        %v1294 = vpop.f32.mrb[0].mxu0
        %v1295 = vadd.f32 0.0, %v1294
        %1296 = vmatprep.mubr.f32.mxu0 0.0
        %1297 = vmatmul.mubr.f32.gmra.mrb[0].mxu0 %v1188
        %v1298 = vpop.f32.mrb[0].mxu0
        %v1299 = vadd.f32 0.0, %v1298
        %v1300 = vpop.f32.mrb[0].mxu0
        %v1301 = vadd.f32 0.0, %v1300
        %1302 = vdwg.mxu0
        %1303 = vmatprep.subr.mxu0 %v1121
        %1304 = vmatpush1.msra.mxu0 %v1120
        %1305 = vmatprep.subr.mxu0 %v1125
        %1306 = vmatpush1.msra.mxu0 %v1124
        %1307 = vmatprep.subr.mxu0 %v1129
        %1308 = vmatpush1.msra.mxu0 %v1128
        %1309 = vmatprep.subr.mxu0 %v1133
        %1310 = vmatpush1.msra.mxu0 %v1132
        %1311 = vmatprep.subr.mxu0 %v1137
        %1312 = vmatpush1.msra.mxu0 %v1136
        %1313 = vmatprep.subr.mxu0 %v1141
        %1314 = vmatpush1.msra.mxu0 %v1140
        %1315 = vmatprep.subr.mxu0 %v1145
        %1316 = vmatpush1.msra.mxu0 %v1144
        %1317 = vmatprep.subr.mxu0 %v1149
        %1318 = vmatpush1.msra.mxu0 %v1148
        %1319 = vmatprep.subr.mxu0 %v1153
        %1320 = vmatpush1.msra.mxu0 %v1152
        %1321 = vmatprep.subr.mxu0 %v1157
        %1322 = vmatpush1.msra.mxu0 %v1156
        %1323 = vmatprep.subr.mxu0 %v1161
        %1324 = vmatpush1.msra.mxu0 %v1160
        %1325 = vmatprep.subr.mxu0 %v1165
        %1326 = vmatpush1.msra.mxu0 %v1164
        %1327 = vmatprep.subr.mxu0 0.0
        %1328 = vmatpush1.msra.mxu0 0.0
        %1329 = vmatprep.subr.mxu0 0.0
        %1330 = vmatpush1.msra.mxu0 0.0
        %1331 = vmatprep.subr.mxu0 0.0
        %1332 = vmatpush1.msra.mxu0 0.0
        %1333 = vmatprep.subr.mxu0 0.0
        %1334 = vmatpush1.msra.mxu0 0.0
        %1335 = vmatprep.subr.mxu0 0.0
        %1336 = vmatpush1.msra.mxu0 0.0
        %1337 = vmatprep.subr.mxu0 0.0
        %1338 = vmatpush1.msra.mxu0 0.0
        %1339 = vmatprep.subr.mxu0 0.0
        %1340 = vmatpush1.msra.mxu0 0.0
        %1341 = vmatprep.subr.mxu0 0.0
        %1342 = vmatpush1.msra.mxu0 0.0
        %1343 = vmatprep.subr.mxu0 0.0
        %1344 = vmatpush1.msra.mxu0 0.0
        %1345 = vmatprep.subr.mxu0 0.0
        %1346 = vmatpush1.msra.mxu0 0.0
        %1347 = vmatprep.subr.mxu0 0.0
        %1348 = vmatpush1.msra.mxu0 0.0
        %1349 = vmatprep.subr.mxu0 0.0
        %1350 = vmatpush1.msra.mxu0 0.0
        %1351 = vmatprep.subr.mxu0 0.0
        %1352 = vmatpush1.msra.mxu0 0.0
        %1353 = vmatprep.subr.mxu0 0.0
        %1354 = vmatpush1.msra.mxu0 0.0
        %1355 = vmatprep.subr.mxu0 0.0
        %1356 = vmatpush1.msra.mxu0 0.0
        %1357 = vmatprep.subr.mxu0 0.0
        %1358 = vmatpush1.msra.mxu0 0.0
        %1359 = vmatprep.subr.mxu0 0.0
        %1360 = vmatpush1.msra.mxu0 0.0
        %1361 = vmatprep.subr.mxu0 0.0
        %1362 = vmatpush1.msra.mxu0 0.0
        %1363 = vmatprep.subr.mxu0 0.0
        %1364 = vmatpush1.msra.mxu0 0.0
        %1365 = vmatprep.subr.mxu0 0.0
        %1366 = vmatpush1.msra.mxu0 0.0
        %1367 = vmatprep.mubr.f32.mxu0 0.0
        %1368 = vmatmul.mubr.f32.gmra.mrb[0].mxu0 %v1167
        %v1369 = vpop.f32.mrb[0].mxu0
        %v1370 = vadd.f32 0.0, %v1369
        %v1371 = vpop.f32.mrb[0].mxu0
        %v1372 = vadd.f32 0.0, %v1371
        %1373 = vmatprep.mubr.f32.mxu0 0.0
        %1374 = vmatmul.mubr.f32.gmra.mrb[0].mxu0 %v1170
        %v1375 = vpop.f32.mrb[0].mxu0
        %v1376 = vadd.f32 0.0, %v1375
        %v1377 = vpop.f32.mrb[0].mxu0
        %v1378 = vadd.f32 0.0, %v1377
        %1379 = vmatprep.mubr.f32.mxu0 0.0
        %1380 = vmatmul.mubr.f32.gmra.mrb[0].mxu0 %v1173
        %v1381 = vpop.f32.mrb[0].mxu0
        %v1382 = vadd.f32 0.0, %v1381
        %v1383 = vpop.f32.mrb[0].mxu0
        %v1384 = vadd.f32 0.0, %v1383
        %1385 = vmatprep.mubr.f32.mxu0 0.0
        %1386 = vmatmul.mubr.f32.gmra.mrb[0].mxu0 %v1176
        %v1387 = vpop.f32.mrb[0].mxu0
        %v1388 = vadd.f32 0.0, %v1387
        %v1389 = vpop.f32.mrb[0].mxu0
        %v1390 = vadd.f32 0.0, %v1389
        %1391 = vmatprep.mubr.f32.mxu0 0.0
        %1392 = vmatmul.mubr.f32.gmra.mrb[0].mxu0 %v1179
        %v1393 = vpop.f32.mrb[0].mxu0
        %v1394 = vadd.f32 0.0, %v1393
        %v1395 = vpop.f32.mrb[0].mxu0
        %v1396 = vadd.f32 0.0, %v1395
        %1397 = vmatprep.mubr.f32.mxu0 0.0
        %1398 = vmatmul.mubr.f32.gmra.mrb[0].mxu0 %v1182
        %v1399 = vpop.f32.mrb[0].mxu0
        %v1400 = vadd.f32 0.0, %v1399
        %v1401 = vpop.f32.mrb[0].mxu0
        %v1402 = vadd.f32 0.0, %v1401
        %1403 = vmatprep.mubr.f32.mxu0 0.0
        %1404 = vmatmul.mubr.f32.gmra.mrb[0].mxu0 %v1185
        %v1405 = vpop.f32.mrb[0].mxu0
        %v1406 = vadd.f32 0.0, %v1405
        %v1407 = vpop.f32.mrb[0].mxu0
        %v1408 = vadd.f32 0.0, %v1407
        %1409 = vmatprep.mubr.f32.mxu0 0.0
        %1410 = vmatmul.mubr.f32.gmra.mrb[0].mxu0 %v1188
        %v1411 = vpop.f32.mrb[0].mxu0
        %v1412 = vadd.f32 0.0, %v1411
        %v1413 = vpop.f32.mrb[0].mxu0
        %v1414 = vadd.f32 0.0, %v1413
        %1415 = vdwg.mxu0
        %v1416 = vadd.f32 %v949, %v1257
        %v1417 = vadd.f32 %v951, %v1259
        %v1418 = vadd.f32 %v1062, %v1370
        %v1419 = vadd.f32 %v1064, %v1372
        %v1420 = vadd.f32 %v955, %v1263
        %v1421 = vadd.f32 %v957, %v1265
        %v1422 = vadd.f32 %v1068, %v1376
        %v1423 = vadd.f32 %v1070, %v1378
        %v1424 = vadd.f32 %v961, %v1269
        %v1425 = vadd.f32 %v963, %v1271
        %v1426 = vadd.f32 %v1074, %v1382
        %v1427 = vadd.f32 %v1076, %v1384
        %v1428 = vadd.f32 %v967, %v1275
        %v1429 = vadd.f32 %v969, %v1277
        %v1430 = vadd.f32 %v1080, %v1388
        %v1431 = vadd.f32 %v1082, %v1390
        %v1432 = vadd.f32 %v973, %v1281
        %v1433 = vadd.f32 %v975, %v1283
        %v1434 = vadd.f32 %v1086, %v1394
        %v1435 = vadd.f32 %v1088, %v1396
        %v1436 = vadd.f32 %v979, %v1287
        %v1437 = vadd.f32 %v981, %v1289
        %v1438 = vadd.f32 %v1092, %v1400
        %v1439 = vadd.f32 %v1094, %v1402
        %v1440 = vadd.f32 %v985, %v1293
        %v1441 = vadd.f32 %v987, %v1295
        %v1442 = vadd.f32 %v1098, %v1406
        %v1443 = vadd.f32 %v1100, %v1408
        %v1444 = vadd.f32 %v991, %v1299
        %v1445 = vadd.f32 %v993, %v1301
        %v1446 = vadd.f32 %v1104, %v1412
        %v1447 = vadd.f32 %v1106, %v1414
        %1448 = vmatprep.subr.mxu0 %v560
        %1449 = vmatpush1.msra.mxu0 %v559
        %1450 = vmatprep.subr.mxu0 %v564
        %1451 = vmatpush1.msra.mxu0 %v563
        %1452 = vmatprep.subr.mxu0 %v568
        %1453 = vmatpush1.msra.mxu0 %v567
        %1454 = vmatprep.subr.mxu0 %v572
        %1455 = vmatpush1.msra.mxu0 %v571
        %1456 = vmatprep.subr.mxu0 %v576
        %1457 = vmatpush1.msra.mxu0 %v575
        %1458 = vmatprep.subr.mxu0 %v580
        %1459 = vmatpush1.msra.mxu0 %v579
        %1460 = vmatprep.subr.mxu0 %v584
        %1461 = vmatpush1.msra.mxu0 %v583
        %1462 = vmatprep.subr.mxu0 %v588
        %1463 = vmatpush1.msra.mxu0 %v587
        %1464 = vmatprep.subr.mxu0 %v592
        %1465 = vmatpush1.msra.mxu0 %v591
        %1466 = vmatprep.subr.mxu0 %v596
        %1467 = vmatpush1.msra.mxu0 %v595
        %1468 = vmatprep.subr.mxu0 %v600
        %1469 = vmatpush1.msra.mxu0 %v599
        %1470 = vmatprep.subr.mxu0 %v604
        %1471 = vmatpush1.msra.mxu0 %v603
        %1472 = vmatprep.subr.mxu0 0.0
        %1473 = vmatpush1.msra.mxu0 0.0
        %1474 = vmatprep.subr.mxu0 0.0
        %1475 = vmatpush1.msra.mxu0 0.0
        %1476 = vmatprep.subr.mxu0 0.0
        %1477 = vmatpush1.msra.mxu0 0.0
        %1478 = vmatprep.subr.mxu0 0.0
        %1479 = vmatpush1.msra.mxu0 0.0
        %1480 = vmatprep.subr.mxu0 0.0
        %1481 = vmatpush1.msra.mxu0 0.0
        %1482 = vmatprep.subr.mxu0 0.0
        %1483 = vmatpush1.msra.mxu0 0.0
        %1484 = vmatprep.subr.mxu0 0.0
        %1485 = vmatpush1.msra.mxu0 0.0
        %1486 = vmatprep.subr.mxu0 0.0
        %1487 = vmatpush1.msra.mxu0 0.0
        %1488 = vmatprep.subr.mxu0 0.0
        %1489 = vmatpush1.msra.mxu0 0.0
        %1490 = vmatprep.subr.mxu0 0.0
        %1491 = vmatpush1.msra.mxu0 0.0
        %1492 = vmatprep.subr.mxu0 0.0
        %1493 = vmatpush1.msra.mxu0 0.0
        %1494 = vmatprep.subr.mxu0 0.0
        %1495 = vmatpush1.msra.mxu0 0.0
        %1496 = vmatprep.subr.mxu0 0.0
        %1497 = vmatpush1.msra.mxu0 0.0
        %1498 = vmatprep.subr.mxu0 0.0
        %1499 = vmatpush1.msra.mxu0 0.0
        %1500 = vmatprep.subr.mxu0 0.0
        %1501 = vmatpush1.msra.mxu0 0.0
        %1502 = vmatprep.subr.mxu0 0.0
        %1503 = vmatpush1.msra.mxu0 0.0
        %1504 = vmatprep.subr.mxu0 0.0
        %1505 = vmatpush1.msra.mxu0 0.0
        %1506 = vmatprep.subr.mxu0 0.0
        %1507 = vmatpush1.msra.mxu0 0.0
        %1508 = vmatprep.subr.mxu0 0.0
        %1509 = vmatpush1.msra.mxu0 0.0
        %1510 = vmatprep.subr.mxu0 0.0
        %1511 = vmatpush1.msra.mxu0 0.0
        %1512 = vmatprep.mubr.f32.mxu0 0.0
        %1513 = vmatmul.mubr.f32.gmra.mrb[0].mxu0 %v1167
        %v1514 = vpop.f32.mrb[0].mxu0
        %v1515 = vadd.f32 0.0, %v1514
        %v1516 = vpop.f32.mrb[0].mxu0
        %v1517 = vadd.f32 0.0, %v1516
        %1518 = vmatprep.mubr.f32.mxu0 0.0
        %1519 = vmatmul.mubr.f32.gmra.mrb[0].mxu0 %v1170
        %v1520 = vpop.f32.mrb[0].mxu0
        %v1521 = vadd.f32 0.0, %v1520
        %v1522 = vpop.f32.mrb[0].mxu0
        %v1523 = vadd.f32 0.0, %v1522
        %1524 = vmatprep.mubr.f32.mxu0 0.0
        %1525 = vmatmul.mubr.f32.gmra.mrb[0].mxu0 %v1173
        %v1526 = vpop.f32.mrb[0].mxu0
        %v1527 = vadd.f32 0.0, %v1526
        %v1528 = vpop.f32.mrb[0].mxu0
        %v1529 = vadd.f32 0.0, %v1528
        %1530 = vmatprep.mubr.f32.mxu0 0.0
        %1531 = vmatmul.mubr.f32.gmra.mrb[0].mxu0 %v1176
        %v1532 = vpop.f32.mrb[0].mxu0
        %v1533 = vadd.f32 0.0, %v1532
        %v1534 = vpop.f32.mrb[0].mxu0
        %v1535 = vadd.f32 0.0, %v1534
        %1536 = vmatprep.mubr.f32.mxu0 0.0
        %1537 = vmatmul.mubr.f32.gmra.mrb[0].mxu0 %v1179
        %v1538 = vpop.f32.mrb[0].mxu0
        %v1539 = vadd.f32 0.0, %v1538
        %v1540 = vpop.f32.mrb[0].mxu0
        %v1541 = vadd.f32 0.0, %v1540
        %1542 = vmatprep.mubr.f32.mxu0 0.0
        %1543 = vmatmul.mubr.f32.gmra.mrb[0].mxu0 %v1182
        %v1544 = vpop.f32.mrb[0].mxu0
        %v1545 = vadd.f32 0.0, %v1544
        %v1546 = vpop.f32.mrb[0].mxu0
        %v1547 = vadd.f32 0.0, %v1546
        %1548 = vmatprep.mubr.f32.mxu0 0.0
        %1549 = vmatmul.mubr.f32.gmra.mrb[0].mxu0 %v1185
        %v1550 = vpop.f32.mrb[0].mxu0
        %v1551 = vadd.f32 0.0, %v1550
        %v1552 = vpop.f32.mrb[0].mxu0
        %v1553 = vadd.f32 0.0, %v1552
        %1554 = vmatprep.mubr.f32.mxu0 0.0
        %1555 = vmatmul.mubr.f32.gmra.mrb[0].mxu0 %v1188
        %v1556 = vpop.f32.mrb[0].mxu0
        %v1557 = vadd.f32 0.0, %v1556
        %v1558 = vpop.f32.mrb[0].mxu0
        %v1559 = vadd.f32 0.0, %v1558
        %1560 = vdwg.mxu0
        %1561 = vmatprep.subr.mxu0 %v562
        %1562 = vmatpush1.msra.mxu0 %v561
        %1563 = vmatprep.subr.mxu0 %v566
        %1564 = vmatpush1.msra.mxu0 %v565
        %1565 = vmatprep.subr.mxu0 %v570
        %1566 = vmatpush1.msra.mxu0 %v569
        %1567 = vmatprep.subr.mxu0 %v574
        %1568 = vmatpush1.msra.mxu0 %v573
        %1569 = vmatprep.subr.mxu0 %v578
        %1570 = vmatpush1.msra.mxu0 %v577
        %1571 = vmatprep.subr.mxu0 %v582
        %1572 = vmatpush1.msra.mxu0 %v581
        %1573 = vmatprep.subr.mxu0 %v586
        %1574 = vmatpush1.msra.mxu0 %v585
        %1575 = vmatprep.subr.mxu0 %v590
        %1576 = vmatpush1.msra.mxu0 %v589
        %1577 = vmatprep.subr.mxu0 %v594
        %1578 = vmatpush1.msra.mxu0 %v593
        %1579 = vmatprep.subr.mxu0 %v598
        %1580 = vmatpush1.msra.mxu0 %v597
        %1581 = vmatprep.subr.mxu0 %v602
        %1582 = vmatpush1.msra.mxu0 %v601
        %1583 = vmatprep.subr.mxu0 %v606
        %1584 = vmatpush1.msra.mxu0 %v605
        %1585 = vmatprep.subr.mxu0 0.0
        %1586 = vmatpush1.msra.mxu0 0.0
        %1587 = vmatprep.subr.mxu0 0.0
        %1588 = vmatpush1.msra.mxu0 0.0
        %1589 = vmatprep.subr.mxu0 0.0
        %1590 = vmatpush1.msra.mxu0 0.0
        %1591 = vmatprep.subr.mxu0 0.0
        %1592 = vmatpush1.msra.mxu0 0.0
        %1593 = vmatprep.subr.mxu0 0.0
        %1594 = vmatpush1.msra.mxu0 0.0
        %1595 = vmatprep.subr.mxu0 0.0
        %1596 = vmatpush1.msra.mxu0 0.0
        %1597 = vmatprep.subr.mxu0 0.0
        %1598 = vmatpush1.msra.mxu0 0.0
        %1599 = vmatprep.subr.mxu0 0.0
        %1600 = vmatpush1.msra.mxu0 0.0
        %1601 = vmatprep.subr.mxu0 0.0
        %1602 = vmatpush1.msra.mxu0 0.0
        %1603 = vmatprep.subr.mxu0 0.0
        %1604 = vmatpush1.msra.mxu0 0.0
        %1605 = vmatprep.subr.mxu0 0.0
        %1606 = vmatpush1.msra.mxu0 0.0
        %1607 = vmatprep.subr.mxu0 0.0
        %1608 = vmatpush1.msra.mxu0 0.0
        %1609 = vmatprep.subr.mxu0 0.0
        %1610 = vmatpush1.msra.mxu0 0.0
        %1611 = vmatprep.subr.mxu0 0.0
        %1612 = vmatpush1.msra.mxu0 0.0
        %1613 = vmatprep.subr.mxu0 0.0
        %1614 = vmatpush1.msra.mxu0 0.0
        %1615 = vmatprep.subr.mxu0 0.0
        %1616 = vmatpush1.msra.mxu0 0.0
        %1617 = vmatprep.subr.mxu0 0.0
        %1618 = vmatpush1.msra.mxu0 0.0
        %1619 = vmatprep.subr.mxu0 0.0
        %1620 = vmatpush1.msra.mxu0 0.0
        %1621 = vmatprep.subr.mxu0 0.0
        %1622 = vmatpush1.msra.mxu0 0.0
        %1623 = vmatprep.subr.mxu0 0.0
        %1624 = vmatpush1.msra.mxu0 0.0
        %1625 = vmatprep.mubr.f32.mxu0 0.0
        %1626 = vmatmul.mubr.f32.gmra.mrb[0].mxu0 %v1167
        %v1627 = vpop.f32.mrb[0].mxu0
        %v1628 = vadd.f32 0.0, %v1627
        %v1629 = vpop.f32.mrb[0].mxu0
        %v1630 = vadd.f32 0.0, %v1629
        %1631 = vmatprep.mubr.f32.mxu0 0.0
        %1632 = vmatmul.mubr.f32.gmra.mrb[0].mxu0 %v1170
        %v1633 = vpop.f32.mrb[0].mxu0
        %v1634 = vadd.f32 0.0, %v1633
        %v1635 = vpop.f32.mrb[0].mxu0
        %v1636 = vadd.f32 0.0, %v1635
        %1637 = vmatprep.mubr.f32.mxu0 0.0
        %1638 = vmatmul.mubr.f32.gmra.mrb[0].mxu0 %v1173
        %v1639 = vpop.f32.mrb[0].mxu0
        %v1640 = vadd.f32 0.0, %v1639
        %v1641 = vpop.f32.mrb[0].mxu0
        %v1642 = vadd.f32 0.0, %v1641
        %1643 = vmatprep.mubr.f32.mxu0 0.0
        %1644 = vmatmul.mubr.f32.gmra.mrb[0].mxu0 %v1176
        %v1645 = vpop.f32.mrb[0].mxu0
        %v1646 = vadd.f32 0.0, %v1645
        %v1647 = vpop.f32.mrb[0].mxu0
        %v1648 = vadd.f32 0.0, %v1647
        %1649 = vmatprep.mubr.f32.mxu0 0.0
        %1650 = vmatmul.mubr.f32.gmra.mrb[0].mxu0 %v1179
        %v1651 = vpop.f32.mrb[0].mxu0
        %v1652 = vadd.f32 0.0, %v1651
        %v1653 = vpop.f32.mrb[0].mxu0
        %v1654 = vadd.f32 0.0, %v1653
        %1655 = vmatprep.mubr.f32.mxu0 0.0
        %1656 = vmatmul.mubr.f32.gmra.mrb[0].mxu0 %v1182
        %v1657 = vpop.f32.mrb[0].mxu0
        %v1658 = vadd.f32 0.0, %v1657
        %v1659 = vpop.f32.mrb[0].mxu0
        %v1660 = vadd.f32 0.0, %v1659
        %1661 = vmatprep.mubr.f32.mxu0 0.0
        %1662 = vmatmul.mubr.f32.gmra.mrb[0].mxu0 %v1185
        %v1663 = vpop.f32.mrb[0].mxu0
        %v1664 = vadd.f32 0.0, %v1663
        %v1665 = vpop.f32.mrb[0].mxu0
        %v1666 = vadd.f32 0.0, %v1665
        %1667 = vmatprep.mubr.f32.mxu0 0.0
        %1668 = vmatmul.mubr.f32.gmra.mrb[0].mxu0 %v1188
        %v1669 = vpop.f32.mrb[0].mxu0
        %v1670 = vadd.f32 0.0, %v1669
        %v1671 = vpop.f32.mrb[0].mxu0
        %v1672 = vadd.f32 0.0, %v1671
        %1673 = vdwg.mxu0
        %1674 = vmatprep.subr.mxu0 %v502
        %1675 = vmatpush1.msra.mxu0 %v501
        %1676 = vmatprep.subr.mxu0 %v506
        %1677 = vmatpush1.msra.mxu0 %v505
        %1678 = vmatprep.subr.mxu0 %v510
        %1679 = vmatpush1.msra.mxu0 %v509
        %1680 = vmatprep.subr.mxu0 %v514
        %1681 = vmatpush1.msra.mxu0 %v513
        %1682 = vmatprep.subr.mxu0 %v518
        %1683 = vmatpush1.msra.mxu0 %v517
        %1684 = vmatprep.subr.mxu0 %v522
        %1685 = vmatpush1.msra.mxu0 %v521
        %1686 = vmatprep.subr.mxu0 %v526
        %1687 = vmatpush1.msra.mxu0 %v525
        %1688 = vmatprep.subr.mxu0 %v530
        %1689 = vmatpush1.msra.mxu0 %v529
        %1690 = vmatprep.subr.mxu0 %v534
        %1691 = vmatpush1.msra.mxu0 %v533
        %1692 = vmatprep.subr.mxu0 %v538
        %1693 = vmatpush1.msra.mxu0 %v537
        %1694 = vmatprep.subr.mxu0 %v542
        %1695 = vmatpush1.msra.mxu0 %v541
        %1696 = vmatprep.subr.mxu0 %v546
        %1697 = vmatpush1.msra.mxu0 %v545
        %1698 = vmatprep.subr.mxu0 0.0
        %1699 = vmatpush1.msra.mxu0 0.0
        %1700 = vmatprep.subr.mxu0 0.0
        %1701 = vmatpush1.msra.mxu0 0.0
        %1702 = vmatprep.subr.mxu0 0.0
        %1703 = vmatpush1.msra.mxu0 0.0
        %1704 = vmatprep.subr.mxu0 0.0
        %1705 = vmatpush1.msra.mxu0 0.0
        %1706 = vmatprep.subr.mxu0 0.0
        %1707 = vmatpush1.msra.mxu0 0.0
        %1708 = vmatprep.subr.mxu0 0.0
        %1709 = vmatpush1.msra.mxu0 0.0
        %1710 = vmatprep.subr.mxu0 0.0
        %1711 = vmatpush1.msra.mxu0 0.0
        %1712 = vmatprep.subr.mxu0 0.0
        %1713 = vmatpush1.msra.mxu0 0.0
        %1714 = vmatprep.subr.mxu0 0.0
        %1715 = vmatpush1.msra.mxu0 0.0
        %1716 = vmatprep.subr.mxu0 0.0
        %1717 = vmatpush1.msra.mxu0 0.0
        %1718 = vmatprep.subr.mxu0 0.0
        %1719 = vmatpush1.msra.mxu0 0.0
        %1720 = vmatprep.subr.mxu0 0.0
        %1721 = vmatpush1.msra.mxu0 0.0
        %1722 = vmatprep.subr.mxu0 0.0
        %1723 = vmatpush1.msra.mxu0 0.0
        %1724 = vmatprep.subr.mxu0 0.0
        %1725 = vmatpush1.msra.mxu0 0.0
        %1726 = vmatprep.subr.mxu0 0.0
        %1727 = vmatpush1.msra.mxu0 0.0
        %1728 = vmatprep.subr.mxu0 0.0
        %1729 = vmatpush1.msra.mxu0 0.0
        %1730 = vmatprep.subr.mxu0 0.0
        %1731 = vmatpush1.msra.mxu0 0.0
        %1732 = vmatprep.subr.mxu0 0.0
        %1733 = vmatpush1.msra.mxu0 0.0
        %1734 = vmatprep.subr.mxu0 0.0
        %1735 = vmatpush1.msra.mxu0 0.0
        %1736 = vmatprep.subr.mxu0 0.0
        %1737 = vmatpush1.msra.mxu0 0.0
        %1738 = vmatprep.mubr.f32.mxu0 0.0
        %1739 = vmatmul.mubr.f32.gmra.mrb[0].mxu0 %v609
        %v1740 = vpop.f32.mrb[0].mxu0
        %v1741 = vadd.f32 %v1515, %v1740
        %v1742 = vpop.f32.mrb[0].mxu0
        %v1743 = vadd.f32 %v1517, %v1742
        %1744 = vmatprep.mubr.f32.mxu0 0.0
        %1745 = vmatmul.mubr.f32.gmra.mrb[0].mxu0 %v612
        %v1746 = vpop.f32.mrb[0].mxu0
        %v1747 = vadd.f32 %v1521, %v1746
        %v1748 = vpop.f32.mrb[0].mxu0
        %v1749 = vadd.f32 %v1523, %v1748
        %1750 = vmatprep.mubr.f32.mxu0 0.0
        %1751 = vmatmul.mubr.f32.gmra.mrb[0].mxu0 %v615
        %v1752 = vpop.f32.mrb[0].mxu0
        %v1753 = vadd.f32 %v1527, %v1752
        %v1754 = vpop.f32.mrb[0].mxu0
        %v1755 = vadd.f32 %v1529, %v1754
        %1756 = vmatprep.mubr.f32.mxu0 0.0
        %1757 = vmatmul.mubr.f32.gmra.mrb[0].mxu0 %v618
        %v1758 = vpop.f32.mrb[0].mxu0
        %v1759 = vadd.f32 %v1533, %v1758
        %v1760 = vpop.f32.mrb[0].mxu0
        %v1761 = vadd.f32 %v1535, %v1760
        %1762 = vmatprep.mubr.f32.mxu0 0.0
        %1763 = vmatmul.mubr.f32.gmra.mrb[0].mxu0 %v621
        %v1764 = vpop.f32.mrb[0].mxu0
        %v1765 = vadd.f32 %v1539, %v1764
        %v1766 = vpop.f32.mrb[0].mxu0
        %v1767 = vadd.f32 %v1541, %v1766
        %1768 = vmatprep.mubr.f32.mxu0 0.0
        %1769 = vmatmul.mubr.f32.gmra.mrb[0].mxu0 %v624
        %v1770 = vpop.f32.mrb[0].mxu0
        %v1771 = vadd.f32 %v1545, %v1770
        %v1772 = vpop.f32.mrb[0].mxu0
        %v1773 = vadd.f32 %v1547, %v1772
        %1774 = vmatprep.mubr.f32.mxu0 0.0
        %1775 = vmatmul.mubr.f32.gmra.mrb[0].mxu0 %v627
        %v1776 = vpop.f32.mrb[0].mxu0
        %v1777 = vadd.f32 %v1551, %v1776
        %v1778 = vpop.f32.mrb[0].mxu0
        %v1779 = vadd.f32 %v1553, %v1778
        %1780 = vmatprep.mubr.f32.mxu0 0.0
        %1781 = vmatmul.mubr.f32.gmra.mrb[0].mxu0 %v630
        %v1782 = vpop.f32.mrb[0].mxu0
        %v1783 = vadd.f32 %v1557, %v1782
        %v1784 = vpop.f32.mrb[0].mxu0
        %v1785 = vadd.f32 %v1559, %v1784
        %1786 = vdwg.mxu0
        %1787 = vmatprep.subr.mxu0 %v504
        %1788 = vmatpush1.msra.mxu0 %v503
        %1789 = vmatprep.subr.mxu0 %v508
        %1790 = vmatpush1.msra.mxu0 %v507
        %1791 = vmatprep.subr.mxu0 %v512
        %1792 = vmatpush1.msra.mxu0 %v511
        %1793 = vmatprep.subr.mxu0 %v516
        %1794 = vmatpush1.msra.mxu0 %v515
        %1795 = vmatprep.subr.mxu0 %v520
        %1796 = vmatpush1.msra.mxu0 %v519
        %1797 = vmatprep.subr.mxu0 %v524
        %1798 = vmatpush1.msra.mxu0 %v523
        %1799 = vmatprep.subr.mxu0 %v528
        %1800 = vmatpush1.msra.mxu0 %v527
        %1801 = vmatprep.subr.mxu0 %v532
        %1802 = vmatpush1.msra.mxu0 %v531
        %1803 = vmatprep.subr.mxu0 %v536
        %1804 = vmatpush1.msra.mxu0 %v535
        %1805 = vmatprep.subr.mxu0 %v540
        %1806 = vmatpush1.msra.mxu0 %v539
        %1807 = vmatprep.subr.mxu0 %v544
        %1808 = vmatpush1.msra.mxu0 %v543
        %1809 = vmatprep.subr.mxu0 %v548
        %1810 = vmatpush1.msra.mxu0 %v547
        %1811 = vmatprep.subr.mxu0 0.0
        %1812 = vmatpush1.msra.mxu0 0.0
        %1813 = vmatprep.subr.mxu0 0.0
        %1814 = vmatpush1.msra.mxu0 0.0
        %1815 = vmatprep.subr.mxu0 0.0
        %1816 = vmatpush1.msra.mxu0 0.0
        %1817 = vmatprep.subr.mxu0 0.0
        %1818 = vmatpush1.msra.mxu0 0.0
        %1819 = vmatprep.subr.mxu0 0.0
        %1820 = vmatpush1.msra.mxu0 0.0
        %1821 = vmatprep.subr.mxu0 0.0
        %1822 = vmatpush1.msra.mxu0 0.0
        %1823 = vmatprep.subr.mxu0 0.0
        %1824 = vmatpush1.msra.mxu0 0.0
        %1825 = vmatprep.subr.mxu0 0.0
        %1826 = vmatpush1.msra.mxu0 0.0
        %1827 = vmatprep.subr.mxu0 0.0
        %1828 = vmatpush1.msra.mxu0 0.0
        %1829 = vmatprep.subr.mxu0 0.0
        %1830 = vmatpush1.msra.mxu0 0.0
        %1831 = vmatprep.subr.mxu0 0.0
        %1832 = vmatpush1.msra.mxu0 0.0
        %1833 = vmatprep.subr.mxu0 0.0
        %1834 = vmatpush1.msra.mxu0 0.0
        %1835 = vmatprep.subr.mxu0 0.0
        %1836 = vmatpush1.msra.mxu0 0.0
        %1837 = vmatprep.subr.mxu0 0.0
        %1838 = vmatpush1.msra.mxu0 0.0
        %1839 = vmatprep.subr.mxu0 0.0
        %1840 = vmatpush1.msra.mxu0 0.0
        %1841 = vmatprep.subr.mxu0 0.0
        %1842 = vmatpush1.msra.mxu0 0.0
        %1843 = vmatprep.subr.mxu0 0.0
        %1844 = vmatpush1.msra.mxu0 0.0
        %1845 = vmatprep.subr.mxu0 0.0
        %1846 = vmatpush1.msra.mxu0 0.0
        %1847 = vmatprep.subr.mxu0 0.0
        %1848 = vmatpush1.msra.mxu0 0.0
        %1849 = vmatprep.subr.mxu0 0.0
        %1850 = vmatpush1.msra.mxu0 0.0
        %1851 = vmatprep.mubr.f32.mxu0 0.0
        %1852 = vmatmul.mubr.f32.gmra.mrb[0].mxu0 %v609
        %v1853 = vpop.f32.mrb[0].mxu0
        %v1854 = vadd.f32 %v1628, %v1853
        %v1855 = vpop.f32.mrb[0].mxu0
        %v1856 = vadd.f32 %v1630, %v1855
        %1857 = vmatprep.mubr.f32.mxu0 0.0
        %1858 = vmatmul.mubr.f32.gmra.mrb[0].mxu0 %v612
        %v1859 = vpop.f32.mrb[0].mxu0
        %v1860 = vadd.f32 %v1634, %v1859
        %v1861 = vpop.f32.mrb[0].mxu0
        %v1862 = vadd.f32 %v1636, %v1861
        %1863 = vmatprep.mubr.f32.mxu0 0.0
        %1864 = vmatmul.mubr.f32.gmra.mrb[0].mxu0 %v615
        %v1865 = vpop.f32.mrb[0].mxu0
        %v1866 = vadd.f32 %v1640, %v1865
        %v1867 = vpop.f32.mrb[0].mxu0
        %v1868 = vadd.f32 %v1642, %v1867
        %1869 = vmatprep.mubr.f32.mxu0 0.0
        %1870 = vmatmul.mubr.f32.gmra.mrb[0].mxu0 %v618
        %v1871 = vpop.f32.mrb[0].mxu0
        %v1872 = vadd.f32 %v1646, %v1871
        %v1873 = vpop.f32.mrb[0].mxu0
        %v1874 = vadd.f32 %v1648, %v1873
        %1875 = vmatprep.mubr.f32.mxu0 0.0
        %1876 = vmatmul.mubr.f32.gmra.mrb[0].mxu0 %v621
        %v1877 = vpop.f32.mrb[0].mxu0
        %v1878 = vadd.f32 %v1652, %v1877
        %v1879 = vpop.f32.mrb[0].mxu0
        %v1880 = vadd.f32 %v1654, %v1879
        %1881 = vmatprep.mubr.f32.mxu0 0.0
        %1882 = vmatmul.mubr.f32.gmra.mrb[0].mxu0 %v624
        %v1883 = vpop.f32.mrb[0].mxu0
        %v1884 = vadd.f32 %v1658, %v1883
        %v1885 = vpop.f32.mrb[0].mxu0
        %v1886 = vadd.f32 %v1660, %v1885
        %1887 = vmatprep.mubr.f32.mxu0 0.0
        %1888 = vmatmul.mubr.f32.gmra.mrb[0].mxu0 %v627
        %v1889 = vpop.f32.mrb[0].mxu0
        %v1890 = vadd.f32 %v1664, %v1889
        %v1891 = vpop.f32.mrb[0].mxu0
        %v1892 = vadd.f32 %v1666, %v1891
        %1893 = vmatprep.mubr.f32.mxu0 0.0
        %1894 = vmatmul.mubr.f32.gmra.mrb[0].mxu0 %v630
        %v1895 = vpop.f32.mrb[0].mxu0
        %v1896 = vadd.f32 %v1670, %v1895
        %v1897 = vpop.f32.mrb[0].mxu0
        %v1898 = vadd.f32 %v1672, %v1897
        %1899 = vdwg.mxu0
        %s1900 = scalar_lea.vmem %s457, 192 [#allocation5]
        %v1901 = vld [vmem:[%s1900] sm:$0xff]
        %v1902 = vld [vmem:[%s1900 + $0x8] sm:$0xff]
        %v1903 = vld [vmem:[%s1900 + $0x10] sm:$0xff]
        %v1904 = vld [vmem:[%s1900 + $0x18] sm:$0xff]
        %v1905 = vld [vmem:[%s1900 + $0x20] sm:$0xff]
        %v1906 = vld [vmem:[%s1900 + $0x28] sm:$0xff]
        %v1907 = vld [vmem:[%s1900 + $0x30] sm:$0xff]
        %v1908 = vld [vmem:[%s1900 + $0x38] sm:$0xff]
        %v1910 = vsel %vm607, %v1901, 0
        %v1913 = vsel %vm607, %v1902, 0
        %v1916 = vsel %vm607, %v1903, 0
        %v1919 = vsel %vm607, %v1904, 0
        %v1922 = vsel %vm607, %v1905, 0
        %v1925 = vsel %vm607, %v1906, 0
        %v1928 = vsel %vm607, %v1907, 0
        %v1931 = vsel %vm607, %v1908, 0
        %1933 = vmatprep.subr.mxu0 %v1119
        %1934 = vmatpush1.msra.mxu0 %v1118
        %1935 = vmatprep.subr.mxu0 %v1123
        %1936 = vmatpush1.msra.mxu0 %v1122
        %1937 = vmatprep.subr.mxu0 %v1127
        %1938 = vmatpush1.msra.mxu0 %v1126
        %1939 = vmatprep.subr.mxu0 %v1131
        %1940 = vmatpush1.msra.mxu0 %v1130
        %1941 = vmatprep.subr.mxu0 %v1135
        %1942 = vmatpush1.msra.mxu0 %v1134
        %1943 = vmatprep.subr.mxu0 %v1139
        %1944 = vmatpush1.msra.mxu0 %v1138
        %1945 = vmatprep.subr.mxu0 %v1143
        %1946 = vmatpush1.msra.mxu0 %v1142
        %1947 = vmatprep.subr.mxu0 %v1147
        %1948 = vmatpush1.msra.mxu0 %v1146
        %1949 = vmatprep.subr.mxu0 %v1151
        %1950 = vmatpush1.msra.mxu0 %v1150
        %1951 = vmatprep.subr.mxu0 %v1155
        %1952 = vmatpush1.msra.mxu0 %v1154
        %1953 = vmatprep.subr.mxu0 %v1159
        %1954 = vmatpush1.msra.mxu0 %v1158
        %1955 = vmatprep.subr.mxu0 %v1163
        %1956 = vmatpush1.msra.mxu0 %v1162
        %1957 = vmatprep.subr.mxu0 0.0
        %1958 = vmatpush1.msra.mxu0 0.0
        %1959 = vmatprep.subr.mxu0 0.0
        %1960 = vmatpush1.msra.mxu0 0.0
        %1961 = vmatprep.subr.mxu0 0.0
        %1962 = vmatpush1.msra.mxu0 0.0
        %1963 = vmatprep.subr.mxu0 0.0
        %1964 = vmatpush1.msra.mxu0 0.0
        %1965 = vmatprep.subr.mxu0 0.0
        %1966 = vmatpush1.msra.mxu0 0.0
        %1967 = vmatprep.subr.mxu0 0.0
        %1968 = vmatpush1.msra.mxu0 0.0
        %1969 = vmatprep.subr.mxu0 0.0
        %1970 = vmatpush1.msra.mxu0 0.0
        %1971 = vmatprep.subr.mxu0 0.0
        %1972 = vmatpush1.msra.mxu0 0.0
        %1973 = vmatprep.subr.mxu0 0.0
        %1974 = vmatpush1.msra.mxu0 0.0
        %1975 = vmatprep.subr.mxu0 0.0
        %1976 = vmatpush1.msra.mxu0 0.0
        %1977 = vmatprep.subr.mxu0 0.0
        %1978 = vmatpush1.msra.mxu0 0.0
        %1979 = vmatprep.subr.mxu0 0.0
        %1980 = vmatpush1.msra.mxu0 0.0
        %1981 = vmatprep.subr.mxu0 0.0
        %1982 = vmatpush1.msra.mxu0 0.0
        %1983 = vmatprep.subr.mxu0 0.0
        %1984 = vmatpush1.msra.mxu0 0.0
        %1985 = vmatprep.subr.mxu0 0.0
        %1986 = vmatpush1.msra.mxu0 0.0
        %1987 = vmatprep.subr.mxu0 0.0
        %1988 = vmatpush1.msra.mxu0 0.0
        %1989 = vmatprep.subr.mxu0 0.0
        %1990 = vmatpush1.msra.mxu0 0.0
        %1991 = vmatprep.subr.mxu0 0.0
        %1992 = vmatpush1.msra.mxu0 0.0
        %1993 = vmatprep.subr.mxu0 0.0
        %1994 = vmatpush1.msra.mxu0 0.0
        %1995 = vmatprep.subr.mxu0 0.0
        %1996 = vmatpush1.msra.mxu0 0.0
        %1997 = vmatprep.mubr.f32.mxu0 0.0
        %1998 = vmatmul.mubr.f32.gmra.mrb[0].mxu0 %v1910
        %v1999 = vpop.f32.mrb[0].mxu0
        %v2000 = vadd.f32 0.0, %v1999
        %v2001 = vpop.f32.mrb[0].mxu0
        %v2002 = vadd.f32 0.0, %v2001
        %2003 = vmatprep.mubr.f32.mxu0 0.0
        %2004 = vmatmul.mubr.f32.gmra.mrb[0].mxu0 %v1913
        %v2005 = vpop.f32.mrb[0].mxu0
        %v2006 = vadd.f32 0.0, %v2005
        %v2007 = vpop.f32.mrb[0].mxu0
        %v2008 = vadd.f32 0.0, %v2007
        %2009 = vmatprep.mubr.f32.mxu0 0.0
        %2010 = vmatmul.mubr.f32.gmra.mrb[0].mxu0 %v1916
        %v2011 = vpop.f32.mrb[0].mxu0
        %v2012 = vadd.f32 0.0, %v2011
        %v2013 = vpop.f32.mrb[0].mxu0
        %v2014 = vadd.f32 0.0, %v2013
        %2015 = vmatprep.mubr.f32.mxu0 0.0
        %2016 = vmatmul.mubr.f32.gmra.mrb[0].mxu0 %v1919
        %v2017 = vpop.f32.mrb[0].mxu0
        %v2018 = vadd.f32 0.0, %v2017
        %v2019 = vpop.f32.mrb[0].mxu0
        %v2020 = vadd.f32 0.0, %v2019
        %2021 = vmatprep.mubr.f32.mxu0 0.0
        %2022 = vmatmul.mubr.f32.gmra.mrb[0].mxu0 %v1922
        %v2023 = vpop.f32.mrb[0].mxu0
        %v2024 = vadd.f32 0.0, %v2023
        %v2025 = vpop.f32.mrb[0].mxu0
        %v2026 = vadd.f32 0.0, %v2025
        %2027 = vmatprep.mubr.f32.mxu0 0.0
        %2028 = vmatmul.mubr.f32.gmra.mrb[0].mxu0 %v1925
        %v2029 = vpop.f32.mrb[0].mxu0
        %v2030 = vadd.f32 0.0, %v2029
        %v2031 = vpop.f32.mrb[0].mxu0
        %v2032 = vadd.f32 0.0, %v2031
        %2033 = vmatprep.mubr.f32.mxu0 0.0
        %2034 = vmatmul.mubr.f32.gmra.mrb[0].mxu0 %v1928
        %v2035 = vpop.f32.mrb[0].mxu0
        %v2036 = vadd.f32 0.0, %v2035
        %v2037 = vpop.f32.mrb[0].mxu0
        %v2038 = vadd.f32 0.0, %v2037
        %2039 = vmatprep.mubr.f32.mxu0 0.0
        %2040 = vmatmul.mubr.f32.gmra.mrb[0].mxu0 %v1931
        %v2041 = vpop.f32.mrb[0].mxu0
        %v2042 = vadd.f32 0.0, %v2041
        %v2043 = vpop.f32.mrb[0].mxu0
        %v2044 = vadd.f32 0.0, %v2043
        %2045 = vdwg.mxu0
        %2046 = vmatprep.subr.mxu0 %v1121
        %2047 = vmatpush1.msra.mxu0 %v1120
        %2048 = vmatprep.subr.mxu0 %v1125
        %2049 = vmatpush1.msra.mxu0 %v1124
        %2050 = vmatprep.subr.mxu0 %v1129
        %2051 = vmatpush1.msra.mxu0 %v1128
        %2052 = vmatprep.subr.mxu0 %v1133
        %2053 = vmatpush1.msra.mxu0 %v1132
        %2054 = vmatprep.subr.mxu0 %v1137
        %2055 = vmatpush1.msra.mxu0 %v1136
        %2056 = vmatprep.subr.mxu0 %v1141
        %2057 = vmatpush1.msra.mxu0 %v1140
        %2058 = vmatprep.subr.mxu0 %v1145
        %2059 = vmatpush1.msra.mxu0 %v1144
        %2060 = vmatprep.subr.mxu0 %v1149
        %2061 = vmatpush1.msra.mxu0 %v1148
        %2062 = vmatprep.subr.mxu0 %v1153
        %2063 = vmatpush1.msra.mxu0 %v1152
        %2064 = vmatprep.subr.mxu0 %v1157
        %2065 = vmatpush1.msra.mxu0 %v1156
        %2066 = vmatprep.subr.mxu0 %v1161
        %2067 = vmatpush1.msra.mxu0 %v1160
        %2068 = vmatprep.subr.mxu0 %v1165
        %2069 = vmatpush1.msra.mxu0 %v1164
        %2070 = vmatprep.subr.mxu0 0.0
        %2071 = vmatpush1.msra.mxu0 0.0
        %2072 = vmatprep.subr.mxu0 0.0
        %2073 = vmatpush1.msra.mxu0 0.0
        %2074 = vmatprep.subr.mxu0 0.0
        %2075 = vmatpush1.msra.mxu0 0.0
        %2076 = vmatprep.subr.mxu0 0.0
        %2077 = vmatpush1.msra.mxu0 0.0
        %2078 = vmatprep.subr.mxu0 0.0
        %2079 = vmatpush1.msra.mxu0 0.0
        %2080 = vmatprep.subr.mxu0 0.0
        %2081 = vmatpush1.msra.mxu0 0.0
        %2082 = vmatprep.subr.mxu0 0.0
        %2083 = vmatpush1.msra.mxu0 0.0
        %2084 = vmatprep.subr.mxu0 0.0
        %2085 = vmatpush1.msra.mxu0 0.0
        %2086 = vmatprep.subr.mxu0 0.0
        %2087 = vmatpush1.msra.mxu0 0.0
        %2088 = vmatprep.subr.mxu0 0.0
        %2089 = vmatpush1.msra.mxu0 0.0
        %2090 = vmatprep.subr.mxu0 0.0
        %2091 = vmatpush1.msra.mxu0 0.0
        %2092 = vmatprep.subr.mxu0 0.0
        %2093 = vmatpush1.msra.mxu0 0.0
        %2094 = vmatprep.subr.mxu0 0.0
        %2095 = vmatpush1.msra.mxu0 0.0
        %2096 = vmatprep.subr.mxu0 0.0
        %2097 = vmatpush1.msra.mxu0 0.0
        %2098 = vmatprep.subr.mxu0 0.0
        %2099 = vmatpush1.msra.mxu0 0.0
        %2100 = vmatprep.subr.mxu0 0.0
        %2101 = vmatpush1.msra.mxu0 0.0
        %2102 = vmatprep.subr.mxu0 0.0
        %2103 = vmatpush1.msra.mxu0 0.0
        %2104 = vmatprep.subr.mxu0 0.0
        %2105 = vmatpush1.msra.mxu0 0.0
        %2106 = vmatprep.subr.mxu0 0.0
        %2107 = vmatpush1.msra.mxu0 0.0
        %2108 = vmatprep.subr.mxu0 0.0
        %2109 = vmatpush1.msra.mxu0 0.0
        %2110 = vmatprep.mubr.f32.mxu0 0.0
        %2111 = vmatmul.mubr.f32.gmra.mrb[0].mxu0 %v1910
        %v2112 = vpop.f32.mrb[0].mxu0
        %v2113 = vadd.f32 0.0, %v2112
        %v2114 = vpop.f32.mrb[0].mxu0
        %v2115 = vadd.f32 0.0, %v2114
        %2116 = vmatprep.mubr.f32.mxu0 0.0
        %2117 = vmatmul.mubr.f32.gmra.mrb[0].mxu0 %v1913
        %v2118 = vpop.f32.mrb[0].mxu0
        %v2119 = vadd.f32 0.0, %v2118
        %v2120 = vpop.f32.mrb[0].mxu0
        %v2121 = vadd.f32 0.0, %v2120
        %2122 = vmatprep.mubr.f32.mxu0 0.0
        %2123 = vmatmul.mubr.f32.gmra.mrb[0].mxu0 %v1916
        %v2124 = vpop.f32.mrb[0].mxu0
        %v2125 = vadd.f32 0.0, %v2124
        %v2126 = vpop.f32.mrb[0].mxu0
        %v2127 = vadd.f32 0.0, %v2126
        %2128 = vmatprep.mubr.f32.mxu0 0.0
        %2129 = vmatmul.mubr.f32.gmra.mrb[0].mxu0 %v1919
        %v2130 = vpop.f32.mrb[0].mxu0
        %v2131 = vadd.f32 0.0, %v2130
        %v2132 = vpop.f32.mrb[0].mxu0
        %v2133 = vadd.f32 0.0, %v2132
        %2134 = vmatprep.mubr.f32.mxu0 0.0
        %2135 = vmatmul.mubr.f32.gmra.mrb[0].mxu0 %v1922
        %v2136 = vpop.f32.mrb[0].mxu0
        %v2137 = vadd.f32 0.0, %v2136
        %v2138 = vpop.f32.mrb[0].mxu0
        %v2139 = vadd.f32 0.0, %v2138
        %2140 = vmatprep.mubr.f32.mxu0 0.0
        %2141 = vmatmul.mubr.f32.gmra.mrb[0].mxu0 %v1925
        %v2142 = vpop.f32.mrb[0].mxu0
        %v2143 = vadd.f32 0.0, %v2142
        %v2144 = vpop.f32.mrb[0].mxu0
        %v2145 = vadd.f32 0.0, %v2144
        %2146 = vmatprep.mubr.f32.mxu0 0.0
        %2147 = vmatmul.mubr.f32.gmra.mrb[0].mxu0 %v1928
        %v2148 = vpop.f32.mrb[0].mxu0
        %v2149 = vadd.f32 0.0, %v2148
        %v2150 = vpop.f32.mrb[0].mxu0
        %v2151 = vadd.f32 0.0, %v2150
        %2152 = vmatprep.mubr.f32.mxu0 0.0
        %2153 = vmatmul.mubr.f32.gmra.mrb[0].mxu0 %v1931
        %v2154 = vpop.f32.mrb[0].mxu0
        %v2155 = vadd.f32 0.0, %v2154
        %v2156 = vpop.f32.mrb[0].mxu0
        %v2157 = vadd.f32 0.0, %v2156
        %2158 = vdwg.mxu0
        %v2159 = vadd.f32 %v1741, %v2000
        %v2160 = vadd.f32 %v1743, %v2002
        %v2161 = vadd.f32 %v1854, %v2113
        %v2162 = vadd.f32 %v1856, %v2115
        %v2163 = vadd.f32 %v1747, %v2006
        %v2164 = vadd.f32 %v1749, %v2008
        %v2165 = vadd.f32 %v1860, %v2119
        %v2166 = vadd.f32 %v1862, %v2121
        %v2167 = vadd.f32 %v1753, %v2012
        %v2168 = vadd.f32 %v1755, %v2014
        %v2169 = vadd.f32 %v1866, %v2125
        %v2170 = vadd.f32 %v1868, %v2127
        %v2171 = vadd.f32 %v1759, %v2018
        %v2172 = vadd.f32 %v1761, %v2020
        %v2173 = vadd.f32 %v1872, %v2131
        %v2174 = vadd.f32 %v1874, %v2133
        %v2175 = vadd.f32 %v1765, %v2024
        %v2176 = vadd.f32 %v1767, %v2026
        %v2177 = vadd.f32 %v1878, %v2137
        %v2178 = vadd.f32 %v1880, %v2139
        %v2179 = vadd.f32 %v1771, %v2030
        %v2180 = vadd.f32 %v1773, %v2032
        %v2181 = vadd.f32 %v1884, %v2143
        %v2182 = vadd.f32 %v1886, %v2145
        %v2183 = vadd.f32 %v1777, %v2036
        %v2184 = vadd.f32 %v1779, %v2038
        %v2185 = vadd.f32 %v1890, %v2149
        %v2186 = vadd.f32 %v1892, %v2151
        %v2187 = vadd.f32 %v1783, %v2042
        %v2188 = vadd.f32 %v1785, %v2044
        %v2189 = vadd.f32 %v1896, %v2155
        %v2190 = vadd.f32 %v1898, %v2157
        %v2191 = vld [vmem:[%s1108] sm:$0xff]
        %v2192 = vld [vmem:[%s1108 + $0x8] sm:$0xff]
        %v2193 = vld [vmem:[%s1108 + $0x10] sm:$0xff]
        %v2194 = vld [vmem:[%s1108 + $0x18] sm:$0xff]
        %v2195 = vld [vmem:[%s1108 + $0x20] sm:$0xff]
        %v2196 = vld [vmem:[%s1108 + $0x28] sm:$0xff]
        %v2197 = vld [vmem:[%s1108 + $0x30] sm:$0xff]
        %v2198 = vld [vmem:[%s1108 + $0x38] sm:$0x7f]
        %v2199 = vld [vmem:[%s1900] sm:$0xff]
        %v2200 = vld [vmem:[%s1900 + $0x8] sm:$0xff]
        %v2201 = vld [vmem:[%s1900 + $0x10] sm:$0xff]
        %v2202 = vld [vmem:[%s1900 + $0x18] sm:$0xff]
        %v2203 = vld [vmem:[%s1900 + $0x20] sm:$0xff]
        %v2204 = vld [vmem:[%s1900 + $0x28] sm:$0xff]
        %v2205 = vld [vmem:[%s1900 + $0x30] sm:$0xff]
        %v2206 = vld [vmem:[%s1900 + $0x38] sm:$0x7f]
        %v2208 = vsel %vm607, %v2199, 0
        %v2211 = vsel %vm607, %v2200, 0
        %v2214 = vsel %vm607, %v2201, 0
        %v2217 = vsel %vm607, %v2202, 0
        %v2220 = vsel %vm607, %v2203, 0
        %v2223 = vsel %vm607, %v2204, 0
        %v2226 = vsel %vm607, %v2205, 0
        %v2229 = vsel %vm607, %v2206, 0
        %2231 = vmatprep.subr.mxu0 %v560
        %2232 = vmatpush1.msra.mxu0 %v559
        %2233 = vmatprep.subr.mxu0 %v564
        %2234 = vmatpush1.msra.mxu0 %v563
        %2235 = vmatprep.subr.mxu0 %v568
        %2236 = vmatpush1.msra.mxu0 %v567
        %2237 = vmatprep.subr.mxu0 %v572
        %2238 = vmatpush1.msra.mxu0 %v571
        %2239 = vmatprep.subr.mxu0 %v576
        %2240 = vmatpush1.msra.mxu0 %v575
        %2241 = vmatprep.subr.mxu0 %v580
        %2242 = vmatpush1.msra.mxu0 %v579
        %2243 = vmatprep.subr.mxu0 %v584
        %2244 = vmatpush1.msra.mxu0 %v583
        %2245 = vmatprep.subr.mxu0 %v588
        %2246 = vmatpush1.msra.mxu0 %v587
        %2247 = vmatprep.subr.mxu0 %v592
        %2248 = vmatpush1.msra.mxu0 %v591
        %2249 = vmatprep.subr.mxu0 %v596
        %2250 = vmatpush1.msra.mxu0 %v595
        %2251 = vmatprep.subr.mxu0 %v600
        %2252 = vmatpush1.msra.mxu0 %v599
        %2253 = vmatprep.subr.mxu0 %v604
        %2254 = vmatpush1.msra.mxu0 %v603
        %2255 = vmatprep.subr.mxu0 0.0
        %2256 = vmatpush1.msra.mxu0 0.0
        %2257 = vmatprep.subr.mxu0 0.0
        %2258 = vmatpush1.msra.mxu0 0.0
        %2259 = vmatprep.subr.mxu0 0.0
        %2260 = vmatpush1.msra.mxu0 0.0
        %2261 = vmatprep.subr.mxu0 0.0
        %2262 = vmatpush1.msra.mxu0 0.0
        %2263 = vmatprep.subr.mxu0 0.0
        %2264 = vmatpush1.msra.mxu0 0.0
        %2265 = vmatprep.subr.mxu0 0.0
        %2266 = vmatpush1.msra.mxu0 0.0
        %2267 = vmatprep.subr.mxu0 0.0
        %2268 = vmatpush1.msra.mxu0 0.0
        %2269 = vmatprep.subr.mxu0 0.0
        %2270 = vmatpush1.msra.mxu0 0.0
        %2271 = vmatprep.subr.mxu0 0.0
        %2272 = vmatpush1.msra.mxu0 0.0
        %2273 = vmatprep.subr.mxu0 0.0
        %2274 = vmatpush1.msra.mxu0 0.0
        %2275 = vmatprep.subr.mxu0 0.0
        %2276 = vmatpush1.msra.mxu0 0.0
        %2277 = vmatprep.subr.mxu0 0.0
        %2278 = vmatpush1.msra.mxu0 0.0
        %2279 = vmatprep.subr.mxu0 0.0
        %2280 = vmatpush1.msra.mxu0 0.0
        %2281 = vmatprep.subr.mxu0 0.0
        %2282 = vmatpush1.msra.mxu0 0.0
        %2283 = vmatprep.subr.mxu0 0.0
        %2284 = vmatpush1.msra.mxu0 0.0
        %2285 = vmatprep.subr.mxu0 0.0
        %2286 = vmatpush1.msra.mxu0 0.0
        %2287 = vmatprep.subr.mxu0 0.0
        %2288 = vmatpush1.msra.mxu0 0.0
        %2289 = vmatprep.subr.mxu0 0.0
        %2290 = vmatpush1.msra.mxu0 0.0
        %2291 = vmatprep.subr.mxu0 0.0
        %2292 = vmatpush1.msra.mxu0 0.0
        %2293 = vmatprep.subr.mxu0 0.0
        %2294 = vmatpush1.msra.mxu0 0.0
        %2295 = vmatprep.mubr.f32.mxu0 0.0
        %2296 = vmatmul.mubr.f32.gmra.mrb[0].mxu0 %v2208
        %v2297 = vpop.f32.mrb[0].mxu0
        %v2298 = vadd.f32 0.0, %v2297
        %v2299 = vpop.f32.mrb[0].mxu0
        %v2300 = vadd.f32 0.0, %v2299
        %2301 = vmatprep.mubr.f32.mxu0 0.0
        %2302 = vmatmul.mubr.f32.gmra.mrb[0].mxu0 %v2211
        %v2303 = vpop.f32.mrb[0].mxu0
        %v2304 = vadd.f32 0.0, %v2303
        %v2305 = vpop.f32.mrb[0].mxu0
        %v2306 = vadd.f32 0.0, %v2305
        %2307 = vmatprep.mubr.f32.mxu0 0.0
        %2308 = vmatmul.mubr.f32.gmra.mrb[0].mxu0 %v2214
        %v2309 = vpop.f32.mrb[0].mxu0
        %v2310 = vadd.f32 0.0, %v2309
        %v2311 = vpop.f32.mrb[0].mxu0
        %v2312 = vadd.f32 0.0, %v2311
        %2313 = vmatprep.mubr.f32.mxu0 0.0
        %2314 = vmatmul.mubr.f32.gmra.mrb[0].mxu0 %v2217
        %v2315 = vpop.f32.mrb[0].mxu0
        %v2316 = vadd.f32 0.0, %v2315
        %v2317 = vpop.f32.mrb[0].mxu0
        %v2318 = vadd.f32 0.0, %v2317
        %2319 = vmatprep.mubr.f32.mxu0 0.0
        %2320 = vmatmul.mubr.f32.gmra.mrb[0].mxu0 %v2220
        %v2321 = vpop.f32.mrb[0].mxu0
        %v2322 = vadd.f32 0.0, %v2321
        %v2323 = vpop.f32.mrb[0].mxu0
        %v2324 = vadd.f32 0.0, %v2323
        %2325 = vmatprep.mubr.f32.mxu0 0.0
        %2326 = vmatmul.mubr.f32.gmra.mrb[0].mxu0 %v2223
        %v2327 = vpop.f32.mrb[0].mxu0
        %v2328 = vadd.f32 0.0, %v2327
        %v2329 = vpop.f32.mrb[0].mxu0
        %v2330 = vadd.f32 0.0, %v2329
        %2331 = vmatprep.mubr.f32.mxu0 0.0
        %2332 = vmatmul.mubr.f32.gmra.mrb[0].mxu0 %v2226
        %v2333 = vpop.f32.mrb[0].mxu0
        %v2334 = vadd.f32 0.0, %v2333
        %v2335 = vpop.f32.mrb[0].mxu0
        %v2336 = vadd.f32 0.0, %v2335
        %2337 = vmatprep.mubr.f32.mxu0 0.0
        %2338 = vmatmul.mubr.f32.gmra.mrb[0].mxu0 %v2229
        %v2339 = vpop.f32.mrb[0].mxu0
        %v2340 = vadd.f32 0.0, %v2339
        %v2341 = vpop.f32.mrb[0].mxu0
        %v2342 = vadd.f32 0.0, %v2341
        %2343 = vdwg.mxu0
        %2344 = vmatprep.subr.mxu0 %v562
        %2345 = vmatpush1.msra.mxu0 %v561
        %2346 = vmatprep.subr.mxu0 %v566
        %2347 = vmatpush1.msra.mxu0 %v565
        %2348 = vmatprep.subr.mxu0 %v570
        %2349 = vmatpush1.msra.mxu0 %v569
        %2350 = vmatprep.subr.mxu0 %v574
        %2351 = vmatpush1.msra.mxu0 %v573
        %2352 = vmatprep.subr.mxu0 %v578
        %2353 = vmatpush1.msra.mxu0 %v577
        %2354 = vmatprep.subr.mxu0 %v582
        %2355 = vmatpush1.msra.mxu0 %v581
        %2356 = vmatprep.subr.mxu0 %v586
        %2357 = vmatpush1.msra.mxu0 %v585
        %2358 = vmatprep.subr.mxu0 %v590
        %2359 = vmatpush1.msra.mxu0 %v589
        %2360 = vmatprep.subr.mxu0 %v594
        %2361 = vmatpush1.msra.mxu0 %v593
        %2362 = vmatprep.subr.mxu0 %v598
        %2363 = vmatpush1.msra.mxu0 %v597
        %2364 = vmatprep.subr.mxu0 %v602
        %2365 = vmatpush1.msra.mxu0 %v601
        %2366 = vmatprep.subr.mxu0 %v606
        %2367 = vmatpush1.msra.mxu0 %v605
        %2368 = vmatprep.subr.mxu0 0.0
        %2369 = vmatpush1.msra.mxu0 0.0
        %2370 = vmatprep.subr.mxu0 0.0
        %2371 = vmatpush1.msra.mxu0 0.0
        %2372 = vmatprep.subr.mxu0 0.0
        %2373 = vmatpush1.msra.mxu0 0.0
        %2374 = vmatprep.subr.mxu0 0.0
        %2375 = vmatpush1.msra.mxu0 0.0
        %2376 = vmatprep.subr.mxu0 0.0
        %2377 = vmatpush1.msra.mxu0 0.0
        %2378 = vmatprep.subr.mxu0 0.0
        %2379 = vmatpush1.msra.mxu0 0.0
        %2380 = vmatprep.subr.mxu0 0.0
        %2381 = vmatpush1.msra.mxu0 0.0
        %2382 = vmatprep.subr.mxu0 0.0
        %2383 = vmatpush1.msra.mxu0 0.0
        %2384 = vmatprep.subr.mxu0 0.0
        %2385 = vmatpush1.msra.mxu0 0.0
        %2386 = vmatprep.subr.mxu0 0.0
        %2387 = vmatpush1.msra.mxu0 0.0
        %2388 = vmatprep.subr.mxu0 0.0
        %2389 = vmatpush1.msra.mxu0 0.0
        %2390 = vmatprep.subr.mxu0 0.0
        %2391 = vmatpush1.msra.mxu0 0.0
        %2392 = vmatprep.subr.mxu0 0.0
        %2393 = vmatpush1.msra.mxu0 0.0
        %2394 = vmatprep.subr.mxu0 0.0
        %2395 = vmatpush1.msra.mxu0 0.0
        %2396 = vmatprep.subr.mxu0 0.0
        %2397 = vmatpush1.msra.mxu0 0.0
        %2398 = vmatprep.subr.mxu0 0.0
        %2399 = vmatpush1.msra.mxu0 0.0
        %2400 = vmatprep.subr.mxu0 0.0
        %2401 = vmatpush1.msra.mxu0 0.0
        %2402 = vmatprep.subr.mxu0 0.0
        %2403 = vmatpush1.msra.mxu0 0.0
        %2404 = vmatprep.subr.mxu0 0.0
        %2405 = vmatpush1.msra.mxu0 0.0
        %2406 = vmatprep.subr.mxu0 0.0
        %2407 = vmatpush1.msra.mxu0 0.0
        %2408 = vmatprep.mubr.f32.mxu0 0.0
        %2409 = vmatmul.mubr.f32.gmra.mrb[0].mxu0 %v2208
        %v2410 = vpop.f32.mrb[0].mxu0
        %v2411 = vadd.f32 0.0, %v2410
        %v2412 = vpop.f32.mrb[0].mxu0
        %v2413 = vadd.f32 0.0, %v2412
        %2414 = vmatprep.mubr.f32.mxu0 0.0
        %2415 = vmatmul.mubr.f32.gmra.mrb[0].mxu0 %v2211
        %v2416 = vpop.f32.mrb[0].mxu0
        %v2417 = vadd.f32 0.0, %v2416
        %v2418 = vpop.f32.mrb[0].mxu0
        %v2419 = vadd.f32 0.0, %v2418
        %2420 = vmatprep.mubr.f32.mxu0 0.0
        %2421 = vmatmul.mubr.f32.gmra.mrb[0].mxu0 %v2214
        %v2422 = vpop.f32.mrb[0].mxu0
        %v2423 = vadd.f32 0.0, %v2422
        %v2424 = vpop.f32.mrb[0].mxu0
        %v2425 = vadd.f32 0.0, %v2424
        %2426 = vmatprep.mubr.f32.mxu0 0.0
        %2427 = vmatmul.mubr.f32.gmra.mrb[0].mxu0 %v2217
        %v2428 = vpop.f32.mrb[0].mxu0
        %v2429 = vadd.f32 0.0, %v2428
        %v2430 = vpop.f32.mrb[0].mxu0
        %v2431 = vadd.f32 0.0, %v2430
        %2432 = vmatprep.mubr.f32.mxu0 0.0
        %2433 = vmatmul.mubr.f32.gmra.mrb[0].mxu0 %v2220
        %v2434 = vpop.f32.mrb[0].mxu0
        %v2435 = vadd.f32 0.0, %v2434
        %v2436 = vpop.f32.mrb[0].mxu0
        %v2437 = vadd.f32 0.0, %v2436
        %2438 = vmatprep.mubr.f32.mxu0 0.0
        %2439 = vmatmul.mubr.f32.gmra.mrb[0].mxu0 %v2223
        %v2440 = vpop.f32.mrb[0].mxu0
        %v2441 = vadd.f32 0.0, %v2440
        %v2442 = vpop.f32.mrb[0].mxu0
        %v2443 = vadd.f32 0.0, %v2442
        %2444 = vmatprep.mubr.f32.mxu0 0.0
        %2445 = vmatmul.mubr.f32.gmra.mrb[0].mxu0 %v2226
        %v2446 = vpop.f32.mrb[0].mxu0
        %v2447 = vadd.f32 0.0, %v2446
        %v2448 = vpop.f32.mrb[0].mxu0
        %v2449 = vadd.f32 0.0, %v2448
        %2450 = vmatprep.mubr.f32.mxu0 0.0
        %2451 = vmatmul.mubr.f32.gmra.mrb[0].mxu0 %v2229
        %v2452 = vpop.f32.mrb[0].mxu0
        %v2453 = vadd.f32 0.0, %v2452
        %v2454 = vpop.f32.mrb[0].mxu0
        %v2455 = vadd.f32 0.0, %v2454
        %2456 = vdwg.mxu0
        %v2458 = vsel %vm607, %v2191, 0
        %v2461 = vsel %vm607, %v2192, 0
        %v2464 = vsel %vm607, %v2193, 0
        %v2467 = vsel %vm607, %v2194, 0
        %v2470 = vsel %vm607, %v2195, 0
        %v2473 = vsel %vm607, %v2196, 0
        %v2476 = vsel %vm607, %v2197, 0
        %v2479 = vsel %vm607, %v2198, 0
        %2481 = vmatprep.subr.mxu0 %v502
        %2482 = vmatpush1.msra.mxu0 %v501
        %2483 = vmatprep.subr.mxu0 %v506
        %2484 = vmatpush1.msra.mxu0 %v505
        %2485 = vmatprep.subr.mxu0 %v510
        %2486 = vmatpush1.msra.mxu0 %v509
        %2487 = vmatprep.subr.mxu0 %v514
        %2488 = vmatpush1.msra.mxu0 %v513
        %2489 = vmatprep.subr.mxu0 %v518
        %2490 = vmatpush1.msra.mxu0 %v517
        %2491 = vmatprep.subr.mxu0 %v522
        %2492 = vmatpush1.msra.mxu0 %v521
        %2493 = vmatprep.subr.mxu0 %v526
        %2494 = vmatpush1.msra.mxu0 %v525
        %2495 = vmatprep.subr.mxu0 %v530
        %2496 = vmatpush1.msra.mxu0 %v529
        %2497 = vmatprep.subr.mxu0 %v534
        %2498 = vmatpush1.msra.mxu0 %v533
        %2499 = vmatprep.subr.mxu0 %v538
        %2500 = vmatpush1.msra.mxu0 %v537
        %2501 = vmatprep.subr.mxu0 %v542
        %2502 = vmatpush1.msra.mxu0 %v541
        %2503 = vmatprep.subr.mxu0 %v546
        %2504 = vmatpush1.msra.mxu0 %v545
        %2505 = vmatprep.subr.mxu0 0.0
        %2506 = vmatpush1.msra.mxu0 0.0
        %2507 = vmatprep.subr.mxu0 0.0
        %2508 = vmatpush1.msra.mxu0 0.0
        %2509 = vmatprep.subr.mxu0 0.0
        %2510 = vmatpush1.msra.mxu0 0.0
        %2511 = vmatprep.subr.mxu0 0.0
        %2512 = vmatpush1.msra.mxu0 0.0
        %2513 = vmatprep.subr.mxu0 0.0
        %2514 = vmatpush1.msra.mxu0 0.0
        %2515 = vmatprep.subr.mxu0 0.0
        %2516 = vmatpush1.msra.mxu0 0.0
        %2517 = vmatprep.subr.mxu0 0.0
        %2518 = vmatpush1.msra.mxu0 0.0
        %2519 = vmatprep.subr.mxu0 0.0
        %2520 = vmatpush1.msra.mxu0 0.0
        %2521 = vmatprep.subr.mxu0 0.0
        %2522 = vmatpush1.msra.mxu0 0.0
        %2523 = vmatprep.subr.mxu0 0.0
        %2524 = vmatpush1.msra.mxu0 0.0
        %2525 = vmatprep.subr.mxu0 0.0
        %2526 = vmatpush1.msra.mxu0 0.0
        %2527 = vmatprep.subr.mxu0 0.0
        %2528 = vmatpush1.msra.mxu0 0.0
        %2529 = vmatprep.subr.mxu0 0.0
        %2530 = vmatpush1.msra.mxu0 0.0
        %2531 = vmatprep.subr.mxu0 0.0
        %2532 = vmatpush1.msra.mxu0 0.0
        %2533 = vmatprep.subr.mxu0 0.0
        %2534 = vmatpush1.msra.mxu0 0.0
        %2535 = vmatprep.subr.mxu0 0.0
        %2536 = vmatpush1.msra.mxu0 0.0
        %2537 = vmatprep.subr.mxu0 0.0
        %2538 = vmatpush1.msra.mxu0 0.0
        %2539 = vmatprep.subr.mxu0 0.0
        %2540 = vmatpush1.msra.mxu0 0.0
        %2541 = vmatprep.subr.mxu0 0.0
        %2542 = vmatpush1.msra.mxu0 0.0
        %2543 = vmatprep.subr.mxu0 0.0
        %2544 = vmatpush1.msra.mxu0 0.0
        %2545 = vmatprep.mubr.f32.mxu0 0.0
        %2546 = vmatmul.mubr.f32.gmra.mrb[0].mxu0 %v2458
        %v2547 = vpop.f32.mrb[0].mxu0
        %v2548 = vadd.f32 %v2298, %v2547
        %v2549 = vpop.f32.mrb[0].mxu0
        %v2550 = vadd.f32 %v2300, %v2549
        %2551 = vmatprep.mubr.f32.mxu0 0.0
        %2552 = vmatmul.mubr.f32.gmra.mrb[0].mxu0 %v2461
        %v2553 = vpop.f32.mrb[0].mxu0
        %v2554 = vadd.f32 %v2304, %v2553
        %v2555 = vpop.f32.mrb[0].mxu0
        %v2556 = vadd.f32 %v2306, %v2555
        %2557 = vmatprep.mubr.f32.mxu0 0.0
        %2558 = vmatmul.mubr.f32.gmra.mrb[0].mxu0 %v2464
        %v2559 = vpop.f32.mrb[0].mxu0
        %v2560 = vadd.f32 %v2310, %v2559
        %v2561 = vpop.f32.mrb[0].mxu0
        %v2562 = vadd.f32 %v2312, %v2561
        %2563 = vmatprep.mubr.f32.mxu0 0.0
        %2564 = vmatmul.mubr.f32.gmra.mrb[0].mxu0 %v2467
        %v2565 = vpop.f32.mrb[0].mxu0
        %v2566 = vadd.f32 %v2316, %v2565
        %v2567 = vpop.f32.mrb[0].mxu0
        %v2568 = vadd.f32 %v2318, %v2567
        %2569 = vmatprep.mubr.f32.mxu0 0.0
        %2570 = vmatmul.mubr.f32.gmra.mrb[0].mxu0 %v2470
        %v2571 = vpop.f32.mrb[0].mxu0
        %v2572 = vadd.f32 %v2322, %v2571
        %v2573 = vpop.f32.mrb[0].mxu0
        %v2574 = vadd.f32 %v2324, %v2573
        %2575 = vmatprep.mubr.f32.mxu0 0.0
        %2576 = vmatmul.mubr.f32.gmra.mrb[0].mxu0 %v2473
        %v2577 = vpop.f32.mrb[0].mxu0
        %v2578 = vadd.f32 %v2328, %v2577
        %v2579 = vpop.f32.mrb[0].mxu0
        %v2580 = vadd.f32 %v2330, %v2579
        %2581 = vmatprep.mubr.f32.mxu0 0.0
        %2582 = vmatmul.mubr.f32.gmra.mrb[0].mxu0 %v2476
        %v2583 = vpop.f32.mrb[0].mxu0
        %v2584 = vadd.f32 %v2334, %v2583
        %v2585 = vpop.f32.mrb[0].mxu0
        %v2586 = vadd.f32 %v2336, %v2585
        %2587 = vmatprep.mubr.f32.mxu0 0.0
        %2588 = vmatmul.mubr.f32.gmra.mrb[0].mxu0 %v2479
        %v2589 = vpop.f32.mrb[0].mxu0
        %v2590 = vadd.f32 %v2340, %v2589
        %v2591 = vpop.f32.mrb[0].mxu0
        %v2592 = vadd.f32 %v2342, %v2591
        %2593 = vdwg.mxu0
        %2594 = vmatprep.subr.mxu0 %v504
        %2595 = vmatpush1.msra.mxu0 %v503
        %2596 = vmatprep.subr.mxu0 %v508
        %2597 = vmatpush1.msra.mxu0 %v507
        %2598 = vmatprep.subr.mxu0 %v512
        %2599 = vmatpush1.msra.mxu0 %v511
        %2600 = vmatprep.subr.mxu0 %v516
        %2601 = vmatpush1.msra.mxu0 %v515
        %2602 = vmatprep.subr.mxu0 %v520
        %2603 = vmatpush1.msra.mxu0 %v519
        %2604 = vmatprep.subr.mxu0 %v524
        %2605 = vmatpush1.msra.mxu0 %v523
        %2606 = vmatprep.subr.mxu0 %v528
        %2607 = vmatpush1.msra.mxu0 %v527
        %2608 = vmatprep.subr.mxu0 %v532
        %2609 = vmatpush1.msra.mxu0 %v531
        %2610 = vmatprep.subr.mxu0 %v536
        %2611 = vmatpush1.msra.mxu0 %v535
        %2612 = vmatprep.subr.mxu0 %v540
        %2613 = vmatpush1.msra.mxu0 %v539
        %2614 = vmatprep.subr.mxu0 %v544
        %2615 = vmatpush1.msra.mxu0 %v543
        %2616 = vmatprep.subr.mxu0 %v548
        %2617 = vmatpush1.msra.mxu0 %v547
        %2618 = vmatprep.subr.mxu0 0.0
        %2619 = vmatpush1.msra.mxu0 0.0
        %2620 = vmatprep.subr.mxu0 0.0
        %2621 = vmatpush1.msra.mxu0 0.0
        %2622 = vmatprep.subr.mxu0 0.0
        %2623 = vmatpush1.msra.mxu0 0.0
        %2624 = vmatprep.subr.mxu0 0.0
        %2625 = vmatpush1.msra.mxu0 0.0
        %2626 = vmatprep.subr.mxu0 0.0
        %2627 = vmatpush1.msra.mxu0 0.0
        %2628 = vmatprep.subr.mxu0 0.0
        %2629 = vmatpush1.msra.mxu0 0.0
        %2630 = vmatprep.subr.mxu0 0.0
        %2631 = vmatpush1.msra.mxu0 0.0
        %2632 = vmatprep.subr.mxu0 0.0
        %2633 = vmatpush1.msra.mxu0 0.0
        %2634 = vmatprep.subr.mxu0 0.0
        %2635 = vmatpush1.msra.mxu0 0.0
        %2636 = vmatprep.subr.mxu0 0.0
        %2637 = vmatpush1.msra.mxu0 0.0
        %2638 = vmatprep.subr.mxu0 0.0
        %2639 = vmatpush1.msra.mxu0 0.0
        %2640 = vmatprep.subr.mxu0 0.0
        %2641 = vmatpush1.msra.mxu0 0.0
        %2642 = vmatprep.subr.mxu0 0.0
        %2643 = vmatpush1.msra.mxu0 0.0
        %2644 = vmatprep.subr.mxu0 0.0
        %2645 = vmatpush1.msra.mxu0 0.0
        %2646 = vmatprep.subr.mxu0 0.0
        %2647 = vmatpush1.msra.mxu0 0.0
        %2648 = vmatprep.subr.mxu0 0.0
        %2649 = vmatpush1.msra.mxu0 0.0
        %2650 = vmatprep.subr.mxu0 0.0
        %2651 = vmatpush1.msra.mxu0 0.0
        %2652 = vmatprep.subr.mxu0 0.0
        %2653 = vmatpush1.msra.mxu0 0.0
        %2654 = vmatprep.subr.mxu0 0.0
        %2655 = vmatpush1.msra.mxu0 0.0
        %2656 = vmatprep.subr.mxu0 0.0
        %2657 = vmatpush1.msra.mxu0 0.0
        %2658 = vmatprep.mubr.f32.mxu0 0.0
        %2659 = vmatmul.mubr.f32.gmra.mrb[0].mxu0 %v2458
        %v2660 = vpop.f32.mrb[0].mxu0
        %v2661 = vadd.f32 %v2411, %v2660
        %v2662 = vpop.f32.mrb[0].mxu0
        %v2663 = vadd.f32 %v2413, %v2662
        %2664 = vmatprep.mubr.f32.mxu0 0.0
        %2665 = vmatmul.mubr.f32.gmra.mrb[0].mxu0 %v2461
        %v2666 = vpop.f32.mrb[0].mxu0
        %v2667 = vadd.f32 %v2417, %v2666
        %v2668 = vpop.f32.mrb[0].mxu0
        %v2669 = vadd.f32 %v2419, %v2668
        %2670 = vmatprep.mubr.f32.mxu0 0.0
        %2671 = vmatmul.mubr.f32.gmra.mrb[0].mxu0 %v2464
        %v2672 = vpop.f32.mrb[0].mxu0
        %v2673 = vadd.f32 %v2423, %v2672
        %v2674 = vpop.f32.mrb[0].mxu0
        %v2675 = vadd.f32 %v2425, %v2674
        %2676 = vmatprep.mubr.f32.mxu0 0.0
        %2677 = vmatmul.mubr.f32.gmra.mrb[0].mxu0 %v2467
        %v2678 = vpop.f32.mrb[0].mxu0
        %v2679 = vadd.f32 %v2429, %v2678
        %v2680 = vpop.f32.mrb[0].mxu0
        %v2681 = vadd.f32 %v2431, %v2680
        %2682 = vmatprep.mubr.f32.mxu0 0.0
        %2683 = vmatmul.mubr.f32.gmra.mrb[0].mxu0 %v2470
        %v2684 = vpop.f32.mrb[0].mxu0
        %v2685 = vadd.f32 %v2435, %v2684
        %v2686 = vpop.f32.mrb[0].mxu0
        %v2687 = vadd.f32 %v2437, %v2686
        %2688 = vmatprep.mubr.f32.mxu0 0.0
        %2689 = vmatmul.mubr.f32.gmra.mrb[0].mxu0 %v2473
        %v2690 = vpop.f32.mrb[0].mxu0
        %v2691 = vadd.f32 %v2441, %v2690
        %v2692 = vpop.f32.mrb[0].mxu0
        %v2693 = vadd.f32 %v2443, %v2692
        %2694 = vmatprep.mubr.f32.mxu0 0.0
        %2695 = vmatmul.mubr.f32.gmra.mrb[0].mxu0 %v2476
        %v2696 = vpop.f32.mrb[0].mxu0
        %v2697 = vadd.f32 %v2447, %v2696
        %v2698 = vpop.f32.mrb[0].mxu0
        %v2699 = vadd.f32 %v2449, %v2698
        %2700 = vmatprep.mubr.f32.mxu0 0.0
        %2701 = vmatmul.mubr.f32.gmra.mrb[0].mxu0 %v2479
        %v2702 = vpop.f32.mrb[0].mxu0
        %v2703 = vadd.f32 %v2453, %v2702
        %v2704 = vpop.f32.mrb[0].mxu0
        %v2705 = vadd.f32 %v2455, %v2704
        %2706 = vdwg.mxu0
        %v2707 = vld [vmem:[%s457 + $0x1] sm:$0xff]
        %v2708 = vld [vmem:[%s457 + $0x9] sm:$0xff]
        %v2709 = vld [vmem:[%s457 + $0x11] sm:$0xff]
        %v2710 = vld [vmem:[%s457 + $0x19] sm:$0xff]
        %v2711 = vld [vmem:[%s457 + $0x21] sm:$0xff]
        %v2712 = vld [vmem:[%s457 + $0x29] sm:$0xff]
        %v2713 = vld [vmem:[%s457 + $0x31] sm:$0xff]
        %v2714 = vld [vmem:[%s457 + $0x39] sm:$0x7f]
        %v2716 = vsel %vm607, %v2707, 0
        %v2719 = vsel %vm607, %v2708, 0
        %v2722 = vsel %vm607, %v2709, 0
        %v2725 = vsel %vm607, %v2710, 0
        %v2728 = vsel %vm607, %v2711, 0
        %v2731 = vsel %vm607, %v2712, 0
        %v2734 = vsel %vm607, %v2713, 0
        %v2737 = vsel %vm607, %v2714, 0
        %2739 = vmatprep.subr.mxu0 %v1119
        %2740 = vmatpush1.msra.mxu0 %v1118
        %2741 = vmatprep.subr.mxu0 %v1123
        %2742 = vmatpush1.msra.mxu0 %v1122
        %2743 = vmatprep.subr.mxu0 %v1127
        %2744 = vmatpush1.msra.mxu0 %v1126
        %2745 = vmatprep.subr.mxu0 %v1131
        %2746 = vmatpush1.msra.mxu0 %v1130
        %2747 = vmatprep.subr.mxu0 %v1135
        %2748 = vmatpush1.msra.mxu0 %v1134
        %2749 = vmatprep.subr.mxu0 %v1139
        %2750 = vmatpush1.msra.mxu0 %v1138
        %2751 = vmatprep.subr.mxu0 %v1143
        %2752 = vmatpush1.msra.mxu0 %v1142
        %2753 = vmatprep.subr.mxu0 %v1147
        %2754 = vmatpush1.msra.mxu0 %v1146
        %2755 = vmatprep.subr.mxu0 %v1151
        %2756 = vmatpush1.msra.mxu0 %v1150
        %2757 = vmatprep.subr.mxu0 %v1155
        %2758 = vmatpush1.msra.mxu0 %v1154
        %2759 = vmatprep.subr.mxu0 %v1159
        %2760 = vmatpush1.msra.mxu0 %v1158
        %2761 = vmatprep.subr.mxu0 %v1163
        %2762 = vmatpush1.msra.mxu0 %v1162
        %2763 = vmatprep.subr.mxu0 0.0
        %2764 = vmatpush1.msra.mxu0 0.0
        %2765 = vmatprep.subr.mxu0 0.0
        %2766 = vmatpush1.msra.mxu0 0.0
        %2767 = vmatprep.subr.mxu0 0.0
        %2768 = vmatpush1.msra.mxu0 0.0
        %2769 = vmatprep.subr.mxu0 0.0
        %2770 = vmatpush1.msra.mxu0 0.0
        %2771 = vmatprep.subr.mxu0 0.0
        %2772 = vmatpush1.msra.mxu0 0.0
        %2773 = vmatprep.subr.mxu0 0.0
        %2774 = vmatpush1.msra.mxu0 0.0
        %2775 = vmatprep.subr.mxu0 0.0
        %2776 = vmatpush1.msra.mxu0 0.0
        %2777 = vmatprep.subr.mxu0 0.0
        %2778 = vmatpush1.msra.mxu0 0.0
        %2779 = vmatprep.subr.mxu0 0.0
        %2780 = vmatpush1.msra.mxu0 0.0
        %2781 = vmatprep.subr.mxu0 0.0
        %2782 = vmatpush1.msra.mxu0 0.0
        %2783 = vmatprep.subr.mxu0 0.0
        %2784 = vmatpush1.msra.mxu0 0.0
        %2785 = vmatprep.subr.mxu0 0.0
        %2786 = vmatpush1.msra.mxu0 0.0
        %2787 = vmatprep.subr.mxu0 0.0
        %2788 = vmatpush1.msra.mxu0 0.0
        %2789 = vmatprep.subr.mxu0 0.0
        %2790 = vmatpush1.msra.mxu0 0.0
        %2791 = vmatprep.subr.mxu0 0.0
        %2792 = vmatpush1.msra.mxu0 0.0
        %2793 = vmatprep.subr.mxu0 0.0
        %2794 = vmatpush1.msra.mxu0 0.0
        %2795 = vmatprep.subr.mxu0 0.0
        %2796 = vmatpush1.msra.mxu0 0.0
        %2797 = vmatprep.subr.mxu0 0.0
        %2798 = vmatpush1.msra.mxu0 0.0
        %2799 = vmatprep.subr.mxu0 0.0
        %2800 = vmatpush1.msra.mxu0 0.0
        %2801 = vmatprep.subr.mxu0 0.0
        %2802 = vmatpush1.msra.mxu0 0.0
        %2803 = vmatprep.mubr.f32.mxu0 0.0
        %2804 = vmatmul.mubr.f32.gmra.mrb[0].mxu0 %v2716
        %v2805 = vpop.f32.mrb[0].mxu0
        %v2806 = vadd.f32 0.0, %v2805
        %v2807 = vpop.f32.mrb[0].mxu0
        %v2808 = vadd.f32 0.0, %v2807
        %2809 = vmatprep.mubr.f32.mxu0 0.0
        %2810 = vmatmul.mubr.f32.gmra.mrb[0].mxu0 %v2719
        %v2811 = vpop.f32.mrb[0].mxu0
        %v2812 = vadd.f32 0.0, %v2811
        %v2813 = vpop.f32.mrb[0].mxu0
        %v2814 = vadd.f32 0.0, %v2813
        %2815 = vmatprep.mubr.f32.mxu0 0.0
        %2816 = vmatmul.mubr.f32.gmra.mrb[0].mxu0 %v2722
        %v2817 = vpop.f32.mrb[0].mxu0
        %v2818 = vadd.f32 0.0, %v2817
        %v2819 = vpop.f32.mrb[0].mxu0
        %v2820 = vadd.f32 0.0, %v2819
        %2821 = vmatprep.mubr.f32.mxu0 0.0
        %2822 = vmatmul.mubr.f32.gmra.mrb[0].mxu0 %v2725
        %v2823 = vpop.f32.mrb[0].mxu0
        %v2824 = vadd.f32 0.0, %v2823
        %v2825 = vpop.f32.mrb[0].mxu0
        %v2826 = vadd.f32 0.0, %v2825
        %2827 = vmatprep.mubr.f32.mxu0 0.0
        %2828 = vmatmul.mubr.f32.gmra.mrb[0].mxu0 %v2728
        %v2829 = vpop.f32.mrb[0].mxu0
        %v2830 = vadd.f32 0.0, %v2829
        %v2831 = vpop.f32.mrb[0].mxu0
        %v2832 = vadd.f32 0.0, %v2831
        %2833 = vmatprep.mubr.f32.mxu0 0.0
        %2834 = vmatmul.mubr.f32.gmra.mrb[0].mxu0 %v2731
        %v2835 = vpop.f32.mrb[0].mxu0
        %v2836 = vadd.f32 0.0, %v2835
        %v2837 = vpop.f32.mrb[0].mxu0
        %v2838 = vadd.f32 0.0, %v2837
        %2839 = vmatprep.mubr.f32.mxu0 0.0
        %2840 = vmatmul.mubr.f32.gmra.mrb[0].mxu0 %v2734
        %v2841 = vpop.f32.mrb[0].mxu0
        %v2842 = vadd.f32 0.0, %v2841
        %v2843 = vpop.f32.mrb[0].mxu0
        %v2844 = vadd.f32 0.0, %v2843
        %2845 = vmatprep.mubr.f32.mxu0 0.0
        %2846 = vmatmul.mubr.f32.gmra.mrb[0].mxu0 %v2737
        %v2847 = vpop.f32.mrb[0].mxu0
        %v2848 = vadd.f32 0.0, %v2847
        %v2849 = vpop.f32.mrb[0].mxu0
        %v2850 = vadd.f32 0.0, %v2849
        %2851 = vdwg.mxu0
        %2852 = vmatprep.subr.mxu0 %v1121
        %2853 = vmatpush1.msra.mxu0 %v1120
        %2854 = vmatprep.subr.mxu0 %v1125
        %2855 = vmatpush1.msra.mxu0 %v1124
        %2856 = vmatprep.subr.mxu0 %v1129
        %2857 = vmatpush1.msra.mxu0 %v1128
        %2858 = vmatprep.subr.mxu0 %v1133
        %2859 = vmatpush1.msra.mxu0 %v1132
        %2860 = vmatprep.subr.mxu0 %v1137
        %2861 = vmatpush1.msra.mxu0 %v1136
        %2862 = vmatprep.subr.mxu0 %v1141
        %2863 = vmatpush1.msra.mxu0 %v1140
        %2864 = vmatprep.subr.mxu0 %v1145
        %2865 = vmatpush1.msra.mxu0 %v1144
        %2866 = vmatprep.subr.mxu0 %v1149
        %2867 = vmatpush1.msra.mxu0 %v1148
        %2868 = vmatprep.subr.mxu0 %v1153
        %2869 = vmatpush1.msra.mxu0 %v1152
        %2870 = vmatprep.subr.mxu0 %v1157
        %2871 = vmatpush1.msra.mxu0 %v1156
        %2872 = vmatprep.subr.mxu0 %v1161
        %2873 = vmatpush1.msra.mxu0 %v1160
        %2874 = vmatprep.subr.mxu0 %v1165
        %2875 = vmatpush1.msra.mxu0 %v1164
        %2876 = vmatprep.subr.mxu0 0.0
        %2877 = vmatpush1.msra.mxu0 0.0
        %2878 = vmatprep.subr.mxu0 0.0
        %2879 = vmatpush1.msra.mxu0 0.0
        %2880 = vmatprep.subr.mxu0 0.0
        %2881 = vmatpush1.msra.mxu0 0.0
        %2882 = vmatprep.subr.mxu0 0.0
        %2883 = vmatpush1.msra.mxu0 0.0
        %2884 = vmatprep.subr.mxu0 0.0
        %2885 = vmatpush1.msra.mxu0 0.0
        %2886 = vmatprep.subr.mxu0 0.0
        %2887 = vmatpush1.msra.mxu0 0.0
        %2888 = vmatprep.subr.mxu0 0.0
        %2889 = vmatpush1.msra.mxu0 0.0
        %2890 = vmatprep.subr.mxu0 0.0
        %2891 = vmatpush1.msra.mxu0 0.0
        %2892 = vmatprep.subr.mxu0 0.0
        %2893 = vmatpush1.msra.mxu0 0.0
        %2894 = vmatprep.subr.mxu0 0.0
        %2895 = vmatpush1.msra.mxu0 0.0
        %2896 = vmatprep.subr.mxu0 0.0
        %2897 = vmatpush1.msra.mxu0 0.0
        %2898 = vmatprep.subr.mxu0 0.0
        %2899 = vmatpush1.msra.mxu0 0.0
        %2900 = vmatprep.subr.mxu0 0.0
        %2901 = vmatpush1.msra.mxu0 0.0
        %2902 = vmatprep.subr.mxu0 0.0
        %2903 = vmatpush1.msra.mxu0 0.0
        %2904 = vmatprep.subr.mxu0 0.0
        %2905 = vmatpush1.msra.mxu0 0.0
        %2906 = vmatprep.subr.mxu0 0.0
        %2907 = vmatpush1.msra.mxu0 0.0
        %2908 = vmatprep.subr.mxu0 0.0
        %2909 = vmatpush1.msra.mxu0 0.0
        %2910 = vmatprep.subr.mxu0 0.0
        %2911 = vmatpush1.msra.mxu0 0.0
        %2912 = vmatprep.subr.mxu0 0.0
        %2913 = vmatpush1.msra.mxu0 0.0
        %2914 = vmatprep.subr.mxu0 0.0
        %2915 = vmatpush1.msra.mxu0 0.0
        %2916 = vmatprep.mubr.f32.mxu0 0.0
        %2917 = vmatmul.mubr.f32.gmra.mrb[0].mxu0 %v2716
        %v2918 = vpop.f32.mrb[0].mxu0
        %v2919 = vadd.f32 0.0, %v2918
        %v2920 = vpop.f32.mrb[0].mxu0
        %v2921 = vadd.f32 0.0, %v2920
        %2922 = vmatprep.mubr.f32.mxu0 0.0
        %2923 = vmatmul.mubr.f32.gmra.mrb[0].mxu0 %v2719
        %v2924 = vpop.f32.mrb[0].mxu0
        %v2925 = vadd.f32 0.0, %v2924
        %v2926 = vpop.f32.mrb[0].mxu0
        %v2927 = vadd.f32 0.0, %v2926
        %2928 = vmatprep.mubr.f32.mxu0 0.0
        %2929 = vmatmul.mubr.f32.gmra.mrb[0].mxu0 %v2722
        %v2930 = vpop.f32.mrb[0].mxu0
        %v2931 = vadd.f32 0.0, %v2930
        %v2932 = vpop.f32.mrb[0].mxu0
        %v2933 = vadd.f32 0.0, %v2932
        %2934 = vmatprep.mubr.f32.mxu0 0.0
        %2935 = vmatmul.mubr.f32.gmra.mrb[0].mxu0 %v2725
        %v2936 = vpop.f32.mrb[0].mxu0
        %v2937 = vadd.f32 0.0, %v2936
        %v2938 = vpop.f32.mrb[0].mxu0
        %v2939 = vadd.f32 0.0, %v2938
        %2940 = vmatprep.mubr.f32.mxu0 0.0
        %2941 = vmatmul.mubr.f32.gmra.mrb[0].mxu0 %v2728
        %v2942 = vpop.f32.mrb[0].mxu0
        %v2943 = vadd.f32 0.0, %v2942
        %v2944 = vpop.f32.mrb[0].mxu0
        %v2945 = vadd.f32 0.0, %v2944
        %2946 = vmatprep.mubr.f32.mxu0 0.0
        %2947 = vmatmul.mubr.f32.gmra.mrb[0].mxu0 %v2731
        %v2948 = vpop.f32.mrb[0].mxu0
        %v2949 = vadd.f32 0.0, %v2948
        %v2950 = vpop.f32.mrb[0].mxu0
        %v2951 = vadd.f32 0.0, %v2950
        %2952 = vmatprep.mubr.f32.mxu0 0.0
        %2953 = vmatmul.mubr.f32.gmra.mrb[0].mxu0 %v2734
        %v2954 = vpop.f32.mrb[0].mxu0
        %v2955 = vadd.f32 0.0, %v2954
        %v2956 = vpop.f32.mrb[0].mxu0
        %v2957 = vadd.f32 0.0, %v2956
        %2958 = vmatprep.mubr.f32.mxu0 0.0
        %2959 = vmatmul.mubr.f32.gmra.mrb[0].mxu0 %v2737
        %v2960 = vpop.f32.mrb[0].mxu0
        %v2961 = vadd.f32 0.0, %v2960
        %v2962 = vpop.f32.mrb[0].mxu0
        %v2963 = vadd.f32 0.0, %v2962
        %2964 = vdwg.mxu0
        %v2965 = vadd.f32 %v2548, %v2806
        %v2966 = vadd.f32 %v2550, %v2808
        %v2967 = vadd.f32 %v2661, %v2919
        %v2968 = vadd.f32 %v2663, %v2921
        %v2969 = vadd.f32 %v2554, %v2812
        %v2970 = vadd.f32 %v2556, %v2814
        %v2971 = vadd.f32 %v2667, %v2925
        %v2972 = vadd.f32 %v2669, %v2927
        %v2973 = vadd.f32 %v2560, %v2818
        %v2974 = vadd.f32 %v2562, %v2820
        %v2975 = vadd.f32 %v2673, %v2931
        %v2976 = vadd.f32 %v2675, %v2933
        %v2977 = vadd.f32 %v2566, %v2824
        %v2978 = vadd.f32 %v2568, %v2826
        %v2979 = vadd.f32 %v2679, %v2937
        %v2980 = vadd.f32 %v2681, %v2939
        %v2981 = vadd.f32 %v2572, %v2830
        %v2982 = vadd.f32 %v2574, %v2832
        %v2983 = vadd.f32 %v2685, %v2943
        %v2984 = vadd.f32 %v2687, %v2945
        %v2985 = vadd.f32 %v2578, %v2836
        %v2986 = vadd.f32 %v2580, %v2838
        %v2987 = vadd.f32 %v2691, %v2949
        %v2988 = vadd.f32 %v2693, %v2951
        %v2989 = vadd.f32 %v2584, %v2842
        %v2990 = vadd.f32 %v2586, %v2844
        %v2991 = vadd.f32 %v2697, %v2955
        %v2992 = vadd.f32 %v2699, %v2957
        %v2993 = vadd.f32 %v2590, %v2848
        %v2994 = vadd.f32 %v2592, %v2850
        %v2995 = vadd.f32 %v2703, %v2961
        %v2996 = vadd.f32 %v2705, %v2963
        %2997 = vmatprep.subr.mxu0 %v560
        %2998 = vmatpush1.msra.mxu0 %v559
        %2999 = vmatprep.subr.mxu0 %v564
        %3000 = vmatpush1.msra.mxu0 %v563
        %3001 = vmatprep.subr.mxu0 %v568
        %3002 = vmatpush1.msra.mxu0 %v567
        %3003 = vmatprep.subr.mxu0 %v572
        %3004 = vmatpush1.msra.mxu0 %v571
        %3005 = vmatprep.subr.mxu0 %v576
        %3006 = vmatpush1.msra.mxu0 %v575
        %3007 = vmatprep.subr.mxu0 %v580
        %3008 = vmatpush1.msra.mxu0 %v579
        %3009 = vmatprep.subr.mxu0 %v584
        %3010 = vmatpush1.msra.mxu0 %v583
        %3011 = vmatprep.subr.mxu0 %v588
        %3012 = vmatpush1.msra.mxu0 %v587
        %3013 = vmatprep.subr.mxu0 %v592
        %3014 = vmatpush1.msra.mxu0 %v591
        %3015 = vmatprep.subr.mxu0 %v596
        %3016 = vmatpush1.msra.mxu0 %v595
        %3017 = vmatprep.subr.mxu0 %v600
        %3018 = vmatpush1.msra.mxu0 %v599
        %3019 = vmatprep.subr.mxu0 %v604
        %3020 = vmatpush1.msra.mxu0 %v603
        %3021 = vmatprep.subr.mxu0 0.0
        %3022 = vmatpush1.msra.mxu0 0.0
        %3023 = vmatprep.subr.mxu0 0.0
        %3024 = vmatpush1.msra.mxu0 0.0
        %3025 = vmatprep.subr.mxu0 0.0
        %3026 = vmatpush1.msra.mxu0 0.0
        %3027 = vmatprep.subr.mxu0 0.0
        %3028 = vmatpush1.msra.mxu0 0.0
        %3029 = vmatprep.subr.mxu0 0.0
        %3030 = vmatpush1.msra.mxu0 0.0
        %3031 = vmatprep.subr.mxu0 0.0
        %3032 = vmatpush1.msra.mxu0 0.0
        %3033 = vmatprep.subr.mxu0 0.0
        %3034 = vmatpush1.msra.mxu0 0.0
        %3035 = vmatprep.subr.mxu0 0.0
        %3036 = vmatpush1.msra.mxu0 0.0
        %3037 = vmatprep.subr.mxu0 0.0
        %3038 = vmatpush1.msra.mxu0 0.0
        %3039 = vmatprep.subr.mxu0 0.0
        %3040 = vmatpush1.msra.mxu0 0.0
        %3041 = vmatprep.subr.mxu0 0.0
        %3042 = vmatpush1.msra.mxu0 0.0
        %3043 = vmatprep.subr.mxu0 0.0
        %3044 = vmatpush1.msra.mxu0 0.0
        %3045 = vmatprep.subr.mxu0 0.0
        %3046 = vmatpush1.msra.mxu0 0.0
        %3047 = vmatprep.subr.mxu0 0.0
        %3048 = vmatpush1.msra.mxu0 0.0
        %3049 = vmatprep.subr.mxu0 0.0
        %3050 = vmatpush1.msra.mxu0 0.0
        %3051 = vmatprep.subr.mxu0 0.0
        %3052 = vmatpush1.msra.mxu0 0.0
        %3053 = vmatprep.subr.mxu0 0.0
        %3054 = vmatpush1.msra.mxu0 0.0
        %3055 = vmatprep.subr.mxu0 0.0
        %3056 = vmatpush1.msra.mxu0 0.0
        %3057 = vmatprep.subr.mxu0 0.0
        %3058 = vmatpush1.msra.mxu0 0.0
        %3059 = vmatprep.subr.mxu0 0.0
        %3060 = vmatpush1.msra.mxu0 0.0
        %3061 = vmatprep.mubr.f32.mxu0 0.0
        %3062 = vmatmul.mubr.f32.gmra.mrb[0].mxu0 %v2716
        %v3063 = vpop.f32.mrb[0].mxu0
        %v3064 = vadd.f32 0.0, %v3063
        %v3065 = vpop.f32.mrb[0].mxu0
        %v3066 = vadd.f32 0.0, %v3065
        %3067 = vmatprep.mubr.f32.mxu0 0.0
        %3068 = vmatmul.mubr.f32.gmra.mrb[0].mxu0 %v2719
        %v3069 = vpop.f32.mrb[0].mxu0
        %v3070 = vadd.f32 0.0, %v3069
        %v3071 = vpop.f32.mrb[0].mxu0
        %v3072 = vadd.f32 0.0, %v3071
        %3073 = vmatprep.mubr.f32.mxu0 0.0
        %3074 = vmatmul.mubr.f32.gmra.mrb[0].mxu0 %v2722
        %v3075 = vpop.f32.mrb[0].mxu0
        %v3076 = vadd.f32 0.0, %v3075
        %v3077 = vpop.f32.mrb[0].mxu0
        %v3078 = vadd.f32 0.0, %v3077
        %3079 = vmatprep.mubr.f32.mxu0 0.0
        %3080 = vmatmul.mubr.f32.gmra.mrb[0].mxu0 %v2725
        %v3081 = vpop.f32.mrb[0].mxu0
        %v3082 = vadd.f32 0.0, %v3081
        %v3083 = vpop.f32.mrb[0].mxu0
        %v3084 = vadd.f32 0.0, %v3083
        %3085 = vmatprep.mubr.f32.mxu0 0.0
        %3086 = vmatmul.mubr.f32.gmra.mrb[0].mxu0 %v2728
        %v3087 = vpop.f32.mrb[0].mxu0
        %v3088 = vadd.f32 0.0, %v3087
        %v3089 = vpop.f32.mrb[0].mxu0
        %v3090 = vadd.f32 0.0, %v3089
        %3091 = vmatprep.mubr.f32.mxu0 0.0
        %3092 = vmatmul.mubr.f32.gmra.mrb[0].mxu0 %v2731
        %v3093 = vpop.f32.mrb[0].mxu0
        %v3094 = vadd.f32 0.0, %v3093
        %v3095 = vpop.f32.mrb[0].mxu0
        %v3096 = vadd.f32 0.0, %v3095
        %3097 = vmatprep.mubr.f32.mxu0 0.0
        %3098 = vmatmul.mubr.f32.gmra.mrb[0].mxu0 %v2734
        %v3099 = vpop.f32.mrb[0].mxu0
        %v3100 = vadd.f32 0.0, %v3099
        %v3101 = vpop.f32.mrb[0].mxu0
        %v3102 = vadd.f32 0.0, %v3101
        %3103 = vmatprep.mubr.f32.mxu0 0.0
        %3104 = vmatmul.mubr.f32.gmra.mrb[0].mxu0 %v2737
        %v3105 = vpop.f32.mrb[0].mxu0
        %v3106 = vadd.f32 0.0, %v3105
        %v3107 = vpop.f32.mrb[0].mxu0
        %v3108 = vadd.f32 0.0, %v3107
        %3109 = vdwg.mxu0
        %3110 = vmatprep.subr.mxu0 %v562
        %3111 = vmatpush1.msra.mxu0 %v561
        %3112 = vmatprep.subr.mxu0 %v566
        %3113 = vmatpush1.msra.mxu0 %v565
        %3114 = vmatprep.subr.mxu0 %v570
        %3115 = vmatpush1.msra.mxu0 %v569
        %3116 = vmatprep.subr.mxu0 %v574
        %3117 = vmatpush1.msra.mxu0 %v573
        %3118 = vmatprep.subr.mxu0 %v578
        %3119 = vmatpush1.msra.mxu0 %v577
        %3120 = vmatprep.subr.mxu0 %v582
        %3121 = vmatpush1.msra.mxu0 %v581
        %3122 = vmatprep.subr.mxu0 %v586
        %3123 = vmatpush1.msra.mxu0 %v585
        %3124 = vmatprep.subr.mxu0 %v590
        %3125 = vmatpush1.msra.mxu0 %v589
        %3126 = vmatprep.subr.mxu0 %v594
        %3127 = vmatpush1.msra.mxu0 %v593
        %3128 = vmatprep.subr.mxu0 %v598
        %3129 = vmatpush1.msra.mxu0 %v597
        %3130 = vmatprep.subr.mxu0 %v602
        %3131 = vmatpush1.msra.mxu0 %v601
        %3132 = vmatprep.subr.mxu0 %v606
        %3133 = vmatpush1.msra.mxu0 %v605
        %3134 = vmatprep.subr.mxu0 0.0
        %3135 = vmatpush1.msra.mxu0 0.0
        %3136 = vmatprep.subr.mxu0 0.0
        %3137 = vmatpush1.msra.mxu0 0.0
        %3138 = vmatprep.subr.mxu0 0.0
        %3139 = vmatpush1.msra.mxu0 0.0
        %3140 = vmatprep.subr.mxu0 0.0
        %3141 = vmatpush1.msra.mxu0 0.0
        %3142 = vmatprep.subr.mxu0 0.0
        %3143 = vmatpush1.msra.mxu0 0.0
        %3144 = vmatprep.subr.mxu0 0.0
        %3145 = vmatpush1.msra.mxu0 0.0
        %3146 = vmatprep.subr.mxu0 0.0
        %3147 = vmatpush1.msra.mxu0 0.0
        %3148 = vmatprep.subr.mxu0 0.0
        %3149 = vmatpush1.msra.mxu0 0.0
        %3150 = vmatprep.subr.mxu0 0.0
        %3151 = vmatpush1.msra.mxu0 0.0
        %3152 = vmatprep.subr.mxu0 0.0
        %3153 = vmatpush1.msra.mxu0 0.0
        %3154 = vmatprep.subr.mxu0 0.0
        %3155 = vmatpush1.msra.mxu0 0.0
        %3156 = vmatprep.subr.mxu0 0.0
        %3157 = vmatpush1.msra.mxu0 0.0
        %3158 = vmatprep.subr.mxu0 0.0
        %3159 = vmatpush1.msra.mxu0 0.0
        %3160 = vmatprep.subr.mxu0 0.0
        %3161 = vmatpush1.msra.mxu0 0.0
        %3162 = vmatprep.subr.mxu0 0.0
        %3163 = vmatpush1.msra.mxu0 0.0
        %3164 = vmatprep.subr.mxu0 0.0
        %3165 = vmatpush1.msra.mxu0 0.0
        %3166 = vmatprep.subr.mxu0 0.0
        %3167 = vmatpush1.msra.mxu0 0.0
        %3168 = vmatprep.subr.mxu0 0.0
        %3169 = vmatpush1.msra.mxu0 0.0
        %3170 = vmatprep.subr.mxu0 0.0
        %3171 = vmatpush1.msra.mxu0 0.0
        %3172 = vmatprep.subr.mxu0 0.0
        %3173 = vmatpush1.msra.mxu0 0.0
        %3174 = vmatprep.mubr.f32.mxu0 0.0
        %3175 = vmatmul.mubr.f32.gmra.mrb[0].mxu0 %v2716
        %v3176 = vpop.f32.mrb[0].mxu0
        %v3177 = vadd.f32 0.0, %v3176
        %v3178 = vpop.f32.mrb[0].mxu0
        %v3179 = vadd.f32 0.0, %v3178
        %3180 = vmatprep.mubr.f32.mxu0 0.0
        %3181 = vmatmul.mubr.f32.gmra.mrb[0].mxu0 %v2719
        %v3182 = vpop.f32.mrb[0].mxu0
        %v3183 = vadd.f32 0.0, %v3182
        %v3184 = vpop.f32.mrb[0].mxu0
        %v3185 = vadd.f32 0.0, %v3184
        %3186 = vmatprep.mubr.f32.mxu0 0.0
        %3187 = vmatmul.mubr.f32.gmra.mrb[0].mxu0 %v2722
        %v3188 = vpop.f32.mrb[0].mxu0
        %v3189 = vadd.f32 0.0, %v3188
        %v3190 = vpop.f32.mrb[0].mxu0
        %v3191 = vadd.f32 0.0, %v3190
        %3192 = vmatprep.mubr.f32.mxu0 0.0
        %3193 = vmatmul.mubr.f32.gmra.mrb[0].mxu0 %v2725
        %v3194 = vpop.f32.mrb[0].mxu0
        %v3195 = vadd.f32 0.0, %v3194
        %v3196 = vpop.f32.mrb[0].mxu0
        %v3197 = vadd.f32 0.0, %v3196
        %3198 = vmatprep.mubr.f32.mxu0 0.0
        %3199 = vmatmul.mubr.f32.gmra.mrb[0].mxu0 %v2728
        %v3200 = vpop.f32.mrb[0].mxu0
        %v3201 = vadd.f32 0.0, %v3200
        %v3202 = vpop.f32.mrb[0].mxu0
        %v3203 = vadd.f32 0.0, %v3202
        %3204 = vmatprep.mubr.f32.mxu0 0.0
        %3205 = vmatmul.mubr.f32.gmra.mrb[0].mxu0 %v2731
        %v3206 = vpop.f32.mrb[0].mxu0
        %v3207 = vadd.f32 0.0, %v3206
        %v3208 = vpop.f32.mrb[0].mxu0
        %v3209 = vadd.f32 0.0, %v3208
        %3210 = vmatprep.mubr.f32.mxu0 0.0
        %3211 = vmatmul.mubr.f32.gmra.mrb[0].mxu0 %v2734
        %v3212 = vpop.f32.mrb[0].mxu0
        %v3213 = vadd.f32 0.0, %v3212
        %v3214 = vpop.f32.mrb[0].mxu0
        %v3215 = vadd.f32 0.0, %v3214
        %3216 = vmatprep.mubr.f32.mxu0 0.0
        %3217 = vmatmul.mubr.f32.gmra.mrb[0].mxu0 %v2737
        %v3218 = vpop.f32.mrb[0].mxu0
        %v3219 = vadd.f32 0.0, %v3218
        %v3220 = vpop.f32.mrb[0].mxu0
        %v3221 = vadd.f32 0.0, %v3220
        %3222 = vdwg.mxu0
        %3223 = vmatprep.subr.mxu0 %v502
        %3224 = vmatpush1.msra.mxu0 %v501
        %3225 = vmatprep.subr.mxu0 %v506
        %3226 = vmatpush1.msra.mxu0 %v505
        %3227 = vmatprep.subr.mxu0 %v510
        %3228 = vmatpush1.msra.mxu0 %v509
        %3229 = vmatprep.subr.mxu0 %v514
        %3230 = vmatpush1.msra.mxu0 %v513
        %3231 = vmatprep.subr.mxu0 %v518
        %3232 = vmatpush1.msra.mxu0 %v517
        %3233 = vmatprep.subr.mxu0 %v522
        %3234 = vmatpush1.msra.mxu0 %v521
        %3235 = vmatprep.subr.mxu0 %v526
        %3236 = vmatpush1.msra.mxu0 %v525
        %3237 = vmatprep.subr.mxu0 %v530
        %3238 = vmatpush1.msra.mxu0 %v529
        %3239 = vmatprep.subr.mxu0 %v534
        %3240 = vmatpush1.msra.mxu0 %v533
        %3241 = vmatprep.subr.mxu0 %v538
        %3242 = vmatpush1.msra.mxu0 %v537
        %3243 = vmatprep.subr.mxu0 %v542
        %3244 = vmatpush1.msra.mxu0 %v541
        %3245 = vmatprep.subr.mxu0 %v546
        %3246 = vmatpush1.msra.mxu0 %v545
        %3247 = vmatprep.subr.mxu0 0.0
        %3248 = vmatpush1.msra.mxu0 0.0
        %3249 = vmatprep.subr.mxu0 0.0
        %3250 = vmatpush1.msra.mxu0 0.0
        %3251 = vmatprep.subr.mxu0 0.0
        %3252 = vmatpush1.msra.mxu0 0.0
        %3253 = vmatprep.subr.mxu0 0.0
        %3254 = vmatpush1.msra.mxu0 0.0
        %3255 = vmatprep.subr.mxu0 0.0
        %3256 = vmatpush1.msra.mxu0 0.0
        %3257 = vmatprep.subr.mxu0 0.0
        %3258 = vmatpush1.msra.mxu0 0.0
        %3259 = vmatprep.subr.mxu0 0.0
        %3260 = vmatpush1.msra.mxu0 0.0
        %3261 = vmatprep.subr.mxu0 0.0
        %3262 = vmatpush1.msra.mxu0 0.0
        %3263 = vmatprep.subr.mxu0 0.0
        %3264 = vmatpush1.msra.mxu0 0.0
        %3265 = vmatprep.subr.mxu0 0.0
        %3266 = vmatpush1.msra.mxu0 0.0
        %3267 = vmatprep.subr.mxu0 0.0
        %3268 = vmatpush1.msra.mxu0 0.0
        %3269 = vmatprep.subr.mxu0 0.0
        %3270 = vmatpush1.msra.mxu0 0.0
        %3271 = vmatprep.subr.mxu0 0.0
        %3272 = vmatpush1.msra.mxu0 0.0
        %3273 = vmatprep.subr.mxu0 0.0
        %3274 = vmatpush1.msra.mxu0 0.0
        %3275 = vmatprep.subr.mxu0 0.0
        %3276 = vmatpush1.msra.mxu0 0.0
        %3277 = vmatprep.subr.mxu0 0.0
        %3278 = vmatpush1.msra.mxu0 0.0
        %3279 = vmatprep.subr.mxu0 0.0
        %3280 = vmatpush1.msra.mxu0 0.0
        %3281 = vmatprep.subr.mxu0 0.0
        %3282 = vmatpush1.msra.mxu0 0.0
        %3283 = vmatprep.subr.mxu0 0.0
        %3284 = vmatpush1.msra.mxu0 0.0
        %3285 = vmatprep.subr.mxu0 0.0
        %3286 = vmatpush1.msra.mxu0 0.0
        %3287 = vmatprep.mubr.f32.mxu0 0.0
        %3288 = vmatmul.mubr.f32.gmra.mrb[0].mxu0 %v2208
        %v3289 = vpop.f32.mrb[0].mxu0
        %v3290 = vadd.f32 %v3064, %v3289
        %v3291 = vpop.f32.mrb[0].mxu0
        %v3292 = vadd.f32 %v3066, %v3291
        %3293 = vmatprep.mubr.f32.mxu0 0.0
        %3294 = vmatmul.mubr.f32.gmra.mrb[0].mxu0 %v2211
        %v3295 = vpop.f32.mrb[0].mxu0
        %v3296 = vadd.f32 %v3070, %v3295
        %v3297 = vpop.f32.mrb[0].mxu0
        %v3298 = vadd.f32 %v3072, %v3297
        %3299 = vmatprep.mubr.f32.mxu0 0.0
        %3300 = vmatmul.mubr.f32.gmra.mrb[0].mxu0 %v2214
        %v3301 = vpop.f32.mrb[0].mxu0
        %v3302 = vadd.f32 %v3076, %v3301
        %v3303 = vpop.f32.mrb[0].mxu0
        %v3304 = vadd.f32 %v3078, %v3303
        %3305 = vmatprep.mubr.f32.mxu0 0.0
        %3306 = vmatmul.mubr.f32.gmra.mrb[0].mxu0 %v2217
        %v3307 = vpop.f32.mrb[0].mxu0
        %v3308 = vadd.f32 %v3082, %v3307
        %v3309 = vpop.f32.mrb[0].mxu0
        %v3310 = vadd.f32 %v3084, %v3309
        %3311 = vmatprep.mubr.f32.mxu0 0.0
        %3312 = vmatmul.mubr.f32.gmra.mrb[0].mxu0 %v2220
        %v3313 = vpop.f32.mrb[0].mxu0
        %v3314 = vadd.f32 %v3088, %v3313
        %v3315 = vpop.f32.mrb[0].mxu0
        %v3316 = vadd.f32 %v3090, %v3315
        %3317 = vmatprep.mubr.f32.mxu0 0.0
        %3318 = vmatmul.mubr.f32.gmra.mrb[0].mxu0 %v2223
        %v3319 = vpop.f32.mrb[0].mxu0
        %v3320 = vadd.f32 %v3094, %v3319
        %v3321 = vpop.f32.mrb[0].mxu0
        %v3322 = vadd.f32 %v3096, %v3321
        %3323 = vmatprep.mubr.f32.mxu0 0.0
        %3324 = vmatmul.mubr.f32.gmra.mrb[0].mxu0 %v2226
        %v3325 = vpop.f32.mrb[0].mxu0
        %v3326 = vadd.f32 %v3100, %v3325
        %v3327 = vpop.f32.mrb[0].mxu0
        %v3328 = vadd.f32 %v3102, %v3327
        %3329 = vmatprep.mubr.f32.mxu0 0.0
        %3330 = vmatmul.mubr.f32.gmra.mrb[0].mxu0 %v2229
        %v3331 = vpop.f32.mrb[0].mxu0
        %v3332 = vadd.f32 %v3106, %v3331
        %v3333 = vpop.f32.mrb[0].mxu0
        %v3334 = vadd.f32 %v3108, %v3333
        %3335 = vdwg.mxu0
        %3336 = vmatprep.subr.mxu0 %v504
        %3337 = vmatpush1.msra.mxu0 %v503
        %3338 = vmatprep.subr.mxu0 %v508
        %3339 = vmatpush1.msra.mxu0 %v507
        %3340 = vmatprep.subr.mxu0 %v512
        %3341 = vmatpush1.msra.mxu0 %v511
        %3342 = vmatprep.subr.mxu0 %v516
        %3343 = vmatpush1.msra.mxu0 %v515
        %3344 = vmatprep.subr.mxu0 %v520
        %3345 = vmatpush1.msra.mxu0 %v519
        %3346 = vmatprep.subr.mxu0 %v524
        %3347 = vmatpush1.msra.mxu0 %v523
        %3348 = vmatprep.subr.mxu0 %v528
        %3349 = vmatpush1.msra.mxu0 %v527
        %3350 = vmatprep.subr.mxu0 %v532
        %3351 = vmatpush1.msra.mxu0 %v531
        %3352 = vmatprep.subr.mxu0 %v536
        %3353 = vmatpush1.msra.mxu0 %v535
        %3354 = vmatprep.subr.mxu0 %v540
        %3355 = vmatpush1.msra.mxu0 %v539
        %3356 = vmatprep.subr.mxu0 %v544
        %3357 = vmatpush1.msra.mxu0 %v543
        %3358 = vmatprep.subr.mxu0 %v548
        %3359 = vmatpush1.msra.mxu0 %v547
        %3360 = vmatprep.subr.mxu0 0.0
        %3361 = vmatpush1.msra.mxu0 0.0
        %3362 = vmatprep.subr.mxu0 0.0
        %3363 = vmatpush1.msra.mxu0 0.0
        %3364 = vmatprep.subr.mxu0 0.0
        %3365 = vmatpush1.msra.mxu0 0.0
        %3366 = vmatprep.subr.mxu0 0.0
        %3367 = vmatpush1.msra.mxu0 0.0
        %3368 = vmatprep.subr.mxu0 0.0
        %3369 = vmatpush1.msra.mxu0 0.0
        %3370 = vmatprep.subr.mxu0 0.0
        %3371 = vmatpush1.msra.mxu0 0.0
        %3372 = vmatprep.subr.mxu0 0.0
        %3373 = vmatpush1.msra.mxu0 0.0
        %3374 = vmatprep.subr.mxu0 0.0
        %3375 = vmatpush1.msra.mxu0 0.0
        %3376 = vmatprep.subr.mxu0 0.0
        %3377 = vmatpush1.msra.mxu0 0.0
        %3378 = vmatprep.subr.mxu0 0.0
        %3379 = vmatpush1.msra.mxu0 0.0
        %3380 = vmatprep.subr.mxu0 0.0
        %3381 = vmatpush1.msra.mxu0 0.0
        %3382 = vmatprep.subr.mxu0 0.0
        %3383 = vmatpush1.msra.mxu0 0.0
        %3384 = vmatprep.subr.mxu0 0.0
        %3385 = vmatpush1.msra.mxu0 0.0
        %3386 = vmatprep.subr.mxu0 0.0
        %3387 = vmatpush1.msra.mxu0 0.0
        %3388 = vmatprep.subr.mxu0 0.0
        %3389 = vmatpush1.msra.mxu0 0.0
        %3390 = vmatprep.subr.mxu0 0.0
        %3391 = vmatpush1.msra.mxu0 0.0
        %3392 = vmatprep.subr.mxu0 0.0
        %3393 = vmatpush1.msra.mxu0 0.0
        %3394 = vmatprep.subr.mxu0 0.0
        %3395 = vmatpush1.msra.mxu0 0.0
        %3396 = vmatprep.subr.mxu0 0.0
        %3397 = vmatpush1.msra.mxu0 0.0
        %3398 = vmatprep.subr.mxu0 0.0
        %3399 = vmatpush1.msra.mxu0 0.0
        %3400 = vmatprep.mubr.f32.mxu0 0.0
        %3401 = vmatmul.mubr.f32.gmra.mrb[0].mxu0 %v2208
        %v3402 = vpop.f32.mrb[0].mxu0
        %v3403 = vadd.f32 %v3177, %v3402
        %v3404 = vpop.f32.mrb[0].mxu0
        %v3405 = vadd.f32 %v3179, %v3404
        %3406 = vmatprep.mubr.f32.mxu0 0.0
        %3407 = vmatmul.mubr.f32.gmra.mrb[0].mxu0 %v2211
        %v3408 = vpop.f32.mrb[0].mxu0
        %v3409 = vadd.f32 %v3183, %v3408
        %v3410 = vpop.f32.mrb[0].mxu0
        %v3411 = vadd.f32 %v3185, %v3410
        %3412 = vmatprep.mubr.f32.mxu0 0.0
        %3413 = vmatmul.mubr.f32.gmra.mrb[0].mxu0 %v2214
        %v3414 = vpop.f32.mrb[0].mxu0
        %v3415 = vadd.f32 %v3189, %v3414
        %v3416 = vpop.f32.mrb[0].mxu0
        %v3417 = vadd.f32 %v3191, %v3416
        %3418 = vmatprep.mubr.f32.mxu0 0.0
        %3419 = vmatmul.mubr.f32.gmra.mrb[0].mxu0 %v2217
        %v3420 = vpop.f32.mrb[0].mxu0
        %v3421 = vadd.f32 %v3195, %v3420
        %v3422 = vpop.f32.mrb[0].mxu0
        %v3423 = vadd.f32 %v3197, %v3422
        %3424 = vmatprep.mubr.f32.mxu0 0.0
        %3425 = vmatmul.mubr.f32.gmra.mrb[0].mxu0 %v2220
        %v3426 = vpop.f32.mrb[0].mxu0
        %v3427 = vadd.f32 %v3201, %v3426
        %v3428 = vpop.f32.mrb[0].mxu0
        %v3429 = vadd.f32 %v3203, %v3428
        %3430 = vmatprep.mubr.f32.mxu0 0.0
        %3431 = vmatmul.mubr.f32.gmra.mrb[0].mxu0 %v2223
        %v3432 = vpop.f32.mrb[0].mxu0
        %v3433 = vadd.f32 %v3207, %v3432
        %v3434 = vpop.f32.mrb[0].mxu0
        %v3435 = vadd.f32 %v3209, %v3434
        %3436 = vmatprep.mubr.f32.mxu0 0.0
        %3437 = vmatmul.mubr.f32.gmra.mrb[0].mxu0 %v2226
        %v3438 = vpop.f32.mrb[0].mxu0
        %v3439 = vadd.f32 %v3213, %v3438
        %v3440 = vpop.f32.mrb[0].mxu0
        %v3441 = vadd.f32 %v3215, %v3440
        %3442 = vmatprep.mubr.f32.mxu0 0.0
        %3443 = vmatmul.mubr.f32.gmra.mrb[0].mxu0 %v2229
        %v3444 = vpop.f32.mrb[0].mxu0
        %v3445 = vadd.f32 %v3219, %v3444
        %v3446 = vpop.f32.mrb[0].mxu0
        %v3447 = vadd.f32 %v3221, %v3446
        %3448 = vdwg.mxu0
        %v3449 = vld [vmem:[%s549 + $0x1] sm:$0xff]
        %v3450 = vld [vmem:[%s549 + $0x9] sm:$0xff]
        %v3451 = vld [vmem:[%s549 + $0x11] sm:$0xff]
        %v3452 = vld [vmem:[%s549 + $0x19] sm:$0xff]
        %v3453 = vld [vmem:[%s549 + $0x21] sm:$0xff]
        %v3454 = vld [vmem:[%s549 + $0x29] sm:$0xff]
        %v3455 = vld [vmem:[%s549 + $0x31] sm:$0xff]
        %v3456 = vld [vmem:[%s549 + $0x39] sm:$0x7f]
        %v3458 = vsel %vm607, %v3449, 0
        %v3461 = vsel %vm607, %v3450, 0
        %v3464 = vsel %vm607, %v3451, 0
        %v3467 = vsel %vm607, %v3452, 0
        %v3470 = vsel %vm607, %v3453, 0
        %v3473 = vsel %vm607, %v3454, 0
        %v3476 = vsel %vm607, %v3455, 0
        %v3479 = vsel %vm607, %v3456, 0
        %3481 = vmatprep.subr.mxu0 %v1119
        %3482 = vmatpush1.msra.mxu0 %v1118
        %3483 = vmatprep.subr.mxu0 %v1123
        %3484 = vmatpush1.msra.mxu0 %v1122
        %3485 = vmatprep.subr.mxu0 %v1127
        %3486 = vmatpush1.msra.mxu0 %v1126
        %3487 = vmatprep.subr.mxu0 %v1131
        %3488 = vmatpush1.msra.mxu0 %v1130
        %3489 = vmatprep.subr.mxu0 %v1135
        %3490 = vmatpush1.msra.mxu0 %v1134
        %3491 = vmatprep.subr.mxu0 %v1139
        %3492 = vmatpush1.msra.mxu0 %v1138
        %3493 = vmatprep.subr.mxu0 %v1143
        %3494 = vmatpush1.msra.mxu0 %v1142
        %3495 = vmatprep.subr.mxu0 %v1147
        %3496 = vmatpush1.msra.mxu0 %v1146
        %3497 = vmatprep.subr.mxu0 %v1151
        %3498 = vmatpush1.msra.mxu0 %v1150
        %3499 = vmatprep.subr.mxu0 %v1155
        %3500 = vmatpush1.msra.mxu0 %v1154
        %3501 = vmatprep.subr.mxu0 %v1159
        %3502 = vmatpush1.msra.mxu0 %v1158
        %3503 = vmatprep.subr.mxu0 %v1163
        %3504 = vmatpush1.msra.mxu0 %v1162
        %3505 = vmatprep.subr.mxu0 0.0
        %3506 = vmatpush1.msra.mxu0 0.0
        %3507 = vmatprep.subr.mxu0 0.0
        %3508 = vmatpush1.msra.mxu0 0.0
        %3509 = vmatprep.subr.mxu0 0.0
        %3510 = vmatpush1.msra.mxu0 0.0
        %3511 = vmatprep.subr.mxu0 0.0
        %3512 = vmatpush1.msra.mxu0 0.0
        %3513 = vmatprep.subr.mxu0 0.0
        %3514 = vmatpush1.msra.mxu0 0.0
        %3515 = vmatprep.subr.mxu0 0.0
        %3516 = vmatpush1.msra.mxu0 0.0
        %3517 = vmatprep.subr.mxu0 0.0
        %3518 = vmatpush1.msra.mxu0 0.0
        %3519 = vmatprep.subr.mxu0 0.0
        %3520 = vmatpush1.msra.mxu0 0.0
        %3521 = vmatprep.subr.mxu0 0.0
        %3522 = vmatpush1.msra.mxu0 0.0
        %3523 = vmatprep.subr.mxu0 0.0
        %3524 = vmatpush1.msra.mxu0 0.0
        %3525 = vmatprep.subr.mxu0 0.0
        %3526 = vmatpush1.msra.mxu0 0.0
        %3527 = vmatprep.subr.mxu0 0.0
        %3528 = vmatpush1.msra.mxu0 0.0
        %3529 = vmatprep.subr.mxu0 0.0
        %3530 = vmatpush1.msra.mxu0 0.0
        %3531 = vmatprep.subr.mxu0 0.0
        %3532 = vmatpush1.msra.mxu0 0.0
        %3533 = vmatprep.subr.mxu0 0.0
        %3534 = vmatpush1.msra.mxu0 0.0
        %3535 = vmatprep.subr.mxu0 0.0
        %3536 = vmatpush1.msra.mxu0 0.0
        %3537 = vmatprep.subr.mxu0 0.0
        %3538 = vmatpush1.msra.mxu0 0.0
        %3539 = vmatprep.subr.mxu0 0.0
        %3540 = vmatpush1.msra.mxu0 0.0
        %3541 = vmatprep.subr.mxu0 0.0
        %3542 = vmatpush1.msra.mxu0 0.0
        %3543 = vmatprep.subr.mxu0 0.0
        %3544 = vmatpush1.msra.mxu0 0.0
        %3545 = vmatprep.mubr.f32.mxu0 0.0
        %3546 = vmatmul.mubr.f32.gmra.mrb[0].mxu0 %v3458
        %v3547 = vpop.f32.mrb[0].mxu0
        %v3548 = vadd.f32 0.0, %v3547
        %v3549 = vpop.f32.mrb[0].mxu0
        %v3550 = vadd.f32 0.0, %v3549
        %3551 = vmatprep.mubr.f32.mxu0 0.0
        %3552 = vmatmul.mubr.f32.gmra.mrb[0].mxu0 %v3461
        %v3553 = vpop.f32.mrb[0].mxu0
        %v3554 = vadd.f32 0.0, %v3553
        %v3555 = vpop.f32.mrb[0].mxu0
        %v3556 = vadd.f32 0.0, %v3555
        %3557 = vmatprep.mubr.f32.mxu0 0.0
        %3558 = vmatmul.mubr.f32.gmra.mrb[0].mxu0 %v3464
        %v3559 = vpop.f32.mrb[0].mxu0
        %v3560 = vadd.f32 0.0, %v3559
        %v3561 = vpop.f32.mrb[0].mxu0
        %v3562 = vadd.f32 0.0, %v3561
        %3563 = vmatprep.mubr.f32.mxu0 0.0
        %3564 = vmatmul.mubr.f32.gmra.mrb[0].mxu0 %v3467
        %v3565 = vpop.f32.mrb[0].mxu0
        %v3566 = vadd.f32 0.0, %v3565
        %v3567 = vpop.f32.mrb[0].mxu0
        %v3568 = vadd.f32 0.0, %v3567
        %3569 = vmatprep.mubr.f32.mxu0 0.0
        %3570 = vmatmul.mubr.f32.gmra.mrb[0].mxu0 %v3470
        %v3571 = vpop.f32.mrb[0].mxu0
        %v3572 = vadd.f32 0.0, %v3571
        %v3573 = vpop.f32.mrb[0].mxu0
        %v3574 = vadd.f32 0.0, %v3573
        %3575 = vmatprep.mubr.f32.mxu0 0.0
        %3576 = vmatmul.mubr.f32.gmra.mrb[0].mxu0 %v3473
        %v3577 = vpop.f32.mrb[0].mxu0
        %v3578 = vadd.f32 0.0, %v3577
        %v3579 = vpop.f32.mrb[0].mxu0
        %v3580 = vadd.f32 0.0, %v3579
        %3581 = vmatprep.mubr.f32.mxu0 0.0
        %3582 = vmatmul.mubr.f32.gmra.mrb[0].mxu0 %v3476
        %v3583 = vpop.f32.mrb[0].mxu0
        %v3584 = vadd.f32 0.0, %v3583
        %v3585 = vpop.f32.mrb[0].mxu0
        %v3586 = vadd.f32 0.0, %v3585
        %3587 = vmatprep.mubr.f32.mxu0 0.0
        %3588 = vmatmul.mubr.f32.gmra.mrb[0].mxu0 %v3479
        %v3589 = vpop.f32.mrb[0].mxu0
        %v3590 = vadd.f32 0.0, %v3589
        %v3591 = vpop.f32.mrb[0].mxu0
        %v3592 = vadd.f32 0.0, %v3591
        %3593 = vdwg.mxu0
        %3594 = vmatprep.subr.mxu0 %v1121
        %3595 = vmatpush1.msra.mxu0 %v1120
        %3596 = vmatprep.subr.mxu0 %v1125
        %3597 = vmatpush1.msra.mxu0 %v1124
        %3598 = vmatprep.subr.mxu0 %v1129
        %3599 = vmatpush1.msra.mxu0 %v1128
        %3600 = vmatprep.subr.mxu0 %v1133
        %3601 = vmatpush1.msra.mxu0 %v1132
        %3602 = vmatprep.subr.mxu0 %v1137
        %3603 = vmatpush1.msra.mxu0 %v1136
        %3604 = vmatprep.subr.mxu0 %v1141
        %3605 = vmatpush1.msra.mxu0 %v1140
        %3606 = vmatprep.subr.mxu0 %v1145
        %3607 = vmatpush1.msra.mxu0 %v1144
        %3608 = vmatprep.subr.mxu0 %v1149
        %3609 = vmatpush1.msra.mxu0 %v1148
        %3610 = vmatprep.subr.mxu0 %v1153
        %3611 = vmatpush1.msra.mxu0 %v1152
        %3612 = vmatprep.subr.mxu0 %v1157
        %3613 = vmatpush1.msra.mxu0 %v1156
        %3614 = vmatprep.subr.mxu0 %v1161
        %3615 = vmatpush1.msra.mxu0 %v1160
        %3616 = vmatprep.subr.mxu0 %v1165
        %3617 = vmatpush1.msra.mxu0 %v1164
        %3618 = vmatprep.subr.mxu0 0.0
        %3619 = vmatpush1.msra.mxu0 0.0
        %3620 = vmatprep.subr.mxu0 0.0
        %3621 = vmatpush1.msra.mxu0 0.0
        %3622 = vmatprep.subr.mxu0 0.0
        %3623 = vmatpush1.msra.mxu0 0.0
        %3624 = vmatprep.subr.mxu0 0.0
        %3625 = vmatpush1.msra.mxu0 0.0
        %3626 = vmatprep.subr.mxu0 0.0
        %3627 = vmatpush1.msra.mxu0 0.0
        %3628 = vmatprep.subr.mxu0 0.0
        %3629 = vmatpush1.msra.mxu0 0.0
        %3630 = vmatprep.subr.mxu0 0.0
        %3631 = vmatpush1.msra.mxu0 0.0
        %3632 = vmatprep.subr.mxu0 0.0
        %3633 = vmatpush1.msra.mxu0 0.0
        %3634 = vmatprep.subr.mxu0 0.0
        %3635 = vmatpush1.msra.mxu0 0.0
        %3636 = vmatprep.subr.mxu0 0.0
        %3637 = vmatpush1.msra.mxu0 0.0
        %3638 = vmatprep.subr.mxu0 0.0
        %3639 = vmatpush1.msra.mxu0 0.0
        %3640 = vmatprep.subr.mxu0 0.0
        %3641 = vmatpush1.msra.mxu0 0.0
        %3642 = vmatprep.subr.mxu0 0.0
        %3643 = vmatpush1.msra.mxu0 0.0
        %3644 = vmatprep.subr.mxu0 0.0
        %3645 = vmatpush1.msra.mxu0 0.0
        %3646 = vmatprep.subr.mxu0 0.0
        %3647 = vmatpush1.msra.mxu0 0.0
        %3648 = vmatprep.subr.mxu0 0.0
        %3649 = vmatpush1.msra.mxu0 0.0
        %3650 = vmatprep.subr.mxu0 0.0
        %3651 = vmatpush1.msra.mxu0 0.0
        %3652 = vmatprep.subr.mxu0 0.0
        %3653 = vmatpush1.msra.mxu0 0.0
        %3654 = vmatprep.subr.mxu0 0.0
        %3655 = vmatpush1.msra.mxu0 0.0
        %3656 = vmatprep.subr.mxu0 0.0
        %3657 = vmatpush1.msra.mxu0 0.0
        %3658 = vmatprep.mubr.f32.mxu0 0.0
        %3659 = vmatmul.mubr.f32.gmra.mrb[0].mxu0 %v3458
        %v3660 = vpop.f32.mrb[0].mxu0
        %v3661 = vadd.f32 0.0, %v3660
        %v3662 = vpop.f32.mrb[0].mxu0
        %v3663 = vadd.f32 0.0, %v3662
        %3664 = vmatprep.mubr.f32.mxu0 0.0
        %3665 = vmatmul.mubr.f32.gmra.mrb[0].mxu0 %v3461
        %v3666 = vpop.f32.mrb[0].mxu0
        %v3667 = vadd.f32 0.0, %v3666
        %v3668 = vpop.f32.mrb[0].mxu0
        %v3669 = vadd.f32 0.0, %v3668
        %3670 = vmatprep.mubr.f32.mxu0 0.0
        %3671 = vmatmul.mubr.f32.gmra.mrb[0].mxu0 %v3464
        %v3672 = vpop.f32.mrb[0].mxu0
        %v3673 = vadd.f32 0.0, %v3672
        %v3674 = vpop.f32.mrb[0].mxu0
        %v3675 = vadd.f32 0.0, %v3674
        %3676 = vmatprep.mubr.f32.mxu0 0.0
        %3677 = vmatmul.mubr.f32.gmra.mrb[0].mxu0 %v3467
        %v3678 = vpop.f32.mrb[0].mxu0
        %v3679 = vadd.f32 0.0, %v3678
        %v3680 = vpop.f32.mrb[0].mxu0
        %v3681 = vadd.f32 0.0, %v3680
        %3682 = vmatprep.mubr.f32.mxu0 0.0
        %3683 = vmatmul.mubr.f32.gmra.mrb[0].mxu0 %v3470
        %v3684 = vpop.f32.mrb[0].mxu0
        %v3685 = vadd.f32 0.0, %v3684
        %v3686 = vpop.f32.mrb[0].mxu0
        %v3687 = vadd.f32 0.0, %v3686
        %3688 = vmatprep.mubr.f32.mxu0 0.0
        %3689 = vmatmul.mubr.f32.gmra.mrb[0].mxu0 %v3473
        %v3690 = vpop.f32.mrb[0].mxu0
        %v3691 = vadd.f32 0.0, %v3690
        %v3692 = vpop.f32.mrb[0].mxu0
        %v3693 = vadd.f32 0.0, %v3692
        %3694 = vmatprep.mubr.f32.mxu0 0.0
        %3695 = vmatmul.mubr.f32.gmra.mrb[0].mxu0 %v3476
        %v3696 = vpop.f32.mrb[0].mxu0
        %v3697 = vadd.f32 0.0, %v3696
        %v3698 = vpop.f32.mrb[0].mxu0
        %v3699 = vadd.f32 0.0, %v3698
        %3700 = vmatprep.mubr.f32.mxu0 0.0
        %3701 = vmatmul.mubr.f32.gmra.mrb[0].mxu0 %v3479
        %v3702 = vpop.f32.mrb[0].mxu0
        %v3703 = vadd.f32 0.0, %v3702
        %v3704 = vpop.f32.mrb[0].mxu0
        %v3705 = vadd.f32 0.0, %v3704
        %3706 = vdwg.mxu0
        %v3707 = vadd.f32 %v3290, %v3548
        %v3708 = vadd.f32 %v3292, %v3550
        %v3709 = vadd.f32 %v3403, %v3661
        %v3710 = vadd.f32 %v3405, %v3663
        %v3711 = vadd.f32 %v3296, %v3554
        %v3712 = vadd.f32 %v3298, %v3556
        %v3713 = vadd.f32 %v3409, %v3667
        %v3714 = vadd.f32 %v3411, %v3669
        %v3715 = vadd.f32 %v3302, %v3560
        %v3716 = vadd.f32 %v3304, %v3562
        %v3717 = vadd.f32 %v3415, %v3673
        %v3718 = vadd.f32 %v3417, %v3675
        %v3719 = vadd.f32 %v3308, %v3566
        %v3720 = vadd.f32 %v3310, %v3568
        %v3721 = vadd.f32 %v3421, %v3679
        %v3722 = vadd.f32 %v3423, %v3681
        %v3723 = vadd.f32 %v3314, %v3572
        %v3724 = vadd.f32 %v3316, %v3574
        %v3725 = vadd.f32 %v3427, %v3685
        %v3726 = vadd.f32 %v3429, %v3687
        %v3727 = vadd.f32 %v3320, %v3578
        %v3728 = vadd.f32 %v3322, %v3580
        %v3729 = vadd.f32 %v3433, %v3691
        %v3730 = vadd.f32 %v3435, %v3693
        %v3731 = vadd.f32 %v3326, %v3584
        %v3732 = vadd.f32 %v3328, %v3586
        %v3733 = vadd.f32 %v3439, %v3697
        %v3734 = vadd.f32 %v3441, %v3699
        %v3735 = vadd.f32 %v3332, %v3590
        %v3736 = vadd.f32 %v3334, %v3592
        %v3737 = vadd.f32 %v3445, %v3703
        %v3738 = vadd.f32 %v3447, %v3705
        %v3739 = vmax.f32 %v1416, %v1418
        %v3740 = vmax.f32 %v1417, %v1419
        %v3741 = vmax.f32 %v1420, %v1422
        %v3742 = vmax.f32 %v1421, %v1423
        %v3743 = vmax.f32 %v1424, %v1426
        %v3744 = vmax.f32 %v1425, %v1427
        %v3745 = vmax.f32 %v1428, %v1430
        %v3746 = vmax.f32 %v1429, %v1431
        %v3747 = vmax.f32 %v1432, %v1434
        %v3748 = vmax.f32 %v1433, %v1435
        %v3749 = vmax.f32 %v1436, %v1438
        %v3750 = vmax.f32 %v1437, %v1439
        %v3751 = vmax.f32 %v1440, %v1442
        %v3752 = vmax.f32 %v1441, %v1443
        %v3753 = vmax.f32 %v1444, %v1446
        %v3754 = vmax.f32 %v1445, %v1447
        %v3755 = vmax.f32 %v2159, %v2161
        %v3756 = vmax.f32 %v2160, %v2162
        %v3757 = vmax.f32 %v2163, %v2165
        %v3758 = vmax.f32 %v2164, %v2166
        %v3759 = vmax.f32 %v2167, %v2169
        %v3760 = vmax.f32 %v2168, %v2170
        %v3761 = vmax.f32 %v2171, %v2173
        %v3762 = vmax.f32 %v2172, %v2174
        %v3763 = vmax.f32 %v2175, %v2177
        %v3764 = vmax.f32 %v2176, %v2178
        %v3765 = vmax.f32 %v2179, %v2181
        %v3766 = vmax.f32 %v2180, %v2182
        %v3767 = vmax.f32 %v2183, %v2185
        %v3768 = vmax.f32 %v2184, %v2186
        %v3769 = vmax.f32 %v2187, %v2189
        %v3770 = vmax.f32 %v2188, %v2190
        %v3771 = vmax.f32 %v3739, %v3755
        %v3772 = vmax.f32 %v3740, %v3756
        %v3773 = vmax.f32 %v3741, %v3757
        %v3774 = vmax.f32 %v3742, %v3758
        %v3775 = vmax.f32 %v3743, %v3759
        %v3776 = vmax.f32 %v3744, %v3760
        %v3777 = vmax.f32 %v3745, %v3761
        %v3778 = vmax.f32 %v3746, %v3762
        %v3779 = vmax.f32 %v3747, %v3763
        %v3780 = vmax.f32 %v3748, %v3764
        %v3781 = vmax.f32 %v3749, %v3765
        %v3782 = vmax.f32 %v3750, %v3766
        %v3783 = vmax.f32 %v3751, %v3767
        %v3784 = vmax.f32 %v3752, %v3768
        %v3785 = vmax.f32 %v3753, %v3769
        %v3786 = vmax.f32 %v3754, %v3770
        %v3788 = vlaneseq
        %v3789 = vshrl.u32 %v3788, 7
        %v3790 = vsub.s32 0, %v3789
        %v3791 = vrot.slane %v491, %v3790
        %v3792 = vlaneseq
        %v3793 = vshrl.u32 %v3792, 7
        %v3794 = vsub.s32 1, %v3793
        %v3795 = vrot.slane %v491, %v3794
        %v3798 = vadd.f32 %v3771, %v3791
        %v3799 = vadd.f32 %v3772, %v3795
        %v3800 = vadd.f32 %v3773, %v3791
        %v3801 = vadd.f32 %v3774, %v3795
        %v3802 = vadd.f32 %v3775, %v3791
        %v3803 = vadd.f32 %v3776, %v3795
        %v3804 = vadd.f32 %v3777, %v3791
        %v3805 = vadd.f32 %v3778, %v3795
        %v3806 = vadd.f32 %v3779, %v3791
        %v3807 = vadd.f32 %v3780, %v3795
        %v3808 = vadd.f32 %v3781, %v3791
        %v3809 = vadd.f32 %v3782, %v3795
        %v3810 = vadd.f32 %v3783, %v3791
        %v3811 = vadd.f32 %v3784, %v3795
        %v3812 = vadd.f32 %v3785, %v3791
        %v3813 = vadd.f32 %v3786, %v3795
        %v3814 = vmax.f32 %v3798, 0.0
        %v3815 = vmax.f32 %v3799, 0.0
        %v3816 = vmax.f32 %v3800, 0.0
        %v3817 = vmax.f32 %v3801, 0.0
        %v3818 = vmax.f32 %v3802, 0.0
        %v3819 = vmax.f32 %v3803, 0.0
        %v3820 = vmax.f32 %v3804, 0.0
        %v3821 = vmax.f32 %v3805, 0.0
        %v3822 = vmax.f32 %v3806, 0.0
        %v3823 = vmax.f32 %v3807, 0.0
        %v3824 = vmax.f32 %v3808, 0.0
        %v3825 = vmax.f32 %v3809, 0.0
        %v3826 = vmax.f32 %v3810, 0.0
        %v3827 = vmax.f32 %v3811, 0.0
        %v3828 = vmax.f32 %v3812, 0.0
        %v3829 = vmax.f32 %v3813, 0.0
        %3830 = vst [vmem:[#allocation2] sm:$0xff] %v3814
        %3831 = vst [vmem:[#allocation2 + $0x8] sm:$0xff] %v3815
        %3832 = vst [vmem:[#allocation2 + $0x10] sm:$0xff] %v3816
        %3833 = vst [vmem:[#allocation2 + $0x18] sm:$0xff] %v3817
        %3834 = vst [vmem:[#allocation2 + $0x20] sm:$0xff] %v3818
        %3835 = vst [vmem:[#allocation2 + $0x28] sm:$0xff] %v3819
        %3836 = vst [vmem:[#allocation2 + $0x30] sm:$0xff] %v3820
        %3837 = vst [vmem:[#allocation2 + $0x38] sm:$0xff] %v3821
        %3838 = vst [vmem:[#allocation2 + $0x40] sm:$0xff] %v3822
        %3839 = vst [vmem:[#allocation2 + $0x48] sm:$0xff] %v3823
        %3840 = vst [vmem:[#allocation2 + $0x50] sm:$0xff] %v3824
        %3841 = vst [vmem:[#allocation2 + $0x58] sm:$0xff] %v3825
        %3842 = vst [vmem:[#allocation2 + $0x60] sm:$0xff] %v3826
        %3843 = vst [vmem:[#allocation2 + $0x68] sm:$0xff] %v3827
        %3844 = vst [vmem:[#allocation2 + $0x70] sm:$0xff] %v3828
        %3845 = vst [vmem:[#allocation2 + $0x78] sm:$0xff] %v3829
        %v3846 = vlaneseq
        %vm3847 = vcmp.ge.s32.totalorder %v3846, 0
        %vm3848 = vcmp.lt.s32.totalorder %v3846, 256
        %vm3849 = vmand %vm3847, %vm3848
        %s3850 = scalar_lea.vmem [#allocation3], 119
        %3851 = vst.msk [vmem:[%s3850] ss:$8 sm:$0x3] %vm3849, 0.0
        %3852 = vst.msk [vmem:[%s3850] ss:$8 sm:$0x0] %vm3849, 0.0
        %v3853 = vmax.f32 %v2965, %v2967
        %v3854 = vmax.f32 %v2966, %v2968
        %v3855 = vmax.f32 %v2969, %v2971
        %v3856 = vmax.f32 %v2970, %v2972
        %v3857 = vmax.f32 %v2973, %v2975
        %v3858 = vmax.f32 %v2974, %v2976
        %v3859 = vmax.f32 %v2977, %v2979
        %v3860 = vmax.f32 %v2978, %v2980
        %v3861 = vmax.f32 %v2981, %v2983
        %v3862 = vmax.f32 %v2982, %v2984
        %v3863 = vmax.f32 %v2985, %v2987
        %v3864 = vmax.f32 %v2986, %v2988
        %v3865 = vmax.f32 %v2989, %v2991
        %v3866 = vmax.f32 %v2990, %v2992
        %v3867 = vmax.f32 %v2993, %v2995
        %v3868 = vmax.f32 %v2994, %v2996
        %v3869 = vmax.f32 %v3707, %v3709
        %v3870 = vmax.f32 %v3708, %v3710
        %v3871 = vmax.f32 %v3711, %v3713
        %v3872 = vmax.f32 %v3712, %v3714
        %v3873 = vmax.f32 %v3715, %v3717
        %v3874 = vmax.f32 %v3716, %v3718
        %v3875 = vmax.f32 %v3719, %v3721
        %v3876 = vmax.f32 %v3720, %v3722
        %v3877 = vmax.f32 %v3723, %v3725
        %v3878 = vmax.f32 %v3724, %v3726
        %v3879 = vmax.f32 %v3727, %v3729
        %v3880 = vmax.f32 %v3728, %v3730
        %v3881 = vmax.f32 %v3731, %v3733
        %v3882 = vmax.f32 %v3732, %v3734
        %v3883 = vmax.f32 %v3735, %v3737
        %v3884 = vmax.f32 %v3736, %v3738
        %v3885 = vmax.f32 %v3853, %v3869
        %v3886 = vmax.f32 %v3854, %v3870
        %v3887 = vmax.f32 %v3855, %v3871
        %v3888 = vmax.f32 %v3856, %v3872
        %v3889 = vmax.f32 %v3857, %v3873
        %v3890 = vmax.f32 %v3858, %v3874
        %v3891 = vmax.f32 %v3859, %v3875
        %v3892 = vmax.f32 %v3860, %v3876
        %v3893 = vmax.f32 %v3861, %v3877
        %v3894 = vmax.f32 %v3862, %v3878
        %v3895 = vmax.f32 %v3863, %v3879
        %v3896 = vmax.f32 %v3864, %v3880
        %v3897 = vmax.f32 %v3865, %v3881
        %v3898 = vmax.f32 %v3866, %v3882
        %v3899 = vmax.f32 %v3867, %v3883
        %v3900 = vmax.f32 %v3868, %v3884
        %v3901 = vadd.f32 %v3885, %v3791
        %v3902 = vadd.f32 %v3886, %v3795
        %v3903 = vadd.f32 %v3887, %v3791
        %v3904 = vadd.f32 %v3888, %v3795
        %v3905 = vadd.f32 %v3889, %v3791
        %v3906 = vadd.f32 %v3890, %v3795
        %v3907 = vadd.f32 %v3891, %v3791
        %v3908 = vadd.f32 %v3892, %v3795
        %v3909 = vadd.f32 %v3893, %v3791
        %v3910 = vadd.f32 %v3894, %v3795
        %v3911 = vadd.f32 %v3895, %v3791
        %v3912 = vadd.f32 %v3896, %v3795
        %v3913 = vadd.f32 %v3897, %v3791
        %v3914 = vadd.f32 %v3898, %v3795
        %v3915 = vadd.f32 %v3899, %v3791
        %v3916 = vadd.f32 %v3900, %v3795
        %v3917 = vmax.f32 %v3901, 0.0
        %v3918 = vmax.f32 %v3902, 0.0
        %v3919 = vmax.f32 %v3903, 0.0
        %v3920 = vmax.f32 %v3904, 0.0
        %v3921 = vmax.f32 %v3905, 0.0
        %v3922 = vmax.f32 %v3906, 0.0
        %v3923 = vmax.f32 %v3907, 0.0
        %v3924 = vmax.f32 %v3908, 0.0
        %v3925 = vmax.f32 %v3909, 0.0
        %v3926 = vmax.f32 %v3910, 0.0
        %v3927 = vmax.f32 %v3911, 0.0
        %v3928 = vmax.f32 %v3912, 0.0
        %v3929 = vmax.f32 %v3913, 0.0
        %v3930 = vmax.f32 %v3914, 0.0
        %v3931 = vmax.f32 %v3915, 0.0
        %v3932 = vmax.f32 %v3916, 0.0
        %3933 = vst [vmem:[#allocation3] sm:$0xff] %v3917
        %3934 = vst [vmem:[#allocation3 + $0x8] sm:$0xff] %v3918
        %3935 = vst [vmem:[#allocation3 + $0x10] sm:$0xff] %v3919
        %3936 = vst [vmem:[#allocation3 + $0x18] sm:$0xff] %v3920
        %3937 = vst [vmem:[#allocation3 + $0x20] sm:$0xff] %v3921
        %3938 = vst [vmem:[#allocation3 + $0x28] sm:$0xff] %v3922
        %3939 = vst [vmem:[#allocation3 + $0x30] sm:$0xff] %v3923
        %3940 = vst [vmem:[#allocation3 + $0x38] sm:$0xff] %v3924
        %3941 = vst [vmem:[#allocation3 + $0x40] sm:$0xff] %v3925
        %3942 = vst [vmem:[#allocation3 + $0x48] sm:$0xff] %v3926
        %3943 = vst [vmem:[#allocation3 + $0x50] sm:$0xff] %v3927
        %3944 = vst [vmem:[#allocation3 + $0x58] sm:$0xff] %v3928
        %3945 = vst [vmem:[#allocation3 + $0x60] sm:$0xff] %v3929
        %3946 = vst [vmem:[#allocation3 + $0x68] sm:$0xff] %v3930
        %3947 = vst [vmem:[#allocation3 + $0x70] sm:$0x7f] %v3931
        %3948 = vst [vmem:[#allocation3 + $0x78] sm:$0x7f] %v3932
        %v3949 = vld [vmem:[#allocation2] sm:$0xff]
        %v3950 = vld [vmem:[#allocation2 + $0x8] sm:$0xff]
        %v3951 = vld [vmem:[#allocation2 + $0x10] sm:$0xff]
        %v3952 = vld [vmem:[#allocation2 + $0x18] sm:$0xff]
        %v3953 = vld [vmem:[#allocation2 + $0x20] sm:$0xff]
        %v3954 = vld [vmem:[#allocation2 + $0x28] sm:$0xff]
        %v3955 = vld [vmem:[#allocation2 + $0x30] sm:$0xff]
        %v3956 = vld [vmem:[#allocation2 + $0x38] sm:$0xff]
        %v3957 = vld [vmem:[#allocation2 + $0x40] sm:$0xff]
        %v3958 = vld [vmem:[#allocation2 + $0x48] sm:$0xff]
        %v3959 = vld [vmem:[#allocation2 + $0x50] sm:$0xff]
        %v3960 = vld [vmem:[#allocation2 + $0x58] sm:$0xff]
        %v3961 = vld [vmem:[#allocation2 + $0x60] sm:$0xff]
        %v3962 = vld [vmem:[#allocation2 + $0x68] sm:$0xff]
        %v3963 = vld [vmem:[#allocation2 + $0x70] sm:$0x7f]
        %v3964 = vld [vmem:[#allocation2 + $0x78] sm:$0x7f]
        %v3965 = vld [vmem:[%s3] sm:$0xff]
        %v3966 = vld [vmem:[%s3 + $0x8] sm:$0xff]
        %v3967 = vld [vmem:[%s3 + $0x10] sm:$0xff]
        %v3968 = vld [vmem:[%s3 + $0x18] sm:$0xff]
        %v3969 = vld [vmem:[%s3 + $0x20] sm:$0xff]
        %v3970 = vld [vmem:[%s3 + $0x28] sm:$0xff]
        %v3971 = vld [vmem:[%s3 + $0x30] sm:$0xff]
        %v3972 = vld [vmem:[%s3 + $0x38] sm:$0xff]
        %v3973 = vld [vmem:[%s3 + $0x40] sm:$0xff]
        %v3974 = vld [vmem:[%s3 + $0x48] sm:$0xff]
        %v3975 = vld [vmem:[%s3 + $0x50] sm:$0xff]
        %v3976 = vld [vmem:[%s3 + $0x58] sm:$0xff]
        %v3977 = vld [vmem:[%s3 + $0x60] sm:$0xff]
        %v3978 = vld [vmem:[%s3 + $0x68] sm:$0xff]
        %v3979 = vld [vmem:[%s3 + $0x70] sm:$0xff]
        %v3980 = vld [vmem:[%s3 + $0x78] sm:$0xff]
        %v3981 = vld [vmem:[%s3 + $0x80] sm:$0xff]
        %v3982 = vld [vmem:[%s3 + $0x88] sm:$0xff]
        %v3983 = vld [vmem:[%s3 + $0x90] sm:$0xff]
        %v3984 = vld [vmem:[%s3 + $0x98] sm:$0xff]
        %v3985 = vld [vmem:[%s3 + $0xa0] sm:$0xff]
        %v3986 = vld [vmem:[%s3 + $0xa8] sm:$0xff]
        %v3987 = vld [vmem:[%s3 + $0xb0] sm:$0xff]
        %v3988 = vld [vmem:[%s3 + $0xb8] sm:$0xff]
        %v3989 = vld [vmem:[%s3 + $0xc0] sm:$0xff]
        %v3990 = vld [vmem:[%s3 + $0xc8] sm:$0xff]
        %v3991 = vld [vmem:[%s3 + $0xd0] sm:$0xff]
        %v3992 = vld [vmem:[%s3 + $0xd8] sm:$0xff]
        %v3993 = vld [vmem:[%s3 + $0xe0] sm:$0xff]
        %v3994 = vld [vmem:[%s3 + $0xe8] sm:$0xff]
        %v3995 = vld [vmem:[%s3 + $0xf0] sm:$0xff]
        %v3996 = vld [vmem:[%s3 + $0xf8] sm:$0xff]
        %v3997 = vld [vmem:[%s3 + $0x100] sm:$0xff]
        %v3998 = vld [vmem:[%s3 + $0x108] sm:$0xff]
        %v3999 = vld [vmem:[%s3 + $0x110] sm:$0xff]
        %v4000 = vld [vmem:[%s3 + $0x118] sm:$0xff]
        %v4001 = vld [vmem:[%s3 + $0x120] sm:$0xff]
        %v4002 = vld [vmem:[%s3 + $0x128] sm:$0xff]
        %v4003 = vld [vmem:[%s3 + $0x130] sm:$0xff]
        %v4004 = vld [vmem:[%s3 + $0x138] sm:$0xff]
        %v4005 = vld [vmem:[%s3 + $0x140] sm:$0xff]
        %v4006 = vld [vmem:[%s3 + $0x148] sm:$0xff]
        %v4007 = vld [vmem:[%s3 + $0x150] sm:$0xff]
        %v4008 = vld [vmem:[%s3 + $0x158] sm:$0xff]
        %v4009 = vld [vmem:[%s3 + $0x160] sm:$0xff]
        %v4010 = vld [vmem:[%s3 + $0x168] sm:$0xff]
        %v4011 = vld [vmem:[%s3 + $0x170] sm:$0xff]
        %v4012 = vld [vmem:[%s3 + $0x178] sm:$0xff]
        %v4013 = vld [vmem:[%s3 + $0x180] sm:$0xff]
        %v4014 = vld [vmem:[%s3 + $0x188] sm:$0xff]
        %v4015 = vld [vmem:[%s3 + $0x190] sm:$0xff]
        %v4016 = vld [vmem:[%s3 + $0x198] sm:$0xff]
        %v4017 = vld [vmem:[%s3 + $0x1a0] sm:$0xff]
        %v4018 = vld [vmem:[%s3 + $0x1a8] sm:$0xff]
        %v4019 = vld [vmem:[%s3 + $0x1b0] sm:$0xff]
        %v4020 = vld [vmem:[%s3 + $0x1b8] sm:$0xff]
        %v4021 = vld [vmem:[%s3 + $0x1c0] sm:$0xff]
        %v4022 = vld [vmem:[%s3 + $0x1c8] sm:$0xff]
        %v4023 = vld [vmem:[%s3 + $0x1d0] sm:$0xff]
        %v4024 = vld [vmem:[%s3 + $0x1d8] sm:$0xff]
        %v4025 = vld [vmem:[%s3 + $0x1e0] sm:$0xff]
        %v4026 = vld [vmem:[%s3 + $0x1e8] sm:$0xff]
        %v4027 = vld [vmem:[%s3 + $0x1f0] sm:$0xff]
        %v4028 = vld [vmem:[%s3 + $0x1f8] sm:$0xff]
        %v4029 = vld [vmem:[#allocation3] sm:$0xff]
        %v4030 = vld [vmem:[#allocation3 + $0x8] sm:$0xff]
        %v4031 = vld [vmem:[#allocation3 + $0x10] sm:$0xff]
        %v4032 = vld [vmem:[#allocation3 + $0x18] sm:$0xff]
        %v4033 = vld [vmem:[#allocation3 + $0x20] sm:$0xff]
        %v4034 = vld [vmem:[#allocation3 + $0x28] sm:$0xff]
        %v4035 = vld [vmem:[#allocation3 + $0x30] sm:$0xff]
        %v4036 = vld [vmem:[#allocation3 + $0x38] sm:$0xff]
        %v4037 = vld [vmem:[#allocation3 + $0x40] sm:$0xff]
        %v4038 = vld [vmem:[#allocation3 + $0x48] sm:$0xff]
        %v4039 = vld [vmem:[#allocation3 + $0x50] sm:$0xff]
        %v4040 = vld [vmem:[#allocation3 + $0x58] sm:$0xff]
        %v4041 = vld [vmem:[#allocation3 + $0x60] sm:$0xff]
        %v4042 = vld [vmem:[#allocation3 + $0x68] sm:$0xff]
        %v4043 = vld [vmem:[#allocation3 + $0x70] sm:$0x7f]
        %v4044 = vld [vmem:[#allocation3 + $0x78] sm:$0x7f]
        %s4045 = scalar_lea.vmem %s3, 512
        %v4046 = vld [vmem:[%s4045] sm:$0xff]
        %v4047 = vld [vmem:[%s4045 + $0x8] sm:$0xff]
        %v4048 = vld [vmem:[%s4045 + $0x10] sm:$0xff]
        %v4049 = vld [vmem:[%s4045 + $0x18] sm:$0xff]
        %v4050 = vld [vmem:[%s4045 + $0x20] sm:$0xff]
        %v4051 = vld [vmem:[%s4045 + $0x28] sm:$0xff]
        %v4052 = vld [vmem:[%s4045 + $0x30] sm:$0xff]
        %v4053 = vld [vmem:[%s4045 + $0x38] sm:$0xff]
        %v4054 = vld [vmem:[%s4045 + $0x40] sm:$0xff]
        %v4055 = vld [vmem:[%s4045 + $0x48] sm:$0xff]
        %v4056 = vld [vmem:[%s4045 + $0x50] sm:$0xff]
        %v4057 = vld [vmem:[%s4045 + $0x58] sm:$0xff]
        %v4058 = vld [vmem:[%s4045 + $0x60] sm:$0xff]
        %v4059 = vld [vmem:[%s4045 + $0x68] sm:$0xff]
        %v4060 = vld [vmem:[%s4045 + $0x70] sm:$0xff]
        %v4061 = vld [vmem:[%s4045 + $0x78] sm:$0xff]
        %v4062 = vld [vmem:[%s4045 + $0x80] sm:$0xff]
        %v4063 = vld [vmem:[%s4045 + $0x88] sm:$0xff]
        %v4064 = vld [vmem:[%s4045 + $0x90] sm:$0xff]
        %v4065 = vld [vmem:[%s4045 + $0x98] sm:$0xff]
        %v4066 = vld [vmem:[%s4045 + $0xa0] sm:$0xff]
        %v4067 = vld [vmem:[%s4045 + $0xa8] sm:$0xff]
        %v4068 = vld [vmem:[%s4045 + $0xb0] sm:$0xff]
        %v4069 = vld [vmem:[%s4045 + $0xb8] sm:$0xff]
        %v4070 = vld [vmem:[%s4045 + $0xc0] sm:$0xff]
        %v4071 = vld [vmem:[%s4045 + $0xc8] sm:$0xff]
        %v4072 = vld [vmem:[%s4045 + $0xd0] sm:$0xff]
        %v4073 = vld [vmem:[%s4045 + $0xd8] sm:$0xff]
        %v4074 = vld [vmem:[%s4045 + $0xe0] sm:$0xff]
        %v4075 = vld [vmem:[%s4045 + $0xe8] sm:$0xff]
        %v4076 = vld [vmem:[%s4045 + $0xf0] sm:$0xff]
        %v4077 = vld [vmem:[%s4045 + $0xf8] sm:$0xff]
        %v4078 = vld [vmem:[%s4045 + $0x100] sm:$0xff]
        %v4079 = vld [vmem:[%s4045 + $0x108] sm:$0xff]
        %v4080 = vld [vmem:[%s4045 + $0x110] sm:$0xff]
        %v4081 = vld [vmem:[%s4045 + $0x118] sm:$0xff]
        %v4082 = vld [vmem:[%s4045 + $0x120] sm:$0xff]
        %v4083 = vld [vmem:[%s4045 + $0x128] sm:$0xff]
        %v4084 = vld [vmem:[%s4045 + $0x130] sm:$0xff]
        %v4085 = vld [vmem:[%s4045 + $0x138] sm:$0xff]
        %v4086 = vld [vmem:[%s4045 + $0x140] sm:$0xff]
        %v4087 = vld [vmem:[%s4045 + $0x148] sm:$0xff]
        %v4088 = vld [vmem:[%s4045 + $0x150] sm:$0xff]
        %v4089 = vld [vmem:[%s4045 + $0x158] sm:$0xff]
        %v4090 = vld [vmem:[%s4045 + $0x160] sm:$0xff]
        %v4091 = vld [vmem:[%s4045 + $0x168] sm:$0xff]
        %v4092 = vld [vmem:[%s4045 + $0x170] sm:$0xff]
        %v4093 = vld [vmem:[%s4045 + $0x178] sm:$0xff]
        %v4094 = vld [vmem:[%s4045 + $0x180] sm:$0xff]
        %v4095 = vld [vmem:[%s4045 + $0x188] sm:$0xff]
        %v4096 = vld [vmem:[%s4045 + $0x190] sm:$0xff]
        %v4097 = vld [vmem:[%s4045 + $0x198] sm:$0xff]
        %v4098 = vld [vmem:[%s4045 + $0x1a0] sm:$0xff]
        %v4099 = vld [vmem:[%s4045 + $0x1a8] sm:$0xff]
        %v4100 = vld [vmem:[%s4045 + $0x1b0] sm:$0xff]
        %v4101 = vld [vmem:[%s4045 + $0x1b8] sm:$0xff]
        %v4102 = vld [vmem:[%s4045 + $0x1c0] sm:$0xff]
        %v4103 = vld [vmem:[%s4045 + $0x1c8] sm:$0xff]
        %v4104 = vld [vmem:[%s4045 + $0x1d0] sm:$0xff]
        %v4105 = vld [vmem:[%s4045 + $0x1d8] sm:$0xff]
        %v4106 = vld [vmem:[%s4045 + $0x1e0] sm:$0xff]
        %v4107 = vld [vmem:[%s4045 + $0x1e8] sm:$0xff]
        %v4108 = vld [vmem:[%s4045 + $0x1f0] sm:$0xff]
        %v4109 = vld [vmem:[%s4045 + $0x1f8] sm:$0xff]
        %4110 = vmatprep.subr.mxu0 %v4047
        %4111 = vmatpush1.msra.mxu0 %v4046
        %4112 = vmatprep.subr.mxu0 %v4049
        %4113 = vmatpush1.msra.mxu0 %v4048
        %4114 = vmatprep.subr.mxu0 %v4051
        %4115 = vmatpush1.msra.mxu0 %v4050
        %4116 = vmatprep.subr.mxu0 %v4053
        %4117 = vmatpush1.msra.mxu0 %v4052
        %4118 = vmatprep.subr.mxu0 %v4055
        %4119 = vmatpush1.msra.mxu0 %v4054
        %4120 = vmatprep.subr.mxu0 %v4057
        %4121 = vmatpush1.msra.mxu0 %v4056
        %4122 = vmatprep.subr.mxu0 %v4059
        %4123 = vmatpush1.msra.mxu0 %v4058
        %4124 = vmatprep.subr.mxu0 %v4061
        %4125 = vmatpush1.msra.mxu0 %v4060
        %4126 = vmatprep.subr.mxu0 %v4063
        %4127 = vmatpush1.msra.mxu0 %v4062
        %4128 = vmatprep.subr.mxu0 %v4065
        %4129 = vmatpush1.msra.mxu0 %v4064
        %4130 = vmatprep.subr.mxu0 %v4067
        %4131 = vmatpush1.msra.mxu0 %v4066
        %4132 = vmatprep.subr.mxu0 %v4069
        %4133 = vmatpush1.msra.mxu0 %v4068
        %4134 = vmatprep.subr.mxu0 %v4071
        %4135 = vmatpush1.msra.mxu0 %v4070
        %4136 = vmatprep.subr.mxu0 %v4073
        %4137 = vmatpush1.msra.mxu0 %v4072
        %4138 = vmatprep.subr.mxu0 %v4075
        %4139 = vmatpush1.msra.mxu0 %v4074
        %4140 = vmatprep.subr.mxu0 %v4077
        %4141 = vmatpush1.msra.mxu0 %v4076
        %4142 = vmatprep.subr.mxu0 %v4079
        %4143 = vmatpush1.msra.mxu0 %v4078
        %4144 = vmatprep.subr.mxu0 %v4081
        %4145 = vmatpush1.msra.mxu0 %v4080
        %4146 = vmatprep.subr.mxu0 %v4083
        %4147 = vmatpush1.msra.mxu0 %v4082
        %4148 = vmatprep.subr.mxu0 %v4085
        %4149 = vmatpush1.msra.mxu0 %v4084
        %4150 = vmatprep.subr.mxu0 %v4087
        %4151 = vmatpush1.msra.mxu0 %v4086
        %4152 = vmatprep.subr.mxu0 %v4089
        %4153 = vmatpush1.msra.mxu0 %v4088
        %4154 = vmatprep.subr.mxu0 %v4091
        %4155 = vmatpush1.msra.mxu0 %v4090
        %4156 = vmatprep.subr.mxu0 %v4093
        %4157 = vmatpush1.msra.mxu0 %v4092
        %4158 = vmatprep.subr.mxu0 %v4095
        %4159 = vmatpush1.msra.mxu0 %v4094
        %4160 = vmatprep.subr.mxu0 %v4097
        %4161 = vmatpush1.msra.mxu0 %v4096
        %4162 = vmatprep.subr.mxu0 %v4099
        %4163 = vmatpush1.msra.mxu0 %v4098
        %4164 = vmatprep.subr.mxu0 %v4101
        %4165 = vmatpush1.msra.mxu0 %v4100
        %4166 = vmatprep.subr.mxu0 %v4103
        %4167 = vmatpush1.msra.mxu0 %v4102
        %4168 = vmatprep.subr.mxu0 %v4105
        %4169 = vmatpush1.msra.mxu0 %v4104
        %4170 = vmatprep.subr.mxu0 %v4107
        %4171 = vmatpush1.msra.mxu0 %v4106
        %4172 = vmatprep.subr.mxu0 %v4109
        %4173 = vmatpush1.msra.mxu0 %v4108
        %4174 = vmatprep.mubr.f32.mxu0 %v4030
        %4175 = vmatmul.mubr.f32.gmra.mrb[0].mxu0 %v4029
        %v4176 = vpop.f32.mrb[0].mxu0
        %v4177 = vadd.f32 0.0, %v4176
        %v4178 = vpop.f32.mrb[0].mxu0
        %v4179 = vadd.f32 0.0, %v4178
        %4180 = vmatprep.mubr.f32.mxu0 %v4032
        %4181 = vmatmul.mubr.f32.gmra.mrb[0].mxu0 %v4031
        %v4182 = vpop.f32.mrb[0].mxu0
        %v4183 = vadd.f32 0.0, %v4182
        %v4184 = vpop.f32.mrb[0].mxu0
        %v4185 = vadd.f32 0.0, %v4184
        %4186 = vmatprep.mubr.f32.mxu0 %v4034
        %4187 = vmatmul.mubr.f32.gmra.mrb[0].mxu0 %v4033
        %v4188 = vpop.f32.mrb[0].mxu0
        %v4189 = vadd.f32 0.0, %v4188
        %v4190 = vpop.f32.mrb[0].mxu0
        %v4191 = vadd.f32 0.0, %v4190
        %4192 = vmatprep.mubr.f32.mxu0 %v4036
        %4193 = vmatmul.mubr.f32.gmra.mrb[0].mxu0 %v4035
        %v4194 = vpop.f32.mrb[0].mxu0
        %v4195 = vadd.f32 0.0, %v4194
        %v4196 = vpop.f32.mrb[0].mxu0
        %v4197 = vadd.f32 0.0, %v4196
        %4198 = vmatprep.mubr.f32.mxu0 %v4038
        %4199 = vmatmul.mubr.f32.gmra.mrb[0].mxu0 %v4037
        %v4200 = vpop.f32.mrb[0].mxu0
        %v4201 = vadd.f32 0.0, %v4200
        %v4202 = vpop.f32.mrb[0].mxu0
        %v4203 = vadd.f32 0.0, %v4202
        %4204 = vmatprep.mubr.f32.mxu0 %v4040
        %4205 = vmatmul.mubr.f32.gmra.mrb[0].mxu0 %v4039
        %v4206 = vpop.f32.mrb[0].mxu0
        %v4207 = vadd.f32 0.0, %v4206
        %v4208 = vpop.f32.mrb[0].mxu0
        %v4209 = vadd.f32 0.0, %v4208
        %4210 = vmatprep.mubr.f32.mxu0 %v4042
        %4211 = vmatmul.mubr.f32.gmra.mrb[0].mxu0 %v4041
        %v4212 = vpop.f32.mrb[0].mxu0
        %v4213 = vadd.f32 0.0, %v4212
        %v4214 = vpop.f32.mrb[0].mxu0
        %v4215 = vadd.f32 0.0, %v4214
        %4216 = vmatprep.mubr.f32.mxu0 %v4044
        %4217 = vmatmul.mubr.f32.gmra.mrb[0].mxu0 %v4043
        %v4218 = vpop.f32.mrb[0].mxu0
        %v4219 = vadd.f32 0.0, %v4218
        %v4220 = vpop.f32.mrb[0].mxu0
        %v4221 = vadd.f32 0.0, %v4220
        %4222 = vdwg.mxu0
        %4223 = vmatprep.subr.mxu0 %v3966
        %4224 = vmatpush1.msra.mxu0 %v3965
        %4225 = vmatprep.subr.mxu0 %v3968
        %4226 = vmatpush1.msra.mxu0 %v3967
        %4227 = vmatprep.subr.mxu0 %v3970
        %4228 = vmatpush1.msra.mxu0 %v3969
        %4229 = vmatprep.subr.mxu0 %v3972
        %4230 = vmatpush1.msra.mxu0 %v3971
        %4231 = vmatprep.subr.mxu0 %v3974
        %4232 = vmatpush1.msra.mxu0 %v3973
        %4233 = vmatprep.subr.mxu0 %v3976
        %4234 = vmatpush1.msra.mxu0 %v3975
        %4235 = vmatprep.subr.mxu0 %v3978
        %4236 = vmatpush1.msra.mxu0 %v3977
        %4237 = vmatprep.subr.mxu0 %v3980
        %4238 = vmatpush1.msra.mxu0 %v3979
        %4239 = vmatprep.subr.mxu0 %v3982
        %4240 = vmatpush1.msra.mxu0 %v3981
        %4241 = vmatprep.subr.mxu0 %v3984
        %4242 = vmatpush1.msra.mxu0 %v3983
        %4243 = vmatprep.subr.mxu0 %v3986
        %4244 = vmatpush1.msra.mxu0 %v3985
        %4245 = vmatprep.subr.mxu0 %v3988
        %4246 = vmatpush1.msra.mxu0 %v3987
        %4247 = vmatprep.subr.mxu0 %v3990
        %4248 = vmatpush1.msra.mxu0 %v3989
        %4249 = vmatprep.subr.mxu0 %v3992
        %4250 = vmatpush1.msra.mxu0 %v3991
        %4251 = vmatprep.subr.mxu0 %v3994
        %4252 = vmatpush1.msra.mxu0 %v3993
        %4253 = vmatprep.subr.mxu0 %v3996
        %4254 = vmatpush1.msra.mxu0 %v3995
        %4255 = vmatprep.subr.mxu0 %v3998
        %4256 = vmatpush1.msra.mxu0 %v3997
        %4257 = vmatprep.subr.mxu0 %v4000
        %4258 = vmatpush1.msra.mxu0 %v3999
        %4259 = vmatprep.subr.mxu0 %v4002
        %4260 = vmatpush1.msra.mxu0 %v4001
        %4261 = vmatprep.subr.mxu0 %v4004
        %4262 = vmatpush1.msra.mxu0 %v4003
        %4263 = vmatprep.subr.mxu0 %v4006
        %4264 = vmatpush1.msra.mxu0 %v4005
        %4265 = vmatprep.subr.mxu0 %v4008
        %4266 = vmatpush1.msra.mxu0 %v4007
        %4267 = vmatprep.subr.mxu0 %v4010
        %4268 = vmatpush1.msra.mxu0 %v4009
        %4269 = vmatprep.subr.mxu0 %v4012
        %4270 = vmatpush1.msra.mxu0 %v4011
        %4271 = vmatprep.subr.mxu0 %v4014
        %4272 = vmatpush1.msra.mxu0 %v4013
        %4273 = vmatprep.subr.mxu0 %v4016
        %4274 = vmatpush1.msra.mxu0 %v4015
        %4275 = vmatprep.subr.mxu0 %v4018
        %4276 = vmatpush1.msra.mxu0 %v4017
        %4277 = vmatprep.subr.mxu0 %v4020
        %4278 = vmatpush1.msra.mxu0 %v4019
        %4279 = vmatprep.subr.mxu0 %v4022
        %4280 = vmatpush1.msra.mxu0 %v4021
        %4281 = vmatprep.subr.mxu0 %v4024
        %4282 = vmatpush1.msra.mxu0 %v4023
        %4283 = vmatprep.subr.mxu0 %v4026
        %4284 = vmatpush1.msra.mxu0 %v4025
        %4285 = vmatprep.subr.mxu0 %v4028
        %4286 = vmatpush1.msra.mxu0 %v4027
        %4287 = vmatprep.mubr.f32.mxu0 %v3950
        %4288 = vmatmul.mubr.f32.gmra.mrb[0].mxu0 %v3949
        %v4289 = vpop.f32.mrb[0].mxu0
        %v4290 = vadd.f32 %v4177, %v4289
        %v4291 = vpop.f32.mrb[0].mxu0
        %v4292 = vadd.f32 %v4179, %v4291
        %4293 = vmatprep.mubr.f32.mxu0 %v3952
        %4294 = vmatmul.mubr.f32.gmra.mrb[0].mxu0 %v3951
        %v4295 = vpop.f32.mrb[0].mxu0
        %v4296 = vadd.f32 %v4183, %v4295
        %v4297 = vpop.f32.mrb[0].mxu0
        %v4298 = vadd.f32 %v4185, %v4297
        %4299 = vmatprep.mubr.f32.mxu0 %v3954
        %4300 = vmatmul.mubr.f32.gmra.mrb[0].mxu0 %v3953
        %v4301 = vpop.f32.mrb[0].mxu0
        %v4302 = vadd.f32 %v4189, %v4301
        %v4303 = vpop.f32.mrb[0].mxu0
        %v4304 = vadd.f32 %v4191, %v4303
        %4305 = vmatprep.mubr.f32.mxu0 %v3956
        %4306 = vmatmul.mubr.f32.gmra.mrb[0].mxu0 %v3955
        %v4307 = vpop.f32.mrb[0].mxu0
        %v4308 = vadd.f32 %v4195, %v4307
        %v4309 = vpop.f32.mrb[0].mxu0
        %v4310 = vadd.f32 %v4197, %v4309
        %4311 = vmatprep.mubr.f32.mxu0 %v3958
        %4312 = vmatmul.mubr.f32.gmra.mrb[0].mxu0 %v3957
        %v4313 = vpop.f32.mrb[0].mxu0
        %v4314 = vadd.f32 %v4201, %v4313
        %v4315 = vpop.f32.mrb[0].mxu0
        %v4316 = vadd.f32 %v4203, %v4315
        %4317 = vmatprep.mubr.f32.mxu0 %v3960
        %4318 = vmatmul.mubr.f32.gmra.mrb[0].mxu0 %v3959
        %v4319 = vpop.f32.mrb[0].mxu0
        %v4320 = vadd.f32 %v4207, %v4319
        %v4321 = vpop.f32.mrb[0].mxu0
        %v4322 = vadd.f32 %v4209, %v4321
        %4323 = vmatprep.mubr.f32.mxu0 %v3962
        %4324 = vmatmul.mubr.f32.gmra.mrb[0].mxu0 %v3961
        %v4325 = vpop.f32.mrb[0].mxu0
        %v4326 = vadd.f32 %v4213, %v4325
        %v4327 = vpop.f32.mrb[0].mxu0
        %v4328 = vadd.f32 %v4215, %v4327
        %4329 = vmatprep.mubr.f32.mxu0 %v3964
        %4330 = vmatmul.mubr.f32.gmra.mrb[0].mxu0 %v3963
        %v4331 = vpop.f32.mrb[0].mxu0
        %v4332 = vadd.f32 %v4219, %v4331
        %v4333 = vpop.f32.mrb[0].mxu0
        %v4334 = vadd.f32 %v4221, %v4333
        %4335 = vdwg.mxu0
        %v4336 = vld [vmem:[#allocation2] sm:$0xfe]
        %v4337 = vld [vmem:[#allocation2 + $0x8] sm:$0xfe]
        %v4338 = vld [vmem:[#allocation2 + $0x70] sm:$0xff]
        %v4339 = vld [vmem:[#allocation2 + $0x78] sm:$0xff]
        %s4340 = scalar_lea.vmem %s3, 1024
        %v4341 = vld [vmem:[%s4340] sm:$0xff]
        %v4342 = vld [vmem:[%s4340 + $0x8] sm:$0xff]
        %v4343 = vld [vmem:[%s4340 + $0x10] sm:$0xff]
        %v4344 = vld [vmem:[%s4340 + $0x18] sm:$0xff]
        %v4345 = vld [vmem:[%s4340 + $0x20] sm:$0xff]
        %v4346 = vld [vmem:[%s4340 + $0x28] sm:$0xff]
        %v4347 = vld [vmem:[%s4340 + $0x30] sm:$0xff]
        %v4348 = vld [vmem:[%s4340 + $0x38] sm:$0xff]
        %v4349 = vld [vmem:[%s4340 + $0x40] sm:$0xff]
        %v4350 = vld [vmem:[%s4340 + $0x48] sm:$0xff]
        %v4351 = vld [vmem:[%s4340 + $0x50] sm:$0xff]
        %v4352 = vld [vmem:[%s4340 + $0x58] sm:$0xff]
        %v4353 = vld [vmem:[%s4340 + $0x60] sm:$0xff]
        %v4354 = vld [vmem:[%s4340 + $0x68] sm:$0xff]
        %v4355 = vld [vmem:[%s4340 + $0x70] sm:$0xff]
        %v4356 = vld [vmem:[%s4340 + $0x78] sm:$0xff]
        %v4357 = vld [vmem:[%s4340 + $0x80] sm:$0xff]
        %v4358 = vld [vmem:[%s4340 + $0x88] sm:$0xff]
        %v4359 = vld [vmem:[%s4340 + $0x90] sm:$0xff]
        %v4360 = vld [vmem:[%s4340 + $0x98] sm:$0xff]
        %v4361 = vld [vmem:[%s4340 + $0xa0] sm:$0xff]
        %v4362 = vld [vmem:[%s4340 + $0xa8] sm:$0xff]
        %v4363 = vld [vmem:[%s4340 + $0xb0] sm:$0xff]
        %v4364 = vld [vmem:[%s4340 + $0xb8] sm:$0xff]
        %v4365 = vld [vmem:[%s4340 + $0xc0] sm:$0xff]
        %v4366 = vld [vmem:[%s4340 + $0xc8] sm:$0xff]
        %v4367 = vld [vmem:[%s4340 + $0xd0] sm:$0xff]
        %v4368 = vld [vmem:[%s4340 + $0xd8] sm:$0xff]
        %v4369 = vld [vmem:[%s4340 + $0xe0] sm:$0xff]
        %v4370 = vld [vmem:[%s4340 + $0xe8] sm:$0xff]
        %v4371 = vld [vmem:[%s4340 + $0xf0] sm:$0xff]
        %v4372 = vld [vmem:[%s4340 + $0xf8] sm:$0xff]
        %v4373 = vld [vmem:[%s4340 + $0x100] sm:$0xff]
        %v4374 = vld [vmem:[%s4340 + $0x108] sm:$0xff]
        %v4375 = vld [vmem:[%s4340 + $0x110] sm:$0xff]
        %v4376 = vld [vmem:[%s4340 + $0x118] sm:$0xff]
        %v4377 = vld [vmem:[%s4340 + $0x120] sm:$0xff]
        %v4378 = vld [vmem:[%s4340 + $0x128] sm:$0xff]
        %v4379 = vld [vmem:[%s4340 + $0x130] sm:$0xff]
        %v4380 = vld [vmem:[%s4340 + $0x138] sm:$0xff]
        %v4381 = vld [vmem:[%s4340 + $0x140] sm:$0xff]
        %v4382 = vld [vmem:[%s4340 + $0x148] sm:$0xff]
        %v4383 = vld [vmem:[%s4340 + $0x150] sm:$0xff]
        %v4384 = vld [vmem:[%s4340 + $0x158] sm:$0xff]
        %v4385 = vld [vmem:[%s4340 + $0x160] sm:$0xff]
        %v4386 = vld [vmem:[%s4340 + $0x168] sm:$0xff]
        %v4387 = vld [vmem:[%s4340 + $0x170] sm:$0xff]
        %v4388 = vld [vmem:[%s4340 + $0x178] sm:$0xff]
        %v4389 = vld [vmem:[%s4340 + $0x180] sm:$0xff]
        %v4390 = vld [vmem:[%s4340 + $0x188] sm:$0xff]
        %v4391 = vld [vmem:[%s4340 + $0x190] sm:$0xff]
        %v4392 = vld [vmem:[%s4340 + $0x198] sm:$0xff]
        %v4393 = vld [vmem:[%s4340 + $0x1a0] sm:$0xff]
        %v4394 = vld [vmem:[%s4340 + $0x1a8] sm:$0xff]
        %v4395 = vld [vmem:[%s4340 + $0x1b0] sm:$0xff]
        %v4396 = vld [vmem:[%s4340 + $0x1b8] sm:$0xff]
        %v4397 = vld [vmem:[%s4340 + $0x1c0] sm:$0xff]
        %v4398 = vld [vmem:[%s4340 + $0x1c8] sm:$0xff]
        %v4399 = vld [vmem:[%s4340 + $0x1d0] sm:$0xff]
        %v4400 = vld [vmem:[%s4340 + $0x1d8] sm:$0xff]
        %v4401 = vld [vmem:[%s4340 + $0x1e0] sm:$0xff]
        %v4402 = vld [vmem:[%s4340 + $0x1e8] sm:$0xff]
        %v4403 = vld [vmem:[%s4340 + $0x1f0] sm:$0xff]
        %v4404 = vld [vmem:[%s4340 + $0x1f8] sm:$0xff]
        %vm4421 = vcmask 1046528
        %v4422 = vrot.slane %v4336, 1
        %v4423 = vrot.slane %v3951, 1
        %v4424 = vsel %vm4421, %v4422, %v4423
        %v4425 = vrot.slane %v4337, 1
        %v4426 = vrot.slane %v3952, 1
        %v4427 = vsel %vm4421, %v4425, %v4426
        %v4428 = vrot.slane %v3953, 1
        %v4429 = vsel %vm4421, %v4423, %v4428
        %v4430 = vrot.slane %v3954, 1
        %v4431 = vsel %vm4421, %v4426, %v4430
        %v4432 = vrot.slane %v3955, 1
        %v4433 = vsel %vm4421, %v4428, %v4432
        %v4434 = vrot.slane %v3956, 1
        %v4435 = vsel %vm4421, %v4430, %v4434
        %v4436 = vrot.slane %v3957, 1
        %v4437 = vsel %vm4421, %v4432, %v4436
        %v4438 = vrot.slane %v3958, 1
        %v4439 = vsel %vm4421, %v4434, %v4438
        %v4440 = vrot.slane %v3959, 1
        %v4441 = vsel %vm4421, %v4436, %v4440
        %v4442 = vrot.slane %v3960, 1
        %v4443 = vsel %vm4421, %v4438, %v4442
        %v4444 = vrot.slane %v3961, 1
        %v4445 = vsel %vm4421, %v4440, %v4444
        %v4446 = vrot.slane %v3962, 1
        %v4447 = vsel %vm4421, %v4442, %v4446
        %v4448 = vrot.slane %v4338, 1
        %v4449 = vsel %vm4421, %v4444, %v4448
        %v4450 = vrot.slane %v4339, 1
        %v4451 = vsel %vm4421, %v4446, %v4450
        %4468 = vmatprep.subr.mxu0 %v4342
        %4469 = vmatpush1.msra.mxu0 %v4341
        %4470 = vmatprep.subr.mxu0 %v4344
        %4471 = vmatpush1.msra.mxu0 %v4343
        %4472 = vmatprep.subr.mxu0 %v4346
        %4473 = vmatpush1.msra.mxu0 %v4345
        %4474 = vmatprep.subr.mxu0 %v4348
        %4475 = vmatpush1.msra.mxu0 %v4347
        %4476 = vmatprep.subr.mxu0 %v4350
        %4477 = vmatpush1.msra.mxu0 %v4349
        %4478 = vmatprep.subr.mxu0 %v4352
        %4479 = vmatpush1.msra.mxu0 %v4351
        %4480 = vmatprep.subr.mxu0 %v4354
        %4481 = vmatpush1.msra.mxu0 %v4353
        %4482 = vmatprep.subr.mxu0 %v4356
        %4483 = vmatpush1.msra.mxu0 %v4355
        %4484 = vmatprep.subr.mxu0 %v4358
        %4485 = vmatpush1.msra.mxu0 %v4357
        %4486 = vmatprep.subr.mxu0 %v4360
        %4487 = vmatpush1.msra.mxu0 %v4359
        %4488 = vmatprep.subr.mxu0 %v4362
        %4489 = vmatpush1.msra.mxu0 %v4361
        %4490 = vmatprep.subr.mxu0 %v4364
        %4491 = vmatpush1.msra.mxu0 %v4363
        %4492 = vmatprep.subr.mxu0 %v4366
        %4493 = vmatpush1.msra.mxu0 %v4365
        %4494 = vmatprep.subr.mxu0 %v4368
        %4495 = vmatpush1.msra.mxu0 %v4367
        %4496 = vmatprep.subr.mxu0 %v4370
        %4497 = vmatpush1.msra.mxu0 %v4369
        %4498 = vmatprep.subr.mxu0 %v4372
        %4499 = vmatpush1.msra.mxu0 %v4371
        %4500 = vmatprep.subr.mxu0 %v4374
        %4501 = vmatpush1.msra.mxu0 %v4373
        %4502 = vmatprep.subr.mxu0 %v4376
        %4503 = vmatpush1.msra.mxu0 %v4375
        %4504 = vmatprep.subr.mxu0 %v4378
        %4505 = vmatpush1.msra.mxu0 %v4377
        %4506 = vmatprep.subr.mxu0 %v4380
        %4507 = vmatpush1.msra.mxu0 %v4379
        %4508 = vmatprep.subr.mxu0 %v4382
        %4509 = vmatpush1.msra.mxu0 %v4381
        %4510 = vmatprep.subr.mxu0 %v4384
        %4511 = vmatpush1.msra.mxu0 %v4383
        %4512 = vmatprep.subr.mxu0 %v4386
        %4513 = vmatpush1.msra.mxu0 %v4385
        %4514 = vmatprep.subr.mxu0 %v4388
        %4515 = vmatpush1.msra.mxu0 %v4387
        %4516 = vmatprep.subr.mxu0 %v4390
        %4517 = vmatpush1.msra.mxu0 %v4389
        %4518 = vmatprep.subr.mxu0 %v4392
        %4519 = vmatpush1.msra.mxu0 %v4391
        %4520 = vmatprep.subr.mxu0 %v4394
        %4521 = vmatpush1.msra.mxu0 %v4393
        %4522 = vmatprep.subr.mxu0 %v4396
        %4523 = vmatpush1.msra.mxu0 %v4395
        %4524 = vmatprep.subr.mxu0 %v4398
        %4525 = vmatpush1.msra.mxu0 %v4397
        %4526 = vmatprep.subr.mxu0 %v4400
        %4527 = vmatpush1.msra.mxu0 %v4399
        %4528 = vmatprep.subr.mxu0 %v4402
        %4529 = vmatpush1.msra.mxu0 %v4401
        %4530 = vmatprep.subr.mxu0 %v4404
        %4531 = vmatpush1.msra.mxu0 %v4403
        %4532 = vmatprep.mubr.f32.mxu0 %v4427
        %4533 = vmatmul.mubr.f32.gmra.mrb[0].mxu0 %v4424
        %v4534 = vpop.f32.mrb[0].mxu0
        %v4535 = vadd.f32 0.0, %v4534
        %v4536 = vpop.f32.mrb[0].mxu0
        %v4537 = vadd.f32 0.0, %v4536
        %4538 = vmatprep.mubr.f32.mxu0 %v4431
        %4539 = vmatmul.mubr.f32.gmra.mrb[0].mxu0 %v4429
        %v4540 = vpop.f32.mrb[0].mxu0
        %v4541 = vadd.f32 0.0, %v4540
        %v4542 = vpop.f32.mrb[0].mxu0
        %v4543 = vadd.f32 0.0, %v4542
        %4544 = vmatprep.mubr.f32.mxu0 %v4435
        %4545 = vmatmul.mubr.f32.gmra.mrb[0].mxu0 %v4433
        %v4546 = vpop.f32.mrb[0].mxu0
        %v4547 = vadd.f32 0.0, %v4546
        %v4548 = vpop.f32.mrb[0].mxu0
        %v4549 = vadd.f32 0.0, %v4548
        %4550 = vmatprep.mubr.f32.mxu0 %v4439
        %4551 = vmatmul.mubr.f32.gmra.mrb[0].mxu0 %v4437
        %v4552 = vpop.f32.mrb[0].mxu0
        %v4553 = vadd.f32 0.0, %v4552
        %v4554 = vpop.f32.mrb[0].mxu0
        %v4555 = vadd.f32 0.0, %v4554
        %4556 = vmatprep.mubr.f32.mxu0 %v4443
        %4557 = vmatmul.mubr.f32.gmra.mrb[0].mxu0 %v4441
        %v4558 = vpop.f32.mrb[0].mxu0
        %v4559 = vadd.f32 0.0, %v4558
        %v4560 = vpop.f32.mrb[0].mxu0
        %v4561 = vadd.f32 0.0, %v4560
        %4562 = vmatprep.mubr.f32.mxu0 %v4447
        %4563 = vmatmul.mubr.f32.gmra.mrb[0].mxu0 %v4445
        %v4564 = vpop.f32.mrb[0].mxu0
        %v4565 = vadd.f32 0.0, %v4564
        %v4566 = vpop.f32.mrb[0].mxu0
        %v4567 = vadd.f32 0.0, %v4566
        %4568 = vmatprep.mubr.f32.mxu0 %v4451
        %4569 = vmatmul.mubr.f32.gmra.mrb[0].mxu0 %v4449
        %v4570 = vpop.f32.mrb[0].mxu0
        %v4571 = vadd.f32 0.0, %v4570
        %v4572 = vpop.f32.mrb[0].mxu0
        %v4573 = vadd.f32 0.0, %v4572
        %4574 = vmatprep.mubr.f32.mxu0 %v4450
        %4575 = vmatmul.mubr.f32.gmra.mrb[0].mxu0 %v4448
        %v4576 = vpop.f32.mrb[0].mxu0
        %v4577 = vadd.f32 0.0, %v4576
        %v4578 = vpop.f32.mrb[0].mxu0
        %v4579 = vadd.f32 0.0, %v4578
        %4580 = vdwg.mxu0
        %v4581 = vadd.f32 %v4290, %v4535
        %v4582 = vadd.f32 %v4292, %v4537
        %v4583 = vadd.f32 %v4296, %v4541
        %v4584 = vadd.f32 %v4298, %v4543
        %v4585 = vadd.f32 %v4302, %v4547
        %v4586 = vadd.f32 %v4304, %v4549
        %v4587 = vadd.f32 %v4308, %v4553
        %v4588 = vadd.f32 %v4310, %v4555
        %v4589 = vadd.f32 %v4314, %v4559
        %v4590 = vadd.f32 %v4316, %v4561
        %v4591 = vadd.f32 %v4320, %v4565
        %v4592 = vadd.f32 %v4322, %v4567
        %v4593 = vadd.f32 %v4326, %v4571
        %v4594 = vadd.f32 %v4328, %v4573
        %v4595 = vadd.f32 %v4332, %v4577
        %v4596 = vadd.f32 %v4334, %v4579
        %4597 = vmatprep.subr.mxu0 %v4047
        %4598 = vmatpush1.msra.mxu0 %v4046
        %4599 = vmatprep.subr.mxu0 %v4049
        %4600 = vmatpush1.msra.mxu0 %v4048
        %4601 = vmatprep.subr.mxu0 %v4051
        %4602 = vmatpush1.msra.mxu0 %v4050
        %4603 = vmatprep.subr.mxu0 %v4053
        %4604 = vmatpush1.msra.mxu0 %v4052
        %4605 = vmatprep.subr.mxu0 %v4055
        %4606 = vmatpush1.msra.mxu0 %v4054
        %4607 = vmatprep.subr.mxu0 %v4057
        %4608 = vmatpush1.msra.mxu0 %v4056
        %4609 = vmatprep.subr.mxu0 %v4059
        %4610 = vmatpush1.msra.mxu0 %v4058
        %4611 = vmatprep.subr.mxu0 %v4061
        %4612 = vmatpush1.msra.mxu0 %v4060
        %4613 = vmatprep.subr.mxu0 %v4063
        %4614 = vmatpush1.msra.mxu0 %v4062
        %4615 = vmatprep.subr.mxu0 %v4065
        %4616 = vmatpush1.msra.mxu0 %v4064
        %4617 = vmatprep.subr.mxu0 %v4067
        %4618 = vmatpush1.msra.mxu0 %v4066
        %4619 = vmatprep.subr.mxu0 %v4069
        %4620 = vmatpush1.msra.mxu0 %v4068
        %4621 = vmatprep.subr.mxu0 %v4071
        %4622 = vmatpush1.msra.mxu0 %v4070
        %4623 = vmatprep.subr.mxu0 %v4073
        %4624 = vmatpush1.msra.mxu0 %v4072
        %4625 = vmatprep.subr.mxu0 %v4075
        %4626 = vmatpush1.msra.mxu0 %v4074
        %4627 = vmatprep.subr.mxu0 %v4077
        %4628 = vmatpush1.msra.mxu0 %v4076
        %4629 = vmatprep.subr.mxu0 %v4079
        %4630 = vmatpush1.msra.mxu0 %v4078
        %4631 = vmatprep.subr.mxu0 %v4081
        %4632 = vmatpush1.msra.mxu0 %v4080
        %4633 = vmatprep.subr.mxu0 %v4083
        %4634 = vmatpush1.msra.mxu0 %v4082
        %4635 = vmatprep.subr.mxu0 %v4085
        %4636 = vmatpush1.msra.mxu0 %v4084
        %4637 = vmatprep.subr.mxu0 %v4087
        %4638 = vmatpush1.msra.mxu0 %v4086
        %4639 = vmatprep.subr.mxu0 %v4089
        %4640 = vmatpush1.msra.mxu0 %v4088
        %4641 = vmatprep.subr.mxu0 %v4091
        %4642 = vmatpush1.msra.mxu0 %v4090
        %4643 = vmatprep.subr.mxu0 %v4093
        %4644 = vmatpush1.msra.mxu0 %v4092
        %4645 = vmatprep.subr.mxu0 %v4095
        %4646 = vmatpush1.msra.mxu0 %v4094
        %4647 = vmatprep.subr.mxu0 %v4097
        %4648 = vmatpush1.msra.mxu0 %v4096
        %4649 = vmatprep.subr.mxu0 %v4099
        %4650 = vmatpush1.msra.mxu0 %v4098
        %4651 = vmatprep.subr.mxu0 %v4101
        %4652 = vmatpush1.msra.mxu0 %v4100
        %4653 = vmatprep.subr.mxu0 %v4103
        %4654 = vmatpush1.msra.mxu0 %v4102
        %4655 = vmatprep.subr.mxu0 %v4105
        %4656 = vmatpush1.msra.mxu0 %v4104
        %4657 = vmatprep.subr.mxu0 %v4107
        %4658 = vmatpush1.msra.mxu0 %v4106
        %4659 = vmatprep.subr.mxu0 %v4109
        %4660 = vmatpush1.msra.mxu0 %v4108
        %4661 = vmatprep.mubr.f32.mxu0 %v4427
        %4662 = vmatmul.mubr.f32.gmra.mrb[0].mxu0 %v4424
        %v4663 = vpop.f32.mrb[0].mxu0
        %v4664 = vadd.f32 0.0, %v4663
        %v4665 = vpop.f32.mrb[0].mxu0
        %v4666 = vadd.f32 0.0, %v4665
        %4667 = vmatprep.mubr.f32.mxu0 %v4431
        %4668 = vmatmul.mubr.f32.gmra.mrb[0].mxu0 %v4429
        %v4669 = vpop.f32.mrb[0].mxu0
        %v4670 = vadd.f32 0.0, %v4669
        %v4671 = vpop.f32.mrb[0].mxu0
        %v4672 = vadd.f32 0.0, %v4671
        %4673 = vmatprep.mubr.f32.mxu0 %v4435
        %4674 = vmatmul.mubr.f32.gmra.mrb[0].mxu0 %v4433
        %v4675 = vpop.f32.mrb[0].mxu0
        %v4676 = vadd.f32 0.0, %v4675
        %v4677 = vpop.f32.mrb[0].mxu0
        %v4678 = vadd.f32 0.0, %v4677
        %4679 = vmatprep.mubr.f32.mxu0 %v4439
        %4680 = vmatmul.mubr.f32.gmra.mrb[0].mxu0 %v4437
        %v4681 = vpop.f32.mrb[0].mxu0
        %v4682 = vadd.f32 0.0, %v4681
        %v4683 = vpop.f32.mrb[0].mxu0
        %v4684 = vadd.f32 0.0, %v4683
        %4685 = vmatprep.mubr.f32.mxu0 %v4443
        %4686 = vmatmul.mubr.f32.gmra.mrb[0].mxu0 %v4441
        %v4687 = vpop.f32.mrb[0].mxu0
        %v4688 = vadd.f32 0.0, %v4687
        %v4689 = vpop.f32.mrb[0].mxu0
        %v4690 = vadd.f32 0.0, %v4689
        %4691 = vmatprep.mubr.f32.mxu0 %v4447
        %4692 = vmatmul.mubr.f32.gmra.mrb[0].mxu0 %v4445
        %v4693 = vpop.f32.mrb[0].mxu0
        %v4694 = vadd.f32 0.0, %v4693
        %v4695 = vpop.f32.mrb[0].mxu0
        %v4696 = vadd.f32 0.0, %v4695
        %4697 = vmatprep.mubr.f32.mxu0 %v4451
        %4698 = vmatmul.mubr.f32.gmra.mrb[0].mxu0 %v4449
        %v4699 = vpop.f32.mrb[0].mxu0
        %v4700 = vadd.f32 0.0, %v4699
        %v4701 = vpop.f32.mrb[0].mxu0
        %v4702 = vadd.f32 0.0, %v4701
        %4703 = vmatprep.mubr.f32.mxu0 %v4450
        %4704 = vmatmul.mubr.f32.gmra.mrb[0].mxu0 %v4448
        %v4705 = vpop.f32.mrb[0].mxu0
        %v4706 = vadd.f32 0.0, %v4705
        %v4707 = vpop.f32.mrb[0].mxu0
        %v4708 = vadd.f32 0.0, %v4707
        %4709 = vdwg.mxu0
        %4710 = vmatprep.subr.mxu0 %v3966
        %4711 = vmatpush1.msra.mxu0 %v3965
        %4712 = vmatprep.subr.mxu0 %v3968
        %4713 = vmatpush1.msra.mxu0 %v3967
        %4714 = vmatprep.subr.mxu0 %v3970
        %4715 = vmatpush1.msra.mxu0 %v3969
        %4716 = vmatprep.subr.mxu0 %v3972
        %4717 = vmatpush1.msra.mxu0 %v3971
        %4718 = vmatprep.subr.mxu0 %v3974
        %4719 = vmatpush1.msra.mxu0 %v3973
        %4720 = vmatprep.subr.mxu0 %v3976
        %4721 = vmatpush1.msra.mxu0 %v3975
        %4722 = vmatprep.subr.mxu0 %v3978
        %4723 = vmatpush1.msra.mxu0 %v3977
        %4724 = vmatprep.subr.mxu0 %v3980
        %4725 = vmatpush1.msra.mxu0 %v3979
        %4726 = vmatprep.subr.mxu0 %v3982
        %4727 = vmatpush1.msra.mxu0 %v3981
        %4728 = vmatprep.subr.mxu0 %v3984
        %4729 = vmatpush1.msra.mxu0 %v3983
        %4730 = vmatprep.subr.mxu0 %v3986
        %4731 = vmatpush1.msra.mxu0 %v3985
        %4732 = vmatprep.subr.mxu0 %v3988
        %4733 = vmatpush1.msra.mxu0 %v3987
        %4734 = vmatprep.subr.mxu0 %v3990
        %4735 = vmatpush1.msra.mxu0 %v3989
        %4736 = vmatprep.subr.mxu0 %v3992
        %4737 = vmatpush1.msra.mxu0 %v3991
        %4738 = vmatprep.subr.mxu0 %v3994
        %4739 = vmatpush1.msra.mxu0 %v3993
        %4740 = vmatprep.subr.mxu0 %v3996
        %4741 = vmatpush1.msra.mxu0 %v3995
        %4742 = vmatprep.subr.mxu0 %v3998
        %4743 = vmatpush1.msra.mxu0 %v3997
        %4744 = vmatprep.subr.mxu0 %v4000
        %4745 = vmatpush1.msra.mxu0 %v3999
        %4746 = vmatprep.subr.mxu0 %v4002
        %4747 = vmatpush1.msra.mxu0 %v4001
        %4748 = vmatprep.subr.mxu0 %v4004
        %4749 = vmatpush1.msra.mxu0 %v4003
        %4750 = vmatprep.subr.mxu0 %v4006
        %4751 = vmatpush1.msra.mxu0 %v4005
        %4752 = vmatprep.subr.mxu0 %v4008
        %4753 = vmatpush1.msra.mxu0 %v4007
        %4754 = vmatprep.subr.mxu0 %v4010
        %4755 = vmatpush1.msra.mxu0 %v4009
        %4756 = vmatprep.subr.mxu0 %v4012
        %4757 = vmatpush1.msra.mxu0 %v4011
        %4758 = vmatprep.subr.mxu0 %v4014
        %4759 = vmatpush1.msra.mxu0 %v4013
        %4760 = vmatprep.subr.mxu0 %v4016
        %4761 = vmatpush1.msra.mxu0 %v4015
        %4762 = vmatprep.subr.mxu0 %v4018
        %4763 = vmatpush1.msra.mxu0 %v4017
        %4764 = vmatprep.subr.mxu0 %v4020
        %4765 = vmatpush1.msra.mxu0 %v4019
        %4766 = vmatprep.subr.mxu0 %v4022
        %4767 = vmatpush1.msra.mxu0 %v4021
        %4768 = vmatprep.subr.mxu0 %v4024
        %4769 = vmatpush1.msra.mxu0 %v4023
        %4770 = vmatprep.subr.mxu0 %v4026
        %4771 = vmatpush1.msra.mxu0 %v4025
        %4772 = vmatprep.subr.mxu0 %v4028
        %4773 = vmatpush1.msra.mxu0 %v4027
        %4774 = vmatprep.mubr.f32.mxu0 %v4030
        %4775 = vmatmul.mubr.f32.gmra.mrb[0].mxu0 %v4029
        %v4776 = vpop.f32.mrb[0].mxu0
        %v4777 = vadd.f32 %v4664, %v4776
        %v4778 = vpop.f32.mrb[0].mxu0
        %v4779 = vadd.f32 %v4666, %v4778
        %4780 = vmatprep.mubr.f32.mxu0 %v4032
        %4781 = vmatmul.mubr.f32.gmra.mrb[0].mxu0 %v4031
        %v4782 = vpop.f32.mrb[0].mxu0
        %v4783 = vadd.f32 %v4670, %v4782
        %v4784 = vpop.f32.mrb[0].mxu0
        %v4785 = vadd.f32 %v4672, %v4784
        %4786 = vmatprep.mubr.f32.mxu0 %v4034
        %4787 = vmatmul.mubr.f32.gmra.mrb[0].mxu0 %v4033
        %v4788 = vpop.f32.mrb[0].mxu0
        %v4789 = vadd.f32 %v4676, %v4788
        %v4790 = vpop.f32.mrb[0].mxu0
        %v4791 = vadd.f32 %v4678, %v4790
        %4792 = vmatprep.mubr.f32.mxu0 %v4036
        %4793 = vmatmul.mubr.f32.gmra.mrb[0].mxu0 %v4035
        %v4794 = vpop.f32.mrb[0].mxu0
        %v4795 = vadd.f32 %v4682, %v4794
        %v4796 = vpop.f32.mrb[0].mxu0
        %v4797 = vadd.f32 %v4684, %v4796
        %4798 = vmatprep.mubr.f32.mxu0 %v4038
        %4799 = vmatmul.mubr.f32.gmra.mrb[0].mxu0 %v4037
        %v4800 = vpop.f32.mrb[0].mxu0
        %v4801 = vadd.f32 %v4688, %v4800
        %v4802 = vpop.f32.mrb[0].mxu0
        %v4803 = vadd.f32 %v4690, %v4802
        %4804 = vmatprep.mubr.f32.mxu0 %v4040
        %4805 = vmatmul.mubr.f32.gmra.mrb[0].mxu0 %v4039
        %v4806 = vpop.f32.mrb[0].mxu0
        %v4807 = vadd.f32 %v4694, %v4806
        %v4808 = vpop.f32.mrb[0].mxu0
        %v4809 = vadd.f32 %v4696, %v4808
        %4810 = vmatprep.mubr.f32.mxu0 %v4042
        %4811 = vmatmul.mubr.f32.gmra.mrb[0].mxu0 %v4041
        %v4812 = vpop.f32.mrb[0].mxu0
        %v4813 = vadd.f32 %v4700, %v4812
        %v4814 = vpop.f32.mrb[0].mxu0
        %v4815 = vadd.f32 %v4702, %v4814
        %4816 = vmatprep.mubr.f32.mxu0 %v4044
        %4817 = vmatmul.mubr.f32.gmra.mrb[0].mxu0 %v4043
        %v4818 = vpop.f32.mrb[0].mxu0
        %v4819 = vadd.f32 %v4706, %v4818
        %v4820 = vpop.f32.mrb[0].mxu0
        %v4821 = vadd.f32 %v4708, %v4820
        %4822 = vdwg.mxu0
        %v4823 = vld [vmem:[#allocation3] sm:$0xfe]
        %v4824 = vld [vmem:[#allocation3 + $0x8] sm:$0xfe]
        %v4825 = vld [vmem:[#allocation3 + $0x70] sm:$0xff]
        %v4826 = vld [vmem:[#allocation3 + $0x78] sm:$0xff]
        %v4843 = vrot.slane %v4823, 1
        %v4844 = vrot.slane %v4031, 1
        %v4845 = vsel %vm4421, %v4843, %v4844
        %v4846 = vrot.slane %v4824, 1
        %v4847 = vrot.slane %v4032, 1
        %v4848 = vsel %vm4421, %v4846, %v4847
        %v4849 = vrot.slane %v4033, 1
        %v4850 = vsel %vm4421, %v4844, %v4849
        %v4851 = vrot.slane %v4034, 1
        %v4852 = vsel %vm4421, %v4847, %v4851
        %v4853 = vrot.slane %v4035, 1
        %v4854 = vsel %vm4421, %v4849, %v4853
        %v4855 = vrot.slane %v4036, 1
        %v4856 = vsel %vm4421, %v4851, %v4855
        %v4857 = vrot.slane %v4037, 1
        %v4858 = vsel %vm4421, %v4853, %v4857
        %v4859 = vrot.slane %v4038, 1
        %v4860 = vsel %vm4421, %v4855, %v4859
        %v4861 = vrot.slane %v4039, 1
        %v4862 = vsel %vm4421, %v4857, %v4861
        %v4863 = vrot.slane %v4040, 1
        %v4864 = vsel %vm4421, %v4859, %v4863
        %v4865 = vrot.slane %v4041, 1
        %v4866 = vsel %vm4421, %v4861, %v4865
        %v4867 = vrot.slane %v4042, 1
        %v4868 = vsel %vm4421, %v4863, %v4867
        %v4869 = vrot.slane %v4825, 1
        %v4870 = vsel %vm4421, %v4865, %v4869
        %v4871 = vrot.slane %v4826, 1
        %v4872 = vsel %vm4421, %v4867, %v4871
        %4889 = vmatprep.subr.mxu0 %v4342
        %4890 = vmatpush1.msra.mxu0 %v4341
        %4891 = vmatprep.subr.mxu0 %v4344
        %4892 = vmatpush1.msra.mxu0 %v4343
        %4893 = vmatprep.subr.mxu0 %v4346
        %4894 = vmatpush1.msra.mxu0 %v4345
        %4895 = vmatprep.subr.mxu0 %v4348
        %4896 = vmatpush1.msra.mxu0 %v4347
        %4897 = vmatprep.subr.mxu0 %v4350
        %4898 = vmatpush1.msra.mxu0 %v4349
        %4899 = vmatprep.subr.mxu0 %v4352
        %4900 = vmatpush1.msra.mxu0 %v4351
        %4901 = vmatprep.subr.mxu0 %v4354
        %4902 = vmatpush1.msra.mxu0 %v4353
        %4903 = vmatprep.subr.mxu0 %v4356
        %4904 = vmatpush1.msra.mxu0 %v4355
        %4905 = vmatprep.subr.mxu0 %v4358
        %4906 = vmatpush1.msra.mxu0 %v4357
        %4907 = vmatprep.subr.mxu0 %v4360
        %4908 = vmatpush1.msra.mxu0 %v4359
        %4909 = vmatprep.subr.mxu0 %v4362
        %4910 = vmatpush1.msra.mxu0 %v4361
        %4911 = vmatprep.subr.mxu0 %v4364
        %4912 = vmatpush1.msra.mxu0 %v4363
        %4913 = vmatprep.subr.mxu0 %v4366
        %4914 = vmatpush1.msra.mxu0 %v4365
        %4915 = vmatprep.subr.mxu0 %v4368
        %4916 = vmatpush1.msra.mxu0 %v4367
        %4917 = vmatprep.subr.mxu0 %v4370
        %4918 = vmatpush1.msra.mxu0 %v4369
        %4919 = vmatprep.subr.mxu0 %v4372
        %4920 = vmatpush1.msra.mxu0 %v4371
        %4921 = vmatprep.subr.mxu0 %v4374
        %4922 = vmatpush1.msra.mxu0 %v4373
        %4923 = vmatprep.subr.mxu0 %v4376
        %4924 = vmatpush1.msra.mxu0 %v4375
        %4925 = vmatprep.subr.mxu0 %v4378
        %4926 = vmatpush1.msra.mxu0 %v4377
        %4927 = vmatprep.subr.mxu0 %v4380
        %4928 = vmatpush1.msra.mxu0 %v4379
        %4929 = vmatprep.subr.mxu0 %v4382
        %4930 = vmatpush1.msra.mxu0 %v4381
        %4931 = vmatprep.subr.mxu0 %v4384
        %4932 = vmatpush1.msra.mxu0 %v4383
        %4933 = vmatprep.subr.mxu0 %v4386
        %4934 = vmatpush1.msra.mxu0 %v4385
        %4935 = vmatprep.subr.mxu0 %v4388
        %4936 = vmatpush1.msra.mxu0 %v4387
        %4937 = vmatprep.subr.mxu0 %v4390
        %4938 = vmatpush1.msra.mxu0 %v4389
        %4939 = vmatprep.subr.mxu0 %v4392
        %4940 = vmatpush1.msra.mxu0 %v4391
        %4941 = vmatprep.subr.mxu0 %v4394
        %4942 = vmatpush1.msra.mxu0 %v4393
        %4943 = vmatprep.subr.mxu0 %v4396
        %4944 = vmatpush1.msra.mxu0 %v4395
        %4945 = vmatprep.subr.mxu0 %v4398
        %4946 = vmatpush1.msra.mxu0 %v4397
        %4947 = vmatprep.subr.mxu0 %v4400
        %4948 = vmatpush1.msra.mxu0 %v4399
        %4949 = vmatprep.subr.mxu0 %v4402
        %4950 = vmatpush1.msra.mxu0 %v4401
        %4951 = vmatprep.subr.mxu0 %v4404
        %4952 = vmatpush1.msra.mxu0 %v4403
        %4953 = vmatprep.mubr.f32.mxu0 %v4848
        %4954 = vmatmul.mubr.f32.gmra.mrb[0].mxu0 %v4845
        %v4955 = vpop.f32.mrb[0].mxu0
        %v4956 = vadd.f32 0.0, %v4955
        %v4957 = vpop.f32.mrb[0].mxu0
        %v4958 = vadd.f32 0.0, %v4957
        %4959 = vmatprep.mubr.f32.mxu0 %v4852
        %4960 = vmatmul.mubr.f32.gmra.mrb[0].mxu0 %v4850
        %v4961 = vpop.f32.mrb[0].mxu0
        %v4962 = vadd.f32 0.0, %v4961
        %v4963 = vpop.f32.mrb[0].mxu0
        %v4964 = vadd.f32 0.0, %v4963
        %4965 = vmatprep.mubr.f32.mxu0 %v4856
        %4966 = vmatmul.mubr.f32.gmra.mrb[0].mxu0 %v4854
        %v4967 = vpop.f32.mrb[0].mxu0
        %v4968 = vadd.f32 0.0, %v4967
        %v4969 = vpop.f32.mrb[0].mxu0
        %v4970 = vadd.f32 0.0, %v4969
        %4971 = vmatprep.mubr.f32.mxu0 %v4860
        %4972 = vmatmul.mubr.f32.gmra.mrb[0].mxu0 %v4858
        %v4973 = vpop.f32.mrb[0].mxu0
        %v4974 = vadd.f32 0.0, %v4973
        %v4975 = vpop.f32.mrb[0].mxu0
        %v4976 = vadd.f32 0.0, %v4975
        %4977 = vmatprep.mubr.f32.mxu0 %v4864
        %4978 = vmatmul.mubr.f32.gmra.mrb[0].mxu0 %v4862
        %v4979 = vpop.f32.mrb[0].mxu0
        %v4980 = vadd.f32 0.0, %v4979
        %v4981 = vpop.f32.mrb[0].mxu0
        %v4982 = vadd.f32 0.0, %v4981
        %4983 = vmatprep.mubr.f32.mxu0 %v4868
        %4984 = vmatmul.mubr.f32.gmra.mrb[0].mxu0 %v4866
        %v4985 = vpop.f32.mrb[0].mxu0
        %v4986 = vadd.f32 0.0, %v4985
        %v4987 = vpop.f32.mrb[0].mxu0
        %v4988 = vadd.f32 0.0, %v4987
        %4989 = vmatprep.mubr.f32.mxu0 %v4872
        %4990 = vmatmul.mubr.f32.gmra.mrb[0].mxu0 %v4870
        %v4991 = vpop.f32.mrb[0].mxu0
        %v4992 = vadd.f32 0.0, %v4991
        %v4993 = vpop.f32.mrb[0].mxu0
        %v4994 = vadd.f32 0.0, %v4993
        %4995 = vmatprep.mubr.f32.mxu0 %v4871
        %4996 = vmatmul.mubr.f32.gmra.mrb[0].mxu0 %v4869
        %v4997 = vpop.f32.mrb[0].mxu0
        %v4998 = vadd.f32 0.0, %v4997
        %v4999 = vpop.f32.mrb[0].mxu0
        %v5000 = vadd.f32 0.0, %v4999
        %5001 = vdwg.mxu0
        %v5002 = vadd.f32 %v4777, %v4956
        %v5003 = vadd.f32 %v4779, %v4958
        %v5004 = vadd.f32 %v4783, %v4962
        %v5005 = vadd.f32 %v4785, %v4964
        %v5006 = vadd.f32 %v4789, %v4968
        %v5007 = vadd.f32 %v4791, %v4970
        %v5008 = vadd.f32 %v4795, %v4974
        %v5009 = vadd.f32 %v4797, %v4976
        %v5010 = vadd.f32 %v4801, %v4980
        %v5011 = vadd.f32 %v4803, %v4982
        %v5012 = vadd.f32 %v4807, %v4986
        %v5013 = vadd.f32 %v4809, %v4988
        %v5014 = vadd.f32 %v4813, %v4992
        %v5015 = vadd.f32 %v4815, %v4994
        %v5016 = vadd.f32 %v4819, %v4998
        %v5017 = vadd.f32 %v4821, %v5000
        %v5018 = vmax.f32 %v4581, %v4582
        %v5019 = vmax.f32 %v4583, %v4584
        %v5020 = vmax.f32 %v4585, %v4586
        %v5021 = vmax.f32 %v4587, %v4588
        %v5022 = vmax.f32 %v4589, %v4590
        %v5023 = vmax.f32 %v4591, %v4592
        %v5024 = vmax.f32 %v4593, %v4594
        %v5025 = vmax.f32 %v4595, %v4596
        %v5026 = vmax.f32 %v5002, %v5003
        %v5027 = vmax.f32 %v5004, %v5005
        %v5028 = vmax.f32 %v5006, %v5007
        %v5029 = vmax.f32 %v5008, %v5009
        %v5030 = vmax.f32 %v5010, %v5011
        %v5031 = vmax.f32 %v5012, %v5013
        %v5032 = vmax.f32 %v5014, %v5015
        %v5033 = vmax.f32 %v5016, %v5017
        %v5034 = vmax.f32 %v5018, %v5026
        %v5035 = vmax.f32 %v5019, %v5027
        %v5036 = vmax.f32 %v5020, %v5028
        %v5037 = vmax.f32 %v5021, %v5029
        %v5038 = vmax.f32 %v5022, %v5030
        %v5039 = vmax.f32 %v5023, %v5031
        %v5040 = vmax.f32 %v5024, %v5032
        %v5041 = vmax.f32 %v5025, %v5033
        %v5043 = vlaneseq
        %v5044 = vshrl.u32 %v5043, 7
        %v5045 = vsub.s32 0, %v5044
        %v5046 = vrot.slane %v492, %v5045
        %v5048 = vadd.f32 %v5034, %v5046
        %v5049 = vadd.f32 %v5035, %v5046
        %v5050 = vadd.f32 %v5036, %v5046
        %v5051 = vadd.f32 %v5037, %v5046
        %v5052 = vadd.f32 %v5038, %v5046
        %v5053 = vadd.f32 %v5039, %v5046
        %v5054 = vadd.f32 %v5040, %v5046
        %v5055 = vadd.f32 %v5041, %v5046
        %v5056 = vmax.f32 %v5048, 0.0
        %v5057 = vmax.f32 %v5049, 0.0
        %v5058 = vmax.f32 %v5050, 0.0
        %v5059 = vmax.f32 %v5051, 0.0
        %v5060 = vmax.f32 %v5052, 0.0
        %v5061 = vmax.f32 %v5053, 0.0
        %v5062 = vmax.f32 %v5054, 0.0
        %v5063 = vmax.f32 %v5055, 0.0
        %5064 = vst [vmem:[#allocation4] sm:$0x3f] %v5056
        %s5065 = scalar_lea.vmem [#allocation4], 8
        %5066 = vst [vmem:[%s5065] sm:$0x3f] %v5057
        %s5067 = scalar_lea.vmem [#allocation4], 16
        %5068 = vst [vmem:[%s5067] sm:$0x3f] %v5058
        %s5069 = scalar_lea.vmem [#allocation4], 24
        %5070 = vst [vmem:[%s5069] sm:$0x3f] %v5059
        %s5071 = scalar_lea.vmem [#allocation4], 32
        %5072 = vst [vmem:[%s5071] sm:$0x3f] %v5060
        %s5073 = scalar_lea.vmem [#allocation4], 40
        %5074 = vst [vmem:[%s5073] sm:$0x3f] %v5061
        %s5075 = scalar_lea.vmem [#allocation4], 48
        %5076 = vst [vmem:[%s5075] sm:$0x3f] %v5062
        %s5077 = scalar_lea.vmem [#allocation4], 56
        %5078 = vst [vmem:[%s5077] sm:$0x3f] %v5063
        %v5079 = vld [vmem:[%s6] sm:$0x1]
        %v5080 = vld [vmem:[#allocation4] sm:$0x1]
        %v5081 = vld [vmem:[#allocation4 + $0x8] sm:$0x1]
        %v5082 = vld [vmem:[#allocation4 + $0x10] sm:$0x1]
        %v5083 = vld [vmem:[#allocation4 + $0x18] sm:$0x1]
        %v5084 = vld [vmem:[#allocation4 + $0x20] sm:$0x1]
        %v5085 = vld [vmem:[#allocation4 + $0x28] sm:$0x1]
        %v5086 = vld [vmem:[#allocation4 + $0x30] sm:$0x1]
        %v5087 = vld [vmem:[#allocation4 + $0x38] sm:$0x1]
        %v5088 = vld [vmem:[%s5] sm:$0xff]
        %v5089 = vld [vmem:[%s5 + $0x8] sm:$0xff]
        %v5090 = vld [vmem:[%s5 + $0x10] sm:$0xff]
        %v5091 = vld [vmem:[%s5 + $0x18] sm:$0xff]
        %v5092 = vld [vmem:[%s5 + $0x20] sm:$0xff]
        %v5093 = vld [vmem:[%s5 + $0x28] sm:$0xff]
        %v5094 = vld [vmem:[%s5 + $0x30] sm:$0xff]
        %v5095 = vld [vmem:[%s5 + $0x38] sm:$0xff]
        %v5096 = vld [vmem:[%s5 + $0x40] sm:$0xff]
        %v5097 = vld [vmem:[%s5 + $0x48] sm:$0xff]
        %v5098 = vld [vmem:[%s5 + $0x50] sm:$0xff]
        %v5099 = vld [vmem:[%s5 + $0x58] sm:$0xff]
        %v5100 = vld [vmem:[%s5 + $0x60] sm:$0xff]
        %v5101 = vld [vmem:[%s5 + $0x68] sm:$0xff]
        %v5102 = vld [vmem:[%s5 + $0x70] sm:$0xff]
        %v5103 = vld [vmem:[%s5 + $0x78] sm:$0xff]
        %v5112 = vrot.slane %v5081, 7
        %vm5113 = vcmask 1041409
        %v5114 = vsel %vm5113, %v5112, %v5080
        %v5115 = vrot.slane %v5082, 6
        %vm5116 = vcmask 1042434
        %v5117 = vsel %vm5116, %v5115, %v5114
        %v5118 = vrot.slane %v5083, 5
        %vm5119 = vcmask 1043459
        %v5120 = vsel %vm5119, %v5118, %v5117
        %v5121 = vrot.slane %v5084, 4
        %vm5122 = vcmask 1044484
        %v5123 = vsel %vm5122, %v5121, %v5120
        %v5124 = vrot.slane %v5085, 3
        %vm5125 = vcmask 1045509
        %v5126 = vsel %vm5125, %v5124, %v5123
        %v5127 = vrot.slane %v5086, 2
        %vm5128 = vcmask 1046534
        %v5129 = vsel %vm5128, %v5127, %v5126
        %v5130 = vrot.slane %v5087, 1
        %vm5131 = vcmask 1047559
        %v5132 = vsel %vm5131, %v5130, %v5129
        %5134 = vmatprep.subr.mxu0 0.0
        %5135 = vmatpush1.msra.mxu0 %v5088
        %5136 = vmatprep.subr.mxu0 0.0
        %5137 = vmatpush1.msra.mxu0 %v5089
        %5138 = vmatprep.subr.mxu0 0.0
        %5139 = vmatpush1.msra.mxu0 %v5090
        %5140 = vmatprep.subr.mxu0 0.0
        %5141 = vmatpush1.msra.mxu0 %v5091
        %5142 = vmatprep.subr.mxu0 0.0
        %5143 = vmatpush1.msra.mxu0 %v5092
        %5144 = vmatprep.subr.mxu0 0.0
        %5145 = vmatpush1.msra.mxu0 %v5093
        %5146 = vmatprep.subr.mxu0 0.0
        %5147 = vmatpush1.msra.mxu0 %v5094
        %5148 = vmatprep.subr.mxu0 0.0
        %5149 = vmatpush1.msra.mxu0 %v5095
        %5150 = vmatprep.subr.mxu0 0.0
        %5151 = vmatpush1.msra.mxu0 %v5096
        %5152 = vmatprep.subr.mxu0 0.0
        %5153 = vmatpush1.msra.mxu0 %v5097
        %5154 = vmatprep.subr.mxu0 0.0
        %5155 = vmatpush1.msra.mxu0 %v5098
        %5156 = vmatprep.subr.mxu0 0.0
        %5157 = vmatpush1.msra.mxu0 %v5099
        %5158 = vmatprep.subr.mxu0 0.0
        %5159 = vmatpush1.msra.mxu0 %v5100
        %5160 = vmatprep.subr.mxu0 0.0
        %5161 = vmatpush1.msra.mxu0 %v5101
        %5162 = vmatprep.subr.mxu0 0.0
        %5163 = vmatpush1.msra.mxu0 %v5102
        %5164 = vmatprep.subr.mxu0 0.0
        %5165 = vmatpush1.msra.mxu0 %v5103
        %5166 = vmatprep.subr.mxu0 0.0
        %5167 = vmatpush1.msra.mxu0 0.0
        %5168 = vmatprep.subr.mxu0 0.0
        %5169 = vmatpush1.msra.mxu0 0.0
        %5170 = vmatprep.subr.mxu0 0.0
        %5171 = vmatpush1.msra.mxu0 0.0
        %5172 = vmatprep.subr.mxu0 0.0
        %5173 = vmatpush1.msra.mxu0 0.0
        %5174 = vmatprep.subr.mxu0 0.0
        %5175 = vmatpush1.msra.mxu0 0.0
        %5176 = vmatprep.subr.mxu0 0.0
        %5177 = vmatpush1.msra.mxu0 0.0
        %5178 = vmatprep.subr.mxu0 0.0
        %5179 = vmatpush1.msra.mxu0 0.0
        %5180 = vmatprep.subr.mxu0 0.0
        %5181 = vmatpush1.msra.mxu0 0.0
        %5182 = vmatprep.subr.mxu0 0.0
        %5183 = vmatpush1.msra.mxu0 0.0
        %5184 = vmatprep.subr.mxu0 0.0
        %5185 = vmatpush1.msra.mxu0 0.0
        %5186 = vmatprep.subr.mxu0 0.0
        %5187 = vmatpush1.msra.mxu0 0.0
        %5188 = vmatprep.subr.mxu0 0.0
        %5189 = vmatpush1.msra.mxu0 0.0
        %5190 = vmatprep.subr.mxu0 0.0
        %5191 = vmatpush1.msra.mxu0 0.0
        %5192 = vmatprep.subr.mxu0 0.0
        %5193 = vmatpush1.msra.mxu0 0.0
        %5194 = vmatprep.subr.mxu0 0.0
        %5195 = vmatpush1.msra.mxu0 0.0
        %5196 = vmatprep.subr.mxu0 0.0
        %5197 = vmatpush1.msra.mxu0 0.0
        %5198 = vmatprep.mubr.f32.mxu0 0.0
        %5199 = vmatmul.mubr.f32.gmra.mrb[0].mxu0 %v5132
        %v5200 = vpop.f32.mrb[0].mxu0
        %v5201 = vadd.f32 0.0, %v5200
        %v5202 = vpop.f32.mrb[0].mxu0
        %5203 = vdwg.mxu0
        %v5205 = vlaneseq
        %v5206 = vshrl.u32 %v5205, 7
        %v5207 = vsub.s32 0, %v5206
        %v5208 = vrot.slane %v5079, %v5207
        %v5210 = vadd.f32 %v5208, %v5201
        %v5211 = vld [vmem:[#allocation4 + $0x1] sm:$0x1]
        %v5212 = vld [vmem:[#allocation4 + $0x9] sm:$0x1]
        %v5213 = vld [vmem:[#allocation4 + $0x11] sm:$0x1]
        %v5214 = vld [vmem:[#allocation4 + $0x19] sm:$0x1]
        %v5215 = vld [vmem:[#allocation4 + $0x21] sm:$0x1]
        %v5216 = vld [vmem:[#allocation4 + $0x29] sm:$0x1]
        %v5217 = vld [vmem:[#allocation4 + $0x31] sm:$0x1]
        %v5218 = vld [vmem:[#allocation4 + $0x39] sm:$0x1]
        %v5219 = vld [vmem:[%s5 + $0x80] sm:$0xff]
        %v5220 = vld [vmem:[%s5 + $0x88] sm:$0xff]
        %v5221 = vld [vmem:[%s5 + $0x90] sm:$0xff]
        %v5222 = vld [vmem:[%s5 + $0x98] sm:$0xff]
        %v5223 = vld [vmem:[%s5 + $0xa0] sm:$0xff]
        %v5224 = vld [vmem:[%s5 + $0xa8] sm:$0xff]
        %v5225 = vld [vmem:[%s5 + $0xb0] sm:$0xff]
        %v5226 = vld [vmem:[%s5 + $0xb8] sm:$0xff]
        %v5227 = vld [vmem:[%s5 + $0xc0] sm:$0xff]
        %v5228 = vld [vmem:[%s5 + $0xc8] sm:$0xff]
        %v5229 = vld [vmem:[%s5 + $0xd0] sm:$0xff]
        %v5230 = vld [vmem:[%s5 + $0xd8] sm:$0xff]
        %v5231 = vld [vmem:[%s5 + $0xe0] sm:$0xff]
        %v5232 = vld [vmem:[%s5 + $0xe8] sm:$0xff]
        %v5233 = vld [vmem:[%s5 + $0xf0] sm:$0xff]
        %v5234 = vld [vmem:[%s5 + $0xf8] sm:$0xff]
        %v5243 = vrot.slane %v5212, 7
        %v5244 = vsel %vm5113, %v5243, %v5211
        %v5245 = vrot.slane %v5213, 6
        %v5246 = vsel %vm5116, %v5245, %v5244
        %v5247 = vrot.slane %v5214, 5
        %v5248 = vsel %vm5119, %v5247, %v5246
        %v5249 = vrot.slane %v5215, 4
        %v5250 = vsel %vm5122, %v5249, %v5248
        %v5251 = vrot.slane %v5216, 3
        %v5252 = vsel %vm5125, %v5251, %v5250
        %v5253 = vrot.slane %v5217, 2
        %v5254 = vsel %vm5128, %v5253, %v5252
        %v5255 = vrot.slane %v5218, 1
        %v5256 = vsel %vm5131, %v5255, %v5254
        %5258 = vmatprep.subr.mxu0 0.0
        %5259 = vmatpush1.msra.mxu0 %v5219
        %5260 = vmatprep.subr.mxu0 0.0
        %5261 = vmatpush1.msra.mxu0 %v5220
        %5262 = vmatprep.subr.mxu0 0.0
        %5263 = vmatpush1.msra.mxu0 %v5221
        %5264 = vmatprep.subr.mxu0 0.0
        %5265 = vmatpush1.msra.mxu0 %v5222
        %5266 = vmatprep.subr.mxu0 0.0
        %5267 = vmatpush1.msra.mxu0 %v5223
        %5268 = vmatprep.subr.mxu0 0.0
        %5269 = vmatpush1.msra.mxu0 %v5224
        %5270 = vmatprep.subr.mxu0 0.0
        %5271 = vmatpush1.msra.mxu0 %v5225
        %5272 = vmatprep.subr.mxu0 0.0
        %5273 = vmatpush1.msra.mxu0 %v5226
        %5274 = vmatprep.subr.mxu0 0.0
        %5275 = vmatpush1.msra.mxu0 %v5227
        %5276 = vmatprep.subr.mxu0 0.0
        %5277 = vmatpush1.msra.mxu0 %v5228
        %5278 = vmatprep.subr.mxu0 0.0
        %5279 = vmatpush1.msra.mxu0 %v5229
        %5280 = vmatprep.subr.mxu0 0.0
        %5281 = vmatpush1.msra.mxu0 %v5230
        %5282 = vmatprep.subr.mxu0 0.0
        %5283 = vmatpush1.msra.mxu0 %v5231
        %5284 = vmatprep.subr.mxu0 0.0
        %5285 = vmatpush1.msra.mxu0 %v5232
        %5286 = vmatprep.subr.mxu0 0.0
        %5287 = vmatpush1.msra.mxu0 %v5233
        %5288 = vmatprep.subr.mxu0 0.0
        %5289 = vmatpush1.msra.mxu0 %v5234
        %5290 = vmatprep.subr.mxu0 0.0
        %5291 = vmatpush1.msra.mxu0 0.0
        %5292 = vmatprep.subr.mxu0 0.0
        %5293 = vmatpush1.msra.mxu0 0.0
        %5294 = vmatprep.subr.mxu0 0.0
        %5295 = vmatpush1.msra.mxu0 0.0
        %5296 = vmatprep.subr.mxu0 0.0
        %5297 = vmatpush1.msra.mxu0 0.0
        %5298 = vmatprep.subr.mxu0 0.0
        %5299 = vmatpush1.msra.mxu0 0.0
        %5300 = vmatprep.subr.mxu0 0.0
        %5301 = vmatpush1.msra.mxu0 0.0
        %5302 = vmatprep.subr.mxu0 0.0
        %5303 = vmatpush1.msra.mxu0 0.0
        %5304 = vmatprep.subr.mxu0 0.0
        %5305 = vmatpush1.msra.mxu0 0.0
        %5306 = vmatprep.subr.mxu0 0.0
        %5307 = vmatpush1.msra.mxu0 0.0
        %5308 = vmatprep.subr.mxu0 0.0
        %5309 = vmatpush1.msra.mxu0 0.0
        %5310 = vmatprep.subr.mxu0 0.0
        %5311 = vmatpush1.msra.mxu0 0.0
        %5312 = vmatprep.subr.mxu0 0.0
        %5313 = vmatpush1.msra.mxu0 0.0
        %5314 = vmatprep.subr.mxu0 0.0
        %5315 = vmatpush1.msra.mxu0 0.0
        %5316 = vmatprep.subr.mxu0 0.0
        %5317 = vmatpush1.msra.mxu0 0.0
        %5318 = vmatprep.subr.mxu0 0.0
        %5319 = vmatpush1.msra.mxu0 0.0
        %5320 = vmatprep.subr.mxu0 0.0
        %5321 = vmatpush1.msra.mxu0 0.0
        %5322 = vmatprep.mubr.f32.mxu0 0.0
        %5323 = vmatmul.mubr.f32.gmra.mrb[0].mxu0 %v5256
        %v5324 = vpop.f32.mrb[0].mxu0
        %v5325 = vadd.f32 0.0, %v5324
        %v5326 = vpop.f32.mrb[0].mxu0
        %5327 = vdwg.mxu0
        %v5328 = vadd.f32 %v5210, %v5325
        %v5329 = vld [vmem:[#allocation4 + $0x2] sm:$0x1]
        %v5330 = vld [vmem:[#allocation4 + $0xa] sm:$0x1]
        %v5331 = vld [vmem:[#allocation4 + $0x12] sm:$0x1]
        %v5332 = vld [vmem:[#allocation4 + $0x1a] sm:$0x1]
        %v5333 = vld [vmem:[#allocation4 + $0x22] sm:$0x1]
        %v5334 = vld [vmem:[#allocation4 + $0x2a] sm:$0x1]
        %v5335 = vld [vmem:[#allocation4 + $0x32] sm:$0x1]
        %v5336 = vld [vmem:[#allocation4 + $0x3a] sm:$0x1]
        %v5337 = vld [vmem:[%s5 + $0x100] sm:$0xff]
        %v5338 = vld [vmem:[%s5 + $0x108] sm:$0xff]
        %v5339 = vld [vmem:[%s5 + $0x110] sm:$0xff]
        %v5340 = vld [vmem:[%s5 + $0x118] sm:$0xff]
        %v5341 = vld [vmem:[%s5 + $0x120] sm:$0xff]
        %v5342 = vld [vmem:[%s5 + $0x128] sm:$0xff]
        %v5343 = vld [vmem:[%s5 + $0x130] sm:$0xff]
        %v5344 = vld [vmem:[%s5 + $0x138] sm:$0xff]
        %v5345 = vld [vmem:[%s5 + $0x140] sm:$0xff]
        %v5346 = vld [vmem:[%s5 + $0x148] sm:$0xff]
        %v5347 = vld [vmem:[%s5 + $0x150] sm:$0xff]
        %v5348 = vld [vmem:[%s5 + $0x158] sm:$0xff]
        %v5349 = vld [vmem:[%s5 + $0x160] sm:$0xff]
        %v5350 = vld [vmem:[%s5 + $0x168] sm:$0xff]
        %v5351 = vld [vmem:[%s5 + $0x170] sm:$0xff]
        %v5352 = vld [vmem:[%s5 + $0x178] sm:$0xff]
        %v5361 = vrot.slane %v5330, 7
        %v5362 = vsel %vm5113, %v5361, %v5329
        %v5363 = vrot.slane %v5331, 6
        %v5364 = vsel %vm5116, %v5363, %v5362
        %v5365 = vrot.slane %v5332, 5
        %v5366 = vsel %vm5119, %v5365, %v5364
        %v5367 = vrot.slane %v5333, 4
        %v5368 = vsel %vm5122, %v5367, %v5366
        %v5369 = vrot.slane %v5334, 3
        %v5370 = vsel %vm5125, %v5369, %v5368
        %v5371 = vrot.slane %v5335, 2
        %v5372 = vsel %vm5128, %v5371, %v5370
        %v5373 = vrot.slane %v5336, 1
        %v5374 = vsel %vm5131, %v5373, %v5372
        %5376 = vmatprep.subr.mxu0 0.0
        %5377 = vmatpush1.msra.mxu0 %v5337
        %5378 = vmatprep.subr.mxu0 0.0
        %5379 = vmatpush1.msra.mxu0 %v5338
        %5380 = vmatprep.subr.mxu0 0.0
        %5381 = vmatpush1.msra.mxu0 %v5339
        %5382 = vmatprep.subr.mxu0 0.0
        %5383 = vmatpush1.msra.mxu0 %v5340
        %5384 = vmatprep.subr.mxu0 0.0
        %5385 = vmatpush1.msra.mxu0 %v5341
        %5386 = vmatprep.subr.mxu0 0.0
        %5387 = vmatpush1.msra.mxu0 %v5342
        %5388 = vmatprep.subr.mxu0 0.0
        %5389 = vmatpush1.msra.mxu0 %v5343
        %5390 = vmatprep.subr.mxu0 0.0
        %5391 = vmatpush1.msra.mxu0 %v5344
        %5392 = vmatprep.subr.mxu0 0.0
        %5393 = vmatpush1.msra.mxu0 %v5345
        %5394 = vmatprep.subr.mxu0 0.0
        %5395 = vmatpush1.msra.mxu0 %v5346
        %5396 = vmatprep.subr.mxu0 0.0
        %5397 = vmatpush1.msra.mxu0 %v5347
        %5398 = vmatprep.subr.mxu0 0.0
        %5399 = vmatpush1.msra.mxu0 %v5348
        %5400 = vmatprep.subr.mxu0 0.0
        %5401 = vmatpush1.msra.mxu0 %v5349
        %5402 = vmatprep.subr.mxu0 0.0
        %5403 = vmatpush1.msra.mxu0 %v5350
        %5404 = vmatprep.subr.mxu0 0.0
        %5405 = vmatpush1.msra.mxu0 %v5351
        %5406 = vmatprep.subr.mxu0 0.0
        %5407 = vmatpush1.msra.mxu0 %v5352
        %5408 = vmatprep.subr.mxu0 0.0
        %5409 = vmatpush1.msra.mxu0 0.0
        %5410 = vmatprep.subr.mxu0 0.0
        %5411 = vmatpush1.msra.mxu0 0.0
        %5412 = vmatprep.subr.mxu0 0.0
        %5413 = vmatpush1.msra.mxu0 0.0
        %5414 = vmatprep.subr.mxu0 0.0
        %5415 = vmatpush1.msra.mxu0 0.0
        %5416 = vmatprep.subr.mxu0 0.0
        %5417 = vmatpush1.msra.mxu0 0.0
        %5418 = vmatprep.subr.mxu0 0.0
        %5419 = vmatpush1.msra.mxu0 0.0
        %5420 = vmatprep.subr.mxu0 0.0
        %5421 = vmatpush1.msra.mxu0 0.0
        %5422 = vmatprep.subr.mxu0 0.0
        %5423 = vmatpush1.msra.mxu0 0.0
        %5424 = vmatprep.subr.mxu0 0.0
        %5425 = vmatpush1.msra.mxu0 0.0
        %5426 = vmatprep.subr.mxu0 0.0
        %5427 = vmatpush1.msra.mxu0 0.0
        %5428 = vmatprep.subr.mxu0 0.0
        %5429 = vmatpush1.msra.mxu0 0.0
        %5430 = vmatprep.subr.mxu0 0.0
        %5431 = vmatpush1.msra.mxu0 0.0
        %5432 = vmatprep.subr.mxu0 0.0
        %5433 = vmatpush1.msra.mxu0 0.0
        %5434 = vmatprep.subr.mxu0 0.0
        %5435 = vmatpush1.msra.mxu0 0.0
        %5436 = vmatprep.subr.mxu0 0.0
        %5437 = vmatpush1.msra.mxu0 0.0
        %5438 = vmatprep.subr.mxu0 0.0
        %5439 = vmatpush1.msra.mxu0 0.0
        %5440 = vmatprep.mubr.f32.mxu0 0.0
        %5441 = vmatmul.mubr.f32.gmra.mrb[0].mxu0 %v5374
        %v5442 = vpop.f32.mrb[0].mxu0
        %v5443 = vadd.f32 0.0, %v5442
        %v5444 = vpop.f32.mrb[0].mxu0
        %5445 = vdwg.mxu0
        %v5446 = vadd.f32 %v5328, %v5443
        %v5447 = vld [vmem:[#allocation4 + $0x3] sm:$0x1]
        %v5448 = vld [vmem:[#allocation4 + $0xb] sm:$0x1]
        %v5449 = vld [vmem:[#allocation4 + $0x13] sm:$0x1]
        %v5450 = vld [vmem:[#allocation4 + $0x1b] sm:$0x1]
        %v5451 = vld [vmem:[#allocation4 + $0x23] sm:$0x1]
        %v5452 = vld [vmem:[#allocation4 + $0x2b] sm:$0x1]
        %v5453 = vld [vmem:[#allocation4 + $0x33] sm:$0x1]
        %v5454 = vld [vmem:[#allocation4 + $0x3b] sm:$0x1]
        %v5455 = vld [vmem:[%s5 + $0x180] sm:$0xff]
        %v5456 = vld [vmem:[%s5 + $0x188] sm:$0xff]
        %v5457 = vld [vmem:[%s5 + $0x190] sm:$0xff]
        %v5458 = vld [vmem:[%s5 + $0x198] sm:$0xff]
        %v5459 = vld [vmem:[%s5 + $0x1a0] sm:$0xff]
        %v5460 = vld [vmem:[%s5 + $0x1a8] sm:$0xff]
        %v5461 = vld [vmem:[%s5 + $0x1b0] sm:$0xff]
        %v5462 = vld [vmem:[%s5 + $0x1b8] sm:$0xff]
        %v5463 = vld [vmem:[%s5 + $0x1c0] sm:$0xff]
        %v5464 = vld [vmem:[%s5 + $0x1c8] sm:$0xff]
        %v5465 = vld [vmem:[%s5 + $0x1d0] sm:$0xff]
        %v5466 = vld [vmem:[%s5 + $0x1d8] sm:$0xff]
        %v5467 = vld [vmem:[%s5 + $0x1e0] sm:$0xff]
        %v5468 = vld [vmem:[%s5 + $0x1e8] sm:$0xff]
        %v5469 = vld [vmem:[%s5 + $0x1f0] sm:$0xff]
        %v5470 = vld [vmem:[%s5 + $0x1f8] sm:$0xff]
        %v5479 = vrot.slane %v5448, 7
        %v5480 = vsel %vm5113, %v5479, %v5447
        %v5481 = vrot.slane %v5449, 6
        %v5482 = vsel %vm5116, %v5481, %v5480
        %v5483 = vrot.slane %v5450, 5
        %v5484 = vsel %vm5119, %v5483, %v5482
        %v5485 = vrot.slane %v5451, 4
        %v5486 = vsel %vm5122, %v5485, %v5484
        %v5487 = vrot.slane %v5452, 3
        %v5488 = vsel %vm5125, %v5487, %v5486
        %v5489 = vrot.slane %v5453, 2
        %v5490 = vsel %vm5128, %v5489, %v5488
        %v5491 = vrot.slane %v5454, 1
        %v5492 = vsel %vm5131, %v5491, %v5490
        %5494 = vmatprep.subr.mxu0 0.0
        %5495 = vmatpush1.msra.mxu0 %v5455
        %5496 = vmatprep.subr.mxu0 0.0
        %5497 = vmatpush1.msra.mxu0 %v5456
        %5498 = vmatprep.subr.mxu0 0.0
        %5499 = vmatpush1.msra.mxu0 %v5457
        %5500 = vmatprep.subr.mxu0 0.0
        %5501 = vmatpush1.msra.mxu0 %v5458
        %5502 = vmatprep.subr.mxu0 0.0
        %5503 = vmatpush1.msra.mxu0 %v5459
        %5504 = vmatprep.subr.mxu0 0.0
        %5505 = vmatpush1.msra.mxu0 %v5460
        %5506 = vmatprep.subr.mxu0 0.0
        %5507 = vmatpush1.msra.mxu0 %v5461
        %5508 = vmatprep.subr.mxu0 0.0
        %5509 = vmatpush1.msra.mxu0 %v5462
        %5510 = vmatprep.subr.mxu0 0.0
        %5511 = vmatpush1.msra.mxu0 %v5463
        %5512 = vmatprep.subr.mxu0 0.0
        %5513 = vmatpush1.msra.mxu0 %v5464
        %5514 = vmatprep.subr.mxu0 0.0
        %5515 = vmatpush1.msra.mxu0 %v5465
        %5516 = vmatprep.subr.mxu0 0.0
        %5517 = vmatpush1.msra.mxu0 %v5466
        %5518 = vmatprep.subr.mxu0 0.0
        %5519 = vmatpush1.msra.mxu0 %v5467
        %5520 = vmatprep.subr.mxu0 0.0
        %5521 = vmatpush1.msra.mxu0 %v5468
        %5522 = vmatprep.subr.mxu0 0.0
        %5523 = vmatpush1.msra.mxu0 %v5469
        %5524 = vmatprep.subr.mxu0 0.0
        %5525 = vmatpush1.msra.mxu0 %v5470
        %5526 = vmatprep.subr.mxu0 0.0
        %5527 = vmatpush1.msra.mxu0 0.0
        %5528 = vmatprep.subr.mxu0 0.0
        %5529 = vmatpush1.msra.mxu0 0.0
        %5530 = vmatprep.subr.mxu0 0.0
        %5531 = vmatpush1.msra.mxu0 0.0
        %5532 = vmatprep.subr.mxu0 0.0
        %5533 = vmatpush1.msra.mxu0 0.0
        %5534 = vmatprep.subr.mxu0 0.0
        %5535 = vmatpush1.msra.mxu0 0.0
        %5536 = vmatprep.subr.mxu0 0.0
        %5537 = vmatpush1.msra.mxu0 0.0
        %5538 = vmatprep.subr.mxu0 0.0
        %5539 = vmatpush1.msra.mxu0 0.0
        %5540 = vmatprep.subr.mxu0 0.0
        %5541 = vmatpush1.msra.mxu0 0.0
        %5542 = vmatprep.subr.mxu0 0.0
        %5543 = vmatpush1.msra.mxu0 0.0
        %5544 = vmatprep.subr.mxu0 0.0
        %5545 = vmatpush1.msra.mxu0 0.0
        %5546 = vmatprep.subr.mxu0 0.0
        %5547 = vmatpush1.msra.mxu0 0.0
        %5548 = vmatprep.subr.mxu0 0.0
        %5549 = vmatpush1.msra.mxu0 0.0
        %5550 = vmatprep.subr.mxu0 0.0
        %5551 = vmatpush1.msra.mxu0 0.0
        %5552 = vmatprep.subr.mxu0 0.0
        %5553 = vmatpush1.msra.mxu0 0.0
        %5554 = vmatprep.subr.mxu0 0.0
        %5555 = vmatpush1.msra.mxu0 0.0
        %5556 = vmatprep.subr.mxu0 0.0
        %5557 = vmatpush1.msra.mxu0 0.0
        %5558 = vmatprep.mubr.f32.mxu0 0.0
        %5559 = vmatmul.mubr.f32.gmra.mrb[0].mxu0 %v5492
        %v5560 = vpop.f32.mrb[0].mxu0
        %v5561 = vadd.f32 0.0, %v5560
        %v5562 = vpop.f32.mrb[0].mxu0
        %5563 = vdwg.mxu0
        %v5564 = vadd.f32 %v5446, %v5561
        %v5565 = vld [vmem:[#allocation4 + $0x4] sm:$0x1]
        %v5566 = vld [vmem:[#allocation4 + $0xc] sm:$0x1]
        %v5567 = vld [vmem:[#allocation4 + $0x14] sm:$0x1]
        %v5568 = vld [vmem:[#allocation4 + $0x1c] sm:$0x1]
        %v5569 = vld [vmem:[#allocation4 + $0x24] sm:$0x1]
        %v5570 = vld [vmem:[#allocation4 + $0x2c] sm:$0x1]
        %v5571 = vld [vmem:[#allocation4 + $0x34] sm:$0x1]
        %v5572 = vld [vmem:[#allocation4 + $0x3c] sm:$0x1]
        %v5573 = vld [vmem:[%s5 + $0x200] sm:$0xff]
        %v5574 = vld [vmem:[%s5 + $0x208] sm:$0xff]
        %v5575 = vld [vmem:[%s5 + $0x210] sm:$0xff]
        %v5576 = vld [vmem:[%s5 + $0x218] sm:$0xff]
        %v5577 = vld [vmem:[%s5 + $0x220] sm:$0xff]
        %v5578 = vld [vmem:[%s5 + $0x228] sm:$0xff]
        %v5579 = vld [vmem:[%s5 + $0x230] sm:$0xff]
        %v5580 = vld [vmem:[%s5 + $0x238] sm:$0xff]
        %v5581 = vld [vmem:[%s5 + $0x240] sm:$0xff]
        %v5582 = vld [vmem:[%s5 + $0x248] sm:$0xff]
        %v5583 = vld [vmem:[%s5 + $0x250] sm:$0xff]
        %v5584 = vld [vmem:[%s5 + $0x258] sm:$0xff]
        %v5585 = vld [vmem:[%s5 + $0x260] sm:$0xff]
        %v5586 = vld [vmem:[%s5 + $0x268] sm:$0xff]
        %v5587 = vld [vmem:[%s5 + $0x270] sm:$0xff]
        %v5588 = vld [vmem:[%s5 + $0x278] sm:$0xff]
        %v5597 = vrot.slane %v5566, 7
        %v5598 = vsel %vm5113, %v5597, %v5565
        %v5599 = vrot.slane %v5567, 6
        %v5600 = vsel %vm5116, %v5599, %v5598
        %v5601 = vrot.slane %v5568, 5
        %v5602 = vsel %vm5119, %v5601, %v5600
        %v5603 = vrot.slane %v5569, 4
        %v5604 = vsel %vm5122, %v5603, %v5602
        %v5605 = vrot.slane %v5570, 3
        %v5606 = vsel %vm5125, %v5605, %v5604
        %v5607 = vrot.slane %v5571, 2
        %v5608 = vsel %vm5128, %v5607, %v5606
        %v5609 = vrot.slane %v5572, 1
        %v5610 = vsel %vm5131, %v5609, %v5608
        %5612 = vmatprep.subr.mxu0 0.0
        %5613 = vmatpush1.msra.mxu0 %v5573
        %5614 = vmatprep.subr.mxu0 0.0
        %5615 = vmatpush1.msra.mxu0 %v5574
        %5616 = vmatprep.subr.mxu0 0.0
        %5617 = vmatpush1.msra.mxu0 %v5575
        %5618 = vmatprep.subr.mxu0 0.0
        %5619 = vmatpush1.msra.mxu0 %v5576
        %5620 = vmatprep.subr.mxu0 0.0
        %5621 = vmatpush1.msra.mxu0 %v5577
        %5622 = vmatprep.subr.mxu0 0.0
        %5623 = vmatpush1.msra.mxu0 %v5578
        %5624 = vmatprep.subr.mxu0 0.0
        %5625 = vmatpush1.msra.mxu0 %v5579
        %5626 = vmatprep.subr.mxu0 0.0
        %5627 = vmatpush1.msra.mxu0 %v5580
        %5628 = vmatprep.subr.mxu0 0.0
        %5629 = vmatpush1.msra.mxu0 %v5581
        %5630 = vmatprep.subr.mxu0 0.0
        %5631 = vmatpush1.msra.mxu0 %v5582
        %5632 = vmatprep.subr.mxu0 0.0
        %5633 = vmatpush1.msra.mxu0 %v5583
        %5634 = vmatprep.subr.mxu0 0.0
        %5635 = vmatpush1.msra.mxu0 %v5584
        %5636 = vmatprep.subr.mxu0 0.0
        %5637 = vmatpush1.msra.mxu0 %v5585
        %5638 = vmatprep.subr.mxu0 0.0
        %5639 = vmatpush1.msra.mxu0 %v5586
        %5640 = vmatprep.subr.mxu0 0.0
        %5641 = vmatpush1.msra.mxu0 %v5587
        %5642 = vmatprep.subr.mxu0 0.0
        %5643 = vmatpush1.msra.mxu0 %v5588
        %5644 = vmatprep.subr.mxu0 0.0
        %5645 = vmatpush1.msra.mxu0 0.0
        %5646 = vmatprep.subr.mxu0 0.0
        %5647 = vmatpush1.msra.mxu0 0.0
        %5648 = vmatprep.subr.mxu0 0.0
        %5649 = vmatpush1.msra.mxu0 0.0
        %5650 = vmatprep.subr.mxu0 0.0
        %5651 = vmatpush1.msra.mxu0 0.0
        %5652 = vmatprep.subr.mxu0 0.0
        %5653 = vmatpush1.msra.mxu0 0.0
        %5654 = vmatprep.subr.mxu0 0.0
        %5655 = vmatpush1.msra.mxu0 0.0
        %5656 = vmatprep.subr.mxu0 0.0
        %5657 = vmatpush1.msra.mxu0 0.0
        %5658 = vmatprep.subr.mxu0 0.0
        %5659 = vmatpush1.msra.mxu0 0.0
        %5660 = vmatprep.subr.mxu0 0.0
        %5661 = vmatpush1.msra.mxu0 0.0
        %5662 = vmatprep.subr.mxu0 0.0
        %5663 = vmatpush1.msra.mxu0 0.0
        %5664 = vmatprep.subr.mxu0 0.0
        %5665 = vmatpush1.msra.mxu0 0.0
        %5666 = vmatprep.subr.mxu0 0.0
        %5667 = vmatpush1.msra.mxu0 0.0
        %5668 = vmatprep.subr.mxu0 0.0
        %5669 = vmatpush1.msra.mxu0 0.0
        %5670 = vmatprep.subr.mxu0 0.0
        %5671 = vmatpush1.msra.mxu0 0.0
        %5672 = vmatprep.subr.mxu0 0.0
        %5673 = vmatpush1.msra.mxu0 0.0
        %5674 = vmatprep.subr.mxu0 0.0
        %5675 = vmatpush1.msra.mxu0 0.0
        %5676 = vmatprep.mubr.f32.mxu0 0.0
        %5677 = vmatmul.mubr.f32.gmra.mrb[0].mxu0 %v5610
        %v5678 = vpop.f32.mrb[0].mxu0
        %v5679 = vadd.f32 0.0, %v5678
        %v5680 = vpop.f32.mrb[0].mxu0
        %5681 = vdwg.mxu0
        %v5682 = vadd.f32 %v5564, %v5679
        %v5683 = vld [vmem:[#allocation4 + $0x5] sm:$0x1]
        %v5684 = vld [vmem:[#allocation4 + $0xd] sm:$0x1]
        %v5685 = vld [vmem:[#allocation4 + $0x15] sm:$0x1]
        %v5686 = vld [vmem:[#allocation4 + $0x1d] sm:$0x1]
        %v5687 = vld [vmem:[#allocation4 + $0x25] sm:$0x1]
        %v5688 = vld [vmem:[#allocation4 + $0x2d] sm:$0x1]
        %v5689 = vld [vmem:[#allocation4 + $0x35] sm:$0x1]
        %v5690 = vld [vmem:[#allocation4 + $0x3d] sm:$0x1]
        %v5691 = vld [vmem:[%s5 + $0x280] sm:$0xff]
        %v5692 = vld [vmem:[%s5 + $0x288] sm:$0xff]
        %v5693 = vld [vmem:[%s5 + $0x290] sm:$0xff]
        %v5694 = vld [vmem:[%s5 + $0x298] sm:$0xff]
        %v5695 = vld [vmem:[%s5 + $0x2a0] sm:$0xff]
        %v5696 = vld [vmem:[%s5 + $0x2a8] sm:$0xff]
        %v5697 = vld [vmem:[%s5 + $0x2b0] sm:$0xff]
        %v5698 = vld [vmem:[%s5 + $0x2b8] sm:$0xff]
        %v5699 = vld [vmem:[%s5 + $0x2c0] sm:$0xff]
        %v5700 = vld [vmem:[%s5 + $0x2c8] sm:$0xff]
        %v5701 = vld [vmem:[%s5 + $0x2d0] sm:$0xff]
        %v5702 = vld [vmem:[%s5 + $0x2d8] sm:$0xff]
        %v5703 = vld [vmem:[%s5 + $0x2e0] sm:$0xff]
        %v5704 = vld [vmem:[%s5 + $0x2e8] sm:$0xff]
        %v5705 = vld [vmem:[%s5 + $0x2f0] sm:$0xff]
        %v5706 = vld [vmem:[%s5 + $0x2f8] sm:$0xff]
        %v5715 = vrot.slane %v5684, 7
        %v5716 = vsel %vm5113, %v5715, %v5683
        %v5717 = vrot.slane %v5685, 6
        %v5718 = vsel %vm5116, %v5717, %v5716
        %v5719 = vrot.slane %v5686, 5
        %v5720 = vsel %vm5119, %v5719, %v5718
        %v5721 = vrot.slane %v5687, 4
        %v5722 = vsel %vm5122, %v5721, %v5720
        %v5723 = vrot.slane %v5688, 3
        %v5724 = vsel %vm5125, %v5723, %v5722
        %v5725 = vrot.slane %v5689, 2
        %v5726 = vsel %vm5128, %v5725, %v5724
        %v5727 = vrot.slane %v5690, 1
        %v5728 = vsel %vm5131, %v5727, %v5726
        %5730 = vmatprep.subr.mxu0 0.0
        %5731 = vmatpush1.msra.mxu0 %v5691
        %5732 = vmatprep.subr.mxu0 0.0
        %5733 = vmatpush1.msra.mxu0 %v5692
        %5734 = vmatprep.subr.mxu0 0.0
        %5735 = vmatpush1.msra.mxu0 %v5693
        %5736 = vmatprep.subr.mxu0 0.0
        %5737 = vmatpush1.msra.mxu0 %v5694
        %5738 = vmatprep.subr.mxu0 0.0
        %5739 = vmatpush1.msra.mxu0 %v5695
        %5740 = vmatprep.subr.mxu0 0.0
        %5741 = vmatpush1.msra.mxu0 %v5696
        %5742 = vmatprep.subr.mxu0 0.0
        %5743 = vmatpush1.msra.mxu0 %v5697
        %5744 = vmatprep.subr.mxu0 0.0
        %5745 = vmatpush1.msra.mxu0 %v5698
        %5746 = vmatprep.subr.mxu0 0.0
        %5747 = vmatpush1.msra.mxu0 %v5699
        %5748 = vmatprep.subr.mxu0 0.0
        %5749 = vmatpush1.msra.mxu0 %v5700
        %5750 = vmatprep.subr.mxu0 0.0
        %5751 = vmatpush1.msra.mxu0 %v5701
        %5752 = vmatprep.subr.mxu0 0.0
        %5753 = vmatpush1.msra.mxu0 %v5702
        %5754 = vmatprep.subr.mxu0 0.0
        %5755 = vmatpush1.msra.mxu0 %v5703
        %5756 = vmatprep.subr.mxu0 0.0
        %5757 = vmatpush1.msra.mxu0 %v5704
        %5758 = vmatprep.subr.mxu0 0.0
        %5759 = vmatpush1.msra.mxu0 %v5705
        %5760 = vmatprep.subr.mxu0 0.0
        %5761 = vmatpush1.msra.mxu0 %v5706
        %5762 = vmatprep.subr.mxu0 0.0
        %5763 = vmatpush1.msra.mxu0 0.0
        %5764 = vmatprep.subr.mxu0 0.0
        %5765 = vmatpush1.msra.mxu0 0.0
        %5766 = vmatprep.subr.mxu0 0.0
        %5767 = vmatpush1.msra.mxu0 0.0
        %5768 = vmatprep.subr.mxu0 0.0
        %5769 = vmatpush1.msra.mxu0 0.0
        %5770 = vmatprep.subr.mxu0 0.0
        %5771 = vmatpush1.msra.mxu0 0.0
        %5772 = vmatprep.subr.mxu0 0.0
        %5773 = vmatpush1.msra.mxu0 0.0
        %5774 = vmatprep.subr.mxu0 0.0
        %5775 = vmatpush1.msra.mxu0 0.0
        %5776 = vmatprep.subr.mxu0 0.0
        %5777 = vmatpush1.msra.mxu0 0.0
        %5778 = vmatprep.subr.mxu0 0.0
        %5779 = vmatpush1.msra.mxu0 0.0
        %5780 = vmatprep.subr.mxu0 0.0
        %5781 = vmatpush1.msra.mxu0 0.0
        %5782 = vmatprep.subr.mxu0 0.0
        %5783 = vmatpush1.msra.mxu0 0.0
        %5784 = vmatprep.subr.mxu0 0.0
        %5785 = vmatpush1.msra.mxu0 0.0
        %5786 = vmatprep.subr.mxu0 0.0
        %5787 = vmatpush1.msra.mxu0 0.0
        %5788 = vmatprep.subr.mxu0 0.0
        %5789 = vmatpush1.msra.mxu0 0.0
        %5790 = vmatprep.subr.mxu0 0.0
        %5791 = vmatpush1.msra.mxu0 0.0
        %5792 = vmatprep.subr.mxu0 0.0
        %5793 = vmatpush1.msra.mxu0 0.0
        %5794 = vmatprep.mubr.f32.mxu0 0.0
        %5795 = vmatmul.mubr.f32.gmra.mrb[0].mxu0 %v5728
        %v5796 = vpop.f32.mrb[0].mxu0
        %v5797 = vadd.f32 0.0, %v5796
        %v5798 = vpop.f32.mrb[0].mxu0
        %5799 = vdwg.mxu0
        %v5800 = vadd.f32 %v5682, %v5797
        %v5801 = vmax.f32 %v5800, 0.0
        %v5802 = vld [vmem:[%s7] sm:$0xff]
        %v5803 = vld [vmem:[%s7 + $0x8] sm:$0xff]
        %v5804 = vld [vmem:[%s7 + $0x10] sm:$0xff]
        %v5805 = vld [vmem:[%s7 + $0x18] sm:$0xff]
        %v5806 = vld [vmem:[%s7 + $0x20] sm:$0xff]
        %v5807 = vld [vmem:[%s7 + $0x28] sm:$0xff]
        %v5808 = vld [vmem:[%s7 + $0x30] sm:$0xff]
        %v5809 = vld [vmem:[%s7 + $0x38] sm:$0xff]
        %v5810 = vld [vmem:[%s7 + $0x40] sm:$0xff]
        %v5811 = vld [vmem:[%s7 + $0x48] sm:$0xff]
        %v5812 = vld [vmem:[%s7 + $0x50] sm:$0xff]
        %v5813 = vld [vmem:[%s7 + $0x58] sm:$0xff]
        %v5814 = vld [vmem:[%s7 + $0x60] sm:$0xf]
        %v5815 = vld [vmem:[%s8] sm:$0x1]
        %v5817 = vlaneseq
        %v5818 = vshrl.u32 %v5817, 7
        %v5819 = vsub.s32 0, %v5818
        %v5820 = vrot.slane %v5815, %v5819
        %vm5822 = vcmask 818176
        %v5824 = vsel %vm5822, %v5801, 0
        %vm5826 = vcmask 1043456
        %v5828 = vsel %vm5826, %v5814, 0
        %5830 = vmatprep.subr.mxu0 0.0
        %5831 = vmatpush1.msra.mxu0 %v5802
        %5832 = vmatprep.subr.mxu0 0.0
        %5833 = vmatpush1.msra.mxu0 %v5803
        %5834 = vmatprep.subr.mxu0 0.0
        %5835 = vmatpush1.msra.mxu0 %v5804
        %5836 = vmatprep.subr.mxu0 0.0
        %5837 = vmatpush1.msra.mxu0 %v5805
        %5838 = vmatprep.subr.mxu0 0.0
        %5839 = vmatpush1.msra.mxu0 %v5806
        %5840 = vmatprep.subr.mxu0 0.0
        %5841 = vmatpush1.msra.mxu0 %v5807
        %5842 = vmatprep.subr.mxu0 0.0
        %5843 = vmatpush1.msra.mxu0 %v5808
        %5844 = vmatprep.subr.mxu0 0.0
        %5845 = vmatpush1.msra.mxu0 %v5809
        %5846 = vmatprep.subr.mxu0 0.0
        %5847 = vmatpush1.msra.mxu0 %v5810
        %5848 = vmatprep.subr.mxu0 0.0
        %5849 = vmatpush1.msra.mxu0 %v5811
        %5850 = vmatprep.subr.mxu0 0.0
        %5851 = vmatpush1.msra.mxu0 %v5812
        %5852 = vmatprep.subr.mxu0 0.0
        %5853 = vmatpush1.msra.mxu0 %v5813
        %5854 = vmatprep.subr.mxu0 0.0
        %5855 = vmatpush1.msra.mxu0 %v5828
        %5856 = vmatprep.subr.mxu0 0.0
        %5857 = vmatpush1.msra.mxu0 0.0
        %5858 = vmatprep.subr.mxu0 0.0
        %5859 = vmatpush1.msra.mxu0 0.0
        %5860 = vmatprep.subr.mxu0 0.0
        %5861 = vmatpush1.msra.mxu0 0.0
        %5862 = vmatprep.subr.mxu0 0.0
        %5863 = vmatpush1.msra.mxu0 0.0
        %5864 = vmatprep.subr.mxu0 0.0
        %5865 = vmatpush1.msra.mxu0 0.0
        %5866 = vmatprep.subr.mxu0 0.0
        %5867 = vmatpush1.msra.mxu0 0.0
        %5868 = vmatprep.subr.mxu0 0.0
        %5869 = vmatpush1.msra.mxu0 0.0
        %5870 = vmatprep.subr.mxu0 0.0
        %5871 = vmatpush1.msra.mxu0 0.0
        %5872 = vmatprep.subr.mxu0 0.0
        %5873 = vmatpush1.msra.mxu0 0.0
        %5874 = vmatprep.subr.mxu0 0.0
        %5875 = vmatpush1.msra.mxu0 0.0
        %5876 = vmatprep.subr.mxu0 0.0
        %5877 = vmatpush1.msra.mxu0 0.0
        %5878 = vmatprep.subr.mxu0 0.0
        %5879 = vmatpush1.msra.mxu0 0.0
        %5880 = vmatprep.subr.mxu0 0.0
        %5881 = vmatpush1.msra.mxu0 0.0
        %5882 = vmatprep.subr.mxu0 0.0
        %5883 = vmatpush1.msra.mxu0 0.0
        %5884 = vmatprep.subr.mxu0 0.0
        %5885 = vmatpush1.msra.mxu0 0.0
        %5886 = vmatprep.subr.mxu0 0.0
        %5887 = vmatpush1.msra.mxu0 0.0
        %5888 = vmatprep.subr.mxu0 0.0
        %5889 = vmatpush1.msra.mxu0 0.0
        %5890 = vmatprep.subr.mxu0 0.0
        %5891 = vmatpush1.msra.mxu0 0.0
        %5892 = vmatprep.subr.mxu0 0.0
        %5893 = vmatpush1.msra.mxu0 0.0
        %5894 = vmatprep.mubr.f32.mxu0 0.0
        %5895 = vmatmul.mubr.f32.gmra.mrb[0].mxu0 %v5824
        %v5896 = vpop.f32.mrb[0].mxu0
        %v5897 = vadd.f32 %v5820, %v5896
        %v5898 = vpop.f32.mrb[0].mxu0
        %5899 = vdwg.mxu0
        %vm5900 = vcmask 80896
        %5901 = vst.msk [vmem:[%s489] sm:$0xff] %vm5900, %v5897
        %s5902 = sand.u32 %s225, 1
        %s5903 = scalar_lea.sflag [#allocation7], %s5902
        %s5904 = sand.u32 %s225, 1
        %s5905 = smul.addr %s5904, 8
        %s5906 = scalar_lea.vmem [#allocation6], %s5905
        // Predicated region
        $region95: #{example_cnn_forward.1} parent=89 // pred_check
          %p5907 = pneg %p235
        $region96: #{example_cnn_forward.1} parent=89 // pred_check_branch
          %5909 = sbr.rel (%p5907) target = $region98
        $region97: #{example_cnn_forward.1} parent=89 // pred_region
          %s5911 = ssub.s32 128, 128
          %5912 = vsyncadd %s5903, %s5911
          %s5913 = smul.addr %s23, 128
          %s5914 = scalar_lea.hbm %s9, %s5913
          %s5916 = sshll.u32 %s5906, 4
          %s5917 = int_to_ptr.vmem [resolvable:$true] %s5916
          %5919 = dma.vmem_to_hbm [thread:$0]  %s5917, 128, %s5914, %s5903
        $region98: #{example_cnn_forward.1} parent=89 // pred_fallthru
          _
      $region90: #{example_cnn_forward.1} parent=5 // pred_fallthru
        _
      %p5920 = scmp.le.s32.totalorder 2, %s18
      // Predicated region
      $region99: #{example_cnn_forward.1} parent=5 // pred_check
        %p5921 = pneg %p5920
      $region100: #{example_cnn_forward.1} parent=5 // pred_check_branch
        %5923 = sbr.rel (%p5921) target = $region102
      $region101: #{example_cnn_forward.1} parent=5 // pred_region
        %s5924 = ssub.s32 %s18, 2
        // Predicated region
        $region103: #{example_cnn_forward.1} parent=101 // pred_check
          %p5925 = pneg %p241
        $region104: #{example_cnn_forward.1} parent=101 // pred_check_branch
          %5927 = sbr.rel (%p5925) target = $region106
        $region105: #{example_cnn_forward.1} parent=101 // pred_region
          %s5928 = sand.u32 %s226, 1
          %s5929 = scalar_lea.sflag [#allocation7], %s5928
          %s5930 = sand.u32 %s226, 1
          %s5931 = smul.addr %s5930, 8
          %s5932 = scalar_lea.vmem [#allocation6], %s5931
          %5933 = dma.done %s5929, 128
        $region106: #{example_cnn_forward.1} parent=101 // pred_fallthru
          _
      $region102: #{example_cnn_forward.1} parent=5 // pred_fallthru
        _
    $region6: #{example_cnn_forward.1} parent=1 // loop_footer
      %s22 = sadd.s32 1, %s18
    $region7: #{example_cnn_forward.1} parent=1 // loop_footer_branch
      %17 = sbr.rel target = $region3
    $region8: #{example_cnn_forward.1} parent=1 // loop_exit
      _
    %5934 = vsyncpa [#allocation7], 1
    %s5935 = scalar_lea.sflag [#allocation7], 1
    %5936 = vsyncpa %s5935, 1

</llo_original>
